<compile_context>
chip_gen: v7x
topology: tpu7x:2x2x1
jax: 0.10.0
libtpu: 0.0.40
codegen_flags: <defaults>
</compile_context>

<pallas_src>
import functools
import math

import numpy as np
import jax
import jax.numpy as jnp
from jax.experimental import pallas as pl
from jax.experimental.pallas import tpu as pltpu


_BN_EPS = 1e-5


def _vmem_limit_bytes():
    # Use up to 75% of physical VMEM (v5e/v6e: 128 MiB, v7x: 64 MiB), capped at 96 MiB.
    try:
        cap = int(pltpu.get_tpu_info().vmem_capacity_bytes)
    except Exception:
        cap = 128 * 1024 * 1024
    return int(min(96 * 1024 * 1024, (cap * 3) // 4))


_VMEM_LIMIT = _vmem_limit_bytes()


# ----------------------------------------------------------------------------------
# tile pickers
# ----------------------------------------------------------------------------------
def _pick_div(d, prefs):
    for p in prefs:
        if d >= p and d % p == 0:
            return p
    return d


def _pick_tile_m(m):
    # Prefer tiles that leave >=2 blocks so work shards across v7x's 2 TensorCores.
    for p in (1024, 512, 256, 128, 64, 32, 16, 8):
        if m % p == 0 and m // p >= 2:
            return p
    return _pick_div(m, (1024, 512, 256, 128, 64, 32, 16, 8))


def _pick_rows(m):
    for p in (2048, 1024, 512, 256, 128, 64, 32, 16, 8):
        if m % p == 0 and m // p >= 2:
            return p
    return _pick_div(m, (2048, 1024, 512, 256, 128, 64, 32, 16, 8))


# ----------------------------------------------------------------------------------
# Pallas kernels
# ----------------------------------------------------------------------------------
def _matmul_stats_body(x_ref, w_ref, sc_ref, sh_ref, y_ref, s_ref, ss_ref, acc_ref):
    """y = prologue(x) @ w with bf16 MXU operands / fp32 accumulation.
    Optional prologue = BN-apply + ReLU of the previous layer (sc/sh per input channel).
    Also emits per-output-channel partial sum / sum-of-squares for the next BN."""
    k = pl.program_id(2)

    @pl.when(k == 0)
    def _():
        acc_ref[...] = jnp.zeros_like(acc_ref)

    x = x_ref[...]
    if sc_ref is not None:
        x = jnp.maximum(x.astype(jnp.float32) * sc_ref[...] + sh_ref[...], 0.0)
    acc_ref[...] += jnp.dot(x.astype(jnp.bfloat16), w_ref[...],
                            preferred_element_type=jnp.float32)

    @pl.when(k == pl.num_programs(2) - 1)
    def _():
        acc = acc_ref[...]
        y_ref[...] = acc.astype(y_ref.dtype)                       # bf16 to HBM
        s_ref[...] = jnp.sum(acc, axis=0, keepdims=True)[None]
        ss_ref[...] = jnp.sum(acc * acc, axis=0, keepdims=True)[None]


def _matmul_stats_kernel(x_ref, w_ref, y_ref, s_ref, ss_ref, acc_ref):
    _matmul_stats_body(x_ref, w_ref, None, None, y_ref, s_ref, ss_ref, acc_ref)


def _matmul_bn_stats_kernel(x_ref, w_ref, sc_ref, sh_ref, y_ref, s_ref, ss_ref, acc_ref):
    _matmul_stats_body(x_ref, w_ref, sc_ref, sh_ref, y_ref, s_ref, ss_ref, acc_ref)


def _conv3x3_kernel(x_ref, w_ref, sc_ref, sh_ref, y_ref, s_ref, ss_ref, xp_ref, acc_ref,
                    *, kh, kw, dil, pad, ho, wo):
    """Direct stride-1 dilated 3x3 conv.  The input prologue (BN1-apply + ReLU) and the
    zero halo are both done in VMEM (no padded / activated copy ever touches HBM);
    the kh*kw taps accumulate into an fp32 VMEM scratch; output + BN partials emitted."""
    j = pl.program_id(1)                       # cout-tile (inner, sequential grid dim)
    H, W, cin = x_ref.shape[1], x_ref.shape[2], x_ref.shape[3]

    # Fill the zero-padded, BN+ReLU-applied image once per batch element (j == 0).
    @pl.when(j == 0)
    def _():
        xp_ref[...] = jnp.zeros_like(xp_ref)
        xb = jnp.maximum(x_ref[0].astype(jnp.float32) * sc_ref[...] + sh_ref[...], 0.0)
        xp_ref[pl.ds(pad, H), pl.ds(pad, W), :] = xb.astype(xp_ref.dtype)

    for ti in range(kh):
        for tj in range(kw):
            t = ti * kw + tj
            xs = xp_ref[pl.ds(ti * dil, ho), pl.ds(tj * dil, wo), :]
            xs = xs.reshape(ho * wo, cin)
            contrib = jnp.dot(xs, w_ref[t], preferred_element_type=jnp.float32)
            if t == 0:
                acc_ref[...] = contrib
            else:
                acc_ref[...] += contrib

    acc = acc_ref[...]
    y_ref[...] = acc.reshape(1, ho, wo, acc.shape[-1]).astype(y_ref.dtype)
    s_ref[...] = jnp.sum(acc, axis=0, keepdims=True)[None]
    ss_ref[...] = jnp.sum(acc * acc, axis=0, keepdims=True)[None]


def _bn_add_relu_kernel(a_ref, sa_ref, ba_ref, r_ref, o_ref):
    # relu( bn3(a) + identity-residual )
    y = (a_ref[...].astype(jnp.float32) * sa_ref[...] + ba_ref[...]
         + r_ref[...].astype(jnp.float32))
    o_ref[...] = jnp.maximum(y, 0.0).astype(o_ref.dtype)


def _bn_bn_add_relu_kernel(a_ref, sa_ref, ba_ref, r_ref, sr_ref, br_ref, o_ref):
    # relu( bn3(a) + bn_downsample(r) )
    y = (a_ref[...].astype(jnp.float32) * sa_ref[...] + ba_ref[...]
         + r_ref[...].astype(jnp.float32) * sr_ref[...] + br_ref[...])
    o_ref[...] = jnp.maximum(y, 0.0).astype(o_ref.dtype)


# ----------------------------------------------------------------------------------
# pallas_call wrappers
# ----------------------------------------------------------------------------------
def _matmul_stats(x2, w2, scale=None, shift=None):
    """x2: (M, K) bf16, w2: (K, N) bf16 -> y (M, N) bf16, partials (Mt, 1, N) f32 x2.
    If scale/shift (1, K) are given, relu(x*scale+shift) is applied before the dot."""
    M, K = x2.shape
    _, N = w2.shape
    tm = _pick_tile_m(M)
    tn = _pick_div(N, (256, 128))
    tk = _pick_div(K, (512, 256, 128))
    grid = (M // tm, N // tn, K // tk)
    mt = grid[0]

    x_spec = pl.BlockSpec((tm, tk), lambda i, j, k: (i, k))
    w_spec = pl.BlockSpec((tk, tn), lambda i, j, k: (k, j))
    vec_spec = pl.BlockSpec((1, tk), lambda i, j, k: (0, k))
    if scale is None:
        kernel = _matmul_stats_kernel
        operands = (x2, w2)
        in_specs = [x_spec, w_spec]
    else:
        kernel = _matmul_bn_stats_kernel
        operands = (x2, w2, scale, shift)
        in_specs = [x_spec, w_spec, vec_spec, vec_spec]

    return pl.pallas_call(
        kernel,
        out_shape=(jax.ShapeDtypeStruct((M, N), jnp.bfloat16),
                   jax.ShapeDtypeStruct((mt, 1, N), jnp.float32),
                   jax.ShapeDtypeStruct((mt, 1, N), jnp.float32)),
        grid_spec=pltpu.PrefetchScalarGridSpec(
            num_scalar_prefetch=0,
            grid=grid,
            in_specs=in_specs,
            out_specs=[pl.BlockSpec((tm, tn), lambda i, j, k: (i, j)),
                       pl.BlockSpec((1, 1, tn), lambda i, j, k: (i, 0, j)),
                       pl.BlockSpec((1, 1, tn), lambda i, j, k: (i, 0, j))],
            scratch_shapes=[pltpu.VMEM((tm, tn), jnp.float32)]),
        compiler_params=pltpu.CompilerParams(
            dimension_semantics=("parallel", "parallel", "arbitrary"),
            vmem_limit_bytes=_VMEM_LIMIT),
    )(*operands)


def _conv3x3_direct(x, w, scale, shift, *, dilation, padding):
    """Stride-1 dilated 3x3 conv with fused BN-apply + ReLU on the input.
    x: (N,H,W,Cin) bf16 (pre-BN), w: (3,3,Cin,Cout), scale/shift: (1,Cin) f32."""
    N, H, W, cin = x.shape
    kh, kw, _, cout = w.shape
    Ho = H + 2 * padding - dilation * (kh - 1)
    Wo = W + 2 * padding - dilation * (kw - 1)
    Hp, Wp = H + 2 * padding, W + 2 * padding
    w9 = w.reshape(kh * kw, cin, cout).astype(jnp.bfloat16)
    tn = _pick_div(cout, (256, 128))
    grid = (N, cout // tn)
    # TODO(synk): for very large feature maps on v7x (64 MiB VMEM), tile over output
    # rows with a dilation-sized halo instead of keeping the whole image resident.
    kernel = functools.partial(_conv3x3_kernel, kh=kh, kw=kw, dil=dilation,
                               pad=padding, ho=Ho, wo=Wo)
    y, s, ss = pl.pallas_call(
        kernel,
        out_shape=(jax.ShapeDtypeStruct((N, Ho, Wo, cout), jnp.bfloat16),
                   jax.ShapeDtypeStruct((N, 1, cout), jnp.float32),
                   jax.ShapeDtypeStruct((N, 1, cout), jnp.float32)),
        grid_spec=pltpu.PrefetchScalarGridSpec(
            num_scalar_prefetch=0,
            grid=grid,
            in_specs=[pl.BlockSpec((1, H, W, cin), lambda n, j: (n, 0, 0, 0)),
                      pl.BlockSpec((kh * kw, cin, tn), lambda n, j: (0, 0, j)),
                      pl.BlockSpec((1, cin), lambda n, j: (0, 0)),
                      pl.BlockSpec((1, cin), lambda n, j: (0, 0))],
            out_specs=[pl.BlockSpec((1, Ho, Wo, tn), lambda n, j: (n, 0, 0, j)),
                       pl.BlockSpec((1, 1, tn), lambda n, j: (n, 0, j)),
                       pl.BlockSpec((1, 1, tn), lambda n, j: (n, 0, j))],
            scratch_shapes=[pltpu.VMEM((Hp, Wp, cin), jnp.bfloat16),
                            pltpu.VMEM((Ho * Wo, tn), jnp.float32)]),
        compiler_params=pltpu.CompilerParams(
            dimension_semantics=("parallel", "arbitrary"),
            vmem_limit_bytes=_VMEM_LIMIT),
    )(x, w9, scale, shift)
    return y, s, ss, (Ho, Wo)


def _extract_patches(x, kh, kw, stride, dilation, padding):
    """im2col (only used for the stride>1 3x3 conv): (N,H,W,C) -> (N,Ho,Wo,kh*kw*C)."""
    N, H, W, C = x.shape
    Ho = (H + 2 * padding - dilation * (kh - 1) - 1) // stride + 1
    Wo = (W + 2 * padding - dilation * (kw - 1) - 1) // stride + 1
    xp = x if padding == 0 else jnp.pad(
        x, ((0, 0), (padding, padding), (padding, padding), (0, 0)))
    cols = []
    for i in range(kh):
        for j in range(kw):
            hs, ws = i * dilation, j * dilation
            cols.append(xp[:, hs:hs + stride * (Ho - 1) + 1:stride,
                           ws:ws + stride * (Wo - 1) + 1:stride, :])
    return jnp.concatenate(cols, axis=-1), Ho, Wo


def _bn_scale_shift(s, ss, gamma, beta, *, count, eps=_BN_EPS):
    """Training-mode BN: biased variance, batch statistics.  Pure jnp on a (1,C)
    problem — XLA fuses this; no extra kernel launch."""
    c = s.shape[-1]
    s_tot = jnp.sum(s.reshape(-1, c), axis=0)
    ss_tot = jnp.sum(ss.reshape(-1, c), axis=0)
    mean = s_tot / count
    var = jnp.maximum(ss_tot / count - mean * mean, 0.0)
    scale = gamma.reshape(-1) * jax.lax.rsqrt(var + eps)
    shift = beta.reshape(-1) - mean * scale
    return scale.reshape(1, c), shift.reshape(1, c)


def bn_residual_relu(a2, sa, ba, r2, sr=None, br=None, out_dtype=jnp.float32):
    """Fused epilogue: relu( bn3(a) + residual ), residual raw (identity) or BN-applied."""
    M, C = a2.shape
    tm = _pick_rows(M)
    row = pl.BlockSpec((tm, C), lambda i: (i, 0))
    vec = pl.BlockSpec((1, C), lambda i: (0, 0))
    if sr is None:
        kernel = _bn_add_relu_kernel
        operands = (a2, sa, ba, r2)
        in_specs = [row, vec, vec, row]
    else:
        kernel = _bn_bn_add_relu_kernel
        operands = (a2, sa, ba, r2, sr, br)
        in_specs = [row, vec, vec, row, vec, vec]
    return pl.pallas_call(
        kernel,
        out_shape=jax.ShapeDtypeStruct((M, C), out_dtype),
        grid_spec=pltpu.PrefetchScalarGridSpec(
            num_scalar_prefetch=0, grid=(M // tm,),
            in_specs=in_specs, out_specs=row),
        compiler_params=pltpu.CompilerParams(
            dimension_semantics=("parallel",), vmem_limit_bytes=_VMEM_LIMIT),
    )(*operands)


# ----------------------------------------------------------------------------------
# Bottleneck forward (single jit over the whole block)
# ----------------------------------------------------------------------------------
@functools.partial(jax.jit, static_argnames=("stride", "atrous", "has_downsample"))
def bottleneck_forward(x_nchw, params, *, stride=1, atrous=1, has_downsample=False):
    # NCHW -> NHWC and bf16 once at the boundary; all intermediates stay bf16 in HBM.
    x = jnp.transpose(x_nchw.astype(jnp.bfloat16), (0, 2, 3, 1))
    N, H, W, cin = x.shape
    planes = params["w1"].shape[-1]
    cout = params["w3"].shape[-1]

    # conv1 (1x1): bf16 output + fp32 BN1 partial (sum, sumsq); no input prologue.
    n1 = N * H * W
    y1, s1, ss1 = _matmul_stats(
        x.reshape(n1, cin), params["w1"].reshape(cin, planes).astype(jnp.bfloat16))
    sc1, sh1 = _bn_scale_shift(s1, ss1, *params["bn1"], count=n1)

    # conv2 (3x3, stride, dilation=atrous, padding=atrous); bn1 + relu fused into the
    # conv input prologue, padding handled in VMEM.
    if stride == 1:
        y2, s2, ss2, (Ho, Wo) = _conv3x3_direct(
            y1.reshape(N, H, W, planes), params["w2"], sc1, sh1,
            dilation=atrous, padding=atrous)
        n2 = N * Ho * Wo
        y2_2d = y2.reshape(n2, planes)
    else:
        # TODO(synk): replace the stride>1 im2col fallback with a strided-tap direct
        # conv kernel (in-kernel halo + strided reads) to kill the patch tensor.
        a1 = jnp.maximum(y1.astype(jnp.float32) * sc1 + sh1, 0.0).astype(jnp.bfloat16)
        patches, Ho, Wo = _extract_patches(a1.reshape(N, H, W, planes), 3, 3,
                                           stride, atrous, atrous)
        n2 = N * Ho * Wo
        y2_2d, s2, ss2 = _matmul_stats(
            patches.reshape(n2, 9 * planes),
            params["w2"].reshape(9 * planes, planes).astype(jnp.bfloat16))
    sc2, sh2 = _bn_scale_shift(s2, ss2, *params["bn2"], count=n2)

    # conv3 (1x1) with bn2 + relu fused into the input prologue.
    y3, s3, ss3 = _matmul_stats(
        y2_2d, params["w3"].reshape(planes, cout).astype(jnp.bfloat16), sc2, sh2)
    sc3, sh3 = _bn_scale_shift(s3, ss3, *params["bn3"], count=n2)

    # Residual branch + fused bn3(+bn_downsample) + add + relu epilogue (one HBM pass).
    if has_downsample:
        xs = x[:, ::stride, ::stride, :] if stride > 1 else x
        yd, sd, ssd = _matmul_stats(
            xs.reshape(n2, cin), params["wd"].reshape(cin, cout).astype(jnp.bfloat16))
        scd, shd = _bn_scale_shift(sd, ssd, *params["bnd"], count=n2)
        out2 = bn_residual_relu(y3, sc3, sh3, yd, scd, shd)
    else:
        out2 = bn_residual_relu(y3, sc3, sh3, x.reshape(n2, cout))
    out = out2.reshape(N, Ho, Wo, cout)
    return jnp.transpose(out, (0, 3, 1, 2))                        # NHWC -> NCHW (f32)


# ----------------------------------------------------------------------------------
# deterministic parameter construction
# ----------------------------------------------------------------------------------
class _ParamGen:
    def __init__(self, key):
        self._key = key

    def _next(self):
        self._key, k = jax.random.split(self._key)
        return k

    def conv(self, kh, kw, cin, cout):
        std = math.sqrt(2.0 / (cout * kh * kw))
        return std * jax.random.normal(self._next(), (kh, kw, cin, cout), jnp.float32)

    def bn(self, c):
        g = 1.0 + 0.1 * jax.random.normal(self._next(), (1, c), jnp.float32)
        b = 0.1 * jax.random.normal(self._next(), (1, c), jnp.float32)
        return (g, b)


def build_bottleneck_params(key, inplanes, planes, *, downsample=False):
    pg = _ParamGen(key)
    p = {
        "w1": pg.conv(1, 1, inplanes, planes), "bn1": pg.bn(planes),
        "w2": pg.conv(3, 3, planes, planes), "bn2": pg.bn(planes),
        "w3": pg.conv(1, 1, planes, planes * 4), "bn3": pg.bn(planes * 4),
    }
    if downsample:
        p["wd"] = pg.conv(1, 1, inplanes, planes * 4)
        p["bnd"] = pg.bn(planes * 4)
    return p


# ----------------------------------------------------------------------------------
# pure-JAX fp32 reference for a correctness sanity check
# ----------------------------------------------------------------------------------
def _ref_conv(x, w, stride=1, dilation=1, padding=0):
    return jax.lax.conv_general_dilated(
        x, w, window_strides=(stride, stride),
        padding=((padding, padding), (padding, padding)),
        rhs_dilation=(dilation, dilation),
        dimension_numbers=("NHWC", "HWIO", "NHWC"))


def _ref_bn(x, gb, eps=_BN_EPS):
    g, b = gb
    mean = jnp.mean(x, axis=(0, 1, 2), keepdims=True)
    var = jnp.mean(jnp.square(x - mean), axis=(0, 1, 2), keepdims=True)
    return (x - mean) * jax.lax.rsqrt(var + eps) * g.reshape(1, 1, 1, -1) + b.reshape(1, 1, 1, -1)


def _ref_bottleneck(x_nchw, p, *, stride=1, atrous=1, has_downsample=False):
    x = jnp.transpose(x_nchw.astype(jnp.float32), (0, 2, 3, 1))
    out = jax.nn.relu(_ref_bn(_ref_conv(x, p["w1"]), p["bn1"]))
    out = jax.nn.relu(_ref_bn(_ref_conv(out, p["w2"], stride=stride, dilation=atrous,
                                        padding=atrous), p["bn2"]))
    out = _ref_bn(_ref_conv(out, p["w3"]), p["bn3"])
    if has_downsample:
        res = _ref_bn(_ref_conv(x, p["wd"], stride=stride), p["bnd"])
    else:
        res = x
    out = jax.nn.relu(out + res)
    return jnp.transpose(out, (0, 3, 1, 2))


# ----------------------------------------------------------------------------------
if __name__ == "__main__":
    key = jax.random.PRNGKey(0)
    kpa, kpb, kxa, kxb = jax.random.split(key, 4)

    # Block A: identity residual (inplanes == planes*4), stride 1, atrous (dilation) 2.
    pa = build_bottleneck_params(kpa, inplanes=128, planes=32)
    xa = jax.random.normal(kxa, (2, 128, 16, 16), jnp.float32)
    oa = bottleneck_forward(xa, pa, stride=1, atrous=2, has_downsample=False)

    # Block B: stride-2 block with a 1x1/s2 conv + BN downsample branch.
    pb = build_bottleneck_params(kpb, inplanes=64, planes=32, downsample=True)
    xb = jax.random.normal(kxb, (2, 64, 16, 16), jnp.float32)
    ob = bottleneck_forward(xb, pb, stride=2, atrous=1, has_downsample=True)

    jax.block_until_ready((oa, ob))
    assert oa.shape == (2, 128, 16, 16), oa.shape
    assert ob.shape == (2, 128, 8, 8), ob.shape

    # Correctness vs. fp32 pure-JAX reference.  Tolerances are loose because the Pallas
    # path uses bf16 MXU operands AND bf16 HBM storage of intermediate activations.
    ra = _ref_bottleneck(xa, pa, stride=1, atrous=2, has_downsample=False)
    rb = _ref_bottleneck(xb, pb, stride=2, atrous=1, has_downsample=True)
    np.testing.assert_allclose(np.asarray(oa), np.asarray(ra), rtol=2e-1, atol=2e-1)
    np.testing.assert_allclose(np.asarray(ob), np.asarray(rb), rtol=2e-1, atol=2e-1)

    print("KERNEL_OK")
</pallas_src>

<mosaic_0001>
module attributes {stable_mosaic.version = 11 : i64} {
  func.func @_matmul_stats_kernel(%arg0: i32, %arg1: i32, %arg2: i32, %arg3: memref<256x128xbf16, #tpu.memory_space<vmem>>, %arg4: memref<128x32xbf16, #tpu.memory_space<vmem>>, %arg5: memref<256x32xbf16, #tpu.memory_space<vmem>>, %arg6: memref<1x1x32xf32, #tpu.memory_space<vmem>>, %arg7: memref<1x1x32xf32, #tpu.memory_space<vmem>>, %arg8: memref<256x32xf32, #tpu.memory_space<vmem>>) attributes {dimension_semantics = [#tpu.dimension_semantics<parallel>, #tpu.dimension_semantics<parallel>, #tpu.dimension_semantics<arbitrary>], iteration_bounds = array<i64: 2, 1, 1>, scalar_prefetch = 0 : i64, scratch_operands = 1 : i64, tpu.core_type = #tpu.core_type<tc>, window_params = [{transform_indices = @transform_0, window_bounds = array<i64: 256, 128>}, {transform_indices = @transform_1, window_bounds = array<i64: 128, 32>}, {transform_indices = @transform_2, window_bounds = array<i64: 256, 32>}, {transform_indices = @transform_3, window_bounds = array<i64: 1, 1, 32>}, {transform_indices = @transform_4, window_bounds = array<i64: 1, 1, 32>}]} {
    %c0_i32 = arith.constant 0 : i32
    %0 = arith.cmpi eq, %arg2, %c0_i32 : i32
    %1 = arith.extui %0 : i1 to i32
    %c0_i32_0 = arith.constant 0 : i32
    %2 = arith.cmpi ne, %1, %c0_i32_0 : i32
    scf.if %2 {
      %cst_10 = arith.constant 0.000000e+00 : f32
      %12 = vector.broadcast %cst_10 : f32 to vector<256x32xf32>
      %c0_11 = arith.constant 0 : index
      %c0_12 = arith.constant 0 : index
      %13 = vector.load %arg8[%c0_11, %c0_12] : memref<256x32xf32, #tpu.memory_space<vmem>>, vector<256x32xf32>
      tpu.vector_store %arg8[%c0_11, %c0_12], %12 {strides = array<i32>} : memref<256x32xf32, #tpu.memory_space<vmem>>, vector<256x32xf32>,
    } else {
    }
    %c0 = arith.constant 0 : index
    %c0_1 = arith.constant 0 : index
    %3 = vector.load %arg3[%c0, %c0_1] : memref<256x128xbf16, #tpu.memory_space<vmem>>, vector<256x128xbf16>
    %c0_2 = arith.constant 0 : index
    %c0_3 = arith.constant 0 : index
    %4 = vector.load %arg8[%c0_2, %c0_3] : memref<256x32xf32, #tpu.memory_space<vmem>>, vector<256x32xf32>
    %c0_4 = arith.constant 0 : index
    %c0_5 = arith.constant 0 : index
    %5 = vector.load %arg4[%c0_4, %c0_5] : memref<128x32xbf16, #tpu.memory_space<vmem>>, vector<128x32xbf16>
    %cst = arith.constant dense<0.000000e+00> : vector<256x32xf32>
    %6 = tpu.matmul %3, %5, %cst {dimension_numbers = #tpu.dot_dimension_numbers<[1], [0], [0], [1], [0, 0, 1, 1], [], []>} : vector<256x128xbf16>, vector<128x32xbf16>, vector<256x32xf32> -> vector<256x32xf32>
    %7 = arith.addf %4, %6 : vector<256x32xf32>
    %c0_6 = arith.constant 0 : index
    %c0_7 = arith.constant 0 : index
    %8 = vector.load %arg8[%c0_6, %c0_7] : memref<256x32xf32, #tpu.memory_space<vmem>>, vector<256x32xf32>
    tpu.vector_store %arg8[%c0_6, %c0_7], %7 {strides = array<i32>} : memref<256x32xf32, #tpu.memory_space<vmem>>, vector<256x32xf32>,
    %c0_i32_8 = arith.constant 0 : i32
    %9 = arith.cmpi eq, %arg2, %c0_i32_8 : i32
    %10 = arith.extui %9 : i1 to i32
    %c0_i32_9 = arith.constant 0 : i32
    %11 = arith.cmpi ne, %10, %c0_i32_9 : i32
    scf.if %11 {
      %c0_10 = arith.constant 0 : index
      %c0_11 = arith.constant 0 : index
      %12 = vector.load %arg8[%c0_10, %c0_11] : memref<256x32xf32, #tpu.memory_space<vmem>>, vector<256x32xf32>
      %13 = arith.truncf %12 : vector<256x32xf32> to vector<256x32xbf16>
      %c0_12 = arith.constant 0 : index
      %c0_13 = arith.constant 0 : index
      %14 = vector.load %arg5[%c0_12, %c0_13] : memref<256x32xbf16, #tpu.memory_space<vmem>>, vector<256x32xbf16>
      tpu.vector_store %arg5[%c0_12, %c0_13], %13 {strides = array<i32>} : memref<256x32xbf16, #tpu.memory_space<vmem>>, vector<256x32xbf16>,
      %cst_14 = arith.constant dense<0.000000e+00> : vector<32xf32>
      %15 = vector.multi_reduction <add>, %12, %cst_14 [0] : vector<256x32xf32> to vector<32xf32>
      %16 = vector.shape_cast %15 : vector<32xf32> to vector<1x32xf32>
      %17 = vector.shape_cast %16 : vector<1x32xf32> to vector<1x1x32xf32>
      %c0_15 = arith.constant 0 : index
      %c0_16 = arith.constant 0 : index
      %c0_17 = arith.constant 0 : index
      %18 = vector.load %arg6[%c0_15, %c0_16, %c0_17] : memref<1x1x32xf32, #tpu.memory_space<vmem>>, vector<1x1x32xf32>
      tpu.vector_store %arg6[%c0_15, %c0_16, %c0_17], %17 {strides = array<i32>} : memref<1x1x32xf32, #tpu.memory_space<vmem>>, vector<1x1x32xf32>,
      %19 = arith.mulf %12, %12 : vector<256x32xf32>
      %cst_18 = arith.constant dense<0.000000e+00> : vector<32xf32>
      %20 = vector.multi_reduction <add>, %19, %cst_18 [0] : vector<256x32xf32> to vector<32xf32>
      %21 = vector.shape_cast %20 : vector<32xf32> to vector<1x32xf32>
      %22 = vector.shape_cast %21 : vector<1x32xf32> to vector<1x1x32xf32>
      %c0_19 = arith.constant 0 : index
      %c0_20 = arith.constant 0 : index
      %c0_21 = arith.constant 0 : index
      %23 = vector.load %arg7[%c0_19, %c0_20, %c0_21] : memref<1x1x32xf32, #tpu.memory_space<vmem>>, vector<1x1x32xf32>
      tpu.vector_store %arg7[%c0_19, %c0_20, %c0_21], %22 {strides = array<i32>} : memref<1x1x32xf32, #tpu.memory_space<vmem>>, vector<1x1x32xf32>,
    } else {
    }
    return
  }
  func.func @transform_0(%arg0: i32, %arg1: i32, %arg2: i32) -> (i32, i32) {
    %c0_i32 = arith.constant 0 : i32
    return %arg0, %arg2 : i32, i32
  }
  func.func @transform_1(%arg0: i32, %arg1: i32, %arg2: i32) -> (i32, i32) {
    %c0_i32 = arith.constant 0 : i32
    return %arg2, %arg1 : i32, i32
  }
  func.func @transform_2(%arg0: i32, %arg1: i32, %arg2: i32) -> (i32, i32) {
    %c0_i32 = arith.constant 0 : i32
    return %arg0, %arg1 : i32, i32
  }
  func.func @transform_3(%arg0: i32, %arg1: i32, %arg2: i32) -> (i32, i32, i32) {
    %c0_i32 = arith.constant 0 : i32
    %c0_i32_0 = arith.constant 0 : i32
    return %arg0, %c0_i32, %arg1 : i32, i32, i32
  }
  func.func @transform_4(%arg0: i32, %arg1: i32, %arg2: i32) -> (i32, i32, i32) {
    %c0_i32 = arith.constant 0 : i32
    %c0_i32_0 = arith.constant 0 : i32
    return %arg0, %c0_i32, %arg1 : i32, i32, i32
  }
}

module attributes {stable_mosaic.version = 11 : i64} {
  func.func @_matmul_bn_stats_kernel(%arg0: i32, %arg1: i32, %arg2: i32, %arg3: memref<256x32xbf16, #tpu.memory_space<vmem>>, %arg4: memref<32x128xbf16, #tpu.memory_space<vmem>>, %arg5: memref<1x32xf32, #tpu.memory_space<vmem>>, %arg6: memref<1x32xf32, #tpu.memory_space<vmem>>, %arg7: memref<256x128xbf16, #tpu.memory_space<vmem>>, %arg8: memref<1x1x128xf32, #tpu.memory_space<vmem>>, %arg9: memref<1x1x128xf32, #tpu.memory_space<vmem>>, %arg10: memref<256x128xf32, #tpu.memory_space<vmem>>) attributes {dimension_semantics = [#tpu.dimension_semantics<parallel>, #tpu.dimension_semantics<parallel>, #tpu.dimension_semantics<arbitrary>], iteration_bounds = array<i64: 2, 1, 1>, scalar_prefetch = 0 : i64, scratch_operands = 1 : i64, tpu.core_type = #tpu.core_type<tc>, window_params = [{transform_indices = @transform_0, window_bounds = array<i64: 256, 32>}, {transform_indices = @transform_1, window_bounds = array<i64: 32, 128>}, {transform_indices = @transform_2, window_bounds = array<i64: 1, 32>}, {transform_indices = @transform_3, window_bounds = array<i64: 1, 32>}, {transform_indices = @transform_4, window_bounds = array<i64: 256, 128>}, {transform_indices = @transform_5, window_bounds = array<i64: 1, 1, 128>}, {transform_indices = @transform_6, window_bounds = array<i64: 1, 1, 128>}]} {
    %c0_i32 = arith.constant 0 : i32
    %0 = arith.cmpi eq, %arg2, %c0_i32 : i32
    %1 = arith.extui %0 : i1 to i32
    %c0_i32_0 = arith.constant 0 : i32
    %2 = arith.cmpi ne, %1, %c0_i32_0 : i32
    scf.if %2 {
      %cst_15 = arith.constant 0.000000e+00 : f32
      %22 = vector.broadcast %cst_15 : f32 to vector<256x128xf32>
      %c0_16 = arith.constant 0 : index
      %c0_17 = arith.constant 0 : index
      %23 = vector.load %arg10[%c0_16, %c0_17] : memref<256x128xf32, #tpu.memory_space<vmem>>, vector<256x128xf32>
      tpu.vector_store %arg10[%c0_16, %c0_17], %22 {strides = array<i32>} : memref<256x128xf32, #tpu.memory_space<vmem>>, vector<256x128xf32>,
    } else {
    }
    %c0 = arith.constant 0 : index
    %c0_1 = arith.constant 0 : index
    %3 = vector.load %arg3[%c0, %c0_1] : memref<256x32xbf16, #tpu.memory_space<vmem>>, vector<256x32xbf16>
    %4 = arith.extf %3 : vector<256x32xbf16> to vector<256x32xf32>
    %c0_2 = arith.constant 0 : index
    %c0_3 = arith.constant 0 : index
    %5 = vector.load %arg5[%c0_2, %c0_3] : memref<1x32xf32, #tpu.memory_space<vmem>>, vector<1x32xf32>
    %6 = vector.broadcast %5 : vector<1x32xf32> to vector<256x32xf32>
    %7 = arith.mulf %4, %6 : vector<256x32xf32>
    %c0_4 = arith.constant 0 : index
    %c0_5 = arith.constant 0 : index
    %8 = vector.load %arg6[%c0_4, %c0_5] : memref<1x32xf32, #tpu.memory_space<vmem>>, vector<1x32xf32>
    %9 = vector.broadcast %8 : vector<1x32xf32> to vector<256x32xf32>
    %10 = arith.addf %7, %9 : vector<256x32xf32>
    %cst = arith.constant 0.000000e+00 : f32
    %11 = vector.broadcast %cst : f32 to vector<256x32xf32>
    %12 = arith.maximumf %10, %11 : vector<256x32xf32>
    %c0_6 = arith.constant 0 : index
    %c0_7 = arith.constant 0 : index
    %13 = vector.load %arg10[%c0_6, %c0_7] : memref<256x128xf32, #tpu.memory_space<vmem>>, vector<256x128xf32>
    %14 = arith.truncf %12 : vector<256x32xf32> to vector<256x32xbf16>
    %c0_8 = arith.constant 0 : index
    %c0_9 = arith.constant 0 : index
    %15 = vector.load %arg4[%c0_8, %c0_9] : memref<32x128xbf16, #tpu.memory_space<vmem>>, vector<32x128xbf16>
    %cst_10 = arith.constant dense<0.000000e+00> : vector<256x128xf32>
    %16 = tpu.matmul %14, %15, %cst_10 {dimension_numbers = #tpu.dot_dimension_numbers<[1], [0], [0], [1], [0, 0, 1, 1], [], []>} : vector<256x32xbf16>, vector<32x128xbf16>, vector<256x128xf32> -> vector<256x128xf32>
    %17 = arith.addf %13, %16 : vector<256x128xf32>
    %c0_11 = arith.constant 0 : index
    %c0_12 = arith.constant 0 : index
    %18 = vector.load %arg10[%c0_11, %c0_12] : memref<256x128xf32, #tpu.memory_space<vmem>>, vector<256x128xf32>
    tpu.vector_store %arg10[%c0_11, %c0_12], %17 {strides = array<i32>} : memref<256x128xf32, #tpu.memory_space<vmem>>, vector<256x128xf32>,
    %c0_i32_13 = arith.constant 0 : i32
    %19 = arith.cmpi eq, %arg2, %c0_i32_13 : i32
    %20 = arith.extui %19 : i1 to i32
    %c0_i32_14 = arith.constant 0 : i32
    %21 = arith.cmpi ne, %20, %c0_i32_14 : i32
    scf.if %21 {
      %c0_15 = arith.constant 0 : index
      %c0_16 = arith.constant 0 : index
      %22 = vector.load %arg10[%c0_15, %c0_16] : memref<256x128xf32, #tpu.memory_space<vmem>>, vector<256x128xf32>
      %23 = arith.truncf %22 : vector<256x128xf32> to vector<256x128xbf16>
      %c0_17 = arith.constant 0 : index
      %c0_18 = arith.constant 0 : index
      %24 = vector.load %arg7[%c0_17, %c0_18] : memref<256x128xbf16, #tpu.memory_space<vmem>>, vector<256x128xbf16>
      tpu.vector_store %arg7[%c0_17, %c0_18], %23 {strides = array<i32>} : memref<256x128xbf16, #tpu.memory_space<vmem>>, vector<256x128xbf16>,
      %cst_19 = arith.constant dense<0.000000e+00> : vector<128xf32>
      %25 = vector.multi_reduction <add>, %22, %cst_19 [0] : vector<256x128xf32> to vector<128xf32>
      %26 = vector.shape_cast %25 : vector<128xf32> to vector<1x128xf32>
      %27 = vector.shape_cast %26 : vector<1x128xf32> to vector<1x1x128xf32>
      %c0_20 = arith.constant 0 : index
      %c0_21 = arith.constant 0 : index
      %c0_22 = arith.constant 0 : index
      %28 = vector.load %arg8[%c0_20, %c0_21, %c0_22] : memref<1x1x128xf32, #tpu.memory_space<vmem>>, vector<1x1x128xf32>
      tpu.vector_store %arg8[%c0_20, %c0_21, %c0_22], %27 {strides = array<i32>} : memref<1x1x128xf32, #tpu.memory_space<vmem>>, vector<1x1x128xf32>,
      %29 = arith.mulf %22, %22 : vector<256x128xf32>
      %cst_23 = arith.constant dense<0.000000e+00> : vector<128xf32>
      %30 = vector.multi_reduction <add>, %29, %cst_23 [0] : vector<256x128xf32> to vector<128xf32>
      %31 = vector.shape_cast %30 : vector<128xf32> to vector<1x128xf32>
      %32 = vector.shape_cast %31 : vector<1x128xf32> to vector<1x1x128xf32>
      %c0_24 = arith.constant 0 : index
      %c0_25 = arith.constant 0 : index
      %c0_26 = arith.constant 0 : index
      %33 = vector.load %arg9[%c0_24, %c0_25, %c0_26] : memref<1x1x128xf32, #tpu.memory_space<vmem>>, vector<1x1x128xf32>
      tpu.vector_store %arg9[%c0_24, %c0_25, %c0_26], %32 {strides = array<i32>} : memref<1x1x128xf32, #tpu.memory_space<vmem>>, vector<1x1x128xf32>,
    } else {
    }
    return
  }
  func.func @transform_0(%arg0: i32, %arg1: i32, %arg2: i32) -> (i32, i32) {
    %c0_i32 = arith.constant 0 : i32
    return %arg0, %arg2 : i32, i32
  }
  func.func @transform_1(%arg0: i32, %arg1: i32, %arg2: i32) -> (i32, i32) {
    %c0_i32 = arith.constant 0 : i32
    return %arg2, %arg1 : i32, i32
  }
  func.func @transform_2(%arg0: i32, %arg1: i32, %arg2: i32) -> (i32, i32) {
    %c0_i32 = arith.constant 0 : i32
    %c0_i32_0 = arith.constant 0 : i32
    return %c0_i32, %arg2 : i32, i32
  }
  func.func @transform_3(%arg0: i32, %arg1: i32, %arg2: i32) -> (i32, i32) {
    %c0_i32 = arith.constant 0 : i32
    %c0_i32_0 = arith.constant 0 : i32
    return %c0_i32, %arg2 : i32, i32
  }
  func.func @transform_4(%arg0: i32, %arg1: i32, %arg2: i32) -> (i32, i32) {
    %c0_i32 = arith.constant 0 : i32
    return %arg0, %arg1 : i32, i32
  }
  func.func @transform_5(%arg0: i32, %arg1: i32, %arg2: i32) -> (i32, i32, i32) {
    %c0_i32 = arith.constant 0 : i32
    %c0_i32_0 = arith.constant 0 : i32
    return %arg0, %c0_i32, %arg1 : i32, i32, i32
  }
  func.func @transform_6(%arg0: i32, %arg1: i32, %arg2: i32) -> (i32, i32, i32) {
    %c0_i32 = arith.constant 0 : i32
    %c0_i32_0 = arith.constant 0 : i32
    return %arg0, %c0_i32, %arg1 : i32, i32, i32
  }
}

module attributes {stable_mosaic.version = 11 : i64} {
  func.func @_conv3x3_kernel(%arg0: i32, %arg1: i32, %arg2: memref<1x16x16x32xbf16, #tpu.memory_space<vmem>>, %arg3: memref<9x32x32xbf16, #tpu.memory_space<vmem>>, %arg4: memref<1x32xf32, #tpu.memory_space<vmem>>, %arg5: memref<1x32xf32, #tpu.memory_space<vmem>>, %arg6: memref<1x16x16x32xbf16, #tpu.memory_space<vmem>>, %arg7: memref<1x1x32xf32, #tpu.memory_space<vmem>>, %arg8: memref<1x1x32xf32, #tpu.memory_space<vmem>>, %arg9: memref<20x20x32xbf16, #tpu.memory_space<vmem>>, %arg10: memref<256x32xf32, #tpu.memory_space<vmem>>) attributes {dimension_semantics = [#tpu.dimension_semantics<parallel>, #tpu.dimension_semantics<arbitrary>], iteration_bounds = array<i64: 2, 1>, scalar_prefetch = 0 : i64, scratch_operands = 2 : i64, tpu.core_type = #tpu.core_type<tc>, window_params = [{transform_indices = @transform_0, window_bounds = array<i64: 1, 16, 16, 32>}, {transform_indices = @transform_1, window_bounds = array<i64: 9, 32, 32>}, {pipeline_mode = #tpu.pipeline_mode<synchronous>, transform_indices = @transform_2, window_bounds = array<i64: 1, 32>}, {pipeline_mode = #tpu.pipeline_mode<synchronous>, transform_indices = @transform_3, window_bounds = array<i64: 1, 32>}, {transform_indices = @transform_4, window_bounds = array<i64: 1, 16, 16, 32>}, {transform_indices = @transform_5, window_bounds = array<i64: 1, 1, 32>}, {transform_indices = @transform_6, window_bounds = array<i64: 1, 1, 32>}]} {
    %c0_i32 = arith.constant 0 : i32
    %0 = arith.cmpi eq, %arg1, %c0_i32 : i32
    %1 = arith.extui %0 : i1 to i32
    %c0_i32_0 = arith.constant 0 : i32
    %2 = arith.cmpi ne, %1, %c0_i32_0 : i32
    scf.if %2 {
      %cst_102 = arith.constant 0.000000e+00 : bf16
      %86 = vector.broadcast %cst_102 : bf16 to vector<20x20x32xbf16>
      %c0_103 = arith.constant 0 : index
      %c0_104 = arith.constant 0 : index
      %c0_105 = arith.constant 0 : index
      %87 = vector.load %arg9[%c0_103, %c0_104, %c0_105] : memref<20x20x32xbf16, #tpu.memory_space<vmem>>, vector<20x20x32xbf16>
      tpu.vector_store %arg9[%c0_103, %c0_104, %c0_105], %86 {strides = array<i32>} : memref<20x20x32xbf16, #tpu.memory_space<vmem>>, vector<20x20x32xbf16>,
      %c0_106 = arith.constant 0 : index
      %c0_107 = arith.constant 0 : index
      %c0_108 = arith.constant 0 : index
      %c0_109 = arith.constant 0 : index
      %88 = vector.load %arg2[%c0_106, %c0_107, %c0_108, %c0_109] : memref<1x16x16x32xbf16, #tpu.memory_space<vmem>>, vector<1x16x16x32xbf16>
      %89 = vector.shape_cast %88 : vector<1x16x16x32xbf16> to vector<16x16x32xbf16>
      %90 = arith.extf %89 : vector<16x16x32xbf16> to vector<16x16x32xf32>
      %c0_110 = arith.constant 0 : index
      %c0_111 = arith.constant 0 : index
      %91 = vector.load %arg4[%c0_110, %c0_111] : memref<1x32xf32, #tpu.memory_space<vmem>>, vector<1x32xf32>
      %92 = vector.shape_cast %91 : vector<1x32xf32> to vector<1x1x32xf32>
      %93 = vector.broadcast %92 : vector<1x1x32xf32> to vector<16x16x32xf32>
      %94 = arith.mulf %90, %93 : vector<16x16x32xf32>
      %c0_112 = arith.constant 0 : index
      %c0_113 = arith.constant 0 : index
      %95 = vector.load %arg5[%c0_112, %c0_113] : memref<1x32xf32, #tpu.memory_space<vmem>>, vector<1x32xf32>
      %96 = vector.shape_cast %95 : vector<1x32xf32> to vector<1x1x32xf32>
      %97 = vector.broadcast %96 : vector<1x1x32xf32> to vector<16x16x32xf32>
      %98 = arith.addf %94, %97 : vector<16x16x32xf32>
      %cst_114 = arith.constant 0.000000e+00 : f32
      %99 = vector.broadcast %cst_114 : f32 to vector<16x16x32xf32>
      %100 = arith.maximumf %98, %99 : vector<16x16x32xf32>
      %101 = arith.truncf %100 : vector<16x16x32xf32> to vector<16x16x32xbf16>
      %c2_115 = arith.constant 2 : index
      %c2_116 = arith.constant 2 : index
      %c0_117 = arith.constant 0 : index
      %102 = vector.load %arg9[%c2_115, %c2_116, %c0_117] : memref<20x20x32xbf16, #tpu.memory_space<vmem>>, vector<16x16x32xbf16>
      tpu.vector_store %arg9[%c2_115, %c2_116, %c0_117], %101 {strides = array<i32>} : memref<20x20x32xbf16, #tpu.memory_space<vmem>>, vector<16x16x32xbf16>,
    } else {
    }
    %c0 = arith.constant 0 : index
    %c0_1 = arith.constant 0 : index
    %c0_2 = arith.constant 0 : index
    %3 = vector.load %arg9[%c0, %c0_1, %c0_2] : memref<20x20x32xbf16, #tpu.memory_space<vmem>>, vector<16x16x32xbf16>
    %4 = vector.shape_cast %3 : vector<16x16x32xbf16> to vector<256x32xbf16>
    %c0_3 = arith.constant 0 : index
    %c0_4 = arith.constant 0 : index
    %c0_5 = arith.constant 0 : index
    %5 = vector.load %arg3[%c0_3, %c0_4, %c0_5] : memref<9x32x32xbf16, #tpu.memory_space<vmem>>, vector<1x32x32xbf16>
    %6 = vector.shape_cast %5 : vector<1x32x32xbf16> to vector<32x32xbf16>
    %cst = arith.constant dense<0.000000e+00> : vector<256x32xf32>
    %7 = tpu.matmul %4, %6, %cst {dimension_numbers = #tpu.dot_dimension_numbers<[1], [0], [0], [1], [0, 0, 1, 1], [], []>} : vector<256x32xbf16>, vector<32x32xbf16>, vector<256x32xf32> -> vector<256x32xf32>
    %c0_6 = arith.constant 0 : index
    %c0_7 = arith.constant 0 : index
    %8 = vector.load %arg10[%c0_6, %c0_7] : memref<256x32xf32, #tpu.memory_space<vmem>>, vector<256x32xf32>
    tpu.vector_store %arg10[%c0_6, %c0_7], %7 {strides = array<i32>} : memref<256x32xf32, #tpu.memory_space<vmem>>, vector<256x32xf32>,
    %c0_8 = arith.constant 0 : index
    %c2 = arith.constant 2 : index
    %c0_9 = arith.constant 0 : index
    %9 = vector.load %arg9[%c0_8, %c2, %c0_9] : memref<20x20x32xbf16, #tpu.memory_space<vmem>>, vector<16x16x32xbf16>
    %10 = vector.shape_cast %9 : vector<16x16x32xbf16> to vector<256x32xbf16>
    %c1 = arith.constant 1 : index
    %c0_10 = arith.constant 0 : index
    %c0_11 = arith.constant 0 : index
    %11 = vector.load %arg3[%c1, %c0_10, %c0_11] : memref<9x32x32xbf16, #tpu.memory_space<vmem>>, vector<1x32x32xbf16>
    %12 = vector.shape_cast %11 : vector<1x32x32xbf16> to vector<32x32xbf16>
    %cst_12 = arith.constant dense<0.000000e+00> : vector<256x32xf32>
    %13 = tpu.matmul %10, %12, %cst_12 {dimension_numbers = #tpu.dot_dimension_numbers<[1], [0], [0], [1], [0, 0, 1, 1], [], []>} : vector<256x32xbf16>, vector<32x32xbf16>, vector<256x32xf32> -> vector<256x32xf32>
    %c0_13 = arith.constant 0 : index
    %c0_14 = arith.constant 0 : index
    %14 = vector.load %arg10[%c0_13, %c0_14] : memref<256x32xf32, #tpu.memory_space<vmem>>, vector<256x32xf32>
    %15 = arith.addf %14, %13 : vector<256x32xf32>
    %c0_15 = arith.constant 0 : index
    %c0_16 = arith.constant 0 : index
    %16 = vector.load %arg10[%c0_15, %c0_16] : memref<256x32xf32, #tpu.memory_space<vmem>>, vector<256x32xf32>
    tpu.vector_store %arg10[%c0_15, %c0_16], %15 {strides = array<i32>} : memref<256x32xf32, #tpu.memory_space<vmem>>, vector<256x32xf32>,
    %c0_17 = arith.constant 0 : index
    %c4 = arith.constant 4 : index
    %c0_18 = arith.constant 0 : index
    %17 = vector.load %arg9[%c0_17, %c4, %c0_18] : memref<20x20x32xbf16, #tpu.memory_space<vmem>>, vector<16x16x32xbf16>
    %18 = vector.shape_cast %17 : vector<16x16x32xbf16> to vector<256x32xbf16>
    %c2_19 = arith.constant 2 : index
    %c0_20 = arith.constant 0 : index
    %c0_21 = arith.constant 0 : index
    %19 = vector.load %arg3[%c2_19, %c0_20, %c0_21] : memref<9x32x32xbf16, #tpu.memory_space<vmem>>, vector<1x32x32xbf16>
    %20 = vector.shape_cast %19 : vector<1x32x32xbf16> to vector<32x32xbf16>
    %cst_22 = arith.constant dense<0.000000e+00> : vector<256x32xf32>
    %21 = tpu.matmul %18, %20, %cst_22 {dimension_numbers = #tpu.dot_dimension_numbers<[1], [0], [0], [1], [0, 0, 1, 1], [], []>} : vector<256x32xbf16>, vector<32x32xbf16>, vector<256x32xf32> -> vector<256x32xf32>
    %c0_23 = arith.constant 0 : index
    %c0_24 = arith.constant 0 : index
    %22 = vector.load %arg10[%c0_23, %c0_24] : memref<256x32xf32, #tpu.memory_space<vmem>>, vector<256x32xf32>
    %23 = arith.addf %22, %21 : vector<256x32xf32>
    %c0_25 = arith.constant 0 : index
    %c0_26 = arith.constant 0 : index
    %24 = vector.load %arg10[%c0_25, %c0_26] : memref<256x32xf32, #tpu.memory_space<vmem>>, vector<256x32xf32>
    tpu.vector_store %arg10[%c0_25, %c0_26], %23 {strides = array<i32>} : memref<256x32xf32, #tpu.memory_space<vmem>>, vector<256x32xf32>,
    %c2_27 = arith.constant 2 : index
    %c0_28 = arith.constant 0 : index
    %c0_29 = arith.constant 0 : index
    %25 = vector.load %arg9[%c2_27, %c0_28, %c0_29] : memref<20x20x32xbf16, #tpu.memory_space<vmem>>, vector<16x16x32xbf16>
    %26 = vector.shape_cast %25 : vector<16x16x32xbf16> to vector<256x32xbf16>
    %c3 = arith.constant 3 : index
    %c0_30 = arith.constant 0 : index
    %c0_31 = arith.constant 0 : index
    %27 = vector.load %arg3[%c3, %c0_30, %c0_31] : memref<9x32x32xbf16, #tpu.memory_space<vmem>>, vector<1x32x32xbf16>
    %28 = vector.shape_cast %27 : vector<1x32x32xbf16> to vector<32x32xbf16>
    %cst_32 = arith.constant dense<0.000000e+00> : vector<256x32xf32>
    %29 = tpu.matmul %26, %28, %cst_32 {dimension_numbers = #tpu.dot_dimension_numbers<[1], [0], [0], [1], [0, 0, 1, 1], [], []>} : vector<256x32xbf16>, vector<32x32xbf16>, vector<256x32xf32> -> vector<256x32xf32>
    %c0_33 = arith.constant 0 : index
    %c0_34 = arith.constant 0 : index
    %30 = vector.load %arg10[%c0_33, %c0_34] : memref<256x32xf32, #tpu.memory_space<vmem>>, vector<256x32xf32>
    %31 = arith.addf %30, %29 : vector<256x32xf32>
    %c0_35 = arith.constant 0 : index
    %c0_36 = arith.constant 0 : index
    %32 = vector.load %arg10[%c0_35, %c0_36] : memref<256x32xf32, #tpu.memory_space<vmem>>, vector<256x32xf32>
    tpu.vector_store %arg10[%c0_35, %c0_36], %31 {strides = array<i32>} : memref<256x32xf32, #tpu.memory_space<vmem>>, vector<256x32xf32>,
    %c2_37 = arith.constant 2 : index
    %c2_38 = arith.constant 2 : index
    %c0_39 = arith.constant 0 : index
    %33 = vector.load %arg9[%c2_37, %c2_38, %c0_39] : memref<20x20x32xbf16, #tpu.memory_space<vmem>>, vector<16x16x32xbf16>
    %34 = vector.shape_cast %33 : vector<16x16x32xbf16> to vector<256x32xbf16>
    %c4_40 = arith.constant 4 : index
    %c0_41 = arith.constant 0 : index
    %c0_42 = arith.constant 0 : index
    %35 = vector.load %arg3[%c4_40, %c0_41, %c0_42] : memref<9x32x32xbf16, #tpu.memory_space<vmem>>, vector<1x32x32xbf16>
    %36 = vector.shape_cast %35 : vector<1x32x32xbf16> to vector<32x32xbf16>
    %cst_43 = arith.constant dense<0.000000e+00> : vector<256x32xf32>
    %37 = tpu.matmul %34, %36, %cst_43 {dimension_numbers = #tpu.dot_dimension_numbers<[1], [0], [0], [1], [0, 0, 1, 1], [], []>} : vector<256x32xbf16>, vector<32x32xbf16>, vector<256x32xf32> -> vector<256x32xf32>
    %c0_44 = arith.constant 0 : index
    %c0_45 = arith.constant 0 : index
    %38 = vector.load %arg10[%c0_44, %c0_45] : memref<256x32xf32, #tpu.memory_space<vmem>>, vector<256x32xf32>
    %39 = arith.addf %38, %37 : vector<256x32xf32>
    %c0_46 = arith.constant 0 : index
    %c0_47 = arith.constant 0 : index
    %40 = vector.load %arg10[%c0_46, %c0_47] : memref<256x32xf32, #tpu.memory_space<vmem>>, vector<256x32xf32>
    tpu.vector_store %arg10[%c0_46, %c0_47], %39 {strides = array<i32>} : memref<256x32xf32, #tpu.memory_space<vmem>>, vector<256x32xf32>,
    %c2_48 = arith.constant 2 : index
    %c4_49 = arith.constant 4 : index
    %c0_50 = arith.constant 0 : index
    %41 = vector.load %arg9[%c2_48, %c4_49, %c0_50] : memref<20x20x32xbf16, #tpu.memory_space<vmem>>, vector<16x16x32xbf16>
    %42 = vector.shape_cast %41 : vector<16x16x32xbf16> to vector<256x32xbf16>
    %c5 = arith.constant 5 : index
    %c0_51 = arith.constant 0 : index
    %c0_52 = arith.constant 0 : index
    %43 = vector.load %arg3[%c5, %c0_51, %c0_52] : memref<9x32x32xbf16, #tpu.memory_space<vmem>>, vector<1x32x32xbf16>
    %44 = vector.shape_cast %43 : vector<1x32x32xbf16> to vector<32x32xbf16>
    %cst_53 = arith.constant dense<0.000000e+00> : vector<256x32xf32>
    %45 = tpu.matmul %42, %44, %cst_53 {dimension_numbers = #tpu.dot_dimension_numbers<[1], [0], [0], [1], [0, 0, 1, 1], [], []>} : vector<256x32xbf16>, vector<32x32xbf16>, vector<256x32xf32> -> vector<256x32xf32>
    %c0_54 = arith.constant 0 : index
    %c0_55 = arith.constant 0 : index
    %46 = vector.load %arg10[%c0_54, %c0_55] : memref<256x32xf32, #tpu.memory_space<vmem>>, vector<256x32xf32>
    %47 = arith.addf %46, %45 : vector<256x32xf32>
    %c0_56 = arith.constant 0 : index
    %c0_57 = arith.constant 0 : index
    %48 = vector.load %arg10[%c0_56, %c0_57] : memref<256x32xf32, #tpu.memory_space<vmem>>, vector<256x32xf32>
    tpu.vector_store %arg10[%c0_56, %c0_57], %47 {strides = array<i32>} : memref<256x32xf32, #tpu.memory_space<vmem>>, vector<256x32xf32>,
    %c4_58 = arith.constant 4 : index
    %c0_59 = arith.constant 0 : index
    %c0_60 = arith.constant 0 : index
    %49 = vector.load %arg9[%c4_58, %c0_59, %c0_60] : memref<20x20x32xbf16, #tpu.memory_space<vmem>>, vector<16x16x32xbf16>
    %50 = vector.shape_cast %49 : vector<16x16x32xbf16> to vector<256x32xbf16>
    %c6 = arith.constant 6 : index
    %c0_61 = arith.constant 0 : index
    %c0_62 = arith.constant 0 : index
    %51 = vector.load %arg3[%c6, %c0_61, %c0_62] : memref<9x32x32xbf16, #tpu.memory_space<vmem>>, vector<1x32x32xbf16>
    %52 = vector.shape_cast %51 : vector<1x32x32xbf16> to vector<32x32xbf16>
    %cst_63 = arith.constant dense<0.000000e+00> : vector<256x32xf32>
    %53 = tpu.matmul %50, %52, %cst_63 {dimension_numbers = #tpu.dot_dimension_numbers<[1], [0], [0], [1], [0, 0, 1, 1], [], []>} : vector<256x32xbf16>, vector<32x32xbf16>, vector<256x32xf32> -> vector<256x32xf32>
    %c0_64 = arith.constant 0 : index
    %c0_65 = arith.constant 0 : index
    %54 = vector.load %arg10[%c0_64, %c0_65] : memref<256x32xf32, #tpu.memory_space<vmem>>, vector<256x32xf32>
    %55 = arith.addf %54, %53 : vector<256x32xf32>
    %c0_66 = arith.constant 0 : index
    %c0_67 = arith.constant 0 : index
    %56 = vector.load %arg10[%c0_66, %c0_67] : memref<256x32xf32, #tpu.memory_space<vmem>>, vector<256x32xf32>
    tpu.vector_store %arg10[%c0_66, %c0_67], %55 {strides = array<i32>} : memref<256x32xf32, #tpu.memory_space<vmem>>, vector<256x32xf32>,
    %c4_68 = arith.constant 4 : index
    %c2_69 = arith.constant 2 : index
    %c0_70 = arith.constant 0 : index
    %57 = vector.load %arg9[%c4_68, %c2_69, %c0_70] : memref<20x20x32xbf16, #tpu.memory_space<vmem>>, vector<16x16x32xbf16>
    %58 = vector.shape_cast %57 : vector<16x16x32xbf16> to vector<256x32xbf16>
    %c7 = arith.constant 7 : index
    %c0_71 = arith.constant 0 : index
    %c0_72 = arith.constant 0 : index
    %59 = vector.load %arg3[%c7, %c0_71, %c0_72] : memref<9x32x32xbf16, #tpu.memory_space<vmem>>, vector<1x32x32xbf16>
    %60 = vector.shape_cast %59 : vector<1x32x32xbf16> to vector<32x32xbf16>
    %cst_73 = arith.constant dense<0.000000e+00> : vector<256x32xf32>
    %61 = tpu.matmul %58, %60, %cst_73 {dimension_numbers = #tpu.dot_dimension_numbers<[1], [0], [0], [1], [0, 0, 1, 1], [], []>} : vector<256x32xbf16>, vector<32x32xbf16>, vector<256x32xf32> -> vector<256x32xf32>
    %c0_74 = arith.constant 0 : index
    %c0_75 = arith.constant 0 : index
    %62 = vector.load %arg10[%c0_74, %c0_75] : memref<256x32xf32, #tpu.memory_space<vmem>>, vector<256x32xf32>
    %63 = arith.addf %62, %61 : vector<256x32xf32>
    %c0_76 = arith.constant 0 : index
    %c0_77 = arith.constant 0 : index
    %64 = vector.load %arg10[%c0_76, %c0_77] : memref<256x32xf32, #tpu.memory_space<vmem>>, vector<256x32xf32>
    tpu.vector_store %arg10[%c0_76, %c0_77], %63 {strides = array<i32>} : memref<256x32xf32, #tpu.memory_space<vmem>>, vector<256x32xf32>,
    %c4_78 = arith.constant 4 : index
    %c4_79 = arith.constant 4 : index
    %c0_80 = arith.constant 0 : index
    %65 = vector.load %arg9[%c4_78, %c4_79, %c0_80] : memref<20x20x32xbf16, #tpu.memory_space<vmem>>, vector<16x16x32xbf16>
    %66 = vector.shape_cast %65 : vector<16x16x32xbf16> to vector<256x32xbf16>
    %c8 = arith.constant 8 : index
    %c0_81 = arith.constant 0 : index
    %c0_82 = arith.constant 0 : index
    %67 = vector.load %arg3[%c8, %c0_81, %c0_82] : memref<9x32x32xbf16, #tpu.memory_space<vmem>>, vector<1x32x32xbf16>
    %68 = vector.shape_cast %67 : vector<1x32x32xbf16> to vector<32x32xbf16>
    %cst_83 = arith.constant dense<0.000000e+00> : vector<256x32xf32>
    %69 = tpu.matmul %66, %68, %cst_83 {dimension_numbers = #tpu.dot_dimension_numbers<[1], [0], [0], [1], [0, 0, 1, 1], [], []>} : vector<256x32xbf16>, vector<32x32xbf16>, vector<256x32xf32> -> vector<256x32xf32>
    %c0_84 = arith.constant 0 : index
    %c0_85 = arith.constant 0 : index
    %70 = vector.load %arg10[%c0_84, %c0_85] : memref<256x32xf32, #tpu.memory_space<vmem>>, vector<256x32xf32>
    %71 = arith.addf %70, %69 : vector<256x32xf32>
    %c0_86 = arith.constant 0 : index
    %c0_87 = arith.constant 0 : index
    %72 = vector.load %arg10[%c0_86, %c0_87] : memref<256x32xf32, #tpu.memory_space<vmem>>, vector<256x32xf32>
    tpu.vector_store %arg10[%c0_86, %c0_87], %71 {strides = array<i32>} : memref<256x32xf32, #tpu.memory_space<vmem>>, vector<256x32xf32>,
    %c0_88 = arith.constant 0 : index
    %c0_89 = arith.constant 0 : index
    %73 = vector.load %arg10[%c0_88, %c0_89] : memref<256x32xf32, #tpu.memory_space<vmem>>, vector<256x32xf32>
    %74 = vector.shape_cast %73 : vector<256x32xf32> to vector<1x16x16x32xf32>
    %75 = arith.truncf %74 : vector<1x16x16x32xf32> to vector<1x16x16x32xbf16>
    %c0_90 = arith.constant 0 : index
    %c0_91 = arith.constant 0 : index
    %c0_92 = arith.constant 0 : index
    %c0_93 = arith.constant 0 : index
    %76 = vector.load %arg6[%c0_90, %c0_91, %c0_92, %c0_93] : memref<1x16x16x32xbf16, #tpu.memory_space<vmem>>, vector<1x16x16x32xbf16>
    tpu.vector_store %arg6[%c0_90, %c0_91, %c0_92, %c0_93], %75 {strides = array<i32>} : memref<1x16x16x32xbf16, #tpu.memory_space<vmem>>, vector<1x16x16x32xbf16>,
    %cst_94 = arith.constant dense<0.000000e+00> : vector<32xf32>
    %77 = vector.multi_reduction <add>, %73, %cst_94 [0] : vector<256x32xf32> to vector<32xf32>
    %78 = vector.shape_cast %77 : vector<32xf32> to vector<1x32xf32>
    %79 = vector.shape_cast %78 : vector<1x32xf32> to vector<1x1x32xf32>
    %c0_95 = arith.constant 0 : index
    %c0_96 = arith.constant 0 : index
    %c0_97 = arith.constant 0 : index
    %80 = vector.load %arg7[%c0_95, %c0_96, %c0_97] : memref<1x1x32xf32, #tpu.memory_space<vmem>>, vector<1x1x32xf32>
    tpu.vector_store %arg7[%c0_95, %c0_96, %c0_97], %79 {strides = array<i32>} : memref<1x1x32xf32, #tpu.memory_space<vmem>>, vector<1x1x32xf32>,
    %81 = arith.mulf %73, %73 : vector<256x32xf32>
    %cst_98 = arith.constant dense<0.000000e+00> : vector<32xf32>
    %82 = vector.multi_reduction <add>, %81, %cst_98 [0] : vector<256x32xf32> to vector<32xf32>
    %83 = vector.shape_cast %82 : vector<32xf32> to vector<1x32xf32>
    %84 = vector.shape_cast %83 : vector<1x32xf32> to vector<1x1x32xf32>
    %c0_99 = arith.constant 0 : index
    %c0_100 = arith.constant 0 : index
    %c0_101 = arith.constant 0 : index
    %85 = vector.load %arg8[%c0_99, %c0_100, %c0_101] : memref<1x1x32xf32, #tpu.memory_space<vmem>>, vector<1x1x32xf32>
    tpu.vector_store %arg8[%c0_99, %c0_100, %c0_101], %84 {strides = array<i32>} : memref<1x1x32xf32, #tpu.memory_space<vmem>>, vector<1x1x32xf32>,
    return
  }
  func.func @transform_0(%arg0: i32, %arg1: i32) -> (i32, i32, i32, i32) {
    %c0_i32 = arith.constant 0 : i32
    %c0_i32_0 = arith.constant 0 : i32
    %c0_i32_1 = arith.constant 0 : i32
    %c0_i32_2 = arith.constant 0 : i32
    return %arg0, %c0_i32, %c0_i32_0, %c0_i32_1 : i32, i32, i32, i32
  }
  func.func @transform_1(%arg0: i32, %arg1: i32) -> (i32, i32, i32) {
    %c0_i32 = arith.constant 0 : i32
    %c0_i32_0 = arith.constant 0 : i32
    %c0_i32_1 = arith.constant 0 : i32
    return %c0_i32, %c0_i32_0, %arg1 : i32, i32, i32
  }
  func.func @transform_2(%arg0: i32, %arg1: i32) -> (i32, i32) {
    %c0_i32 = arith.constant 0 : i32
    %c0_i32_0 = arith.constant 0 : i32
    %c0_i32_1 = arith.constant 0 : i32
    return %c0_i32, %c0_i32_0 : i32, i32
  }
  func.func @transform_3(%arg0: i32, %arg1: i32) -> (i32, i32) {
    %c0_i32 = arith.constant 0 : i32
    %c0_i32_0 = arith.constant 0 : i32
    %c0_i32_1 = arith.constant 0 : i32
    return %c0_i32, %c0_i32_0 : i32, i32
  }
  func.func @transform_4(%arg0: i32, %arg1: i32) -> (i32, i32, i32, i32) {
    %c0_i32 = arith.constant 0 : i32
    %c0_i32_0 = arith.constant 0 : i32
    %c0_i32_1 = arith.constant 0 : i32
    return %arg0, %c0_i32, %c0_i32_0, %arg1 : i32, i32, i32, i32
  }
  func.func @transform_5(%arg0: i32, %arg1: i32) -> (i32, i32, i32) {
    %c0_i32 = arith.constant 0 : i32
    %c0_i32_0 = arith.constant 0 : i32
    return %arg0, %c0_i32, %arg1 : i32, i32, i32
  }
  func.func @transform_6(%arg0: i32, %arg1: i32) -> (i32, i32, i32) {
    %c0_i32 = arith.constant 0 : i32
    %c0_i32_0 = arith.constant 0 : i32
    return %arg0, %c0_i32, %arg1 : i32, i32, i32
  }
}

module attributes {stable_mosaic.version = 11 : i64} {
  func.func @_bn_add_relu_kernel(%arg0: i32, %arg1: memref<256x128xbf16, #tpu.memory_space<vmem>>, %arg2: memref<1x128xf32, #tpu.memory_space<vmem>>, %arg3: memref<1x128xf32, #tpu.memory_space<vmem>>, %arg4: memref<256x128xbf16, #tpu.memory_space<vmem>>, %arg5: memref<256x128xf32, #tpu.memory_space<vmem>>) attributes {dimension_semantics = [#tpu.dimension_semantics<parallel>], iteration_bounds = array<i64: 2>, scalar_prefetch = 0 : i64, scratch_operands = 0 : i64, tpu.core_type = #tpu.core_type<tc>, window_params = [{transform_indices = @transform_0, window_bounds = array<i64: 256, 128>}, {pipeline_mode = #tpu.pipeline_mode<synchronous>, transform_indices = @transform_1, window_bounds = array<i64: 1, 128>}, {pipeline_mode = #tpu.pipeline_mode<synchronous>, transform_indices = @transform_2, window_bounds = array<i64: 1, 128>}, {transform_indices = @transform_3, window_bounds = array<i64: 256, 128>}, {transform_indices = @transform_4, window_bounds = array<i64: 256, 128>}]} {
    %c0 = arith.constant 0 : index
    %c0_0 = arith.constant 0 : index
    %0 = vector.load %arg1[%c0, %c0_0] : memref<256x128xbf16, #tpu.memory_space<vmem>>, vector<256x128xbf16>
    %1 = arith.extf %0 : vector<256x128xbf16> to vector<256x128xf32>
    %c0_1 = arith.constant 0 : index
    %c0_2 = arith.constant 0 : index
    %2 = vector.load %arg2[%c0_1, %c0_2] : memref<1x128xf32, #tpu.memory_space<vmem>>, vector<1x128xf32>
    %3 = vector.broadcast %2 : vector<1x128xf32> to vector<256x128xf32>
    %4 = arith.mulf %1, %3 : vector<256x128xf32>
    %c0_3 = arith.constant 0 : index
    %c0_4 = arith.constant 0 : index
    %5 = vector.load %arg3[%c0_3, %c0_4] : memref<1x128xf32, #tpu.memory_space<vmem>>, vector<1x128xf32>
    %6 = vector.broadcast %5 : vector<1x128xf32> to vector<256x128xf32>
    %7 = arith.addf %4, %6 : vector<256x128xf32>
    %c0_5 = arith.constant 0 : index
    %c0_6 = arith.constant 0 : index
    %8 = vector.load %arg4[%c0_5, %c0_6] : memref<256x128xbf16, #tpu.memory_space<vmem>>, vector<256x128xbf16>
    %9 = arith.extf %8 : vector<256x128xbf16> to vector<256x128xf32>
    %10 = arith.addf %7, %9 : vector<256x128xf32>
    %cst = arith.constant 0.000000e+00 : f32
    %11 = vector.broadcast %cst : f32 to vector<256x128xf32>
    %12 = arith.maximumf %10, %11 : vector<256x128xf32>
    %c0_7 = arith.constant 0 : index
    %c0_8 = arith.constant 0 : index
    %13 = vector.load %arg5[%c0_7, %c0_8] : memref<256x128xf32, #tpu.memory_space<vmem>>, vector<256x128xf32>
    tpu.vector_store %arg5[%c0_7, %c0_8], %12 {strides = array<i32>} : memref<256x128xf32, #tpu.memory_space<vmem>>, vector<256x128xf32>,
    return
  }
  func.func @transform_0(%arg0: i32) -> (i32, i32) {
    %c0_i32 = arith.constant 0 : i32
    %c0_i32_0 = arith.constant 0 : i32
    return %arg0, %c0_i32 : i32, i32
  }
  func.func @transform_1(%arg0: i32) -> (i32, i32) {
    %c0_i32 = arith.constant 0 : i32
    %c0_i32_0 = arith.constant 0 : i32
    %c0_i32_1 = arith.constant 0 : i32
    return %c0_i32, %c0_i32_0 : i32, i32
  }
  func.func @transform_2(%arg0: i32) -> (i32, i32) {
    %c0_i32 = arith.constant 0 : i32
    %c0_i32_0 = arith.constant 0 : i32
    %c0_i32_1 = arith.constant 0 : i32
    return %c0_i32, %c0_i32_0 : i32, i32
  }
  func.func @transform_3(%arg0: i32) -> (i32, i32) {
    %c0_i32 = arith.constant 0 : i32
    %c0_i32_0 = arith.constant 0 : i32
    return %arg0, %c0_i32 : i32, i32
  }
  func.func @transform_4(%arg0: i32) -> (i32, i32) {
    %c0_i32 = arith.constant 0 : i32
    %c0_i32_0 = arith.constant 0 : i32
    return %arg0, %c0_i32 : i32, i32
  }
}

</mosaic_0001>

<llo_original>
// kernel: bottleneck_forward.7
$region0: #{bottleneck_forward.7}
  #allocation0 [shape = 'u32[]', space=smem, size = 0x4, offset = 0x4, fixed_abs, tag = 'smem constant byte address 0x4 - core index']
  #allocation1 [shape = 'u32[144,128]{1,0:T(1,128)}', space=vmem, size = 0x12000, scoped, tag = 'internal scratch']
  %s0 = inlined_call_operand.hbm [shape: bf16[512,128], index: 0, kind: input, shape index: {}]
  %s1 = inlined_call_operand.hbm [shape: f32[1,128], index: 1, kind: input, shape index: {}]
  %s2 = inlined_call_operand.hbm [shape: f32[1,128], index: 2, kind: input, shape index: {}]
  %s3 = inlined_call_operand.hbm [shape: bf16[512,128], index: 3, kind: input, shape index: {}]
  %s4 = inlined_call_operand.hbm [shape: f32[512,128], index: 4, kind: output, shape index: {}]
  %s5 = sld [smem:[#allocation0]]
  $region65: #{bottleneck_forward.7} parent=0
    _
  %s7 = ssub.s32 1, %s5
  %s8 = scalar_select 0, %s7, %s5
  $region1: #{bottleneck_forward.7} parent=0
    #allocation2 [shape = 'u8[131072]{0}', space=vmem, size = 0x20000, scoped, tag = 'input window, operand 0']
    #allocation3 [shape = 's32[2]{0}', space=sflag, size = 0x8, scoped, tag = 'scoped memory for bottleneck_forward.7']
    #allocation4 [shape = 's32[2]{0}', space=sflag, size = 0x8, scoped, tag = 'scoped memory for bottleneck_forward.7']
    #allocation5 [shape = 'u8[512]{0}', space=vmem, size = 0x400, scoped, tag = 'input window, operand 1, single buffered']
    #allocation6 [shape = 's32[1]{0}', space=sflag, size = 0x4, scoped, tag = 'scoped memory for bottleneck_forward.7']
    #allocation7 [shape = 'u8[512]{0}', space=vmem, size = 0x400, scoped, tag = 'input window, operand 2, single buffered']
    #allocation8 [shape = 'u8[131072]{0}', space=vmem, size = 0x20000, scoped, tag = 'input window, operand 3']
    #allocation9 [shape = 's32[2]{0}', space=sflag, size = 0x8, scoped, tag = 'scoped memory for bottleneck_forward.7']
    #allocation10 [shape = 'u8[262144]{0}', space=vmem, size = 0x40000, scoped, tag = 'output window, operand 0']
    %9 = vsyncpa [#allocation3], 0
    %s10 = scalar_lea.sflag [#allocation3], 1
    %11 = vsyncpa %s10, 0
    %12 = vsyncpa [#allocation6], 0
    %13 = vsyncpa [#allocation9], 0
    %s14 = scalar_lea.sflag [#allocation9], 1
    %15 = vsyncpa %s14, 0
    %16 = vsyncpa [#allocation4], 0
    %s17 = scalar_lea.sflag [#allocation4], 1
    %18 = vsyncpa %s17, 0
    loop: start=0, step=1, limit=4
    $region2: #{bottleneck_forward.7} parent=1 // loop_pre_header
      _
    $region3: #{bottleneck_forward.7} parent=1 // loop_header
      %s20 = sphi 0, %s24
      %p21 = scmp.ge.s32.totalorder %s20, 4
      %s30 = sphi 0, %s32
      %s33 = sphi 0, %s30
      %s34 = sphi 0, %s33
      %s50 = sphi 0, %s34
      %s54 = sphi 0, %s54
      %s56 = sphi 0, %s54
      %s57 = sphi 0, %s56
      %s71 = sphi 0, %s57
      %s75 = sphi 0, %s75
      %s77 = sphi 0, %s75
      %s78 = sphi 0, %s77
      %s92 = sphi 0, %s78
      %s98 = sphi 0, %s100
      %s101 = sphi 0, %s98
      %s102 = sphi 0, %s101
      %s118 = sphi 0, %s102
      %s124 = sphi 0, %s126
      %s127 = sphi 0, %s124
      %s128 = sphi 0, %s127
      %s144 = sphi 0, %s128
    $region4: #{bottleneck_forward.7} parent=1 // loop_header_branch
      %23 = sbr.rel (%p21) target = $region8
    $region5: #{bottleneck_forward.7} parent=1 // loop_body
      %s25 = ssub.s32 %s20, 1
      %s26 = ssub.s32 %s20, 2
      %s27 = sadd.s32 %s20, 1
      %s28 = ssub.s32 %s20, %s27
      %p29 = scmp.eq.s32.totalorder %s28, 0
      %s31 = sadd.s32 %s30, 1
      %s32 = scalar_select %p29, %s30, %s31
      %p35 = pneg %p29
      %p36 = scmp.eq.s32.totalorder %s20, 1
      %p37 = por %p35, %p36
      %p38 = scmp.ne.s32.totalorder %s30, %s33
      %p39 = scmp.eq.s32.totalorder %s20, 0
      %p40 = por %p38, %p39
      %p41 = scmp.ne.s32.totalorder %s30, %s33
      %p42 = scmp.eq.s32.totalorder %s25, 1
      %p43 = por %p41, %p42
      %p44 = scmp.ne.s32.totalorder %s33, %s34
      %p45 = scmp.eq.s32.totalorder %s25, 0
      %p46 = por %p44, %p45
      %p47 = scmp.ne.s32.totalorder %s33, %s34
      %p48 = scmp.eq.s32.totalorder %s26, 1
      %p49 = por %p47, %p48
      %p51 = scmp.ne.s32.totalorder %s34, %s50
      %p52 = scmp.eq.s32.totalorder %s26, 0
      %p53 = por %p51, %p52
      %s55 = sadd.s32 %s54, 1
      %p58 = scmp.eq.s32.totalorder %s20, 1
      %p59 = scmp.ne.s32.totalorder %s54, %s56
      %p60 = scmp.eq.s32.totalorder %s20, 0
      %p61 = por %p59, %p60
      %p62 = scmp.ne.s32.totalorder %s54, %s56
      %p63 = scmp.eq.s32.totalorder %s25, 1
      %p64 = por %p62, %p63
      %p65 = scmp.ne.s32.totalorder %s56, %s57
      %p66 = scmp.eq.s32.totalorder %s25, 0
      %p67 = por %p65, %p66
      %p68 = scmp.ne.s32.totalorder %s56, %s57
      %p69 = scmp.eq.s32.totalorder %s26, 1
      %p70 = por %p68, %p69
      %p72 = scmp.ne.s32.totalorder %s57, %s71
      %p73 = scmp.eq.s32.totalorder %s26, 0
      %p74 = por %p72, %p73
      %s76 = sadd.s32 %s75, 1
      %p79 = scmp.eq.s32.totalorder %s20, 1
      %p80 = scmp.ne.s32.totalorder %s75, %s77
      %p81 = scmp.eq.s32.totalorder %s20, 0
      %p82 = por %p80, %p81
      %p83 = scmp.ne.s32.totalorder %s75, %s77
      %p84 = scmp.eq.s32.totalorder %s25, 1
      %p85 = por %p83, %p84
      %p86 = scmp.ne.s32.totalorder %s77, %s78
      %p87 = scmp.eq.s32.totalorder %s25, 0
      %p88 = por %p86, %p87
      %p89 = scmp.ne.s32.totalorder %s77, %s78
      %p90 = scmp.eq.s32.totalorder %s26, 1
      %p91 = por %p89, %p90
      %p93 = scmp.ne.s32.totalorder %s78, %s92
      %p94 = scmp.eq.s32.totalorder %s26, 0
      %p95 = por %p93, %p94
      %s96 = ssub.s32 %s20, %s27
      %p97 = scmp.eq.s32.totalorder %s96, 0
      %s99 = sadd.s32 %s98, 1
      %s100 = scalar_select %p97, %s98, %s99
      %p103 = pneg %p97
      %p104 = scmp.eq.s32.totalorder %s20, 1
      %p105 = por %p103, %p104
      %p106 = scmp.ne.s32.totalorder %s98, %s101
      %p107 = scmp.eq.s32.totalorder %s20, 0
      %p108 = por %p106, %p107
      %p109 = scmp.ne.s32.totalorder %s98, %s101
      %p110 = scmp.eq.s32.totalorder %s25, 1
      %p111 = por %p109, %p110
      %p112 = scmp.ne.s32.totalorder %s101, %s102
      %p113 = scmp.eq.s32.totalorder %s25, 0
      %p114 = por %p112, %p113
      %p115 = scmp.ne.s32.totalorder %s101, %s102
      %p116 = scmp.eq.s32.totalorder %s26, 1
      %p117 = por %p115, %p116
      %p119 = scmp.ne.s32.totalorder %s102, %s118
      %p120 = scmp.eq.s32.totalorder %s26, 0
      %p121 = por %p119, %p120
      %s122 = ssub.s32 %s20, %s27
      %p123 = scmp.eq.s32.totalorder %s122, 0
      %s125 = sadd.s32 %s124, 1
      %s126 = scalar_select %p123, %s124, %s125
      %p129 = pneg %p123
      %p130 = scmp.eq.s32.totalorder %s20, 1
      %p131 = por %p129, %p130
      %p132 = scmp.ne.s32.totalorder %s124, %s127
      %p133 = scmp.eq.s32.totalorder %s20, 0
      %p134 = por %p132, %p133
      %p135 = scmp.ne.s32.totalorder %s124, %s127
      %p136 = scmp.eq.s32.totalorder %s25, 1
      %p137 = por %p135, %p136
      %p138 = scmp.ne.s32.totalorder %s127, %s128
      %p139 = scmp.eq.s32.totalorder %s25, 0
      %p140 = por %p138, %p139
      %p141 = scmp.ne.s32.totalorder %s127, %s128
      %p142 = scmp.eq.s32.totalorder %s26, 1
      %p143 = por %p141, %p142
      %p145 = scmp.ne.s32.totalorder %s128, %s144
      %p146 = scmp.eq.s32.totalorder %s26, 0
      %p147 = por %p145, %p146
      %p148 = scmp.le.s32.totalorder 1, %s20
      %p149 = scmp.lt.s32.totalorder %s20, 3
      %p150 = pnand %p148, %p149
      %p151 = pneg %p150
      // Predicated region
      $region9: #{bottleneck_forward.7} parent=5 // pred_check
        _
      $region10: #{bottleneck_forward.7} parent=5 // pred_check_branch
        %153 = sbr.rel (%p150) target = $region12
      $region11: #{bottleneck_forward.7} parent=5 // pred_region
        %s154 = ssub.s32 %s20, 1
        // Predicated region
        $region13: #{bottleneck_forward.7} parent=11 // pred_check
          %p155 = pneg %p67
        $region14: #{bottleneck_forward.7} parent=11 // pred_check_branch
          %157 = sbr.rel (%p155) target = $region16
        $region15: #{bottleneck_forward.7} parent=11 // pred_region
          %s159 = ssub.s32 16, 16
          %160 = vsyncadd [#allocation6], %s159
          %s162 = sshll.u32 [#allocation5], 4
          %s163 = int_to_ptr.vmem [resolvable:$true] %s162
          %165 = dma.hbm_to_vmem [thread:$0]  %s1, 16, %s163, [#allocation6]
        $region16: #{bottleneck_forward.7} parent=11 // pred_fallthru
          _
        // Predicated region
        $region17: #{bottleneck_forward.7} parent=11 // pred_check
          %p166 = pneg %p88
        $region18: #{bottleneck_forward.7} parent=11 // pred_check_branch
          %168 = sbr.rel (%p166) target = $region20
        $region19: #{bottleneck_forward.7} parent=11 // pred_region
          %s170 = ssub.s32 16, 16
          %171 = vsyncadd [#allocation6], %s170
          %s173 = sshll.u32 [#allocation7], 4
          %s174 = int_to_ptr.vmem [resolvable:$true] %s173
          %176 = dma.hbm_to_vmem [thread:$0]  %s2, 16, %s174, [#allocation6]
        $region20: #{bottleneck_forward.7} parent=11 // pred_fallthru
          _
      $region12: #{bottleneck_forward.7} parent=5 // pred_fallthru
        _
      %p177 = scmp.lt.s32.totalorder %s20, 2
      // Predicated region
      $region21: #{bottleneck_forward.7} parent=5 // pred_check
        %p178 = pneg %p177
      $region22: #{bottleneck_forward.7} parent=5 // pred_check_branch
        %180 = sbr.rel (%p178) target = $region24
      $region23: #{bottleneck_forward.7} parent=5 // pred_region
        // Predicated region
        $region25: #{bottleneck_forward.7} parent=23 // pred_check
          %p181 = pneg %p40
        $region26: #{bottleneck_forward.7} parent=23 // pred_check_branch
          %183 = sbr.rel (%p181) target = $region28
        $region27: #{bottleneck_forward.7} parent=23 // pred_region
          %s184 = sand.u32 %s30, 1
          %s185 = scalar_lea.sflag [#allocation3], %s184
          %s186 = sand.u32 %s30, 1
          %s187 = smul.addr %s186, 128
          %s188 = scalar_lea.vmem [#allocation2], %s187
          %s189 = smul.u32 32, %s20
          %s191 = ssub.s32 2048, 2048
          %192 = vsyncadd %s185, %s191
          %s193 = smul.addr %s189, 64
          %s194 = scalar_lea.hbm %s0, %s193
          %s195 = sshll.u32 %s188, 4
          %s196 = int_to_ptr.vmem [resolvable:$true] %s195
          %201 = dma.hbm_to_vmem [thread:$0]  %s194, 2048, %s196, %s185, 64, 64, 4
        $region28: #{bottleneck_forward.7} parent=23 // pred_fallthru
          _
        // Predicated region
        $region29: #{bottleneck_forward.7} parent=23 // pred_check
          %p202 = pneg %p108
        $region30: #{bottleneck_forward.7} parent=23 // pred_check_branch
          %204 = sbr.rel (%p202) target = $region32
        $region31: #{bottleneck_forward.7} parent=23 // pred_region
          %s205 = sand.u32 %s98, 1
          %s206 = scalar_lea.sflag [#allocation9], %s205
          %s207 = sand.u32 %s98, 1
          %s208 = smul.addr %s207, 128
          %s209 = scalar_lea.vmem [#allocation8], %s208
          %s210 = smul.u32 32, %s20
          %s212 = ssub.s32 2048, 2048
          %213 = vsyncadd %s206, %s212
          %s214 = smul.addr %s210, 64
          %s215 = scalar_lea.hbm %s3, %s214
          %s216 = sshll.u32 %s209, 4
          %s217 = int_to_ptr.vmem [resolvable:$true] %s216
          %222 = dma.hbm_to_vmem [thread:$0]  %s215, 2048, %s217, %s206, 64, 64, 4
        $region32: #{bottleneck_forward.7} parent=23 // pred_fallthru
          _
      $region24: #{bottleneck_forward.7} parent=5 // pred_fallthru
        _
      %p223 = scmp.le.s32.totalorder 1, %s20
      %p224 = scmp.lt.s32.totalorder %s20, 3
      %p225 = pnand %p223, %p224
      %p226 = pneg %p225
      // Predicated region
      $region33: #{bottleneck_forward.7} parent=5 // pred_check
        _
      $region34: #{bottleneck_forward.7} parent=5 // pred_check_branch
        %228 = sbr.rel (%p225) target = $region36
      $region35: #{bottleneck_forward.7} parent=5 // pred_region
        %s229 = ssub.s32 %s20, 1
        %s230 = sand.u32 %s33, 1
        %s231 = scalar_lea.sflag [#allocation3], %s230
        %s232 = sand.u32 %s33, 1
        %s233 = smul.addr %s232, 128
        %s234 = scalar_lea.vmem [#allocation2], %s233
        // Predicated region
        $region37: #{bottleneck_forward.7} parent=35 // pred_check
          %p235 = pneg %p46
        $region38: #{bottleneck_forward.7} parent=35 // pred_check_branch
          %237 = sbr.rel (%p235) target = $region40
        $region39: #{bottleneck_forward.7} parent=35 // pred_region
          %238 = dma.done %s231, 2048
        $region40: #{bottleneck_forward.7} parent=35 // pred_fallthru
          _
        // Predicated region
        $region41: #{bottleneck_forward.7} parent=35 // pred_check
          %p239 = pneg %p67
        $region42: #{bottleneck_forward.7} parent=35 // pred_check_branch
          %241 = sbr.rel (%p239) target = $region44
        $region43: #{bottleneck_forward.7} parent=35 // pred_region
          %242 = dma.done [#allocation6], 16
        $region44: #{bottleneck_forward.7} parent=35 // pred_fallthru
          _
        // Predicated region
        $region45: #{bottleneck_forward.7} parent=35 // pred_check
          %p243 = pneg %p88
        $region46: #{bottleneck_forward.7} parent=35 // pred_check_branch
          %245 = sbr.rel (%p243) target = $region48
        $region47: #{bottleneck_forward.7} parent=35 // pred_region
          %246 = dma.done [#allocation6], 16
        $region48: #{bottleneck_forward.7} parent=35 // pred_fallthru
          _
        %s247 = sand.u32 %s101, 1
        %s248 = scalar_lea.sflag [#allocation9], %s247
        %s249 = sand.u32 %s101, 1
        %s250 = smul.addr %s249, 128
        %s251 = scalar_lea.vmem [#allocation8], %s250
        // Predicated region
        $region49: #{bottleneck_forward.7} parent=35 // pred_check
          %p252 = pneg %p114
        $region50: #{bottleneck_forward.7} parent=35 // pred_check_branch
          %254 = sbr.rel (%p252) target = $region52
        $region51: #{bottleneck_forward.7} parent=35 // pred_region
          %255 = dma.done %s248, 2048
        $region52: #{bottleneck_forward.7} parent=35 // pred_fallthru
          _
        %s256 = sand.u32 %s33, 1
        %s257 = scalar_lea.sflag [#allocation3], %s256
        %s258 = sand.u32 %s33, 1
        %s259 = smul.addr %s258, 128
        %s260 = scalar_lea.vmem [#allocation2], %s259
        %p261 = pneg %p46
        %p262 = pneg %p43
        %p263 = pneg %p67
        %p264 = pneg %p64
        %p265 = pneg %p88
        %p266 = pneg %p85
        %s267 = sand.u32 %s101, 1
        %s268 = scalar_lea.sflag [#allocation9], %s267
        %s269 = sand.u32 %s101, 1
        %s270 = smul.addr %s269, 128
        %s271 = scalar_lea.vmem [#allocation8], %s270
        %p272 = pneg %p114
        %p273 = pneg %p111
        %p274 = pneg %p140
        %p275 = pneg %p137
        %s276 = sand.u32 %s127, 1
        %s277 = scalar_lea.sflag [#allocation4], %s276
        %s278 = sand.u32 %s127, 1
        %s279 = smul.addr %s278, 256
        %s280 = scalar_lea.vmem [#allocation10], %s279
        %s281 = smul.u32 32, %s25
        %s282 = smul.u32 32, %s25
        %s283 = smul.u32 32, %s25
        %v284 = vld [vmem:[%s234] sm:$0xf]
        %v285 = vld [vmem:[%s234 + $0x4] sm:$0xf]
        %v286 = vld [vmem:[%s234 + $0x8] sm:$0xf]
        %v287 = vld [vmem:[%s234 + $0xc] sm:$0xf]
        %v288 = vld [vmem:[%s234 + $0x10] sm:$0xf]
        %v289 = vld [vmem:[%s234 + $0x14] sm:$0xf]
        %v290 = vld [vmem:[%s234 + $0x18] sm:$0xf]
        %v291 = vld [vmem:[%s234 + $0x1c] sm:$0xf]
        %v292 = vld [vmem:[%s234 + $0x20] sm:$0xf]
        %v293 = vld [vmem:[%s234 + $0x24] sm:$0xf]
        %v294 = vld [vmem:[%s234 + $0x28] sm:$0xf]
        %v295 = vld [vmem:[%s234 + $0x2c] sm:$0xf]
        %v296 = vld [vmem:[%s234 + $0x30] sm:$0xf]
        %v297 = vld [vmem:[%s234 + $0x34] sm:$0xf]
        %v298 = vld [vmem:[%s234 + $0x38] sm:$0xf]
        %v299 = vld [vmem:[%s234 + $0x3c] sm:$0xf]
        %v300 = vld [vmem:[%s234 + $0x40] sm:$0xf]
        %v301 = vld [vmem:[%s234 + $0x44] sm:$0xf]
        %v302 = vld [vmem:[%s234 + $0x48] sm:$0xf]
        %v303 = vld [vmem:[%s234 + $0x4c] sm:$0xf]
        %v304 = vld [vmem:[%s234 + $0x50] sm:$0xf]
        %v305 = vld [vmem:[%s234 + $0x54] sm:$0xf]
        %v306 = vld [vmem:[%s234 + $0x58] sm:$0xf]
        %v307 = vld [vmem:[%s234 + $0x5c] sm:$0xf]
        %v308 = vld [vmem:[%s234 + $0x60] sm:$0xf]
        %v309 = vld [vmem:[%s234 + $0x64] sm:$0xf]
        %v310 = vld [vmem:[%s234 + $0x68] sm:$0xf]
        %v311 = vld [vmem:[%s234 + $0x6c] sm:$0xf]
        %v312 = vld [vmem:[%s234 + $0x70] sm:$0xf]
        %v313 = vld [vmem:[%s234 + $0x74] sm:$0xf]
        %v314 = vld [vmem:[%s234 + $0x78] sm:$0xf]
        %v315 = vld [vmem:[%s234 + $0x7c] sm:$0xf]
        %v316 = vunpack.c.l.bf16 %v284
        %v317 = vunpack.c.l.bf16 %v285
        %v318 = vunpack.c.l.bf16 %v286
        %v319 = vunpack.c.l.bf16 %v287
        %v320 = vunpack.c.l.bf16 %v288
        %v321 = vunpack.c.l.bf16 %v289
        %v322 = vunpack.c.l.bf16 %v290
        %v323 = vunpack.c.l.bf16 %v291
        %v324 = vunpack.c.l.bf16 %v292
        %v325 = vunpack.c.l.bf16 %v293
        %v326 = vunpack.c.l.bf16 %v294
        %v327 = vunpack.c.l.bf16 %v295
        %v328 = vunpack.c.l.bf16 %v296
        %v329 = vunpack.c.l.bf16 %v297
        %v330 = vunpack.c.l.bf16 %v298
        %v331 = vunpack.c.l.bf16 %v299
        %v332 = vunpack.c.l.bf16 %v300
        %v333 = vunpack.c.l.bf16 %v301
        %v334 = vunpack.c.l.bf16 %v302
        %v335 = vunpack.c.l.bf16 %v303
        %v336 = vunpack.c.l.bf16 %v304
        %v337 = vunpack.c.l.bf16 %v305
        %v338 = vunpack.c.l.bf16 %v306
        %v339 = vunpack.c.l.bf16 %v307
        %v340 = vunpack.c.l.bf16 %v308
        %v341 = vunpack.c.l.bf16 %v309
        %v342 = vunpack.c.l.bf16 %v310
        %v343 = vunpack.c.l.bf16 %v311
        %v344 = vunpack.c.l.bf16 %v312
        %v345 = vunpack.c.l.bf16 %v313
        %v346 = vunpack.c.l.bf16 %v314
        %v347 = vunpack.c.l.bf16 %v315
        %v348 = vld [vmem:[#allocation5] sm:$0x1]
        %v350 = vlaneseq
        %v351 = vshrl.u32 %v350, 7
        %v352 = vsub.s32 0, %v351
        %v353 = vrot.slane %v348, %v352
        %v355 = vmul.f32 %v316, %v353
        %v356 = vmul.f32 %v317, %v353
        %v357 = vmul.f32 %v318, %v353
        %v358 = vmul.f32 %v319, %v353
        %v359 = vmul.f32 %v320, %v353
        %v360 = vmul.f32 %v321, %v353
        %v361 = vmul.f32 %v322, %v353
        %v362 = vmul.f32 %v323, %v353
        %v363 = vmul.f32 %v324, %v353
        %v364 = vmul.f32 %v325, %v353
        %v365 = vmul.f32 %v326, %v353
        %v366 = vmul.f32 %v327, %v353
        %v367 = vmul.f32 %v328, %v353
        %v368 = vmul.f32 %v329, %v353
        %v369 = vmul.f32 %v330, %v353
        %v370 = vmul.f32 %v331, %v353
        %v371 = vmul.f32 %v332, %v353
        %v372 = vmul.f32 %v333, %v353
        %v373 = vmul.f32 %v334, %v353
        %v374 = vmul.f32 %v335, %v353
        %v375 = vmul.f32 %v336, %v353
        %v376 = vmul.f32 %v337, %v353
        %v377 = vmul.f32 %v338, %v353
        %v378 = vmul.f32 %v339, %v353
        %v379 = vmul.f32 %v340, %v353
        %v380 = vmul.f32 %v341, %v353
        %v381 = vmul.f32 %v342, %v353
        %v382 = vmul.f32 %v343, %v353
        %v383 = vmul.f32 %v344, %v353
        %v384 = vmul.f32 %v345, %v353
        %v385 = vmul.f32 %v346, %v353
        %v386 = vmul.f32 %v347, %v353
        %v387 = vld [vmem:[#allocation7] sm:$0x1]
        %v389 = vlaneseq
        %v390 = vshrl.u32 %v389, 7
        %v391 = vsub.s32 0, %v390
        %v392 = vrot.slane %v387, %v391
        %v394 = vadd.f32 %v355, %v392
        %v395 = vadd.f32 %v356, %v392
        %v396 = vadd.f32 %v357, %v392
        %v397 = vadd.f32 %v358, %v392
        %v398 = vadd.f32 %v359, %v392
        %v399 = vadd.f32 %v360, %v392
        %v400 = vadd.f32 %v361, %v392
        %v401 = vadd.f32 %v362, %v392
        %v402 = vadd.f32 %v363, %v392
        %v403 = vadd.f32 %v364, %v392
        %v404 = vadd.f32 %v365, %v392
        %v405 = vadd.f32 %v366, %v392
        %v406 = vadd.f32 %v367, %v392
        %v407 = vadd.f32 %v368, %v392
        %v408 = vadd.f32 %v369, %v392
        %v409 = vadd.f32 %v370, %v392
        %v410 = vadd.f32 %v371, %v392
        %v411 = vadd.f32 %v372, %v392
        %v412 = vadd.f32 %v373, %v392
        %v413 = vadd.f32 %v374, %v392
        %v414 = vadd.f32 %v375, %v392
        %v415 = vadd.f32 %v376, %v392
        %v416 = vadd.f32 %v377, %v392
        %v417 = vadd.f32 %v378, %v392
        %v418 = vadd.f32 %v379, %v392
        %v419 = vadd.f32 %v380, %v392
        %v420 = vadd.f32 %v381, %v392
        %v421 = vadd.f32 %v382, %v392
        %v422 = vadd.f32 %v383, %v392
        %v423 = vadd.f32 %v384, %v392
        %v424 = vadd.f32 %v385, %v392
        %v425 = vadd.f32 %v386, %v392
        %v426 = vld [vmem:[%s251] sm:$0xf]
        %v427 = vld [vmem:[%s251 + $0x4] sm:$0xf]
        %v428 = vld [vmem:[%s251 + $0x8] sm:$0xf]
        %v429 = vld [vmem:[%s251 + $0xc] sm:$0xf]
        %v430 = vld [vmem:[%s251 + $0x10] sm:$0xf]
        %v431 = vld [vmem:[%s251 + $0x14] sm:$0xf]
        %v432 = vld [vmem:[%s251 + $0x18] sm:$0xf]
        %v433 = vld [vmem:[%s251 + $0x1c] sm:$0xf]
        %v434 = vld [vmem:[%s251 + $0x20] sm:$0xf]
        %v435 = vld [vmem:[%s251 + $0x24] sm:$0xf]
        %v436 = vld [vmem:[%s251 + $0x28] sm:$0xf]
        %v437 = vld [vmem:[%s251 + $0x2c] sm:$0xf]
        %v438 = vld [vmem:[%s251 + $0x30] sm:$0xf]
        %v439 = vld [vmem:[%s251 + $0x34] sm:$0xf]
        %v440 = vld [vmem:[%s251 + $0x38] sm:$0xf]
        %v441 = vld [vmem:[%s251 + $0x3c] sm:$0xf]
        %v442 = vld [vmem:[%s251 + $0x40] sm:$0xf]
        %v443 = vld [vmem:[%s251 + $0x44] sm:$0xf]
        %v444 = vld [vmem:[%s251 + $0x48] sm:$0xf]
        %v445 = vld [vmem:[%s251 + $0x4c] sm:$0xf]
        %v446 = vld [vmem:[%s251 + $0x50] sm:$0xf]
        %v447 = vld [vmem:[%s251 + $0x54] sm:$0xf]
        %v448 = vld [vmem:[%s251 + $0x58] sm:$0xf]
        %v449 = vld [vmem:[%s251 + $0x5c] sm:$0xf]
        %v450 = vld [vmem:[%s251 + $0x60] sm:$0xf]
        %v451 = vld [vmem:[%s251 + $0x64] sm:$0xf]
        %v452 = vld [vmem:[%s251 + $0x68] sm:$0xf]
        %v453 = vld [vmem:[%s251 + $0x6c] sm:$0xf]
        %v454 = vld [vmem:[%s251 + $0x70] sm:$0xf]
        %v455 = vld [vmem:[%s251 + $0x74] sm:$0xf]
        %v456 = vld [vmem:[%s251 + $0x78] sm:$0xf]
        %v457 = vld [vmem:[%s251 + $0x7c] sm:$0xf]
        %v458 = vunpack.c.l.bf16 %v426
        %v459 = vunpack.c.l.bf16 %v427
        %v460 = vunpack.c.l.bf16 %v428
        %v461 = vunpack.c.l.bf16 %v429
        %v462 = vunpack.c.l.bf16 %v430
        %v463 = vunpack.c.l.bf16 %v431
        %v464 = vunpack.c.l.bf16 %v432
        %v465 = vunpack.c.l.bf16 %v433
        %v466 = vunpack.c.l.bf16 %v434
        %v467 = vunpack.c.l.bf16 %v435
        %v468 = vunpack.c.l.bf16 %v436
        %v469 = vunpack.c.l.bf16 %v437
        %v470 = vunpack.c.l.bf16 %v438
        %v471 = vunpack.c.l.bf16 %v439
        %v472 = vunpack.c.l.bf16 %v440
        %v473 = vunpack.c.l.bf16 %v441
        %v474 = vunpack.c.l.bf16 %v442
        %v475 = vunpack.c.l.bf16 %v443
        %v476 = vunpack.c.l.bf16 %v444
        %v477 = vunpack.c.l.bf16 %v445
        %v478 = vunpack.c.l.bf16 %v446
        %v479 = vunpack.c.l.bf16 %v447
        %v480 = vunpack.c.l.bf16 %v448
        %v481 = vunpack.c.l.bf16 %v449
        %v482 = vunpack.c.l.bf16 %v450
        %v483 = vunpack.c.l.bf16 %v451
        %v484 = vunpack.c.l.bf16 %v452
        %v485 = vunpack.c.l.bf16 %v453
        %v486 = vunpack.c.l.bf16 %v454
        %v487 = vunpack.c.l.bf16 %v455
        %v488 = vunpack.c.l.bf16 %v456
        %v489 = vunpack.c.l.bf16 %v457
        %v490 = vadd.f32 %v394, %v458
        %v491 = vadd.f32 %v395, %v459
        %v492 = vadd.f32 %v396, %v460
        %v493 = vadd.f32 %v397, %v461
        %v494 = vadd.f32 %v398, %v462
        %v495 = vadd.f32 %v399, %v463
        %v496 = vadd.f32 %v400, %v464
        %v497 = vadd.f32 %v401, %v465
        %v498 = vadd.f32 %v402, %v466
        %v499 = vadd.f32 %v403, %v467
        %v500 = vadd.f32 %v404, %v468
        %v501 = vadd.f32 %v405, %v469
        %v502 = vadd.f32 %v406, %v470
        %v503 = vadd.f32 %v407, %v471
        %v504 = vadd.f32 %v408, %v472
        %v505 = vadd.f32 %v409, %v473
        %v506 = vadd.f32 %v410, %v474
        %v507 = vadd.f32 %v411, %v475
        %v508 = vadd.f32 %v412, %v476
        %v509 = vadd.f32 %v413, %v477
        %v510 = vadd.f32 %v414, %v478
        %v511 = vadd.f32 %v415, %v479
        %v512 = vadd.f32 %v416, %v480
        %v513 = vadd.f32 %v417, %v481
        %v514 = vadd.f32 %v418, %v482
        %v515 = vadd.f32 %v419, %v483
        %v516 = vadd.f32 %v420, %v484
        %v517 = vadd.f32 %v421, %v485
        %v518 = vadd.f32 %v422, %v486
        %v519 = vadd.f32 %v423, %v487
        %v520 = vadd.f32 %v424, %v488
        %v521 = vadd.f32 %v425, %v489
        %v522 = vmax.f32 %v490, 0.0
        %v523 = vmax.f32 %v491, 0.0
        %v524 = vmax.f32 %v492, 0.0
        %v525 = vmax.f32 %v493, 0.0
        %v526 = vmax.f32 %v494, 0.0
        %v527 = vmax.f32 %v495, 0.0
        %v528 = vmax.f32 %v496, 0.0
        %v529 = vmax.f32 %v497, 0.0
        %v530 = vmax.f32 %v498, 0.0
        %v531 = vmax.f32 %v499, 0.0
        %v532 = vmax.f32 %v500, 0.0
        %v533 = vmax.f32 %v501, 0.0
        %v534 = vmax.f32 %v502, 0.0
        %v535 = vmax.f32 %v503, 0.0
        %v536 = vmax.f32 %v504, 0.0
        %v537 = vmax.f32 %v505, 0.0
        %v538 = vmax.f32 %v506, 0.0
        %v539 = vmax.f32 %v507, 0.0
        %v540 = vmax.f32 %v508, 0.0
        %v541 = vmax.f32 %v509, 0.0
        %v542 = vmax.f32 %v510, 0.0
        %v543 = vmax.f32 %v511, 0.0
        %v544 = vmax.f32 %v512, 0.0
        %v545 = vmax.f32 %v513, 0.0
        %v546 = vmax.f32 %v514, 0.0
        %v547 = vmax.f32 %v515, 0.0
        %v548 = vmax.f32 %v516, 0.0
        %v549 = vmax.f32 %v517, 0.0
        %v550 = vmax.f32 %v518, 0.0
        %v551 = vmax.f32 %v519, 0.0
        %v552 = vmax.f32 %v520, 0.0
        %v553 = vmax.f32 %v521, 0.0
        %554 = vst [vmem:[%s280] sm:$0xff] %v522
        %555 = vst [vmem:[%s280 + $0x8] sm:$0xff] %v523
        %556 = vst [vmem:[%s280 + $0x10] sm:$0xff] %v524
        %557 = vst [vmem:[%s280 + $0x18] sm:$0xff] %v525
        %558 = vst [vmem:[%s280 + $0x20] sm:$0xff] %v526
        %559 = vst [vmem:[%s280 + $0x28] sm:$0xff] %v527
        %560 = vst [vmem:[%s280 + $0x30] sm:$0xff] %v528
        %561 = vst [vmem:[%s280 + $0x38] sm:$0xff] %v529
        %562 = vst [vmem:[%s280 + $0x40] sm:$0xff] %v530
        %563 = vst [vmem:[%s280 + $0x48] sm:$0xff] %v531
        %564 = vst [vmem:[%s280 + $0x50] sm:$0xff] %v532
        %565 = vst [vmem:[%s280 + $0x58] sm:$0xff] %v533
        %566 = vst [vmem:[%s280 + $0x60] sm:$0xff] %v534
        %567 = vst [vmem:[%s280 + $0x68] sm:$0xff] %v535
        %568 = vst [vmem:[%s280 + $0x70] sm:$0xff] %v536
        %569 = vst [vmem:[%s280 + $0x78] sm:$0xff] %v537
        %570 = vst [vmem:[%s280 + $0x80] sm:$0xff] %v538
        %571 = vst [vmem:[%s280 + $0x88] sm:$0xff] %v539
        %572 = vst [vmem:[%s280 + $0x90] sm:$0xff] %v540
        %573 = vst [vmem:[%s280 + $0x98] sm:$0xff] %v541
        %574 = vst [vmem:[%s280 + $0xa0] sm:$0xff] %v542
        %575 = vst [vmem:[%s280 + $0xa8] sm:$0xff] %v543
        %576 = vst [vmem:[%s280 + $0xb0] sm:$0xff] %v544
        %577 = vst [vmem:[%s280 + $0xb8] sm:$0xff] %v545
        %578 = vst [vmem:[%s280 + $0xc0] sm:$0xff] %v546
        %579 = vst [vmem:[%s280 + $0xc8] sm:$0xff] %v547
        %580 = vst [vmem:[%s280 + $0xd0] sm:$0xff] %v548
        %581 = vst [vmem:[%s280 + $0xd8] sm:$0xff] %v549
        %582 = vst [vmem:[%s280 + $0xe0] sm:$0xff] %v550
        %583 = vst [vmem:[%s280 + $0xe8] sm:$0xff] %v551
        %584 = vst [vmem:[%s280 + $0xf0] sm:$0xff] %v552
        %585 = vst [vmem:[%s280 + $0xf8] sm:$0xff] %v553
        %s586 = sand.u32 %s127, 1
        %s587 = scalar_lea.sflag [#allocation4], %s586
        %s588 = sand.u32 %s127, 1
        %s589 = smul.addr %s588, 256
        %s590 = scalar_lea.vmem [#allocation10], %s589
        // Predicated region
        $region53: #{bottleneck_forward.7} parent=35 // pred_check
          %p591 = pneg %p137
        $region54: #{bottleneck_forward.7} parent=35 // pred_check_branch
          %593 = sbr.rel (%p591) target = $region56
        $region55: #{bottleneck_forward.7} parent=35 // pred_region
          %s594 = smul.u32 32, %s25
          %s596 = ssub.s32 4096, 4096
          %597 = vsyncadd %s587, %s596
          %s598 = smul.addr %s594, 128
          %s599 = scalar_lea.hbm %s4, %s598
          %s600 = sshll.u32 %s590, 4
          %s601 = int_to_ptr.vmem [resolvable:$true] %s600
          %606 = dma.vmem_to_hbm [thread:$0]  %s601, 4096, %s599, %s587, 128, 128, 8
        $region56: #{bottleneck_forward.7} parent=35 // pred_fallthru
          _
      $region36: #{bottleneck_forward.7} parent=5 // pred_fallthru
        _
      %p607 = scmp.le.s32.totalorder 2, %s20
      // Predicated region
      $region57: #{bottleneck_forward.7} parent=5 // pred_check
        %p608 = pneg %p607
      $region58: #{bottleneck_forward.7} parent=5 // pred_check_branch
        %610 = sbr.rel (%p608) target = $region60
      $region59: #{bottleneck_forward.7} parent=5 // pred_region
        %s611 = ssub.s32 %s20, 2
        // Predicated region
        $region61: #{bottleneck_forward.7} parent=59 // pred_check
          %p612 = pneg %p143
        $region62: #{bottleneck_forward.7} parent=59 // pred_check_branch
          %614 = sbr.rel (%p612) target = $region64
        $region63: #{bottleneck_forward.7} parent=59 // pred_region
          %s615 = sand.u32 %s128, 1
          %s616 = scalar_lea.sflag [#allocation4], %s615
          %s617 = sand.u32 %s128, 1
          %s618 = smul.addr %s617, 256
          %s619 = scalar_lea.vmem [#allocation10], %s618
          %620 = dma.done %s616, 4096
        $region64: #{bottleneck_forward.7} parent=59 // pred_fallthru
          _
      $region60: #{bottleneck_forward.7} parent=5 // pred_fallthru
        _
    $region6: #{bottleneck_forward.7} parent=1 // loop_footer
      %s24 = sadd.s32 1, %s20
    $region7: #{bottleneck_forward.7} parent=1 // loop_footer_branch
      %19 = sbr.rel target = $region3
    $region8: #{bottleneck_forward.7} parent=1 // loop_exit
      _
    %621 = vsyncpa [#allocation3], 1
    %s622 = scalar_lea.sflag [#allocation3], 1
    %623 = vsyncpa %s622, 1
    %624 = vsyncpa [#allocation6], 1
    %625 = vsyncpa [#allocation9], 1
    %s626 = scalar_lea.sflag [#allocation9], 1
    %627 = vsyncpa %s626, 1
    %628 = vsyncpa [#allocation4], 1
    %s629 = scalar_lea.sflag [#allocation4], 1
    %630 = vsyncpa %s629, 1

// kernel: bottleneck_forward.4
$region0: #{bottleneck_forward.4}
  #allocation0 [shape = 'u32[]', space=smem, size = 0x4, offset = 0x4, fixed_abs, tag = 'smem constant byte address 0x4 - core index']
  #allocation1 [shape = 'u32[144,128]{1,0:T(1,128)}', space=vmem, size = 0x12000, scoped, tag = 'internal scratch']
  #allocation2 [shape = 'f32[256,32]{1,0:T(8,128)}', space=vmem, size = 0x20000, scoped, tag = 'scratch operand']
  %s0 = inlined_call_operand.hbm [shape: bf16[512,128], index: 0, kind: input, shape index: {}]
  %s1 = inlined_call_operand.hbm [shape: bf16[128,32], index: 1, kind: input, shape index: {}]
  %s2 = inlined_call_operand.hbm [shape: bf16[512,32], index: 2, kind: output, shape index: {0}]
  %s3 = inlined_call_operand.hbm [shape: f32[2,1,32], index: 3, kind: output, shape index: {1}]
  %s4 = inlined_call_operand.hbm [shape: f32[2,1,32], index: 4, kind: output, shape index: {2}]
  %5 = xla_tuple %s2, %s3, %s4
  %s6 = sld [smem:[#allocation0]]
  $region73: #{bottleneck_forward.4} parent=0
    _
  %s8 = ssub.s32 1, %s6
  %s9 = scalar_select 0, %s8, %s6
  $region1: #{bottleneck_forward.4} parent=0
    #allocation3 [shape = 'u8[131072]{0}', space=vmem, size = 0x20000, scoped, tag = 'input window, operand 0']
    #allocation4 [shape = 's32[2]{0}', space=sflag, size = 0x8, scoped, tag = 'scoped memory for bottleneck_forward.4']
    #allocation5 [shape = 's32[2]{0}', space=sflag, size = 0x8, scoped, tag = 'scoped memory for bottleneck_forward.4']
    #allocation6 [shape = 'u8[32768]{0}', space=vmem, size = 0x8000, scoped, tag = 'input window, operand 1, single buffered']
    #allocation7 [shape = 's32[1]{0}', space=sflag, size = 0x4, scoped, tag = 'scoped memory for bottleneck_forward.4']
    #allocation8 [shape = 'u8[131072]{0}', space=vmem, size = 0x20000, scoped, tag = 'output window, operand 0']
    #allocation9 [shape = 'u8[1024]{0}', space=vmem, size = 0x400, scoped, tag = 'output window, operand 1']
    #allocation10 [shape = 's32[2]{0}', space=sflag, size = 0x8, scoped, tag = 'scoped memory for bottleneck_forward.4']
    #allocation11 [shape = 'u8[1024]{0}', space=vmem, size = 0x400, scoped, tag = 'output window, operand 2']
    %10 = vsyncpa [#allocation4], 0
    %s11 = scalar_lea.sflag [#allocation4], 1
    %12 = vsyncpa %s11, 0
    %13 = vsyncpa [#allocation7], 0
    %14 = vsyncpa [#allocation5], 0
    %s15 = scalar_lea.sflag [#allocation5], 1
    %16 = vsyncpa %s15, 0
    %17 = vsyncpa [#allocation10], 0
    %s18 = scalar_lea.sflag [#allocation10], 1
    %19 = vsyncpa %s18, 0
    loop: start=0, step=1, limit=4
    $region2: #{bottleneck_forward.4} parent=1 // loop_pre_header
      _
    $region3: #{bottleneck_forward.4} parent=1 // loop_header
      %s21 = sphi 0, %s25
      %p22 = scmp.ge.s32.totalorder %s21, 4
      %s28 = sphi 0, %s47
      %s29 = sphi 0, %s43
      %s30 = sphi 0, %s39
      %s31 = sphi 0, %s28
      %s32 = sphi 0, %s29
      %s33 = sphi 0, %s30
      %s34 = sphi 0, %s31
      %s35 = sphi 0, %s32
      %s36 = sphi 0, %s33
      %s52 = sphi 0, %s54
      %s55 = sphi 0, %s52
      %s56 = sphi 0, %s55
      %s72 = sphi 0, %s56
      %s80 = sphi 0, %s82
      %s83 = sphi 0, %s80
      %s84 = sphi 0, %s83
      %s100 = sphi 0, %s84
      %s108 = sphi 0, %s110
      %s111 = sphi 0, %s108
      %s112 = sphi 0, %s111
      %s128 = sphi 0, %s112
      %s136 = sphi 0, %s138
      %s139 = sphi 0, %s136
      %s140 = sphi 0, %s139
      %s156 = sphi 0, %s140
      %s164 = sphi 0, %s166
      %s167 = sphi 0, %s164
      %s168 = sphi 0, %s167
      %s184 = sphi 0, %s168
    $region4: #{bottleneck_forward.4} parent=1 // loop_header_branch
      %24 = sbr.rel (%p22) target = $region8
    $region5: #{bottleneck_forward.4} parent=1 // loop_body
      %s26 = ssub.s32 %s21, 1
      %s27 = ssub.s32 %s21, 2
      %s37 = sadd.s32 1, %s30
      %p38 = scmp.ge.s32.totalorder %s37, 1
      %s39 = scalar_select %p38, 0, %s37
      %s40 = sadd.s32 1, %s29
      %s41 = scalar_select %p38, %s40, %s29
      %p42 = scmp.ge.s32.totalorder %s41, 1
      %s43 = scalar_select %p42, 0, %s41
      %s44 = sadd.s32 1, %s28
      %s45 = scalar_select %p42, %s44, %s28
      %p46 = scmp.ge.s32.totalorder %s45, 2
      %s47 = scalar_select %p46, 0, %s45
      %s48 = ssub.s32 %s28, %s47
      %s49 = ssub.s32 %s30, %s39
      %s50 = sor.u32 %s48, %s49
      %p51 = scmp.eq.s32.totalorder %s50, 0
      %s53 = sadd.s32 %s52, 1
      %s54 = scalar_select %p51, %s52, %s53
      %p57 = pneg %p51
      %p58 = scmp.eq.s32.totalorder %s21, 1
      %p59 = por %p57, %p58
      %p60 = scmp.ne.s32.totalorder %s52, %s55
      %p61 = scmp.eq.s32.totalorder %s21, 0
      %p62 = por %p60, %p61
      %p63 = scmp.ne.s32.totalorder %s52, %s55
      %p64 = scmp.eq.s32.totalorder %s26, 1
      %p65 = por %p63, %p64
      %p66 = scmp.ne.s32.totalorder %s55, %s56
      %p67 = scmp.eq.s32.totalorder %s26, 0
      %p68 = por %p66, %p67
      %p69 = scmp.ne.s32.totalorder %s55, %s56
      %p70 = scmp.eq.s32.totalorder %s27, 1
      %p71 = por %p69, %p70
      %p73 = scmp.ne.s32.totalorder %s56, %s72
      %p74 = scmp.eq.s32.totalorder %s27, 0
      %p75 = por %p73, %p74
      %s76 = ssub.s32 %s30, %s39
      %s77 = ssub.s32 %s29, %s43
      %s78 = sor.u32 %s76, %s77
      %p79 = scmp.eq.s32.totalorder %s78, 0
      %s81 = sadd.s32 %s80, 1
      %s82 = scalar_select %p79, %s80, %s81
      %p85 = pneg %p79
      %p86 = scmp.eq.s32.totalorder %s21, 1
      %p87 = por %p85, %p86
      %p88 = scmp.ne.s32.totalorder %s80, %s83
      %p89 = scmp.eq.s32.totalorder %s21, 0
      %p90 = por %p88, %p89
      %p91 = scmp.ne.s32.totalorder %s80, %s83
      %p92 = scmp.eq.s32.totalorder %s26, 1
      %p93 = por %p91, %p92
      %p94 = scmp.ne.s32.totalorder %s83, %s84
      %p95 = scmp.eq.s32.totalorder %s26, 0
      %p96 = por %p94, %p95
      %p97 = scmp.ne.s32.totalorder %s83, %s84
      %p98 = scmp.eq.s32.totalorder %s27, 1
      %p99 = por %p97, %p98
      %p101 = scmp.ne.s32.totalorder %s84, %s100
      %p102 = scmp.eq.s32.totalorder %s27, 0
      %p103 = por %p101, %p102
      %s104 = ssub.s32 %s28, %s47
      %s105 = ssub.s32 %s29, %s43
      %s106 = sor.u32 %s104, %s105
      %p107 = scmp.eq.s32.totalorder %s106, 0
      %s109 = sadd.s32 %s108, 1
      %s110 = scalar_select %p107, %s108, %s109
      %p113 = pneg %p107
      %p114 = scmp.eq.s32.totalorder %s21, 1
      %p115 = por %p113, %p114
      %p116 = scmp.ne.s32.totalorder %s108, %s111
      %p117 = scmp.eq.s32.totalorder %s21, 0
      %p118 = por %p116, %p117
      %p119 = scmp.ne.s32.totalorder %s108, %s111
      %p120 = scmp.eq.s32.totalorder %s26, 1
      %p121 = por %p119, %p120
      %p122 = scmp.ne.s32.totalorder %s111, %s112
      %p123 = scmp.eq.s32.totalorder %s26, 0
      %p124 = por %p122, %p123
      %p125 = scmp.ne.s32.totalorder %s111, %s112
      %p126 = scmp.eq.s32.totalorder %s27, 1
      %p127 = por %p125, %p126
      %p129 = scmp.ne.s32.totalorder %s112, %s128
      %p130 = scmp.eq.s32.totalorder %s27, 0
      %p131 = por %p129, %p130
      %s132 = ssub.s32 %s28, %s47
      %s133 = ssub.s32 %s29, %s43
      %s134 = sor.u32 %s132, %s133
      %p135 = scmp.eq.s32.totalorder %s134, 0
      %s137 = sadd.s32 %s136, 1
      %s138 = scalar_select %p135, %s136, %s137
      %p141 = pneg %p135
      %p142 = scmp.eq.s32.totalorder %s21, 1
      %p143 = por %p141, %p142
      %p144 = scmp.ne.s32.totalorder %s136, %s139
      %p145 = scmp.eq.s32.totalorder %s21, 0
      %p146 = por %p144, %p145
      %p147 = scmp.ne.s32.totalorder %s136, %s139
      %p148 = scmp.eq.s32.totalorder %s26, 1
      %p149 = por %p147, %p148
      %p150 = scmp.ne.s32.totalorder %s139, %s140
      %p151 = scmp.eq.s32.totalorder %s26, 0
      %p152 = por %p150, %p151
      %p153 = scmp.ne.s32.totalorder %s139, %s140
      %p154 = scmp.eq.s32.totalorder %s27, 1
      %p155 = por %p153, %p154
      %p157 = scmp.ne.s32.totalorder %s140, %s156
      %p158 = scmp.eq.s32.totalorder %s27, 0
      %p159 = por %p157, %p158
      %s160 = ssub.s32 %s28, %s47
      %s161 = ssub.s32 %s29, %s43
      %s162 = sor.u32 %s160, %s161
      %p163 = scmp.eq.s32.totalorder %s162, 0
      %s165 = sadd.s32 %s164, 1
      %s166 = scalar_select %p163, %s164, %s165
      %p169 = pneg %p163
      %p170 = scmp.eq.s32.totalorder %s21, 1
      %p171 = por %p169, %p170
      %p172 = scmp.ne.s32.totalorder %s164, %s167
      %p173 = scmp.eq.s32.totalorder %s21, 0
      %p174 = por %p172, %p173
      %p175 = scmp.ne.s32.totalorder %s164, %s167
      %p176 = scmp.eq.s32.totalorder %s26, 1
      %p177 = por %p175, %p176
      %p178 = scmp.ne.s32.totalorder %s167, %s168
      %p179 = scmp.eq.s32.totalorder %s26, 0
      %p180 = por %p178, %p179
      %p181 = scmp.ne.s32.totalorder %s167, %s168
      %p182 = scmp.eq.s32.totalorder %s27, 1
      %p183 = por %p181, %p182
      %p185 = scmp.ne.s32.totalorder %s168, %s184
      %p186 = scmp.eq.s32.totalorder %s27, 0
      %p187 = por %p185, %p186
      %p188 = scmp.le.s32.totalorder 1, %s21
      %p189 = scmp.lt.s32.totalorder %s21, 3
      %p190 = pnand %p188, %p189
      %p191 = pneg %p190
      // Predicated region
      $region9: #{bottleneck_forward.4} parent=5 // pred_check
        _
      $region10: #{bottleneck_forward.4} parent=5 // pred_check_branch
        %193 = sbr.rel (%p190) target = $region12
      $region11: #{bottleneck_forward.4} parent=5 // pred_region
        %s194 = ssub.s32 %s21, 1
        // Predicated region
        $region13: #{bottleneck_forward.4} parent=11 // pred_check
          %p195 = pneg %p96
        $region14: #{bottleneck_forward.4} parent=11 // pred_check_branch
          %197 = sbr.rel (%p195) target = $region16
        $region15: #{bottleneck_forward.4} parent=11 // pred_region
          %s198 = smul.u32 16, %s33
          %s200 = ssub.s32 1024, 1024
          %201 = vsyncadd [#allocation7], %s200
          %s202 = sadd.s32 %s32, %s198
          %s203 = smul.addr %s202, 64
          %s204 = scalar_lea.hbm %s1, %s203
          %s205 = sshll.u32 [#allocation6], 4
          %s206 = int_to_ptr.vmem [resolvable:$true] %s205
          %211 = dma.hbm_to_vmem [thread:$0]  %s204, 1024, %s206, [#allocation7], 64, 64, 4
        $region16: #{bottleneck_forward.4} parent=11 // pred_fallthru
          _
      $region12: #{bottleneck_forward.4} parent=5 // pred_fallthru
        _
      %p212 = scmp.lt.s32.totalorder %s21, 2
      // Predicated region
      $region17: #{bottleneck_forward.4} parent=5 // pred_check
        %p213 = pneg %p212
      $region18: #{bottleneck_forward.4} parent=5 // pred_check_branch
        %215 = sbr.rel (%p213) target = $region20
      $region19: #{bottleneck_forward.4} parent=5 // pred_region
        // Predicated region
        $region21: #{bottleneck_forward.4} parent=19 // pred_check
          %p216 = pneg %p62
        $region22: #{bottleneck_forward.4} parent=19 // pred_check_branch
          %218 = sbr.rel (%p216) target = $region24
        $region23: #{bottleneck_forward.4} parent=19 // pred_region
          %s219 = sand.u32 %s52, 1
          %s220 = scalar_lea.sflag [#allocation4], %s219
          %s221 = sand.u32 %s52, 1
          %s222 = smul.addr %s221, 128
          %s223 = scalar_lea.vmem [#allocation3], %s222
          %s224 = smul.u32 32, %s28
          %s226 = ssub.s32 2048, 2048
          %227 = vsyncadd %s220, %s226
          %s228 = sadd.s32 %s30, %s224
          %s229 = smul.addr %s228, 64
          %s230 = scalar_lea.hbm %s0, %s229
          %s231 = sshll.u32 %s223, 4
          %s232 = int_to_ptr.vmem [resolvable:$true] %s231
          %237 = dma.hbm_to_vmem [thread:$0]  %s230, 2048, %s232, %s220, 64, 64, 4
        $region24: #{bottleneck_forward.4} parent=19 // pred_fallthru
          _
      $region20: #{bottleneck_forward.4} parent=5 // pred_fallthru
        _
      %p238 = scmp.le.s32.totalorder 1, %s21
      %p239 = scmp.lt.s32.totalorder %s21, 3
      %p240 = pnand %p238, %p239
      %p241 = pneg %p240
      // Predicated region
      $region25: #{bottleneck_forward.4} parent=5 // pred_check
        _
      $region26: #{bottleneck_forward.4} parent=5 // pred_check_branch
        %243 = sbr.rel (%p240) target = $region28
      $region27: #{bottleneck_forward.4} parent=5 // pred_region
        %s244 = ssub.s32 %s21, 1
        %s245 = sand.u32 %s55, 1
        %s246 = scalar_lea.sflag [#allocation4], %s245
        %s247 = sand.u32 %s55, 1
        %s248 = smul.addr %s247, 128
        %s249 = scalar_lea.vmem [#allocation3], %s248
        // Predicated region
        $region29: #{bottleneck_forward.4} parent=27 // pred_check
          %p250 = pneg %p68
        $region30: #{bottleneck_forward.4} parent=27 // pred_check_branch
          %252 = sbr.rel (%p250) target = $region32
        $region31: #{bottleneck_forward.4} parent=27 // pred_region
          %253 = dma.done %s246, 2048
        $region32: #{bottleneck_forward.4} parent=27 // pred_fallthru
          _
        // Predicated region
        $region33: #{bottleneck_forward.4} parent=27 // pred_check
          %p254 = pneg %p96
        $region34: #{bottleneck_forward.4} parent=27 // pred_check_branch
          %256 = sbr.rel (%p254) target = $region36
        $region35: #{bottleneck_forward.4} parent=27 // pred_region
          %257 = dma.done [#allocation7], 1024
        $region36: #{bottleneck_forward.4} parent=27 // pred_fallthru
          _
        %s258 = sand.u32 %s55, 1
        %s259 = scalar_lea.sflag [#allocation4], %s258
        %s260 = sand.u32 %s55, 1
        %s261 = smul.addr %s260, 128
        %s262 = scalar_lea.vmem [#allocation3], %s261
        %p263 = pneg %p68
        %p264 = pneg %p65
        %p265 = pneg %p96
        %p266 = pneg %p93
        %p267 = pneg %p124
        %p268 = pneg %p121
        %s269 = sand.u32 %s111, 1
        %s270 = scalar_lea.sflag [#allocation5], %s269
        %s271 = sand.u32 %s111, 1
        %s272 = smul.addr %s271, 128
        %s273 = scalar_lea.vmem [#allocation8], %s272
        %p274 = pneg %p152
        %p275 = pneg %p149
        %s276 = sand.u32 %s26, 1
        %s277 = scalar_lea.sflag [#allocation10], %s276
        %s278 = sand.u32 %s139, 1
        %s279 = scalar_lea.vmem [#allocation9], %s278
        %p280 = pneg %p180
        %p281 = pneg %p177
        %s282 = sand.u32 %s26, 1
        %s283 = scalar_lea.sflag [#allocation10], %s282
        %s284 = sand.u32 %s167, 1
        %s285 = scalar_lea.vmem [#allocation11], %s284
        %s286 = smul.u32 32, %s31
        %s287 = smul.u32 16, %s33
        %s288 = smul.u32 32, %s31
        %p290 = scmp.eq.s32.totalorder %s33, 0
        // Predicated region
        $region37: #{bottleneck_forward.4} parent=27 // pred_check
          %p291 = pneg %p290
        $region38: #{bottleneck_forward.4} parent=27 // pred_check_branch
          %293 = sbr.rel (%p291) target = $region40
        $region39: #{bottleneck_forward.4} parent=27 // pred_region
          %vm294 = vcmask 261120
          %295 = vst.msk [vmem:[#allocation2] sm:$0xff] %vm294, 0.0
          %296 = vst.msk [vmem:[#allocation2 + $0x8] sm:$0xff] %vm294, 0.0
          %297 = vst.msk [vmem:[#allocation2 + $0x10] sm:$0xff] %vm294, 0.0
          %298 = vst.msk [vmem:[#allocation2 + $0x18] sm:$0xff] %vm294, 0.0
          %299 = vst.msk [vmem:[#allocation2 + $0x20] sm:$0xff] %vm294, 0.0
          %300 = vst.msk [vmem:[#allocation2 + $0x28] sm:$0xff] %vm294, 0.0
          %301 = vst.msk [vmem:[#allocation2 + $0x30] sm:$0xff] %vm294, 0.0
          %302 = vst.msk [vmem:[#allocation2 + $0x38] sm:$0xff] %vm294, 0.0
          %303 = vst.msk [vmem:[#allocation2 + $0x40] sm:$0xff] %vm294, 0.0
          %304 = vst.msk [vmem:[#allocation2 + $0x48] sm:$0xff] %vm294, 0.0
          %305 = vst.msk [vmem:[#allocation2 + $0x50] sm:$0xff] %vm294, 0.0
          %306 = vst.msk [vmem:[#allocation2 + $0x58] sm:$0xff] %vm294, 0.0
          %307 = vst.msk [vmem:[#allocation2 + $0x60] sm:$0xff] %vm294, 0.0
          %308 = vst.msk [vmem:[#allocation2 + $0x68] sm:$0xff] %vm294, 0.0
          %309 = vst.msk [vmem:[#allocation2 + $0x70] sm:$0xff] %vm294, 0.0
          %310 = vst.msk [vmem:[#allocation2 + $0x78] sm:$0xff] %vm294, 0.0
          %311 = vst.msk [vmem:[#allocation2 + $0x80] sm:$0xff] %vm294, 0.0
          %312 = vst.msk [vmem:[#allocation2 + $0x88] sm:$0xff] %vm294, 0.0
          %313 = vst.msk [vmem:[#allocation2 + $0x90] sm:$0xff] %vm294, 0.0
          %314 = vst.msk [vmem:[#allocation2 + $0x98] sm:$0xff] %vm294, 0.0
          %315 = vst.msk [vmem:[#allocation2 + $0xa0] sm:$0xff] %vm294, 0.0
          %316 = vst.msk [vmem:[#allocation2 + $0xa8] sm:$0xff] %vm294, 0.0
          %317 = vst.msk [vmem:[#allocation2 + $0xb0] sm:$0xff] %vm294, 0.0
          %318 = vst.msk [vmem:[#allocation2 + $0xb8] sm:$0xff] %vm294, 0.0
          %319 = vst.msk [vmem:[#allocation2 + $0xc0] sm:$0xff] %vm294, 0.0
          %320 = vst.msk [vmem:[#allocation2 + $0xc8] sm:$0xff] %vm294, 0.0
          %321 = vst.msk [vmem:[#allocation2 + $0xd0] sm:$0xff] %vm294, 0.0
          %322 = vst.msk [vmem:[#allocation2 + $0xd8] sm:$0xff] %vm294, 0.0
          %323 = vst.msk [vmem:[#allocation2 + $0xe0] sm:$0xff] %vm294, 0.0
          %324 = vst.msk [vmem:[#allocation2 + $0xe8] sm:$0xff] %vm294, 0.0
          %325 = vst.msk [vmem:[#allocation2 + $0xf0] sm:$0xff] %vm294, 0.0
          %326 = vst.msk [vmem:[#allocation2 + $0xf8] sm:$0xff] %vm294, 0.0
        $region40: #{bottleneck_forward.4} parent=27 // pred_fallthru
          _
        %v327 = vld [vmem:[%s249] sm:$0xf]
        %v328 = vld [vmem:[%s249 + $0x4] sm:$0xf]
        %v329 = vld [vmem:[%s249 + $0x8] sm:$0xf]
        %v330 = vld [vmem:[%s249 + $0xc] sm:$0xf]
        %v331 = vld [vmem:[%s249 + $0x10] sm:$0xf]
        %v332 = vld [vmem:[%s249 + $0x14] sm:$0xf]
        %v333 = vld [vmem:[%s249 + $0x18] sm:$0xf]
        %v334 = vld [vmem:[%s249 + $0x1c] sm:$0xf]
        %v335 = vld [vmem:[%s249 + $0x20] sm:$0xf]
        %v336 = vld [vmem:[%s249 + $0x24] sm:$0xf]
        %v337 = vld [vmem:[%s249 + $0x28] sm:$0xf]
        %v338 = vld [vmem:[%s249 + $0x2c] sm:$0xf]
        %v339 = vld [vmem:[%s249 + $0x30] sm:$0xf]
        %v340 = vld [vmem:[%s249 + $0x34] sm:$0xf]
        %v341 = vld [vmem:[%s249 + $0x38] sm:$0xf]
        %v342 = vld [vmem:[%s249 + $0x3c] sm:$0xf]
        %v343 = vld [vmem:[%s249 + $0x40] sm:$0xf]
        %v344 = vld [vmem:[%s249 + $0x44] sm:$0xf]
        %v345 = vld [vmem:[%s249 + $0x48] sm:$0xf]
        %v346 = vld [vmem:[%s249 + $0x4c] sm:$0xf]
        %v347 = vld [vmem:[%s249 + $0x50] sm:$0xf]
        %v348 = vld [vmem:[%s249 + $0x54] sm:$0xf]
        %v349 = vld [vmem:[%s249 + $0x58] sm:$0xf]
        %v350 = vld [vmem:[%s249 + $0x5c] sm:$0xf]
        %v351 = vld [vmem:[%s249 + $0x60] sm:$0xf]
        %v352 = vld [vmem:[%s249 + $0x64] sm:$0xf]
        %v353 = vld [vmem:[%s249 + $0x68] sm:$0xf]
        %v354 = vld [vmem:[%s249 + $0x6c] sm:$0xf]
        %v355 = vld [vmem:[%s249 + $0x70] sm:$0xf]
        %v356 = vld [vmem:[%s249 + $0x74] sm:$0xf]
        %v357 = vld [vmem:[%s249 + $0x78] sm:$0xf]
        %v358 = vld [vmem:[%s249 + $0x7c] sm:$0xf]
        %v359 = vld [vmem:[#allocation2] sm:$0xff]
        %v360 = vld [vmem:[#allocation2 + $0x8] sm:$0xff]
        %v361 = vld [vmem:[#allocation2 + $0x10] sm:$0xff]
        %v362 = vld [vmem:[#allocation2 + $0x18] sm:$0xff]
        %v363 = vld [vmem:[#allocation2 + $0x20] sm:$0xff]
        %v364 = vld [vmem:[#allocation2 + $0x28] sm:$0xff]
        %v365 = vld [vmem:[#allocation2 + $0x30] sm:$0xff]
        %v366 = vld [vmem:[#allocation2 + $0x38] sm:$0xff]
        %v367 = vld [vmem:[#allocation2 + $0x40] sm:$0xff]
        %v368 = vld [vmem:[#allocation2 + $0x48] sm:$0xff]
        %v369 = vld [vmem:[#allocation2 + $0x50] sm:$0xff]
        %v370 = vld [vmem:[#allocation2 + $0x58] sm:$0xff]
        %v371 = vld [vmem:[#allocation2 + $0x60] sm:$0xff]
        %v372 = vld [vmem:[#allocation2 + $0x68] sm:$0xff]
        %v373 = vld [vmem:[#allocation2 + $0x70] sm:$0xff]
        %v374 = vld [vmem:[#allocation2 + $0x78] sm:$0xff]
        %v375 = vld [vmem:[#allocation2 + $0x80] sm:$0xff]
        %v376 = vld [vmem:[#allocation2 + $0x88] sm:$0xff]
        %v377 = vld [vmem:[#allocation2 + $0x90] sm:$0xff]
        %v378 = vld [vmem:[#allocation2 + $0x98] sm:$0xff]
        %v379 = vld [vmem:[#allocation2 + $0xa0] sm:$0xff]
        %v380 = vld [vmem:[#allocation2 + $0xa8] sm:$0xff]
        %v381 = vld [vmem:[#allocation2 + $0xb0] sm:$0xff]
        %v382 = vld [vmem:[#allocation2 + $0xb8] sm:$0xff]
        %v383 = vld [vmem:[#allocation2 + $0xc0] sm:$0xff]
        %v384 = vld [vmem:[#allocation2 + $0xc8] sm:$0xff]
        %v385 = vld [vmem:[#allocation2 + $0xd0] sm:$0xff]
        %v386 = vld [vmem:[#allocation2 + $0xd8] sm:$0xff]
        %v387 = vld [vmem:[#allocation2 + $0xe0] sm:$0xff]
        %v388 = vld [vmem:[#allocation2 + $0xe8] sm:$0xff]
        %v389 = vld [vmem:[#allocation2 + $0xf0] sm:$0xff]
        %v390 = vld [vmem:[#allocation2 + $0xf8] sm:$0xff]
        %v391 = vld [vmem:[#allocation6] sm:$0xf]
        %v392 = vld [vmem:[#allocation6 + $0x4] sm:$0xf]
        %v393 = vld [vmem:[#allocation6 + $0x8] sm:$0xf]
        %v394 = vld [vmem:[#allocation6 + $0xc] sm:$0xf]
        %v395 = vld [vmem:[#allocation6 + $0x10] sm:$0xf]
        %v396 = vld [vmem:[#allocation6 + $0x14] sm:$0xf]
        %v397 = vld [vmem:[#allocation6 + $0x18] sm:$0xf]
        %v398 = vld [vmem:[#allocation6 + $0x1c] sm:$0xf]
        %v399 = vld [vmem:[#allocation6 + $0x20] sm:$0xf]
        %v400 = vld [vmem:[#allocation6 + $0x24] sm:$0xf]
        %v401 = vld [vmem:[#allocation6 + $0x28] sm:$0xf]
        %v402 = vld [vmem:[#allocation6 + $0x2c] sm:$0xf]
        %v403 = vld [vmem:[#allocation6 + $0x30] sm:$0xf]
        %v404 = vld [vmem:[#allocation6 + $0x34] sm:$0xf]
        %v405 = vld [vmem:[#allocation6 + $0x38] sm:$0xf]
        %v406 = vld [vmem:[#allocation6 + $0x3c] sm:$0xf]
        %v439 = vunpack.c.l.b16 %v327
        %v440 = vunpack.c.l.b16 %v328
        %v441 = vunpack.c.l.b16 %v329
        %v442 = vunpack.c.l.b16 %v330
        %v443 = vunpack.c.l.b16 %v331
        %v444 = vunpack.c.l.b16 %v332
        %v445 = vunpack.c.l.b16 %v333
        %v446 = vunpack.c.l.b16 %v334
        %v447 = vunpack.c.l.b16 %v335
        %v448 = vunpack.c.l.b16 %v336
        %v449 = vunpack.c.l.b16 %v337
        %v450 = vunpack.c.l.b16 %v338
        %v451 = vunpack.c.l.b16 %v339
        %v452 = vunpack.c.l.b16 %v340
        %v453 = vunpack.c.l.b16 %v341
        %v454 = vunpack.c.l.b16 %v342
        %v455 = vunpack.c.l.b16 %v343
        %v456 = vunpack.c.l.b16 %v344
        %v457 = vunpack.c.l.b16 %v345
        %v458 = vunpack.c.l.b16 %v346
        %v459 = vunpack.c.l.b16 %v347
        %v460 = vunpack.c.l.b16 %v348
        %v461 = vunpack.c.l.b16 %v349
        %v462 = vunpack.c.l.b16 %v350
        %v463 = vunpack.c.l.b16 %v351
        %v464 = vunpack.c.l.b16 %v352
        %v465 = vunpack.c.l.b16 %v353
        %v466 = vunpack.c.l.b16 %v354
        %v467 = vunpack.c.l.b16 %v355
        %v468 = vunpack.c.l.b16 %v356
        %v469 = vunpack.c.l.b16 %v357
        %v470 = vunpack.c.l.b16 %v358
        %v471 = vpack.c.b16 %v440, %v439
        %v472 = vpack.c.b16 %v442, %v441
        %v473 = vpack.c.b16 %v444, %v443
        %v474 = vpack.c.b16 %v446, %v445
        %v475 = vpack.c.b16 %v448, %v447
        %v476 = vpack.c.b16 %v450, %v449
        %v477 = vpack.c.b16 %v452, %v451
        %v478 = vpack.c.b16 %v454, %v453
        %v479 = vpack.c.b16 %v456, %v455
        %v480 = vpack.c.b16 %v458, %v457
        %v481 = vpack.c.b16 %v460, %v459
        %v482 = vpack.c.b16 %v462, %v461
        %v483 = vpack.c.b16 %v464, %v463
        %v484 = vpack.c.b16 %v466, %v465
        %v485 = vpack.c.b16 %v468, %v467
        %v486 = vpack.c.b16 %v470, %v469
        %v519 = vunpack.c.l.b16 %v391
        %v520 = vunpack.c.l.b16 %v392
        %v521 = vunpack.c.l.b16 %v393
        %v522 = vunpack.c.l.b16 %v394
        %v523 = vunpack.c.l.b16 %v395
        %v524 = vunpack.c.l.b16 %v396
        %v525 = vunpack.c.l.b16 %v397
        %v526 = vunpack.c.l.b16 %v398
        %v527 = vunpack.c.l.b16 %v399
        %v528 = vunpack.c.l.b16 %v400
        %v529 = vunpack.c.l.b16 %v401
        %v530 = vunpack.c.l.b16 %v402
        %v531 = vunpack.c.l.b16 %v403
        %v532 = vunpack.c.l.b16 %v404
        %v533 = vunpack.c.l.b16 %v405
        %v534 = vunpack.c.l.b16 %v406
        %v535 = vpack.c.b16 %v520, %v519
        %v536 = vpack.c.b16 %v522, %v521
        %v537 = vpack.c.b16 %v524, %v523
        %v538 = vpack.c.b16 %v526, %v525
        %v539 = vpack.c.b16 %v528, %v527
        %v540 = vpack.c.b16 %v530, %v529
        %v541 = vpack.c.b16 %v532, %v531
        %v542 = vpack.c.b16 %v534, %v533
        %551 = vmatprep.subr.bf16.mxu0 0
        %552 = vmatpush1.bf16.msra.mxu0 %v535
        %553 = vmatprep.subr.bf16.mxu0 0
        %554 = vmatpush1.bf16.msra.mxu0 %v536
        %555 = vmatprep.subr.bf16.mxu0 0
        %556 = vmatpush1.bf16.msra.mxu0 %v537
        %557 = vmatprep.subr.bf16.mxu0 0
        %558 = vmatpush1.bf16.msra.mxu0 %v538
        %559 = vmatprep.subr.bf16.mxu0 0
        %560 = vmatpush1.bf16.msra.mxu0 %v539
        %561 = vmatprep.subr.bf16.mxu0 0
        %562 = vmatpush1.bf16.msra.mxu0 %v540
        %563 = vmatprep.subr.bf16.mxu0 0
        %564 = vmatpush1.bf16.msra.mxu0 %v541
        %565 = vmatprep.subr.bf16.mxu0 0
        %566 = vmatpush1.bf16.msra.mxu0 %v542
        %567 = vmatprep.subr.bf16.mxu0 0
        %568 = vmatpush1.bf16.msra.mxu0 0
        %569 = vmatprep.subr.bf16.mxu0 0
        %570 = vmatpush1.bf16.msra.mxu0 0
        %571 = vmatprep.subr.bf16.mxu0 0
        %572 = vmatpush1.bf16.msra.mxu0 0
        %573 = vmatprep.subr.bf16.mxu0 0
        %574 = vmatpush1.bf16.msra.mxu0 0
        %575 = vmatprep.subr.bf16.mxu0 0
        %576 = vmatpush1.bf16.msra.mxu0 0
        %577 = vmatprep.subr.bf16.mxu0 0
        %578 = vmatpush1.bf16.msra.mxu0 0
        %579 = vmatprep.subr.bf16.mxu0 0
        %580 = vmatpush1.bf16.msra.mxu0 0
        %581 = vmatprep.subr.bf16.mxu0 0
        %582 = vmatpush1.bf16.msra.mxu0 0
        %583 = vmatprep.mubr.bf16.mxu0 0
        %584 = vmatmul.mubr.bf16.gmra.mrb[0].mxu0 %v471
        %v585 = vpop.f32.mrb[0].mxu0
        %v586 = vadd.f32 0.0, %v585
        %v587 = vpop.f32.mrb[0].mxu0
        %v588 = vpop.f32.mrb[0].mxu0
        %v589 = vadd.f32 0.0, %v588
        %v590 = vpop.f32.mrb[0].mxu0
        %591 = vmatprep.mubr.bf16.mxu0 0
        %592 = vmatmul.mubr.bf16.gmra.mrb[0].mxu0 %v472
        %v593 = vpop.f32.mrb[0].mxu0
        %v594 = vadd.f32 0.0, %v593
        %v595 = vpop.f32.mrb[0].mxu0
        %v596 = vpop.f32.mrb[0].mxu0
        %v597 = vadd.f32 0.0, %v596
        %v598 = vpop.f32.mrb[0].mxu0
        %599 = vmatprep.mubr.bf16.mxu0 0
        %600 = vmatmul.mubr.bf16.gmra.mrb[0].mxu0 %v473
        %v601 = vpop.f32.mrb[0].mxu0
        %v602 = vadd.f32 0.0, %v601
        %v603 = vpop.f32.mrb[0].mxu0
        %v604 = vpop.f32.mrb[0].mxu0
        %v605 = vadd.f32 0.0, %v604
        %v606 = vpop.f32.mrb[0].mxu0
        %607 = vmatprep.mubr.bf16.mxu0 0
        %608 = vmatmul.mubr.bf16.gmra.mrb[0].mxu0 %v474
        %v609 = vpop.f32.mrb[0].mxu0
        %v610 = vadd.f32 0.0, %v609
        %v611 = vpop.f32.mrb[0].mxu0
        %v612 = vpop.f32.mrb[0].mxu0
        %v613 = vadd.f32 0.0, %v612
        %v614 = vpop.f32.mrb[0].mxu0
        %615 = vmatprep.mubr.bf16.mxu0 0
        %616 = vmatmul.mubr.bf16.gmra.mrb[0].mxu0 %v475
        %v617 = vpop.f32.mrb[0].mxu0
        %v618 = vadd.f32 0.0, %v617
        %v619 = vpop.f32.mrb[0].mxu0
        %v620 = vpop.f32.mrb[0].mxu0
        %v621 = vadd.f32 0.0, %v620
        %v622 = vpop.f32.mrb[0].mxu0
        %623 = vmatprep.mubr.bf16.mxu0 0
        %624 = vmatmul.mubr.bf16.gmra.mrb[0].mxu0 %v476
        %v625 = vpop.f32.mrb[0].mxu0
        %v626 = vadd.f32 0.0, %v625
        %v627 = vpop.f32.mrb[0].mxu0
        %v628 = vpop.f32.mrb[0].mxu0
        %v629 = vadd.f32 0.0, %v628
        %v630 = vpop.f32.mrb[0].mxu0
        %631 = vmatprep.mubr.bf16.mxu0 0
        %632 = vmatmul.mubr.bf16.gmra.mrb[0].mxu0 %v477
        %v633 = vpop.f32.mrb[0].mxu0
        %v634 = vadd.f32 0.0, %v633
        %v635 = vpop.f32.mrb[0].mxu0
        %v636 = vpop.f32.mrb[0].mxu0
        %v637 = vadd.f32 0.0, %v636
        %v638 = vpop.f32.mrb[0].mxu0
        %639 = vmatprep.mubr.bf16.mxu0 0
        %640 = vmatmul.mubr.bf16.gmra.mrb[0].mxu0 %v478
        %v641 = vpop.f32.mrb[0].mxu0
        %v642 = vadd.f32 0.0, %v641
        %v643 = vpop.f32.mrb[0].mxu0
        %v644 = vpop.f32.mrb[0].mxu0
        %v645 = vadd.f32 0.0, %v644
        %v646 = vpop.f32.mrb[0].mxu0
        %647 = vmatprep.mubr.bf16.mxu0 0
        %648 = vmatmul.mubr.bf16.gmra.mrb[0].mxu0 %v479
        %v649 = vpop.f32.mrb[0].mxu0
        %v650 = vadd.f32 0.0, %v649
        %v651 = vpop.f32.mrb[0].mxu0
        %v652 = vpop.f32.mrb[0].mxu0
        %v653 = vadd.f32 0.0, %v652
        %v654 = vpop.f32.mrb[0].mxu0
        %655 = vmatprep.mubr.bf16.mxu0 0
        %656 = vmatmul.mubr.bf16.gmra.mrb[0].mxu0 %v480
        %v657 = vpop.f32.mrb[0].mxu0
        %v658 = vadd.f32 0.0, %v657
        %v659 = vpop.f32.mrb[0].mxu0
        %v660 = vpop.f32.mrb[0].mxu0
        %v661 = vadd.f32 0.0, %v660
        %v662 = vpop.f32.mrb[0].mxu0
        %663 = vmatprep.mubr.bf16.mxu0 0
        %664 = vmatmul.mubr.bf16.gmra.mrb[0].mxu0 %v481
        %v665 = vpop.f32.mrb[0].mxu0
        %v666 = vadd.f32 0.0, %v665
        %v667 = vpop.f32.mrb[0].mxu0
        %v668 = vpop.f32.mrb[0].mxu0
        %v669 = vadd.f32 0.0, %v668
        %v670 = vpop.f32.mrb[0].mxu0
        %671 = vmatprep.mubr.bf16.mxu0 0
        %672 = vmatmul.mubr.bf16.gmra.mrb[0].mxu0 %v482
        %v673 = vpop.f32.mrb[0].mxu0
        %v674 = vadd.f32 0.0, %v673
        %v675 = vpop.f32.mrb[0].mxu0
        %v676 = vpop.f32.mrb[0].mxu0
        %v677 = vadd.f32 0.0, %v676
        %v678 = vpop.f32.mrb[0].mxu0
        %679 = vmatprep.mubr.bf16.mxu0 0
        %680 = vmatmul.mubr.bf16.gmra.mrb[0].mxu0 %v483
        %v681 = vpop.f32.mrb[0].mxu0
        %v682 = vadd.f32 0.0, %v681
        %v683 = vpop.f32.mrb[0].mxu0
        %v684 = vpop.f32.mrb[0].mxu0
        %v685 = vadd.f32 0.0, %v684
        %v686 = vpop.f32.mrb[0].mxu0
        %687 = vmatprep.mubr.bf16.mxu0 0
        %688 = vmatmul.mubr.bf16.gmra.mrb[0].mxu0 %v484
        %v689 = vpop.f32.mrb[0].mxu0
        %v690 = vadd.f32 0.0, %v689
        %v691 = vpop.f32.mrb[0].mxu0
        %v692 = vpop.f32.mrb[0].mxu0
        %v693 = vadd.f32 0.0, %v692
        %v694 = vpop.f32.mrb[0].mxu0
        %695 = vmatprep.mubr.bf16.mxu0 0
        %696 = vmatmul.mubr.bf16.gmra.mrb[0].mxu0 %v485
        %v697 = vpop.f32.mrb[0].mxu0
        %v698 = vadd.f32 0.0, %v697
        %v699 = vpop.f32.mrb[0].mxu0
        %v700 = vpop.f32.mrb[0].mxu0
        %v701 = vadd.f32 0.0, %v700
        %v702 = vpop.f32.mrb[0].mxu0
        %703 = vmatprep.mubr.bf16.mxu0 0
        %704 = vmatmul.mubr.bf16.gmra.mrb[0].mxu0 %v486
        %v705 = vpop.f32.mrb[0].mxu0
        %v706 = vadd.f32 0.0, %v705
        %v707 = vpop.f32.mrb[0].mxu0
        %v708 = vpop.f32.mrb[0].mxu0
        %v709 = vadd.f32 0.0, %v708
        %v710 = vpop.f32.mrb[0].mxu0
        %711 = vdwg.mxu0
        %v712 = vadd.f32 %v359, %v586
        %v713 = vadd.f32 %v360, %v589
        %v714 = vadd.f32 %v361, %v594
        %v715 = vadd.f32 %v362, %v597
        %v716 = vadd.f32 %v363, %v602
        %v717 = vadd.f32 %v364, %v605
        %v718 = vadd.f32 %v365, %v610
        %v719 = vadd.f32 %v366, %v613
        %v720 = vadd.f32 %v367, %v618
        %v721 = vadd.f32 %v368, %v621
        %v722 = vadd.f32 %v369, %v626
        %v723 = vadd.f32 %v370, %v629
        %v724 = vadd.f32 %v371, %v634
        %v725 = vadd.f32 %v372, %v637
        %v726 = vadd.f32 %v373, %v642
        %v727 = vadd.f32 %v374, %v645
        %v728 = vadd.f32 %v375, %v650
        %v729 = vadd.f32 %v376, %v653
        %v730 = vadd.f32 %v377, %v658
        %v731 = vadd.f32 %v378, %v661
        %v732 = vadd.f32 %v379, %v666
        %v733 = vadd.f32 %v380, %v669
        %v734 = vadd.f32 %v381, %v674
        %v735 = vadd.f32 %v382, %v677
        %v736 = vadd.f32 %v383, %v682
        %v737 = vadd.f32 %v384, %v685
        %v738 = vadd.f32 %v385, %v690
        %v739 = vadd.f32 %v386, %v693
        %v740 = vadd.f32 %v387, %v698
        %v741 = vadd.f32 %v388, %v701
        %v742 = vadd.f32 %v389, %v706
        %v743 = vadd.f32 %v390, %v709
        %vm744 = vcmask 261120
        %745 = vst.msk [vmem:[#allocation2] sm:$0xff] %vm744, %v712
        %746 = vst.msk [vmem:[#allocation2 + $0x8] sm:$0xff] %vm744, %v713
        %747 = vst.msk [vmem:[#allocation2 + $0x10] sm:$0xff] %vm744, %v714
        %748 = vst.msk [vmem:[#allocation2 + $0x18] sm:$0xff] %vm744, %v715
        %749 = vst.msk [vmem:[#allocation2 + $0x20] sm:$0xff] %vm744, %v716
        %750 = vst.msk [vmem:[#allocation2 + $0x28] sm:$0xff] %vm744, %v717
        %751 = vst.msk [vmem:[#allocation2 + $0x30] sm:$0xff] %vm744, %v718
        %752 = vst.msk [vmem:[#allocation2 + $0x38] sm:$0xff] %vm744, %v719
        %753 = vst.msk [vmem:[#allocation2 + $0x40] sm:$0xff] %vm744, %v720
        %754 = vst.msk [vmem:[#allocation2 + $0x48] sm:$0xff] %vm744, %v721
        %755 = vst.msk [vmem:[#allocation2 + $0x50] sm:$0xff] %vm744, %v722
        %756 = vst.msk [vmem:[#allocation2 + $0x58] sm:$0xff] %vm744, %v723
        %757 = vst.msk [vmem:[#allocation2 + $0x60] sm:$0xff] %vm744, %v724
        %758 = vst.msk [vmem:[#allocation2 + $0x68] sm:$0xff] %vm744, %v725
        %759 = vst.msk [vmem:[#allocation2 + $0x70] sm:$0xff] %vm744, %v726
        %760 = vst.msk [vmem:[#allocation2 + $0x78] sm:$0xff] %vm744, %v727
        %761 = vst.msk [vmem:[#allocation2 + $0x80] sm:$0xff] %vm744, %v728
        %762 = vst.msk [vmem:[#allocation2 + $0x88] sm:$0xff] %vm744, %v729
        %763 = vst.msk [vmem:[#allocation2 + $0x90] sm:$0xff] %vm744, %v730
        %764 = vst.msk [vmem:[#allocation2 + $0x98] sm:$0xff] %vm744, %v731
        %765 = vst.msk [vmem:[#allocation2 + $0xa0] sm:$0xff] %vm744, %v732
        %766 = vst.msk [vmem:[#allocation2 + $0xa8] sm:$0xff] %vm744, %v733
        %767 = vst.msk [vmem:[#allocation2 + $0xb0] sm:$0xff] %vm744, %v734
        %768 = vst.msk [vmem:[#allocation2 + $0xb8] sm:$0xff] %vm744, %v735
        %769 = vst.msk [vmem:[#allocation2 + $0xc0] sm:$0xff] %vm744, %v736
        %770 = vst.msk [vmem:[#allocation2 + $0xc8] sm:$0xff] %vm744, %v737
        %771 = vst.msk [vmem:[#allocation2 + $0xd0] sm:$0xff] %vm744, %v738
        %772 = vst.msk [vmem:[#allocation2 + $0xd8] sm:$0xff] %vm744, %v739
        %773 = vst.msk [vmem:[#allocation2 + $0xe0] sm:$0xff] %vm744, %v740
        %774 = vst.msk [vmem:[#allocation2 + $0xe8] sm:$0xff] %vm744, %v741
        %775 = vst.msk [vmem:[#allocation2 + $0xf0] sm:$0xff] %vm744, %v742
        %776 = vst.msk [vmem:[#allocation2 + $0xf8] sm:$0xff] %vm744, %v743
        // Predicated region
        $region41: #{bottleneck_forward.4} parent=27 // pred_check
          %p777 = pneg %p290
        $region42: #{bottleneck_forward.4} parent=27 // pred_check_branch
          %779 = sbr.rel (%p777) target = $region44
        $region43: #{bottleneck_forward.4} parent=27 // pred_region
          %v780 = vld [vmem:[#allocation2] sm:$0xff]
          %v781 = vld [vmem:[#allocation2 + $0x8] sm:$0xff]
          %v782 = vld [vmem:[#allocation2 + $0x10] sm:$0xff]
          %v783 = vld [vmem:[#allocation2 + $0x18] sm:$0xff]
          %v784 = vld [vmem:[#allocation2 + $0x20] sm:$0xff]
          %v785 = vld [vmem:[#allocation2 + $0x28] sm:$0xff]
          %v786 = vld [vmem:[#allocation2 + $0x30] sm:$0xff]
          %v787 = vld [vmem:[#allocation2 + $0x38] sm:$0xff]
          %v788 = vld [vmem:[#allocation2 + $0x40] sm:$0xff]
          %v789 = vld [vmem:[#allocation2 + $0x48] sm:$0xff]
          %v790 = vld [vmem:[#allocation2 + $0x50] sm:$0xff]
          %v791 = vld [vmem:[#allocation2 + $0x58] sm:$0xff]
          %v792 = vld [vmem:[#allocation2 + $0x60] sm:$0xff]
          %v793 = vld [vmem:[#allocation2 + $0x68] sm:$0xff]
          %v794 = vld [vmem:[#allocation2 + $0x70] sm:$0xff]
          %v795 = vld [vmem:[#allocation2 + $0x78] sm:$0xff]
          %v796 = vld [vmem:[#allocation2 + $0x80] sm:$0xff]
          %v797 = vld [vmem:[#allocation2 + $0x88] sm:$0xff]
          %v798 = vld [vmem:[#allocation2 + $0x90] sm:$0xff]
          %v799 = vld [vmem:[#allocation2 + $0x98] sm:$0xff]
          %v800 = vld [vmem:[#allocation2 + $0xa0] sm:$0xff]
          %v801 = vld [vmem:[#allocation2 + $0xa8] sm:$0xff]
          %v802 = vld [vmem:[#allocation2 + $0xb0] sm:$0xff]
          %v803 = vld [vmem:[#allocation2 + $0xb8] sm:$0xff]
          %v804 = vld [vmem:[#allocation2 + $0xc0] sm:$0xff]
          %v805 = vld [vmem:[#allocation2 + $0xc8] sm:$0xff]
          %v806 = vld [vmem:[#allocation2 + $0xd0] sm:$0xff]
          %v807 = vld [vmem:[#allocation2 + $0xd8] sm:$0xff]
          %v808 = vld [vmem:[#allocation2 + $0xe0] sm:$0xff]
          %v809 = vld [vmem:[#allocation2 + $0xe8] sm:$0xff]
          %v810 = vld [vmem:[#allocation2 + $0xf0] sm:$0xff]
          %v811 = vld [vmem:[#allocation2 + $0xf8] sm:$0xff]
          %v812 = vpack.c.bf16 %v781, %v780
          %v813 = vpack.c.bf16 %v783, %v782
          %v814 = vpack.c.bf16 %v785, %v784
          %v815 = vpack.c.bf16 %v787, %v786
          %v816 = vpack.c.bf16 %v789, %v788
          %v817 = vpack.c.bf16 %v791, %v790
          %v818 = vpack.c.bf16 %v793, %v792
          %v819 = vpack.c.bf16 %v795, %v794
          %v820 = vpack.c.bf16 %v797, %v796
          %v821 = vpack.c.bf16 %v799, %v798
          %v822 = vpack.c.bf16 %v801, %v800
          %v823 = vpack.c.bf16 %v803, %v802
          %v824 = vpack.c.bf16 %v805, %v804
          %v825 = vpack.c.bf16 %v807, %v806
          %v826 = vpack.c.bf16 %v809, %v808
          %v827 = vpack.c.bf16 %v811, %v810
          %v844 = vunpack.c.l.b16 %v812
          %v845 = vunpack.c.h.b16 %v812
          %v846 = vunpack.c.l.b16 %v813
          %v847 = vunpack.c.h.b16 %v813
          %v848 = vunpack.c.l.b16 %v814
          %v849 = vunpack.c.h.b16 %v814
          %v850 = vunpack.c.l.b16 %v815
          %v851 = vunpack.c.h.b16 %v815
          %v852 = vunpack.c.l.b16 %v816
          %v853 = vunpack.c.h.b16 %v816
          %v854 = vunpack.c.l.b16 %v817
          %v855 = vunpack.c.h.b16 %v817
          %v856 = vunpack.c.l.b16 %v818
          %v857 = vunpack.c.h.b16 %v818
          %v858 = vunpack.c.l.b16 %v819
          %v859 = vunpack.c.h.b16 %v819
          %v860 = vunpack.c.l.b16 %v820
          %v861 = vunpack.c.h.b16 %v820
          %v862 = vunpack.c.l.b16 %v821
          %v863 = vunpack.c.h.b16 %v821
          %v864 = vunpack.c.l.b16 %v822
          %v865 = vunpack.c.h.b16 %v822
          %v866 = vunpack.c.l.b16 %v823
          %v867 = vunpack.c.h.b16 %v823
          %v868 = vunpack.c.l.b16 %v824
          %v869 = vunpack.c.h.b16 %v824
          %v870 = vunpack.c.l.b16 %v825
          %v871 = vunpack.c.h.b16 %v825
          %v872 = vunpack.c.l.b16 %v826
          %v873 = vunpack.c.h.b16 %v826
          %v874 = vunpack.c.l.b16 %v827
          %v875 = vunpack.c.h.b16 %v827
          %v876 = vpack.c.b16 %v844, %v844
          %v877 = vpack.c.b16 %v845, %v845
          %v878 = vpack.c.b16 %v846, %v846
          %v879 = vpack.c.b16 %v847, %v847
          %v880 = vpack.c.b16 %v848, %v848
          %v881 = vpack.c.b16 %v849, %v849
          %v882 = vpack.c.b16 %v850, %v850
          %v883 = vpack.c.b16 %v851, %v851
          %v884 = vpack.c.b16 %v852, %v852
          %v885 = vpack.c.b16 %v853, %v853
          %v886 = vpack.c.b16 %v854, %v854
          %v887 = vpack.c.b16 %v855, %v855
          %v888 = vpack.c.b16 %v856, %v856
          %v889 = vpack.c.b16 %v857, %v857
          %v890 = vpack.c.b16 %v858, %v858
          %v891 = vpack.c.b16 %v859, %v859
          %v892 = vpack.c.b16 %v860, %v860
          %v893 = vpack.c.b16 %v861, %v861
          %v894 = vpack.c.b16 %v862, %v862
          %v895 = vpack.c.b16 %v863, %v863
          %v896 = vpack.c.b16 %v864, %v864
          %v897 = vpack.c.b16 %v865, %v865
          %v898 = vpack.c.b16 %v866, %v866
          %v899 = vpack.c.b16 %v867, %v867
          %v900 = vpack.c.b16 %v868, %v868
          %v901 = vpack.c.b16 %v869, %v869
          %v902 = vpack.c.b16 %v870, %v870
          %v903 = vpack.c.b16 %v871, %v871
          %v904 = vpack.c.b16 %v872, %v872
          %v905 = vpack.c.b16 %v873, %v873
          %v906 = vpack.c.b16 %v874, %v874
          %v907 = vpack.c.b16 %v875, %v875
          %vm940 = vcmask 257024
          %941 = vst.msk [vmem:[%s273] sm:$0xf] %vm940, %v876
          %942 = vst.msk [vmem:[%s273 + $0x4] sm:$0xf] %vm940, %v877
          %943 = vst.msk [vmem:[%s273 + $0x8] sm:$0xf] %vm940, %v878
          %944 = vst.msk [vmem:[%s273 + $0xc] sm:$0xf] %vm940, %v879
          %945 = vst.msk [vmem:[%s273 + $0x10] sm:$0xf] %vm940, %v880
          %946 = vst.msk [vmem:[%s273 + $0x14] sm:$0xf] %vm940, %v881
          %947 = vst.msk [vmem:[%s273 + $0x18] sm:$0xf] %vm940, %v882
          %948 = vst.msk [vmem:[%s273 + $0x1c] sm:$0xf] %vm940, %v883
          %949 = vst.msk [vmem:[%s273 + $0x20] sm:$0xf] %vm940, %v884
          %950 = vst.msk [vmem:[%s273 + $0x24] sm:$0xf] %vm940, %v885
          %951 = vst.msk [vmem:[%s273 + $0x28] sm:$0xf] %vm940, %v886
          %952 = vst.msk [vmem:[%s273 + $0x2c] sm:$0xf] %vm940, %v887
          %953 = vst.msk [vmem:[%s273 + $0x30] sm:$0xf] %vm940, %v888
          %954 = vst.msk [vmem:[%s273 + $0x34] sm:$0xf] %vm940, %v889
          %955 = vst.msk [vmem:[%s273 + $0x38] sm:$0xf] %vm940, %v890
          %956 = vst.msk [vmem:[%s273 + $0x3c] sm:$0xf] %vm940, %v891
          %957 = vst.msk [vmem:[%s273 + $0x40] sm:$0xf] %vm940, %v892
          %958 = vst.msk [vmem:[%s273 + $0x44] sm:$0xf] %vm940, %v893
          %959 = vst.msk [vmem:[%s273 + $0x48] sm:$0xf] %vm940, %v894
          %960 = vst.msk [vmem:[%s273 + $0x4c] sm:$0xf] %vm940, %v895
          %961 = vst.msk [vmem:[%s273 + $0x50] sm:$0xf] %vm940, %v896
          %962 = vst.msk [vmem:[%s273 + $0x54] sm:$0xf] %vm940, %v897
          %963 = vst.msk [vmem:[%s273 + $0x58] sm:$0xf] %vm940, %v898
          %964 = vst.msk [vmem:[%s273 + $0x5c] sm:$0xf] %vm940, %v899
          %965 = vst.msk [vmem:[%s273 + $0x60] sm:$0xf] %vm940, %v900
          %966 = vst.msk [vmem:[%s273 + $0x64] sm:$0xf] %vm940, %v901
          %967 = vst.msk [vmem:[%s273 + $0x68] sm:$0xf] %vm940, %v902
          %968 = vst.msk [vmem:[%s273 + $0x6c] sm:$0xf] %vm940, %v903
          %969 = vst.msk [vmem:[%s273 + $0x70] sm:$0xf] %vm940, %v904
          %970 = vst.msk [vmem:[%s273 + $0x74] sm:$0xf] %vm940, %v905
          %971 = vst.msk [vmem:[%s273 + $0x78] sm:$0xf] %vm940, %v906
          %972 = vst.msk [vmem:[%s273 + $0x7c] sm:$0xf] %vm940, %v907
          %v973 = vsel %vm744, %v780, 0.0
          %v974 = vsel %vm744, %v781, 0.0
          %v975 = vadd.f32 %v973, %v974
          %v976 = vsel %vm744, %v782, 0.0
          %v977 = vadd.f32 %v975, %v976
          %v978 = vsel %vm744, %v783, 0.0
          %v979 = vadd.f32 %v977, %v978
          %v980 = vsel %vm744, %v784, 0.0
          %v981 = vadd.f32 %v979, %v980
          %v982 = vsel %vm744, %v785, 0.0
          %v983 = vadd.f32 %v981, %v982
          %v984 = vsel %vm744, %v786, 0.0
          %v985 = vadd.f32 %v983, %v984
          %v986 = vsel %vm744, %v787, 0.0
          %v987 = vadd.f32 %v985, %v986
          %v988 = vsel %vm744, %v788, 0.0
          %v989 = vadd.f32 %v987, %v988
          %v990 = vsel %vm744, %v789, 0.0
          %v991 = vadd.f32 %v989, %v990
          %v992 = vsel %vm744, %v790, 0.0
          %v993 = vadd.f32 %v991, %v992
          %v994 = vsel %vm744, %v791, 0.0
          %v995 = vadd.f32 %v993, %v994
          %v996 = vsel %vm744, %v792, 0.0
          %v997 = vadd.f32 %v995, %v996
          %v998 = vsel %vm744, %v793, 0.0
          %v999 = vadd.f32 %v997, %v998
          %v1000 = vsel %vm744, %v794, 0.0
          %v1001 = vadd.f32 %v999, %v1000
          %v1002 = vsel %vm744, %v795, 0.0
          %v1003 = vadd.f32 %v1001, %v1002
          %v1004 = vsel %vm744, %v796, 0.0
          %v1005 = vadd.f32 %v1003, %v1004
          %v1006 = vsel %vm744, %v797, 0.0
          %v1007 = vadd.f32 %v1005, %v1006
          %v1008 = vsel %vm744, %v798, 0.0
          %v1009 = vadd.f32 %v1007, %v1008
          %v1010 = vsel %vm744, %v799, 0.0
          %v1011 = vadd.f32 %v1009, %v1010
          %v1012 = vsel %vm744, %v800, 0.0
          %v1013 = vadd.f32 %v1011, %v1012
          %v1014 = vsel %vm744, %v801, 0.0
          %v1015 = vadd.f32 %v1013, %v1014
          %v1016 = vsel %vm744, %v802, 0.0
          %v1017 = vadd.f32 %v1015, %v1016
          %v1018 = vsel %vm744, %v803, 0.0
          %v1019 = vadd.f32 %v1017, %v1018
          %v1020 = vsel %vm744, %v804, 0.0
          %v1021 = vadd.f32 %v1019, %v1020
          %v1022 = vsel %vm744, %v805, 0.0
          %v1023 = vadd.f32 %v1021, %v1022
          %v1024 = vsel %vm744, %v806, 0.0
          %v1025 = vadd.f32 %v1023, %v1024
          %v1026 = vsel %vm744, %v807, 0.0
          %v1027 = vadd.f32 %v1025, %v1026
          %v1028 = vsel %vm744, %v808, 0.0
          %v1029 = vadd.f32 %v1027, %v1028
          %v1030 = vsel %vm744, %v809, 0.0
          %v1031 = vadd.f32 %v1029, %v1030
          %v1032 = vsel %vm744, %v810, 0.0
          %v1033 = vadd.f32 %v1031, %v1032
          %v1034 = vsel %vm744, %v811, 0.0
          %v1035 = vadd.f32 %v1033, %v1034
          %v1036 = vrot.slane %v1035, 4
          %v1037 = vadd.f32 %v1035, %v1036
          %v1038 = vrot.slane %v1037, 2
          %v1039 = vadd.f32 %v1037, %v1038
          %v1040 = vrot.slane %v1039, 1
          %v1041 = vadd.f32 %v1039, %v1040
          %vm1042 = vcmask 253952
          %1043 = vst.msk [vmem:[%s279] sm:$0x1] %vm1042, %v1041
          %v1044 = vmul.f32 %v780, %v780
          %v1045 = vmul.f32 %v781, %v781
          %v1046 = vmul.f32 %v782, %v782
          %v1047 = vmul.f32 %v783, %v783
          %v1048 = vmul.f32 %v784, %v784
          %v1049 = vmul.f32 %v785, %v785
          %v1050 = vmul.f32 %v786, %v786
          %v1051 = vmul.f32 %v787, %v787
          %v1052 = vmul.f32 %v788, %v788
          %v1053 = vmul.f32 %v789, %v789
          %v1054 = vmul.f32 %v790, %v790
          %v1055 = vmul.f32 %v791, %v791
          %v1056 = vmul.f32 %v792, %v792
          %v1057 = vmul.f32 %v793, %v793
          %v1058 = vmul.f32 %v794, %v794
          %v1059 = vmul.f32 %v795, %v795
          %v1060 = vmul.f32 %v796, %v796
          %v1061 = vmul.f32 %v797, %v797
          %v1062 = vmul.f32 %v798, %v798
          %v1063 = vmul.f32 %v799, %v799
          %v1064 = vmul.f32 %v800, %v800
          %v1065 = vmul.f32 %v801, %v801
          %v1066 = vmul.f32 %v802, %v802
          %v1067 = vmul.f32 %v803, %v803
          %v1068 = vmul.f32 %v804, %v804
          %v1069 = vmul.f32 %v805, %v805
          %v1070 = vmul.f32 %v806, %v806
          %v1071 = vmul.f32 %v807, %v807
          %v1072 = vmul.f32 %v808, %v808
          %v1073 = vmul.f32 %v809, %v809
          %v1074 = vmul.f32 %v810, %v810
          %v1075 = vmul.f32 %v811, %v811
          %v1076 = vsel %vm744, %v1044, 0.0
          %v1077 = vsel %vm744, %v1045, 0.0
          %v1078 = vadd.f32 %v1076, %v1077
          %v1079 = vsel %vm744, %v1046, 0.0
          %v1080 = vadd.f32 %v1078, %v1079
          %v1081 = vsel %vm744, %v1047, 0.0
          %v1082 = vadd.f32 %v1080, %v1081
          %v1083 = vsel %vm744, %v1048, 0.0
          %v1084 = vadd.f32 %v1082, %v1083
          %v1085 = vsel %vm744, %v1049, 0.0
          %v1086 = vadd.f32 %v1084, %v1085
          %v1087 = vsel %vm744, %v1050, 0.0
          %v1088 = vadd.f32 %v1086, %v1087
          %v1089 = vsel %vm744, %v1051, 0.0
          %v1090 = vadd.f32 %v1088, %v1089
          %v1091 = vsel %vm744, %v1052, 0.0
          %v1092 = vadd.f32 %v1090, %v1091
          %v1093 = vsel %vm744, %v1053, 0.0
          %v1094 = vadd.f32 %v1092, %v1093
          %v1095 = vsel %vm744, %v1054, 0.0
          %v1096 = vadd.f32 %v1094, %v1095
          %v1097 = vsel %vm744, %v1055, 0.0
          %v1098 = vadd.f32 %v1096, %v1097
          %v1099 = vsel %vm744, %v1056, 0.0
          %v1100 = vadd.f32 %v1098, %v1099
          %v1101 = vsel %vm744, %v1057, 0.0
          %v1102 = vadd.f32 %v1100, %v1101
          %v1103 = vsel %vm744, %v1058, 0.0
          %v1104 = vadd.f32 %v1102, %v1103
          %v1105 = vsel %vm744, %v1059, 0.0
          %v1106 = vadd.f32 %v1104, %v1105
          %v1107 = vsel %vm744, %v1060, 0.0
          %v1108 = vadd.f32 %v1106, %v1107
          %v1109 = vsel %vm744, %v1061, 0.0
          %v1110 = vadd.f32 %v1108, %v1109
          %v1111 = vsel %vm744, %v1062, 0.0
          %v1112 = vadd.f32 %v1110, %v1111
          %v1113 = vsel %vm744, %v1063, 0.0
          %v1114 = vadd.f32 %v1112, %v1113
          %v1115 = vsel %vm744, %v1064, 0.0
          %v1116 = vadd.f32 %v1114, %v1115
          %v1117 = vsel %vm744, %v1065, 0.0
          %v1118 = vadd.f32 %v1116, %v1117
          %v1119 = vsel %vm744, %v1066, 0.0
          %v1120 = vadd.f32 %v1118, %v1119
          %v1121 = vsel %vm744, %v1067, 0.0
          %v1122 = vadd.f32 %v1120, %v1121
          %v1123 = vsel %vm744, %v1068, 0.0
          %v1124 = vadd.f32 %v1122, %v1123
          %v1125 = vsel %vm744, %v1069, 0.0
          %v1126 = vadd.f32 %v1124, %v1125
          %v1127 = vsel %vm744, %v1070, 0.0
          %v1128 = vadd.f32 %v1126, %v1127
          %v1129 = vsel %vm744, %v1071, 0.0
          %v1130 = vadd.f32 %v1128, %v1129
          %v1131 = vsel %vm744, %v1072, 0.0
          %v1132 = vadd.f32 %v1130, %v1131
          %v1133 = vsel %vm744, %v1073, 0.0
          %v1134 = vadd.f32 %v1132, %v1133
          %v1135 = vsel %vm744, %v1074, 0.0
          %v1136 = vadd.f32 %v1134, %v1135
          %v1137 = vsel %vm744, %v1075, 0.0
          %v1138 = vadd.f32 %v1136, %v1137
          %v1139 = vrot.slane %v1138, 4
          %v1140 = vadd.f32 %v1138, %v1139
          %v1141 = vrot.slane %v1140, 2
          %v1142 = vadd.f32 %v1140, %v1141
          %v1143 = vrot.slane %v1142, 1
          %v1144 = vadd.f32 %v1142, %v1143
          %1145 = vst.msk [vmem:[%s285] sm:$0x1] %vm1042, %v1144
        $region44: #{bottleneck_forward.4} parent=27 // pred_fallthru
          _
        %s1146 = sand.u32 %s111, 1
        %s1147 = scalar_lea.sflag [#allocation5], %s1146
        %s1148 = sand.u32 %s111, 1
        %s1149 = smul.addr %s1148, 128
        %s1150 = scalar_lea.vmem [#allocation8], %s1149
        %s1151 = sand.u32 %s26, 1
        %s1152 = scalar_lea.sflag [#allocation10], %s1151
        %s1153 = sand.u32 %s139, 1
        %s1154 = scalar_lea.vmem [#allocation9], %s1153
        %s1155 = sand.u32 %s26, 1
        %s1156 = scalar_lea.sflag [#allocation10], %s1155
        %s1157 = sand.u32 %s167, 1
        %s1158 = scalar_lea.vmem [#allocation11], %s1157
        // Predicated region
        $region45: #{bottleneck_forward.4} parent=27 // pred_check
          %p1159 = pneg %p121
        $region46: #{bottleneck_forward.4} parent=27 // pred_check_branch
          %1161 = sbr.rel (%p1159) target = $region48
        $region47: #{bottleneck_forward.4} parent=27 // pred_region
          %s1162 = smul.u32 32, %s31
          %s1164 = ssub.s32 2048, 2048
          %1165 = vsyncadd %s1147, %s1164
          %s1166 = sadd.s32 %s32, %s1162
          %s1167 = smul.addr %s1166, 64
          %s1168 = scalar_lea.hbm %s2, %s1167
          %s1169 = sshll.u32 %s1150, 4
          %s1170 = int_to_ptr.vmem [resolvable:$true] %s1169
          %1175 = dma.vmem_to_hbm [thread:$0]  %s1170, 2048, %s1168, %s1147, 64, 64, 4
        $region48: #{bottleneck_forward.4} parent=27 // pred_fallthru
          _
        // Predicated region
        $region49: #{bottleneck_forward.4} parent=27 // pred_check
          %p1176 = pneg %p149
        $region50: #{bottleneck_forward.4} parent=27 // pred_check_branch
          %1178 = sbr.rel (%p1176) target = $region52
        $region51: #{bottleneck_forward.4} parent=27 // pred_region
          %s1180 = ssub.s32 16, 16
          %1181 = vsyncadd %s1152, %s1180
          %s1182 = sadd.s32 %s32, %s31
          %s1183 = smul.addr %s1182, 16
          %s1184 = scalar_lea.hbm %s3, %s1183
          %s1186 = sshll.u32 %s1154, 4
          %s1187 = int_to_ptr.vmem [resolvable:$true] %s1186
          %1189 = dma.vmem_to_hbm [thread:$0]  %s1187, 16, %s1184, %s1152
        $region52: #{bottleneck_forward.4} parent=27 // pred_fallthru
          _
        // Predicated region
        $region53: #{bottleneck_forward.4} parent=27 // pred_check
          %p1190 = pneg %p177
        $region54: #{bottleneck_forward.4} parent=27 // pred_check_branch
          %1192 = sbr.rel (%p1190) target = $region56
        $region55: #{bottleneck_forward.4} parent=27 // pred_region
          %s1194 = ssub.s32 16, 16
          %1195 = vsyncadd %s1156, %s1194
          %s1196 = sadd.s32 %s32, %s31
          %s1197 = smul.addr %s1196, 16
          %s1198 = scalar_lea.hbm %s4, %s1197
          %s1200 = sshll.u32 %s1158, 4
          %s1201 = int_to_ptr.vmem [resolvable:$true] %s1200
          %1203 = dma.vmem_to_hbm [thread:$0]  %s1201, 16, %s1198, %s1156
        $region56: #{bottleneck_forward.4} parent=27 // pred_fallthru
          _
      $region28: #{bottleneck_forward.4} parent=5 // pred_fallthru
        _
      %p1204 = scmp.le.s32.totalorder 2, %s21
      // Predicated region
      $region57: #{bottleneck_forward.4} parent=5 // pred_check
        %p1205 = pneg %p1204
      $region58: #{bottleneck_forward.4} parent=5 // pred_check_branch
        %1207 = sbr.rel (%p1205) target = $region60
      $region59: #{bottleneck_forward.4} parent=5 // pred_region
        %s1208 = ssub.s32 %s21, 2
        // Predicated region
        $region61: #{bottleneck_forward.4} parent=59 // pred_check
          %p1209 = pneg %p127
        $region62: #{bottleneck_forward.4} parent=59 // pred_check_branch
          %1211 = sbr.rel (%p1209) target = $region64
        $region63: #{bottleneck_forward.4} parent=59 // pred_region
          %s1212 = sand.u32 %s112, 1
          %s1213 = scalar_lea.sflag [#allocation5], %s1212
          %s1214 = sand.u32 %s112, 1
          %s1215 = smul.addr %s1214, 128
          %s1216 = scalar_lea.vmem [#allocation8], %s1215
          %1217 = dma.done %s1213, 2048
        $region64: #{bottleneck_forward.4} parent=59 // pred_fallthru
          _
        // Predicated region
        $region65: #{bottleneck_forward.4} parent=59 // pred_check
          %p1218 = pneg %p155
        $region66: #{bottleneck_forward.4} parent=59 // pred_check_branch
          %1220 = sbr.rel (%p1218) target = $region68
        $region67: #{bottleneck_forward.4} parent=59 // pred_region
          %s1221 = sand.u32 %s27, 1
          %s1222 = scalar_lea.sflag [#allocation10], %s1221
          %s1223 = sand.u32 %s140, 1
          %s1224 = scalar_lea.vmem [#allocation9], %s1223
          %1225 = dma.done %s1222, 16
        $region68: #{bottleneck_forward.4} parent=59 // pred_fallthru
          _
        // Predicated region
        $region69: #{bottleneck_forward.4} parent=59 // pred_check
          %p1226 = pneg %p183
        $region70: #{bottleneck_forward.4} parent=59 // pred_check_branch
          %1228 = sbr.rel (%p1226) target = $region72
        $region71: #{bottleneck_forward.4} parent=59 // pred_region
          %s1229 = sand.u32 %s27, 1
          %s1230 = scalar_lea.sflag [#allocation10], %s1229
          %s1231 = sand.u32 %s168, 1
          %s1232 = scalar_lea.vmem [#allocation11], %s1231
          %1233 = dma.done %s1230, 16
        $region72: #{bottleneck_forward.4} parent=59 // pred_fallthru
          _
      $region60: #{bottleneck_forward.4} parent=5 // pred_fallthru
        _
    $region6: #{bottleneck_forward.4} parent=1 // loop_footer
      %s25 = sadd.s32 1, %s21
    $region7: #{bottleneck_forward.4} parent=1 // loop_footer_branch
      %20 = sbr.rel target = $region3
    $region8: #{bottleneck_forward.4} parent=1 // loop_exit
      _
    %1234 = vsyncpa [#allocation4], 1
    %s1235 = scalar_lea.sflag [#allocation4], 1
    %1236 = vsyncpa %s1235, 1
    %1237 = vsyncpa [#allocation7], 1
    %1238 = vsyncpa [#allocation5], 1
    %s1239 = scalar_lea.sflag [#allocation5], 1
    %1240 = vsyncpa %s1239, 1
    %1241 = vsyncpa [#allocation10], 1
    %s1242 = scalar_lea.sflag [#allocation10], 1
    %1243 = vsyncpa %s1242, 1

// kernel: bottleneck_forward.6
$region0: #{bottleneck_forward.6}
  #allocation0 [shape = 'u32[]', space=smem, size = 0x4, offset = 0x4, fixed_abs, tag = 'smem constant byte address 0x4 - core index']
  #allocation1 [shape = 'u32[144,128]{1,0:T(1,128)}', space=vmem, size = 0x12000, scoped, tag = 'internal scratch']
  #allocation2 [shape = 'f32[256,128]{1,0:T(8,128)}', space=vmem, size = 0x20000, scoped, tag = 'scratch operand']
  %s0 = inlined_call_operand.hbm [shape: bf16[512,32], index: 0, kind: input, shape index: {}]
  %s1 = inlined_call_operand.hbm [shape: bf16[32,128], index: 1, kind: input, shape index: {}]
  %s2 = inlined_call_operand.hbm [shape: f32[1,32], index: 2, kind: input, shape index: {}]
  %s3 = inlined_call_operand.hbm [shape: f32[1,32], index: 3, kind: input, shape index: {}]
  %s4 = inlined_call_operand.hbm [shape: bf16[512,128], index: 4, kind: output, shape index: {0}]
  %s5 = inlined_call_operand.hbm [shape: f32[2,1,128], index: 5, kind: output, shape index: {1}]
  %s6 = inlined_call_operand.hbm [shape: f32[2,1,128], index: 6, kind: output, shape index: {2}]
  %7 = xla_tuple %s4, %s5, %s6
  %s8 = sld [smem:[#allocation0]]
  $region89: #{bottleneck_forward.6} parent=0
    _
  %s10 = ssub.s32 1, %s8
  %s11 = scalar_select 0, %s10, %s8
  $region1: #{bottleneck_forward.6} parent=0
    #allocation3 [shape = 'u8[131072]{0}', space=vmem, size = 0x20000, scoped, tag = 'input window, operand 0']
    #allocation4 [shape = 's32[2]{0}', space=sflag, size = 0x8, scoped, tag = 'scoped memory for bottleneck_forward.6']
    #allocation5 [shape = 's32[2]{0}', space=sflag, size = 0x8, scoped, tag = 'scoped memory for bottleneck_forward.6']
    #allocation6 [shape = 'u8[8192]{0}', space=vmem, size = 0x2000, scoped, tag = 'input window, operand 1, single buffered']
    #allocation7 [shape = 's32[1]{0}', space=sflag, size = 0x4, scoped, tag = 'scoped memory for bottleneck_forward.6']
    #allocation8 [shape = 'u8[512]{0}', space=vmem, size = 0x400, scoped, tag = 'input window, operand 2, single buffered']
    #allocation9 [shape = 'u8[512]{0}', space=vmem, size = 0x400, scoped, tag = 'input window, operand 3, single buffered']
    #allocation10 [shape = 's32[1]{0}', space=sflag, size = 0x4, scoped, tag = 'scoped memory for bottleneck_forward.6']
    #allocation11 [shape = 'u8[131072]{0}', space=vmem, size = 0x20000, scoped, tag = 'output window, operand 0']
    #allocation12 [shape = 'u8[1024]{0}', space=vmem, size = 0x400, scoped, tag = 'output window, operand 1']
    #allocation13 [shape = 's32[2]{0}', space=sflag, size = 0x8, scoped, tag = 'scoped memory for bottleneck_forward.6']
    #allocation14 [shape = 'u8[1024]{0}', space=vmem, size = 0x400, scoped, tag = 'output window, operand 2']
    %12 = vsyncpa [#allocation4], 0
    %s13 = scalar_lea.sflag [#allocation4], 1
    %14 = vsyncpa %s13, 0
    %15 = vsyncpa [#allocation7], 0
    %16 = vsyncpa [#allocation10], 0
    %17 = vsyncpa [#allocation5], 0
    %s18 = scalar_lea.sflag [#allocation5], 1
    %19 = vsyncpa %s18, 0
    %20 = vsyncpa [#allocation13], 0
    %s21 = scalar_lea.sflag [#allocation13], 1
    %22 = vsyncpa %s21, 0
    loop: start=0, step=1, limit=4
    $region2: #{bottleneck_forward.6} parent=1 // loop_pre_header
      _
    $region3: #{bottleneck_forward.6} parent=1 // loop_header
      %s24 = sphi 0, %s28
      %p25 = scmp.ge.s32.totalorder %s24, 4
      %s31 = sphi 0, %s50
      %s32 = sphi 0, %s46
      %s33 = sphi 0, %s42
      %s34 = sphi 0, %s31
      %s35 = sphi 0, %s32
      %s36 = sphi 0, %s33
      %s37 = sphi 0, %s34
      %s38 = sphi 0, %s35
      %s39 = sphi 0, %s36
      %s55 = sphi 0, %s57
      %s58 = sphi 0, %s55
      %s59 = sphi 0, %s58
      %s75 = sphi 0, %s59
      %s83 = sphi 0, %s85
      %s86 = sphi 0, %s83
      %s87 = sphi 0, %s86
      %s103 = sphi 0, %s87
      %s109 = sphi 0, %s111
      %s112 = sphi 0, %s109
      %s113 = sphi 0, %s112
      %s129 = sphi 0, %s113
      %s135 = sphi 0, %s137
      %s138 = sphi 0, %s135
      %s139 = sphi 0, %s138
      %s155 = sphi 0, %s139
      %s163 = sphi 0, %s165
      %s166 = sphi 0, %s163
      %s167 = sphi 0, %s166
      %s183 = sphi 0, %s167
      %s191 = sphi 0, %s193
      %s194 = sphi 0, %s191
      %s195 = sphi 0, %s194
      %s211 = sphi 0, %s195
      %s219 = sphi 0, %s221
      %s222 = sphi 0, %s219
      %s223 = sphi 0, %s222
      %s239 = sphi 0, %s223
    $region4: #{bottleneck_forward.6} parent=1 // loop_header_branch
      %27 = sbr.rel (%p25) target = $region8
    $region5: #{bottleneck_forward.6} parent=1 // loop_body
      %s29 = ssub.s32 %s24, 1
      %s30 = ssub.s32 %s24, 2
      %s40 = sadd.s32 1, %s33
      %p41 = scmp.ge.s32.totalorder %s40, 1
      %s42 = scalar_select %p41, 0, %s40
      %s43 = sadd.s32 1, %s32
      %s44 = scalar_select %p41, %s43, %s32
      %p45 = scmp.ge.s32.totalorder %s44, 1
      %s46 = scalar_select %p45, 0, %s44
      %s47 = sadd.s32 1, %s31
      %s48 = scalar_select %p45, %s47, %s31
      %p49 = scmp.ge.s32.totalorder %s48, 2
      %s50 = scalar_select %p49, 0, %s48
      %s51 = ssub.s32 %s31, %s50
      %s52 = ssub.s32 %s33, %s42
      %s53 = sor.u32 %s51, %s52
      %p54 = scmp.eq.s32.totalorder %s53, 0
      %s56 = sadd.s32 %s55, 1
      %s57 = scalar_select %p54, %s55, %s56
      %p60 = pneg %p54
      %p61 = scmp.eq.s32.totalorder %s24, 1
      %p62 = por %p60, %p61
      %p63 = scmp.ne.s32.totalorder %s55, %s58
      %p64 = scmp.eq.s32.totalorder %s24, 0
      %p65 = por %p63, %p64
      %p66 = scmp.ne.s32.totalorder %s55, %s58
      %p67 = scmp.eq.s32.totalorder %s29, 1
      %p68 = por %p66, %p67
      %p69 = scmp.ne.s32.totalorder %s58, %s59
      %p70 = scmp.eq.s32.totalorder %s29, 0
      %p71 = por %p69, %p70
      %p72 = scmp.ne.s32.totalorder %s58, %s59
      %p73 = scmp.eq.s32.totalorder %s30, 1
      %p74 = por %p72, %p73
      %p76 = scmp.ne.s32.totalorder %s59, %s75
      %p77 = scmp.eq.s32.totalorder %s30, 0
      %p78 = por %p76, %p77
      %s79 = ssub.s32 %s33, %s42
      %s80 = ssub.s32 %s32, %s46
      %s81 = sor.u32 %s79, %s80
      %p82 = scmp.eq.s32.totalorder %s81, 0
      %s84 = sadd.s32 %s83, 1
      %s85 = scalar_select %p82, %s83, %s84
      %p88 = pneg %p82
      %p89 = scmp.eq.s32.totalorder %s24, 1
      %p90 = por %p88, %p89
      %p91 = scmp.ne.s32.totalorder %s83, %s86
      %p92 = scmp.eq.s32.totalorder %s24, 0
      %p93 = por %p91, %p92
      %p94 = scmp.ne.s32.totalorder %s83, %s86
      %p95 = scmp.eq.s32.totalorder %s29, 1
      %p96 = por %p94, %p95
      %p97 = scmp.ne.s32.totalorder %s86, %s87
      %p98 = scmp.eq.s32.totalorder %s29, 0
      %p99 = por %p97, %p98
      %p100 = scmp.ne.s32.totalorder %s86, %s87
      %p101 = scmp.eq.s32.totalorder %s30, 1
      %p102 = por %p100, %p101
      %p104 = scmp.ne.s32.totalorder %s87, %s103
      %p105 = scmp.eq.s32.totalorder %s30, 0
      %p106 = por %p104, %p105
      %s107 = ssub.s32 %s33, %s42
      %p108 = scmp.eq.s32.totalorder %s107, 0
      %s110 = sadd.s32 %s109, 1
      %s111 = scalar_select %p108, %s109, %s110
      %p114 = pneg %p108
      %p115 = scmp.eq.s32.totalorder %s24, 1
      %p116 = por %p114, %p115
      %p117 = scmp.ne.s32.totalorder %s109, %s112
      %p118 = scmp.eq.s32.totalorder %s24, 0
      %p119 = por %p117, %p118
      %p120 = scmp.ne.s32.totalorder %s109, %s112
      %p121 = scmp.eq.s32.totalorder %s29, 1
      %p122 = por %p120, %p121
      %p123 = scmp.ne.s32.totalorder %s112, %s113
      %p124 = scmp.eq.s32.totalorder %s29, 0
      %p125 = por %p123, %p124
      %p126 = scmp.ne.s32.totalorder %s112, %s113
      %p127 = scmp.eq.s32.totalorder %s30, 1
      %p128 = por %p126, %p127
      %p130 = scmp.ne.s32.totalorder %s113, %s129
      %p131 = scmp.eq.s32.totalorder %s30, 0
      %p132 = por %p130, %p131
      %s133 = ssub.s32 %s33, %s42
      %p134 = scmp.eq.s32.totalorder %s133, 0
      %s136 = sadd.s32 %s135, 1
      %s137 = scalar_select %p134, %s135, %s136
      %p140 = pneg %p134
      %p141 = scmp.eq.s32.totalorder %s24, 1
      %p142 = por %p140, %p141
      %p143 = scmp.ne.s32.totalorder %s135, %s138
      %p144 = scmp.eq.s32.totalorder %s24, 0
      %p145 = por %p143, %p144
      %p146 = scmp.ne.s32.totalorder %s135, %s138
      %p147 = scmp.eq.s32.totalorder %s29, 1
      %p148 = por %p146, %p147
      %p149 = scmp.ne.s32.totalorder %s138, %s139
      %p150 = scmp.eq.s32.totalorder %s29, 0
      %p151 = por %p149, %p150
      %p152 = scmp.ne.s32.totalorder %s138, %s139
      %p153 = scmp.eq.s32.totalorder %s30, 1
      %p154 = por %p152, %p153
      %p156 = scmp.ne.s32.totalorder %s139, %s155
      %p157 = scmp.eq.s32.totalorder %s30, 0
      %p158 = por %p156, %p157
      %s159 = ssub.s32 %s31, %s50
      %s160 = ssub.s32 %s32, %s46
      %s161 = sor.u32 %s159, %s160
      %p162 = scmp.eq.s32.totalorder %s161, 0
      %s164 = sadd.s32 %s163, 1
      %s165 = scalar_select %p162, %s163, %s164
      %p168 = pneg %p162
      %p169 = scmp.eq.s32.totalorder %s24, 1
      %p170 = por %p168, %p169
      %p171 = scmp.ne.s32.totalorder %s163, %s166
      %p172 = scmp.eq.s32.totalorder %s24, 0
      %p173 = por %p171, %p172
      %p174 = scmp.ne.s32.totalorder %s163, %s166
      %p175 = scmp.eq.s32.totalorder %s29, 1
      %p176 = por %p174, %p175
      %p177 = scmp.ne.s32.totalorder %s166, %s167
      %p178 = scmp.eq.s32.totalorder %s29, 0
      %p179 = por %p177, %p178
      %p180 = scmp.ne.s32.totalorder %s166, %s167
      %p181 = scmp.eq.s32.totalorder %s30, 1
      %p182 = por %p180, %p181
      %p184 = scmp.ne.s32.totalorder %s167, %s183
      %p185 = scmp.eq.s32.totalorder %s30, 0
      %p186 = por %p184, %p185
      %s187 = ssub.s32 %s31, %s50
      %s188 = ssub.s32 %s32, %s46
      %s189 = sor.u32 %s187, %s188
      %p190 = scmp.eq.s32.totalorder %s189, 0
      %s192 = sadd.s32 %s191, 1
      %s193 = scalar_select %p190, %s191, %s192
      %p196 = pneg %p190
      %p197 = scmp.eq.s32.totalorder %s24, 1
      %p198 = por %p196, %p197
      %p199 = scmp.ne.s32.totalorder %s191, %s194
      %p200 = scmp.eq.s32.totalorder %s24, 0
      %p201 = por %p199, %p200
      %p202 = scmp.ne.s32.totalorder %s191, %s194
      %p203 = scmp.eq.s32.totalorder %s29, 1
      %p204 = por %p202, %p203
      %p205 = scmp.ne.s32.totalorder %s194, %s195
      %p206 = scmp.eq.s32.totalorder %s29, 0
      %p207 = por %p205, %p206
      %p208 = scmp.ne.s32.totalorder %s194, %s195
      %p209 = scmp.eq.s32.totalorder %s30, 1
      %p210 = por %p208, %p209
      %p212 = scmp.ne.s32.totalorder %s195, %s211
      %p213 = scmp.eq.s32.totalorder %s30, 0
      %p214 = por %p212, %p213
      %s215 = ssub.s32 %s31, %s50
      %s216 = ssub.s32 %s32, %s46
      %s217 = sor.u32 %s215, %s216
      %p218 = scmp.eq.s32.totalorder %s217, 0
      %s220 = sadd.s32 %s219, 1
      %s221 = scalar_select %p218, %s219, %s220
      %p224 = pneg %p218
      %p225 = scmp.eq.s32.totalorder %s24, 1
      %p226 = por %p224, %p225
      %p227 = scmp.ne.s32.totalorder %s219, %s222
      %p228 = scmp.eq.s32.totalorder %s24, 0
      %p229 = por %p227, %p228
      %p230 = scmp.ne.s32.totalorder %s219, %s222
      %p231 = scmp.eq.s32.totalorder %s29, 1
      %p232 = por %p230, %p231
      %p233 = scmp.ne.s32.totalorder %s222, %s223
      %p234 = scmp.eq.s32.totalorder %s29, 0
      %p235 = por %p233, %p234
      %p236 = scmp.ne.s32.totalorder %s222, %s223
      %p237 = scmp.eq.s32.totalorder %s30, 1
      %p238 = por %p236, %p237
      %p240 = scmp.ne.s32.totalorder %s223, %s239
      %p241 = scmp.eq.s32.totalorder %s30, 0
      %p242 = por %p240, %p241
      %p243 = scmp.le.s32.totalorder 1, %s24
      %p244 = scmp.lt.s32.totalorder %s24, 3
      %p245 = pnand %p243, %p244
      %p246 = pneg %p245
      // Predicated region
      $region9: #{bottleneck_forward.6} parent=5 // pred_check
        _
      $region10: #{bottleneck_forward.6} parent=5 // pred_check_branch
        %248 = sbr.rel (%p245) target = $region12
      $region11: #{bottleneck_forward.6} parent=5 // pred_region
        %s249 = ssub.s32 %s24, 1
        // Predicated region
        $region13: #{bottleneck_forward.6} parent=11 // pred_check
          %p250 = pneg %p99
        $region14: #{bottleneck_forward.6} parent=11 // pred_check_branch
          %252 = sbr.rel (%p250) target = $region16
        $region15: #{bottleneck_forward.6} parent=11 // pred_region
          %s253 = smul.u32 4, %s36
          %s255 = ssub.s32 256, 256
          %256 = vsyncadd [#allocation7], %s255
          %s257 = sadd.s32 %s35, %s253
          %s258 = smul.addr %s257, 64
          %s259 = scalar_lea.hbm %s1, %s258
          %s260 = sshll.u32 [#allocation6], 4
          %s261 = int_to_ptr.vmem [resolvable:$true] %s260
          %266 = dma.hbm_to_vmem [thread:$0]  %s259, 256, %s261, [#allocation7], 64, 64, 4
        $region16: #{bottleneck_forward.6} parent=11 // pred_fallthru
          _
        // Predicated region
        $region17: #{bottleneck_forward.6} parent=11 // pred_check
          %p267 = pneg %p125
        $region18: #{bottleneck_forward.6} parent=11 // pred_check_branch
          %269 = sbr.rel (%p267) target = $region20
        $region19: #{bottleneck_forward.6} parent=11 // pred_region
          %s271 = ssub.s32 16, 16
          %272 = vsyncadd [#allocation7], %s271
          %s273 = smul.addr %s36, 16
          %s274 = scalar_lea.hbm %s2, %s273
          %s276 = sshll.u32 [#allocation8], 4
          %s277 = int_to_ptr.vmem [resolvable:$true] %s276
          %279 = dma.hbm_to_vmem [thread:$0]  %s274, 16, %s277, [#allocation7]
        $region20: #{bottleneck_forward.6} parent=11 // pred_fallthru
          _
        // Predicated region
        $region21: #{bottleneck_forward.6} parent=11 // pred_check
          %p280 = pneg %p151
        $region22: #{bottleneck_forward.6} parent=11 // pred_check_branch
          %282 = sbr.rel (%p280) target = $region24
        $region23: #{bottleneck_forward.6} parent=11 // pred_region
          %s284 = ssub.s32 16, 16
          %285 = vsyncadd [#allocation10], %s284
          %s286 = smul.addr %s36, 16
          %s287 = scalar_lea.hbm %s3, %s286
          %s289 = sshll.u32 [#allocation9], 4
          %s290 = int_to_ptr.vmem [resolvable:$true] %s289
          %292 = dma.hbm_to_vmem [thread:$0]  %s287, 16, %s290, [#allocation10]
        $region24: #{bottleneck_forward.6} parent=11 // pred_fallthru
          _
      $region12: #{bottleneck_forward.6} parent=5 // pred_fallthru
        _
      %p293 = scmp.lt.s32.totalorder %s24, 2
      // Predicated region
      $region25: #{bottleneck_forward.6} parent=5 // pred_check
        %p294 = pneg %p293
      $region26: #{bottleneck_forward.6} parent=5 // pred_check_branch
        %296 = sbr.rel (%p294) target = $region28
      $region27: #{bottleneck_forward.6} parent=5 // pred_region
        // Predicated region
        $region29: #{bottleneck_forward.6} parent=27 // pred_check
          %p297 = pneg %p65
        $region30: #{bottleneck_forward.6} parent=27 // pred_check_branch
          %299 = sbr.rel (%p297) target = $region32
        $region31: #{bottleneck_forward.6} parent=27 // pred_region
          %s300 = sand.u32 %s55, 1
          %s301 = scalar_lea.sflag [#allocation4], %s300
          %s302 = sand.u32 %s55, 1
          %s303 = smul.addr %s302, 128
          %s304 = scalar_lea.vmem [#allocation3], %s303
          %s305 = smul.u32 32, %s31
          %s307 = ssub.s32 2048, 2048
          %308 = vsyncadd %s301, %s307
          %s309 = sadd.s32 %s33, %s305
          %s310 = smul.addr %s309, 64
          %s311 = scalar_lea.hbm %s0, %s310
          %s312 = sshll.u32 %s304, 4
          %s313 = int_to_ptr.vmem [resolvable:$true] %s312
          %318 = dma.hbm_to_vmem [thread:$0]  %s311, 2048, %s313, %s301, 64, 64, 4
        $region32: #{bottleneck_forward.6} parent=27 // pred_fallthru
          _
      $region28: #{bottleneck_forward.6} parent=5 // pred_fallthru
        _
      %p319 = scmp.le.s32.totalorder 1, %s24
      %p320 = scmp.lt.s32.totalorder %s24, 3
      %p321 = pnand %p319, %p320
      %p322 = pneg %p321
      // Predicated region
      $region33: #{bottleneck_forward.6} parent=5 // pred_check
        _
      $region34: #{bottleneck_forward.6} parent=5 // pred_check_branch
        %324 = sbr.rel (%p321) target = $region36
      $region35: #{bottleneck_forward.6} parent=5 // pred_region
        %s325 = ssub.s32 %s24, 1
        %s326 = sand.u32 %s58, 1
        %s327 = scalar_lea.sflag [#allocation4], %s326
        %s328 = sand.u32 %s58, 1
        %s329 = smul.addr %s328, 128
        %s330 = scalar_lea.vmem [#allocation3], %s329
        // Predicated region
        $region37: #{bottleneck_forward.6} parent=35 // pred_check
          %p331 = pneg %p71
        $region38: #{bottleneck_forward.6} parent=35 // pred_check_branch
          %333 = sbr.rel (%p331) target = $region40
        $region39: #{bottleneck_forward.6} parent=35 // pred_region
          %334 = dma.done %s327, 2048
        $region40: #{bottleneck_forward.6} parent=35 // pred_fallthru
          _
        // Predicated region
        $region41: #{bottleneck_forward.6} parent=35 // pred_check
          %p335 = pneg %p99
        $region42: #{bottleneck_forward.6} parent=35 // pred_check_branch
          %337 = sbr.rel (%p335) target = $region44
        $region43: #{bottleneck_forward.6} parent=35 // pred_region
          %338 = dma.done [#allocation7], 256
        $region44: #{bottleneck_forward.6} parent=35 // pred_fallthru
          _
        // Predicated region
        $region45: #{bottleneck_forward.6} parent=35 // pred_check
          %p339 = pneg %p125
        $region46: #{bottleneck_forward.6} parent=35 // pred_check_branch
          %341 = sbr.rel (%p339) target = $region48
        $region47: #{bottleneck_forward.6} parent=35 // pred_region
          %342 = dma.done [#allocation7], 16
        $region48: #{bottleneck_forward.6} parent=35 // pred_fallthru
          _
        // Predicated region
        $region49: #{bottleneck_forward.6} parent=35 // pred_check
          %p343 = pneg %p151
        $region50: #{bottleneck_forward.6} parent=35 // pred_check_branch
          %345 = sbr.rel (%p343) target = $region52
        $region51: #{bottleneck_forward.6} parent=35 // pred_region
          %346 = dma.done [#allocation10], 16
        $region52: #{bottleneck_forward.6} parent=35 // pred_fallthru
          _
        %s347 = sand.u32 %s58, 1
        %s348 = scalar_lea.sflag [#allocation4], %s347
        %s349 = sand.u32 %s58, 1
        %s350 = smul.addr %s349, 128
        %s351 = scalar_lea.vmem [#allocation3], %s350
        %p352 = pneg %p71
        %p353 = pneg %p68
        %p354 = pneg %p99
        %p355 = pneg %p96
        %p356 = pneg %p125
        %p357 = pneg %p122
        %p358 = pneg %p151
        %p359 = pneg %p148
        %p360 = pneg %p179
        %p361 = pneg %p176
        %s362 = sand.u32 %s166, 1
        %s363 = scalar_lea.sflag [#allocation5], %s362
        %s364 = sand.u32 %s166, 1
        %s365 = smul.addr %s364, 128
        %s366 = scalar_lea.vmem [#allocation11], %s365
        %p367 = pneg %p207
        %p368 = pneg %p204
        %s369 = sand.u32 %s29, 1
        %s370 = scalar_lea.sflag [#allocation13], %s369
        %s371 = sand.u32 %s194, 1
        %s372 = scalar_lea.vmem [#allocation12], %s371
        %p373 = pneg %p235
        %p374 = pneg %p232
        %s375 = sand.u32 %s29, 1
        %s376 = scalar_lea.sflag [#allocation13], %s375
        %s377 = sand.u32 %s222, 1
        %s378 = scalar_lea.vmem [#allocation14], %s377
        %s379 = smul.u32 32, %s34
        %s380 = smul.u32 4, %s36
        %s381 = smul.u32 32, %s34
        %p383 = scmp.eq.s32.totalorder %s36, 0
        // Predicated region
        $region53: #{bottleneck_forward.6} parent=35 // pred_check
          %p384 = pneg %p383
        $region54: #{bottleneck_forward.6} parent=35 // pred_check_branch
          %386 = sbr.rel (%p384) target = $region56
        $region55: #{bottleneck_forward.6} parent=35 // pred_region
          %387 = vst [vmem:[#allocation2] sm:$0xff] 0.0
          %388 = vst [vmem:[#allocation2 + $0x8] sm:$0xff] 0.0
          %389 = vst [vmem:[#allocation2 + $0x10] sm:$0xff] 0.0
          %390 = vst [vmem:[#allocation2 + $0x18] sm:$0xff] 0.0
          %391 = vst [vmem:[#allocation2 + $0x20] sm:$0xff] 0.0
          %392 = vst [vmem:[#allocation2 + $0x28] sm:$0xff] 0.0
          %393 = vst [vmem:[#allocation2 + $0x30] sm:$0xff] 0.0
          %394 = vst [vmem:[#allocation2 + $0x38] sm:$0xff] 0.0
          %395 = vst [vmem:[#allocation2 + $0x40] sm:$0xff] 0.0
          %396 = vst [vmem:[#allocation2 + $0x48] sm:$0xff] 0.0
          %397 = vst [vmem:[#allocation2 + $0x50] sm:$0xff] 0.0
          %398 = vst [vmem:[#allocation2 + $0x58] sm:$0xff] 0.0
          %399 = vst [vmem:[#allocation2 + $0x60] sm:$0xff] 0.0
          %400 = vst [vmem:[#allocation2 + $0x68] sm:$0xff] 0.0
          %401 = vst [vmem:[#allocation2 + $0x70] sm:$0xff] 0.0
          %402 = vst [vmem:[#allocation2 + $0x78] sm:$0xff] 0.0
          %403 = vst [vmem:[#allocation2 + $0x80] sm:$0xff] 0.0
          %404 = vst [vmem:[#allocation2 + $0x88] sm:$0xff] 0.0
          %405 = vst [vmem:[#allocation2 + $0x90] sm:$0xff] 0.0
          %406 = vst [vmem:[#allocation2 + $0x98] sm:$0xff] 0.0
          %407 = vst [vmem:[#allocation2 + $0xa0] sm:$0xff] 0.0
          %408 = vst [vmem:[#allocation2 + $0xa8] sm:$0xff] 0.0
          %409 = vst [vmem:[#allocation2 + $0xb0] sm:$0xff] 0.0
          %410 = vst [vmem:[#allocation2 + $0xb8] sm:$0xff] 0.0
          %411 = vst [vmem:[#allocation2 + $0xc0] sm:$0xff] 0.0
          %412 = vst [vmem:[#allocation2 + $0xc8] sm:$0xff] 0.0
          %413 = vst [vmem:[#allocation2 + $0xd0] sm:$0xff] 0.0
          %414 = vst [vmem:[#allocation2 + $0xd8] sm:$0xff] 0.0
          %415 = vst [vmem:[#allocation2 + $0xe0] sm:$0xff] 0.0
          %416 = vst [vmem:[#allocation2 + $0xe8] sm:$0xff] 0.0
          %417 = vst [vmem:[#allocation2 + $0xf0] sm:$0xff] 0.0
          %418 = vst [vmem:[#allocation2 + $0xf8] sm:$0xff] 0.0
        $region56: #{bottleneck_forward.6} parent=35 // pred_fallthru
          _
        %v419 = vld [vmem:[%s330] sm:$0xf]
        %v420 = vld [vmem:[%s330 + $0x4] sm:$0xf]
        %v421 = vld [vmem:[%s330 + $0x8] sm:$0xf]
        %v422 = vld [vmem:[%s330 + $0xc] sm:$0xf]
        %v423 = vld [vmem:[%s330 + $0x10] sm:$0xf]
        %v424 = vld [vmem:[%s330 + $0x14] sm:$0xf]
        %v425 = vld [vmem:[%s330 + $0x18] sm:$0xf]
        %v426 = vld [vmem:[%s330 + $0x1c] sm:$0xf]
        %v427 = vld [vmem:[%s330 + $0x20] sm:$0xf]
        %v428 = vld [vmem:[%s330 + $0x24] sm:$0xf]
        %v429 = vld [vmem:[%s330 + $0x28] sm:$0xf]
        %v430 = vld [vmem:[%s330 + $0x2c] sm:$0xf]
        %v431 = vld [vmem:[%s330 + $0x30] sm:$0xf]
        %v432 = vld [vmem:[%s330 + $0x34] sm:$0xf]
        %v433 = vld [vmem:[%s330 + $0x38] sm:$0xf]
        %v434 = vld [vmem:[%s330 + $0x3c] sm:$0xf]
        %v435 = vld [vmem:[%s330 + $0x40] sm:$0xf]
        %v436 = vld [vmem:[%s330 + $0x44] sm:$0xf]
        %v437 = vld [vmem:[%s330 + $0x48] sm:$0xf]
        %v438 = vld [vmem:[%s330 + $0x4c] sm:$0xf]
        %v439 = vld [vmem:[%s330 + $0x50] sm:$0xf]
        %v440 = vld [vmem:[%s330 + $0x54] sm:$0xf]
        %v441 = vld [vmem:[%s330 + $0x58] sm:$0xf]
        %v442 = vld [vmem:[%s330 + $0x5c] sm:$0xf]
        %v443 = vld [vmem:[%s330 + $0x60] sm:$0xf]
        %v444 = vld [vmem:[%s330 + $0x64] sm:$0xf]
        %v445 = vld [vmem:[%s330 + $0x68] sm:$0xf]
        %v446 = vld [vmem:[%s330 + $0x6c] sm:$0xf]
        %v447 = vld [vmem:[%s330 + $0x70] sm:$0xf]
        %v448 = vld [vmem:[%s330 + $0x74] sm:$0xf]
        %v449 = vld [vmem:[%s330 + $0x78] sm:$0xf]
        %v450 = vld [vmem:[%s330 + $0x7c] sm:$0xf]
        %v451 = vunpack.c.l.bf16 %v419
        %v452 = vunpack.c.l.bf16 %v420
        %v453 = vunpack.c.l.bf16 %v421
        %v454 = vunpack.c.l.bf16 %v422
        %v455 = vunpack.c.l.bf16 %v423
        %v456 = vunpack.c.l.bf16 %v424
        %v457 = vunpack.c.l.bf16 %v425
        %v458 = vunpack.c.l.bf16 %v426
        %v459 = vunpack.c.l.bf16 %v427
        %v460 = vunpack.c.l.bf16 %v428
        %v461 = vunpack.c.l.bf16 %v429
        %v462 = vunpack.c.l.bf16 %v430
        %v463 = vunpack.c.l.bf16 %v431
        %v464 = vunpack.c.l.bf16 %v432
        %v465 = vunpack.c.l.bf16 %v433
        %v466 = vunpack.c.l.bf16 %v434
        %v467 = vunpack.c.l.bf16 %v435
        %v468 = vunpack.c.l.bf16 %v436
        %v469 = vunpack.c.l.bf16 %v437
        %v470 = vunpack.c.l.bf16 %v438
        %v471 = vunpack.c.l.bf16 %v439
        %v472 = vunpack.c.l.bf16 %v440
        %v473 = vunpack.c.l.bf16 %v441
        %v474 = vunpack.c.l.bf16 %v442
        %v475 = vunpack.c.l.bf16 %v443
        %v476 = vunpack.c.l.bf16 %v444
        %v477 = vunpack.c.l.bf16 %v445
        %v478 = vunpack.c.l.bf16 %v446
        %v479 = vunpack.c.l.bf16 %v447
        %v480 = vunpack.c.l.bf16 %v448
        %v481 = vunpack.c.l.bf16 %v449
        %v482 = vunpack.c.l.bf16 %v450
        %v483 = vld [vmem:[#allocation8] sm:$0x1]
        %v485 = vlaneseq
        %v486 = vshrl.u32 %v485, 7
        %v487 = vsub.s32 0, %v486
        %v488 = vrot.slane %v483, %v487
        %v490 = vmul.f32 %v451, %v488
        %v491 = vmul.f32 %v452, %v488
        %v492 = vmul.f32 %v453, %v488
        %v493 = vmul.f32 %v454, %v488
        %v494 = vmul.f32 %v455, %v488
        %v495 = vmul.f32 %v456, %v488
        %v496 = vmul.f32 %v457, %v488
        %v497 = vmul.f32 %v458, %v488
        %v498 = vmul.f32 %v459, %v488
        %v499 = vmul.f32 %v460, %v488
        %v500 = vmul.f32 %v461, %v488
        %v501 = vmul.f32 %v462, %v488
        %v502 = vmul.f32 %v463, %v488
        %v503 = vmul.f32 %v464, %v488
        %v504 = vmul.f32 %v465, %v488
        %v505 = vmul.f32 %v466, %v488
        %v506 = vmul.f32 %v467, %v488
        %v507 = vmul.f32 %v468, %v488
        %v508 = vmul.f32 %v469, %v488
        %v509 = vmul.f32 %v470, %v488
        %v510 = vmul.f32 %v471, %v488
        %v511 = vmul.f32 %v472, %v488
        %v512 = vmul.f32 %v473, %v488
        %v513 = vmul.f32 %v474, %v488
        %v514 = vmul.f32 %v475, %v488
        %v515 = vmul.f32 %v476, %v488
        %v516 = vmul.f32 %v477, %v488
        %v517 = vmul.f32 %v478, %v488
        %v518 = vmul.f32 %v479, %v488
        %v519 = vmul.f32 %v480, %v488
        %v520 = vmul.f32 %v481, %v488
        %v521 = vmul.f32 %v482, %v488
        %v522 = vld [vmem:[#allocation9] sm:$0x1]
        %v524 = vlaneseq
        %v525 = vshrl.u32 %v524, 7
        %v526 = vsub.s32 0, %v525
        %v527 = vrot.slane %v522, %v526
        %v529 = vadd.f32 %v490, %v527
        %v530 = vadd.f32 %v491, %v527
        %v531 = vadd.f32 %v492, %v527
        %v532 = vadd.f32 %v493, %v527
        %v533 = vadd.f32 %v494, %v527
        %v534 = vadd.f32 %v495, %v527
        %v535 = vadd.f32 %v496, %v527
        %v536 = vadd.f32 %v497, %v527
        %v537 = vadd.f32 %v498, %v527
        %v538 = vadd.f32 %v499, %v527
        %v539 = vadd.f32 %v500, %v527
        %v540 = vadd.f32 %v501, %v527
        %v541 = vadd.f32 %v502, %v527
        %v542 = vadd.f32 %v503, %v527
        %v543 = vadd.f32 %v504, %v527
        %v544 = vadd.f32 %v505, %v527
        %v545 = vadd.f32 %v506, %v527
        %v546 = vadd.f32 %v507, %v527
        %v547 = vadd.f32 %v508, %v527
        %v548 = vadd.f32 %v509, %v527
        %v549 = vadd.f32 %v510, %v527
        %v550 = vadd.f32 %v511, %v527
        %v551 = vadd.f32 %v512, %v527
        %v552 = vadd.f32 %v513, %v527
        %v553 = vadd.f32 %v514, %v527
        %v554 = vadd.f32 %v515, %v527
        %v555 = vadd.f32 %v516, %v527
        %v556 = vadd.f32 %v517, %v527
        %v557 = vadd.f32 %v518, %v527
        %v558 = vadd.f32 %v519, %v527
        %v559 = vadd.f32 %v520, %v527
        %v560 = vadd.f32 %v521, %v527
        %v561 = vmax.f32 %v529, 0.0
        %v562 = vmax.f32 %v530, 0.0
        %v563 = vmax.f32 %v531, 0.0
        %v564 = vmax.f32 %v532, 0.0
        %v565 = vmax.f32 %v533, 0.0
        %v566 = vmax.f32 %v534, 0.0
        %v567 = vmax.f32 %v535, 0.0
        %v568 = vmax.f32 %v536, 0.0
        %v569 = vmax.f32 %v537, 0.0
        %v570 = vmax.f32 %v538, 0.0
        %v571 = vmax.f32 %v539, 0.0
        %v572 = vmax.f32 %v540, 0.0
        %v573 = vmax.f32 %v541, 0.0
        %v574 = vmax.f32 %v542, 0.0
        %v575 = vmax.f32 %v543, 0.0
        %v576 = vmax.f32 %v544, 0.0
        %v577 = vmax.f32 %v545, 0.0
        %v578 = vmax.f32 %v546, 0.0
        %v579 = vmax.f32 %v547, 0.0
        %v580 = vmax.f32 %v548, 0.0
        %v581 = vmax.f32 %v549, 0.0
        %v582 = vmax.f32 %v550, 0.0
        %v583 = vmax.f32 %v551, 0.0
        %v584 = vmax.f32 %v552, 0.0
        %v585 = vmax.f32 %v553, 0.0
        %v586 = vmax.f32 %v554, 0.0
        %v587 = vmax.f32 %v555, 0.0
        %v588 = vmax.f32 %v556, 0.0
        %v589 = vmax.f32 %v557, 0.0
        %v590 = vmax.f32 %v558, 0.0
        %v591 = vmax.f32 %v559, 0.0
        %v592 = vmax.f32 %v560, 0.0
        %v593 = vld [vmem:[#allocation2] sm:$0xff]
        %v594 = vld [vmem:[#allocation2 + $0x8] sm:$0xff]
        %v595 = vld [vmem:[#allocation2 + $0x10] sm:$0xff]
        %v596 = vld [vmem:[#allocation2 + $0x18] sm:$0xff]
        %v597 = vld [vmem:[#allocation2 + $0x20] sm:$0xff]
        %v598 = vld [vmem:[#allocation2 + $0x28] sm:$0xff]
        %v599 = vld [vmem:[#allocation2 + $0x30] sm:$0xff]
        %v600 = vld [vmem:[#allocation2 + $0x38] sm:$0xff]
        %v601 = vld [vmem:[#allocation2 + $0x40] sm:$0xff]
        %v602 = vld [vmem:[#allocation2 + $0x48] sm:$0xff]
        %v603 = vld [vmem:[#allocation2 + $0x50] sm:$0xff]
        %v604 = vld [vmem:[#allocation2 + $0x58] sm:$0xff]
        %v605 = vld [vmem:[#allocation2 + $0x60] sm:$0xff]
        %v606 = vld [vmem:[#allocation2 + $0x68] sm:$0xff]
        %v607 = vld [vmem:[#allocation2 + $0x70] sm:$0xff]
        %v608 = vld [vmem:[#allocation2 + $0x78] sm:$0xff]
        %v609 = vld [vmem:[#allocation2 + $0x80] sm:$0xff]
        %v610 = vld [vmem:[#allocation2 + $0x88] sm:$0xff]
        %v611 = vld [vmem:[#allocation2 + $0x90] sm:$0xff]
        %v612 = vld [vmem:[#allocation2 + $0x98] sm:$0xff]
        %v613 = vld [vmem:[#allocation2 + $0xa0] sm:$0xff]
        %v614 = vld [vmem:[#allocation2 + $0xa8] sm:$0xff]
        %v615 = vld [vmem:[#allocation2 + $0xb0] sm:$0xff]
        %v616 = vld [vmem:[#allocation2 + $0xb8] sm:$0xff]
        %v617 = vld [vmem:[#allocation2 + $0xc0] sm:$0xff]
        %v618 = vld [vmem:[#allocation2 + $0xc8] sm:$0xff]
        %v619 = vld [vmem:[#allocation2 + $0xd0] sm:$0xff]
        %v620 = vld [vmem:[#allocation2 + $0xd8] sm:$0xff]
        %v621 = vld [vmem:[#allocation2 + $0xe0] sm:$0xff]
        %v622 = vld [vmem:[#allocation2 + $0xe8] sm:$0xff]
        %v623 = vld [vmem:[#allocation2 + $0xf0] sm:$0xff]
        %v624 = vld [vmem:[#allocation2 + $0xf8] sm:$0xff]
        %v625 = vpack.c.bf16 %v562, %v561
        %v626 = vpack.c.bf16 %v564, %v563
        %v627 = vpack.c.bf16 %v566, %v565
        %v628 = vpack.c.bf16 %v568, %v567
        %v629 = vpack.c.bf16 %v570, %v569
        %v630 = vpack.c.bf16 %v572, %v571
        %v631 = vpack.c.bf16 %v574, %v573
        %v632 = vpack.c.bf16 %v576, %v575
        %v633 = vpack.c.bf16 %v578, %v577
        %v634 = vpack.c.bf16 %v580, %v579
        %v635 = vpack.c.bf16 %v582, %v581
        %v636 = vpack.c.bf16 %v584, %v583
        %v637 = vpack.c.bf16 %v586, %v585
        %v638 = vpack.c.bf16 %v588, %v587
        %v639 = vpack.c.bf16 %v590, %v589
        %v640 = vpack.c.bf16 %v592, %v591
        %v641 = vld [vmem:[#allocation6] sm:$0xf]
        %v642 = vld [vmem:[#allocation6 + $0x4] sm:$0xf]
        %v643 = vld [vmem:[#allocation6 + $0x8] sm:$0xf]
        %v644 = vld [vmem:[#allocation6 + $0xc] sm:$0xf]
        %v649 = vunpack.c.l.b16 %v641
        %v650 = vunpack.c.l.b16 %v642
        %v651 = vunpack.c.l.b16 %v643
        %v652 = vunpack.c.l.b16 %v644
        %v653 = vpack.c.b16 %v650, %v649
        %v654 = vpack.c.b16 %v652, %v651
        %vm657 = vcmask 261120
        %v659 = vsel %vm657, %v625, 0
        %v662 = vsel %vm657, %v626, 0
        %v665 = vsel %vm657, %v627, 0
        %v668 = vsel %vm657, %v628, 0
        %v671 = vsel %vm657, %v629, 0
        %v674 = vsel %vm657, %v630, 0
        %v677 = vsel %vm657, %v631, 0
        %v680 = vsel %vm657, %v632, 0
        %v683 = vsel %vm657, %v633, 0
        %v686 = vsel %vm657, %v634, 0
        %v689 = vsel %vm657, %v635, 0
        %v692 = vsel %vm657, %v636, 0
        %v695 = vsel %vm657, %v637, 0
        %v698 = vsel %vm657, %v638, 0
        %v701 = vsel %vm657, %v639, 0
        %v704 = vsel %vm657, %v640, 0
        %706 = vmatprep.subr.bf16.mxu0 0
        %707 = vmatpush1.bf16.msra.mxu0 %v653
        %708 = vmatprep.subr.bf16.mxu0 0
        %709 = vmatpush1.bf16.msra.mxu0 %v654
        %710 = vmatprep.subr.bf16.mxu0 0
        %711 = vmatpush1.bf16.msra.mxu0 0
        %712 = vmatprep.subr.bf16.mxu0 0
        %713 = vmatpush1.bf16.msra.mxu0 0
        %714 = vmatprep.subr.bf16.mxu0 0
        %715 = vmatpush1.bf16.msra.mxu0 0
        %716 = vmatprep.subr.bf16.mxu0 0
        %717 = vmatpush1.bf16.msra.mxu0 0
        %718 = vmatprep.subr.bf16.mxu0 0
        %719 = vmatpush1.bf16.msra.mxu0 0
        %720 = vmatprep.subr.bf16.mxu0 0
        %721 = vmatpush1.bf16.msra.mxu0 0
        %722 = vmatprep.subr.bf16.mxu0 0
        %723 = vmatpush1.bf16.msra.mxu0 0
        %724 = vmatprep.subr.bf16.mxu0 0
        %725 = vmatpush1.bf16.msra.mxu0 0
        %726 = vmatprep.subr.bf16.mxu0 0
        %727 = vmatpush1.bf16.msra.mxu0 0
        %728 = vmatprep.subr.bf16.mxu0 0
        %729 = vmatpush1.bf16.msra.mxu0 0
        %730 = vmatprep.subr.bf16.mxu0 0
        %731 = vmatpush1.bf16.msra.mxu0 0
        %732 = vmatprep.subr.bf16.mxu0 0
        %733 = vmatpush1.bf16.msra.mxu0 0
        %734 = vmatprep.subr.bf16.mxu0 0
        %735 = vmatpush1.bf16.msra.mxu0 0
        %736 = vmatprep.subr.bf16.mxu0 0
        %737 = vmatpush1.bf16.msra.mxu0 0
        %738 = vmatprep.mubr.bf16.mxu0 0
        %739 = vmatmul.mubr.bf16.gmra.mrb[0].mxu0 %v659
        %v740 = vpop.f32.mrb[0].mxu0
        %v741 = vadd.f32 0.0, %v740
        %v742 = vpop.f32.mrb[0].mxu0
        %v743 = vpop.f32.mrb[0].mxu0
        %v744 = vadd.f32 0.0, %v743
        %v745 = vpop.f32.mrb[0].mxu0
        %746 = vmatprep.mubr.bf16.mxu0 0
        %747 = vmatmul.mubr.bf16.gmra.mrb[0].mxu0 %v662
        %v748 = vpop.f32.mrb[0].mxu0
        %v749 = vadd.f32 0.0, %v748
        %v750 = vpop.f32.mrb[0].mxu0
        %v751 = vpop.f32.mrb[0].mxu0
        %v752 = vadd.f32 0.0, %v751
        %v753 = vpop.f32.mrb[0].mxu0
        %754 = vmatprep.mubr.bf16.mxu0 0
        %755 = vmatmul.mubr.bf16.gmra.mrb[0].mxu0 %v665
        %v756 = vpop.f32.mrb[0].mxu0
        %v757 = vadd.f32 0.0, %v756
        %v758 = vpop.f32.mrb[0].mxu0
        %v759 = vpop.f32.mrb[0].mxu0
        %v760 = vadd.f32 0.0, %v759
        %v761 = vpop.f32.mrb[0].mxu0
        %762 = vmatprep.mubr.bf16.mxu0 0
        %763 = vmatmul.mubr.bf16.gmra.mrb[0].mxu0 %v668
        %v764 = vpop.f32.mrb[0].mxu0
        %v765 = vadd.f32 0.0, %v764
        %v766 = vpop.f32.mrb[0].mxu0
        %v767 = vpop.f32.mrb[0].mxu0
        %v768 = vadd.f32 0.0, %v767
        %v769 = vpop.f32.mrb[0].mxu0
        %770 = vmatprep.mubr.bf16.mxu0 0
        %771 = vmatmul.mubr.bf16.gmra.mrb[0].mxu0 %v671
        %v772 = vpop.f32.mrb[0].mxu0
        %v773 = vadd.f32 0.0, %v772
        %v774 = vpop.f32.mrb[0].mxu0
        %v775 = vpop.f32.mrb[0].mxu0
        %v776 = vadd.f32 0.0, %v775
        %v777 = vpop.f32.mrb[0].mxu0
        %778 = vmatprep.mubr.bf16.mxu0 0
        %779 = vmatmul.mubr.bf16.gmra.mrb[0].mxu0 %v674
        %v780 = vpop.f32.mrb[0].mxu0
        %v781 = vadd.f32 0.0, %v780
        %v782 = vpop.f32.mrb[0].mxu0
        %v783 = vpop.f32.mrb[0].mxu0
        %v784 = vadd.f32 0.0, %v783
        %v785 = vpop.f32.mrb[0].mxu0
        %786 = vmatprep.mubr.bf16.mxu0 0
        %787 = vmatmul.mubr.bf16.gmra.mrb[0].mxu0 %v677
        %v788 = vpop.f32.mrb[0].mxu0
        %v789 = vadd.f32 0.0, %v788
        %v790 = vpop.f32.mrb[0].mxu0
        %v791 = vpop.f32.mrb[0].mxu0
        %v792 = vadd.f32 0.0, %v791
        %v793 = vpop.f32.mrb[0].mxu0
        %794 = vmatprep.mubr.bf16.mxu0 0
        %795 = vmatmul.mubr.bf16.gmra.mrb[0].mxu0 %v680
        %v796 = vpop.f32.mrb[0].mxu0
        %v797 = vadd.f32 0.0, %v796
        %v798 = vpop.f32.mrb[0].mxu0
        %v799 = vpop.f32.mrb[0].mxu0
        %v800 = vadd.f32 0.0, %v799
        %v801 = vpop.f32.mrb[0].mxu0
        %802 = vmatprep.mubr.bf16.mxu0 0
        %803 = vmatmul.mubr.bf16.gmra.mrb[0].mxu0 %v683
        %v804 = vpop.f32.mrb[0].mxu0
        %v805 = vadd.f32 0.0, %v804
        %v806 = vpop.f32.mrb[0].mxu0
        %v807 = vpop.f32.mrb[0].mxu0
        %v808 = vadd.f32 0.0, %v807
        %v809 = vpop.f32.mrb[0].mxu0
        %810 = vmatprep.mubr.bf16.mxu0 0
        %811 = vmatmul.mubr.bf16.gmra.mrb[0].mxu0 %v686
        %v812 = vpop.f32.mrb[0].mxu0
        %v813 = vadd.f32 0.0, %v812
        %v814 = vpop.f32.mrb[0].mxu0
        %v815 = vpop.f32.mrb[0].mxu0
        %v816 = vadd.f32 0.0, %v815
        %v817 = vpop.f32.mrb[0].mxu0
        %818 = vmatprep.mubr.bf16.mxu0 0
        %819 = vmatmul.mubr.bf16.gmra.mrb[0].mxu0 %v689
        %v820 = vpop.f32.mrb[0].mxu0
        %v821 = vadd.f32 0.0, %v820
        %v822 = vpop.f32.mrb[0].mxu0
        %v823 = vpop.f32.mrb[0].mxu0
        %v824 = vadd.f32 0.0, %v823
        %v825 = vpop.f32.mrb[0].mxu0
        %826 = vmatprep.mubr.bf16.mxu0 0
        %827 = vmatmul.mubr.bf16.gmra.mrb[0].mxu0 %v692
        %v828 = vpop.f32.mrb[0].mxu0
        %v829 = vadd.f32 0.0, %v828
        %v830 = vpop.f32.mrb[0].mxu0
        %v831 = vpop.f32.mrb[0].mxu0
        %v832 = vadd.f32 0.0, %v831
        %v833 = vpop.f32.mrb[0].mxu0
        %834 = vmatprep.mubr.bf16.mxu0 0
        %835 = vmatmul.mubr.bf16.gmra.mrb[0].mxu0 %v695
        %v836 = vpop.f32.mrb[0].mxu0
        %v837 = vadd.f32 0.0, %v836
        %v838 = vpop.f32.mrb[0].mxu0
        %v839 = vpop.f32.mrb[0].mxu0
        %v840 = vadd.f32 0.0, %v839
        %v841 = vpop.f32.mrb[0].mxu0
        %842 = vmatprep.mubr.bf16.mxu0 0
        %843 = vmatmul.mubr.bf16.gmra.mrb[0].mxu0 %v698
        %v844 = vpop.f32.mrb[0].mxu0
        %v845 = vadd.f32 0.0, %v844
        %v846 = vpop.f32.mrb[0].mxu0
        %v847 = vpop.f32.mrb[0].mxu0
        %v848 = vadd.f32 0.0, %v847
        %v849 = vpop.f32.mrb[0].mxu0
        %850 = vmatprep.mubr.bf16.mxu0 0
        %851 = vmatmul.mubr.bf16.gmra.mrb[0].mxu0 %v701
        %v852 = vpop.f32.mrb[0].mxu0
        %v853 = vadd.f32 0.0, %v852
        %v854 = vpop.f32.mrb[0].mxu0
        %v855 = vpop.f32.mrb[0].mxu0
        %v856 = vadd.f32 0.0, %v855
        %v857 = vpop.f32.mrb[0].mxu0
        %858 = vmatprep.mubr.bf16.mxu0 0
        %859 = vmatmul.mubr.bf16.gmra.mrb[0].mxu0 %v704
        %v860 = vpop.f32.mrb[0].mxu0
        %v861 = vadd.f32 0.0, %v860
        %v862 = vpop.f32.mrb[0].mxu0
        %v863 = vpop.f32.mrb[0].mxu0
        %v864 = vadd.f32 0.0, %v863
        %v865 = vpop.f32.mrb[0].mxu0
        %866 = vdwg.mxu0
        %v867 = vadd.f32 %v593, %v741
        %v868 = vadd.f32 %v594, %v744
        %v869 = vadd.f32 %v595, %v749
        %v870 = vadd.f32 %v596, %v752
        %v871 = vadd.f32 %v597, %v757
        %v872 = vadd.f32 %v598, %v760
        %v873 = vadd.f32 %v599, %v765
        %v874 = vadd.f32 %v600, %v768
        %v875 = vadd.f32 %v601, %v773
        %v876 = vadd.f32 %v602, %v776
        %v877 = vadd.f32 %v603, %v781
        %v878 = vadd.f32 %v604, %v784
        %v879 = vadd.f32 %v605, %v789
        %v880 = vadd.f32 %v606, %v792
        %v881 = vadd.f32 %v607, %v797
        %v882 = vadd.f32 %v608, %v800
        %v883 = vadd.f32 %v609, %v805
        %v884 = vadd.f32 %v610, %v808
        %v885 = vadd.f32 %v611, %v813
        %v886 = vadd.f32 %v612, %v816
        %v887 = vadd.f32 %v613, %v821
        %v888 = vadd.f32 %v614, %v824
        %v889 = vadd.f32 %v615, %v829
        %v890 = vadd.f32 %v616, %v832
        %v891 = vadd.f32 %v617, %v837
        %v892 = vadd.f32 %v618, %v840
        %v893 = vadd.f32 %v619, %v845
        %v894 = vadd.f32 %v620, %v848
        %v895 = vadd.f32 %v621, %v853
        %v896 = vadd.f32 %v622, %v856
        %v897 = vadd.f32 %v623, %v861
        %v898 = vadd.f32 %v624, %v864
        %899 = vst [vmem:[#allocation2] sm:$0xff] %v867
        %900 = vst [vmem:[#allocation2 + $0x8] sm:$0xff] %v868
        %901 = vst [vmem:[#allocation2 + $0x10] sm:$0xff] %v869
        %902 = vst [vmem:[#allocation2 + $0x18] sm:$0xff] %v870
        %903 = vst [vmem:[#allocation2 + $0x20] sm:$0xff] %v871
        %904 = vst [vmem:[#allocation2 + $0x28] sm:$0xff] %v872
        %905 = vst [vmem:[#allocation2 + $0x30] sm:$0xff] %v873
        %906 = vst [vmem:[#allocation2 + $0x38] sm:$0xff] %v874
        %907 = vst [vmem:[#allocation2 + $0x40] sm:$0xff] %v875
        %908 = vst [vmem:[#allocation2 + $0x48] sm:$0xff] %v876
        %909 = vst [vmem:[#allocation2 + $0x50] sm:$0xff] %v877
        %910 = vst [vmem:[#allocation2 + $0x58] sm:$0xff] %v878
        %911 = vst [vmem:[#allocation2 + $0x60] sm:$0xff] %v879
        %912 = vst [vmem:[#allocation2 + $0x68] sm:$0xff] %v880
        %913 = vst [vmem:[#allocation2 + $0x70] sm:$0xff] %v881
        %914 = vst [vmem:[#allocation2 + $0x78] sm:$0xff] %v882
        %915 = vst [vmem:[#allocation2 + $0x80] sm:$0xff] %v883
        %916 = vst [vmem:[#allocation2 + $0x88] sm:$0xff] %v884
        %917 = vst [vmem:[#allocation2 + $0x90] sm:$0xff] %v885
        %918 = vst [vmem:[#allocation2 + $0x98] sm:$0xff] %v886
        %919 = vst [vmem:[#allocation2 + $0xa0] sm:$0xff] %v887
        %920 = vst [vmem:[#allocation2 + $0xa8] sm:$0xff] %v888
        %921 = vst [vmem:[#allocation2 + $0xb0] sm:$0xff] %v889
        %922 = vst [vmem:[#allocation2 + $0xb8] sm:$0xff] %v890
        %923 = vst [vmem:[#allocation2 + $0xc0] sm:$0xff] %v891
        %924 = vst [vmem:[#allocation2 + $0xc8] sm:$0xff] %v892
        %925 = vst [vmem:[#allocation2 + $0xd0] sm:$0xff] %v893
        %926 = vst [vmem:[#allocation2 + $0xd8] sm:$0xff] %v894
        %927 = vst [vmem:[#allocation2 + $0xe0] sm:$0xff] %v895
        %928 = vst [vmem:[#allocation2 + $0xe8] sm:$0xff] %v896
        %929 = vst [vmem:[#allocation2 + $0xf0] sm:$0xff] %v897
        %930 = vst [vmem:[#allocation2 + $0xf8] sm:$0xff] %v898
        // Predicated region
        $region57: #{bottleneck_forward.6} parent=35 // pred_check
          %p931 = pneg %p383
        $region58: #{bottleneck_forward.6} parent=35 // pred_check_branch
          %933 = sbr.rel (%p931) target = $region60
        $region59: #{bottleneck_forward.6} parent=35 // pred_region
          %v934 = vld [vmem:[#allocation2] sm:$0xff]
          %v935 = vld [vmem:[#allocation2 + $0x8] sm:$0xff]
          %v936 = vld [vmem:[#allocation2 + $0x10] sm:$0xff]
          %v937 = vld [vmem:[#allocation2 + $0x18] sm:$0xff]
          %v938 = vld [vmem:[#allocation2 + $0x20] sm:$0xff]
          %v939 = vld [vmem:[#allocation2 + $0x28] sm:$0xff]
          %v940 = vld [vmem:[#allocation2 + $0x30] sm:$0xff]
          %v941 = vld [vmem:[#allocation2 + $0x38] sm:$0xff]
          %v942 = vld [vmem:[#allocation2 + $0x40] sm:$0xff]
          %v943 = vld [vmem:[#allocation2 + $0x48] sm:$0xff]
          %v944 = vld [vmem:[#allocation2 + $0x50] sm:$0xff]
          %v945 = vld [vmem:[#allocation2 + $0x58] sm:$0xff]
          %v946 = vld [vmem:[#allocation2 + $0x60] sm:$0xff]
          %v947 = vld [vmem:[#allocation2 + $0x68] sm:$0xff]
          %v948 = vld [vmem:[#allocation2 + $0x70] sm:$0xff]
          %v949 = vld [vmem:[#allocation2 + $0x78] sm:$0xff]
          %v950 = vld [vmem:[#allocation2 + $0x80] sm:$0xff]
          %v951 = vld [vmem:[#allocation2 + $0x88] sm:$0xff]
          %v952 = vld [vmem:[#allocation2 + $0x90] sm:$0xff]
          %v953 = vld [vmem:[#allocation2 + $0x98] sm:$0xff]
          %v954 = vld [vmem:[#allocation2 + $0xa0] sm:$0xff]
          %v955 = vld [vmem:[#allocation2 + $0xa8] sm:$0xff]
          %v956 = vld [vmem:[#allocation2 + $0xb0] sm:$0xff]
          %v957 = vld [vmem:[#allocation2 + $0xb8] sm:$0xff]
          %v958 = vld [vmem:[#allocation2 + $0xc0] sm:$0xff]
          %v959 = vld [vmem:[#allocation2 + $0xc8] sm:$0xff]
          %v960 = vld [vmem:[#allocation2 + $0xd0] sm:$0xff]
          %v961 = vld [vmem:[#allocation2 + $0xd8] sm:$0xff]
          %v962 = vld [vmem:[#allocation2 + $0xe0] sm:$0xff]
          %v963 = vld [vmem:[#allocation2 + $0xe8] sm:$0xff]
          %v964 = vld [vmem:[#allocation2 + $0xf0] sm:$0xff]
          %v965 = vld [vmem:[#allocation2 + $0xf8] sm:$0xff]
          %v966 = vpack.c.bf16 %v935, %v934
          %v967 = vpack.c.bf16 %v937, %v936
          %v968 = vpack.c.bf16 %v939, %v938
          %v969 = vpack.c.bf16 %v941, %v940
          %v970 = vpack.c.bf16 %v943, %v942
          %v971 = vpack.c.bf16 %v945, %v944
          %v972 = vpack.c.bf16 %v947, %v946
          %v973 = vpack.c.bf16 %v949, %v948
          %v974 = vpack.c.bf16 %v951, %v950
          %v975 = vpack.c.bf16 %v953, %v952
          %v976 = vpack.c.bf16 %v955, %v954
          %v977 = vpack.c.bf16 %v957, %v956
          %v978 = vpack.c.bf16 %v959, %v958
          %v979 = vpack.c.bf16 %v961, %v960
          %v980 = vpack.c.bf16 %v963, %v962
          %v981 = vpack.c.bf16 %v965, %v964
          %v998 = vunpack.c.l.b16 %v966
          %v999 = vunpack.c.h.b16 %v966
          %v1000 = vunpack.c.l.b16 %v967
          %v1001 = vunpack.c.h.b16 %v967
          %v1002 = vunpack.c.l.b16 %v968
          %v1003 = vunpack.c.h.b16 %v968
          %v1004 = vunpack.c.l.b16 %v969
          %v1005 = vunpack.c.h.b16 %v969
          %v1006 = vunpack.c.l.b16 %v970
          %v1007 = vunpack.c.h.b16 %v970
          %v1008 = vunpack.c.l.b16 %v971
          %v1009 = vunpack.c.h.b16 %v971
          %v1010 = vunpack.c.l.b16 %v972
          %v1011 = vunpack.c.h.b16 %v972
          %v1012 = vunpack.c.l.b16 %v973
          %v1013 = vunpack.c.h.b16 %v973
          %v1014 = vunpack.c.l.b16 %v974
          %v1015 = vunpack.c.h.b16 %v974
          %v1016 = vunpack.c.l.b16 %v975
          %v1017 = vunpack.c.h.b16 %v975
          %v1018 = vunpack.c.l.b16 %v976
          %v1019 = vunpack.c.h.b16 %v976
          %v1020 = vunpack.c.l.b16 %v977
          %v1021 = vunpack.c.h.b16 %v977
          %v1022 = vunpack.c.l.b16 %v978
          %v1023 = vunpack.c.h.b16 %v978
          %v1024 = vunpack.c.l.b16 %v979
          %v1025 = vunpack.c.h.b16 %v979
          %v1026 = vunpack.c.l.b16 %v980
          %v1027 = vunpack.c.h.b16 %v980
          %v1028 = vunpack.c.l.b16 %v981
          %v1029 = vunpack.c.h.b16 %v981
          %v1030 = vpack.c.b16 %v998, %v998
          %v1031 = vpack.c.b16 %v999, %v999
          %v1032 = vpack.c.b16 %v1000, %v1000
          %v1033 = vpack.c.b16 %v1001, %v1001
          %v1034 = vpack.c.b16 %v1002, %v1002
          %v1035 = vpack.c.b16 %v1003, %v1003
          %v1036 = vpack.c.b16 %v1004, %v1004
          %v1037 = vpack.c.b16 %v1005, %v1005
          %v1038 = vpack.c.b16 %v1006, %v1006
          %v1039 = vpack.c.b16 %v1007, %v1007
          %v1040 = vpack.c.b16 %v1008, %v1008
          %v1041 = vpack.c.b16 %v1009, %v1009
          %v1042 = vpack.c.b16 %v1010, %v1010
          %v1043 = vpack.c.b16 %v1011, %v1011
          %v1044 = vpack.c.b16 %v1012, %v1012
          %v1045 = vpack.c.b16 %v1013, %v1013
          %v1046 = vpack.c.b16 %v1014, %v1014
          %v1047 = vpack.c.b16 %v1015, %v1015
          %v1048 = vpack.c.b16 %v1016, %v1016
          %v1049 = vpack.c.b16 %v1017, %v1017
          %v1050 = vpack.c.b16 %v1018, %v1018
          %v1051 = vpack.c.b16 %v1019, %v1019
          %v1052 = vpack.c.b16 %v1020, %v1020
          %v1053 = vpack.c.b16 %v1021, %v1021
          %v1054 = vpack.c.b16 %v1022, %v1022
          %v1055 = vpack.c.b16 %v1023, %v1023
          %v1056 = vpack.c.b16 %v1024, %v1024
          %v1057 = vpack.c.b16 %v1025, %v1025
          %v1058 = vpack.c.b16 %v1026, %v1026
          %v1059 = vpack.c.b16 %v1027, %v1027
          %v1060 = vpack.c.b16 %v1028, %v1028
          %v1061 = vpack.c.b16 %v1029, %v1029
          %1094 = vst [vmem:[%s366] sm:$0xf] %v1030
          %1095 = vst [vmem:[%s366 + $0x4] sm:$0xf] %v1031
          %1096 = vst [vmem:[%s366 + $0x8] sm:$0xf] %v1032
          %1097 = vst [vmem:[%s366 + $0xc] sm:$0xf] %v1033
          %1098 = vst [vmem:[%s366 + $0x10] sm:$0xf] %v1034
          %1099 = vst [vmem:[%s366 + $0x14] sm:$0xf] %v1035
          %1100 = vst [vmem:[%s366 + $0x18] sm:$0xf] %v1036
          %1101 = vst [vmem:[%s366 + $0x1c] sm:$0xf] %v1037
          %1102 = vst [vmem:[%s366 + $0x20] sm:$0xf] %v1038
          %1103 = vst [vmem:[%s366 + $0x24] sm:$0xf] %v1039
          %1104 = vst [vmem:[%s366 + $0x28] sm:$0xf] %v1040
          %1105 = vst [vmem:[%s366 + $0x2c] sm:$0xf] %v1041
          %1106 = vst [vmem:[%s366 + $0x30] sm:$0xf] %v1042
          %1107 = vst [vmem:[%s366 + $0x34] sm:$0xf] %v1043
          %1108 = vst [vmem:[%s366 + $0x38] sm:$0xf] %v1044
          %1109 = vst [vmem:[%s366 + $0x3c] sm:$0xf] %v1045
          %1110 = vst [vmem:[%s366 + $0x40] sm:$0xf] %v1046
          %1111 = vst [vmem:[%s366 + $0x44] sm:$0xf] %v1047
          %1112 = vst [vmem:[%s366 + $0x48] sm:$0xf] %v1048
          %1113 = vst [vmem:[%s366 + $0x4c] sm:$0xf] %v1049
          %1114 = vst [vmem:[%s366 + $0x50] sm:$0xf] %v1050
          %1115 = vst [vmem:[%s366 + $0x54] sm:$0xf] %v1051
          %1116 = vst [vmem:[%s366 + $0x58] sm:$0xf] %v1052
          %1117 = vst [vmem:[%s366 + $0x5c] sm:$0xf] %v1053
          %1118 = vst [vmem:[%s366 + $0x60] sm:$0xf] %v1054
          %1119 = vst [vmem:[%s366 + $0x64] sm:$0xf] %v1055
          %1120 = vst [vmem:[%s366 + $0x68] sm:$0xf] %v1056
          %1121 = vst [vmem:[%s366 + $0x6c] sm:$0xf] %v1057
          %1122 = vst [vmem:[%s366 + $0x70] sm:$0xf] %v1058
          %1123 = vst [vmem:[%s366 + $0x74] sm:$0xf] %v1059
          %1124 = vst [vmem:[%s366 + $0x78] sm:$0xf] %v1060
          %1125 = vst [vmem:[%s366 + $0x7c] sm:$0xf] %v1061
          %v1126 = vadd.f32 %v934, %v935
          %v1127 = vadd.f32 %v1126, %v936
          %v1128 = vadd.f32 %v1127, %v937
          %v1129 = vadd.f32 %v1128, %v938
          %v1130 = vadd.f32 %v1129, %v939
          %v1131 = vadd.f32 %v1130, %v940
          %v1132 = vadd.f32 %v1131, %v941
          %v1133 = vadd.f32 %v1132, %v942
          %v1134 = vadd.f32 %v1133, %v943
          %v1135 = vadd.f32 %v1134, %v944
          %v1136 = vadd.f32 %v1135, %v945
          %v1137 = vadd.f32 %v1136, %v946
          %v1138 = vadd.f32 %v1137, %v947
          %v1139 = vadd.f32 %v1138, %v948
          %v1140 = vadd.f32 %v1139, %v949
          %v1141 = vadd.f32 %v1140, %v950
          %v1142 = vadd.f32 %v1141, %v951
          %v1143 = vadd.f32 %v1142, %v952
          %v1144 = vadd.f32 %v1143, %v953
          %v1145 = vadd.f32 %v1144, %v954
          %v1146 = vadd.f32 %v1145, %v955
          %v1147 = vadd.f32 %v1146, %v956
          %v1148 = vadd.f32 %v1147, %v957
          %v1149 = vadd.f32 %v1148, %v958
          %v1150 = vadd.f32 %v1149, %v959
          %v1151 = vadd.f32 %v1150, %v960
          %v1152 = vadd.f32 %v1151, %v961
          %v1153 = vadd.f32 %v1152, %v962
          %v1154 = vadd.f32 %v1153, %v963
          %v1155 = vadd.f32 %v1154, %v964
          %v1156 = vadd.f32 %v1155, %v965
          %v1157 = vrot.slane %v1156, 4
          %v1158 = vadd.f32 %v1156, %v1157
          %v1159 = vrot.slane %v1158, 2
          %v1160 = vadd.f32 %v1158, %v1159
          %v1161 = vrot.slane %v1160, 1
          %v1162 = vadd.f32 %v1160, %v1161
          %1163 = vst [vmem:[%s372] sm:$0x1] %v1162
          %v1164 = vmul.f32 %v934, %v934
          %v1165 = vmul.f32 %v935, %v935
          %v1166 = vmul.f32 %v936, %v936
          %v1167 = vmul.f32 %v937, %v937
          %v1168 = vmul.f32 %v938, %v938
          %v1169 = vmul.f32 %v939, %v939
          %v1170 = vmul.f32 %v940, %v940
          %v1171 = vmul.f32 %v941, %v941
          %v1172 = vmul.f32 %v942, %v942
          %v1173 = vmul.f32 %v943, %v943
          %v1174 = vmul.f32 %v944, %v944
          %v1175 = vmul.f32 %v945, %v945
          %v1176 = vmul.f32 %v946, %v946
          %v1177 = vmul.f32 %v947, %v947
          %v1178 = vmul.f32 %v948, %v948
          %v1179 = vmul.f32 %v949, %v949
          %v1180 = vmul.f32 %v950, %v950
          %v1181 = vmul.f32 %v951, %v951
          %v1182 = vmul.f32 %v952, %v952
          %v1183 = vmul.f32 %v953, %v953
          %v1184 = vmul.f32 %v954, %v954
          %v1185 = vmul.f32 %v955, %v955
          %v1186 = vmul.f32 %v956, %v956
          %v1187 = vmul.f32 %v957, %v957
          %v1188 = vmul.f32 %v958, %v958
          %v1189 = vmul.f32 %v959, %v959
          %v1190 = vmul.f32 %v960, %v960
          %v1191 = vmul.f32 %v961, %v961
          %v1192 = vmul.f32 %v962, %v962
          %v1193 = vmul.f32 %v963, %v963
          %v1194 = vmul.f32 %v964, %v964
          %v1195 = vmul.f32 %v965, %v965
          %v1196 = vadd.f32 %v1164, %v1165
          %v1197 = vadd.f32 %v1196, %v1166
          %v1198 = vadd.f32 %v1197, %v1167
          %v1199 = vadd.f32 %v1198, %v1168
          %v1200 = vadd.f32 %v1199, %v1169
          %v1201 = vadd.f32 %v1200, %v1170
          %v1202 = vadd.f32 %v1201, %v1171
          %v1203 = vadd.f32 %v1202, %v1172
          %v1204 = vadd.f32 %v1203, %v1173
          %v1205 = vadd.f32 %v1204, %v1174
          %v1206 = vadd.f32 %v1205, %v1175
          %v1207 = vadd.f32 %v1206, %v1176
          %v1208 = vadd.f32 %v1207, %v1177
          %v1209 = vadd.f32 %v1208, %v1178
          %v1210 = vadd.f32 %v1209, %v1179
          %v1211 = vadd.f32 %v1210, %v1180
          %v1212 = vadd.f32 %v1211, %v1181
          %v1213 = vadd.f32 %v1212, %v1182
          %v1214 = vadd.f32 %v1213, %v1183
          %v1215 = vadd.f32 %v1214, %v1184
          %v1216 = vadd.f32 %v1215, %v1185
          %v1217 = vadd.f32 %v1216, %v1186
          %v1218 = vadd.f32 %v1217, %v1187
          %v1219 = vadd.f32 %v1218, %v1188
          %v1220 = vadd.f32 %v1219, %v1189
          %v1221 = vadd.f32 %v1220, %v1190
          %v1222 = vadd.f32 %v1221, %v1191
          %v1223 = vadd.f32 %v1222, %v1192
          %v1224 = vadd.f32 %v1223, %v1193
          %v1225 = vadd.f32 %v1224, %v1194
          %v1226 = vadd.f32 %v1225, %v1195
          %v1227 = vrot.slane %v1226, 4
          %v1228 = vadd.f32 %v1226, %v1227
          %v1229 = vrot.slane %v1228, 2
          %v1230 = vadd.f32 %v1228, %v1229
          %v1231 = vrot.slane %v1230, 1
          %v1232 = vadd.f32 %v1230, %v1231
          %1233 = vst [vmem:[%s378] sm:$0x1] %v1232
        $region60: #{bottleneck_forward.6} parent=35 // pred_fallthru
          _
        %s1234 = sand.u32 %s166, 1
        %s1235 = scalar_lea.sflag [#allocation5], %s1234
        %s1236 = sand.u32 %s166, 1
        %s1237 = smul.addr %s1236, 128
        %s1238 = scalar_lea.vmem [#allocation11], %s1237
        %s1239 = sand.u32 %s29, 1
        %s1240 = scalar_lea.sflag [#allocation13], %s1239
        %s1241 = sand.u32 %s194, 1
        %s1242 = scalar_lea.vmem [#allocation12], %s1241
        %s1243 = sand.u32 %s29, 1
        %s1244 = scalar_lea.sflag [#allocation13], %s1243
        %s1245 = sand.u32 %s222, 1
        %s1246 = scalar_lea.vmem [#allocation14], %s1245
        // Predicated region
        $region61: #{bottleneck_forward.6} parent=35 // pred_check
          %p1247 = pneg %p176
        $region62: #{bottleneck_forward.6} parent=35 // pred_check_branch
          %1249 = sbr.rel (%p1247) target = $region64
        $region63: #{bottleneck_forward.6} parent=35 // pred_region
          %s1250 = smul.u32 32, %s34
          %s1252 = ssub.s32 2048, 2048
          %1253 = vsyncadd %s1235, %s1252
          %s1254 = sadd.s32 %s35, %s1250
          %s1255 = smul.addr %s1254, 64
          %s1256 = scalar_lea.hbm %s4, %s1255
          %s1257 = sshll.u32 %s1238, 4
          %s1258 = int_to_ptr.vmem [resolvable:$true] %s1257
          %1263 = dma.vmem_to_hbm [thread:$0]  %s1258, 2048, %s1256, %s1235, 64, 64, 4
        $region64: #{bottleneck_forward.6} parent=35 // pred_fallthru
          _
        // Predicated region
        $region65: #{bottleneck_forward.6} parent=35 // pred_check
          %p1264 = pneg %p204
        $region66: #{bottleneck_forward.6} parent=35 // pred_check_branch
          %1266 = sbr.rel (%p1264) target = $region68
        $region67: #{bottleneck_forward.6} parent=35 // pred_region
          %s1268 = ssub.s32 16, 16
          %1269 = vsyncadd %s1240, %s1268
          %s1270 = sadd.s32 %s35, %s34
          %s1271 = smul.addr %s1270, 16
          %s1272 = scalar_lea.hbm %s5, %s1271
          %s1274 = sshll.u32 %s1242, 4
          %s1275 = int_to_ptr.vmem [resolvable:$true] %s1274
          %1277 = dma.vmem_to_hbm [thread:$0]  %s1275, 16, %s1272, %s1240
        $region68: #{bottleneck_forward.6} parent=35 // pred_fallthru
          _
        // Predicated region
        $region69: #{bottleneck_forward.6} parent=35 // pred_check
          %p1278 = pneg %p232
        $region70: #{bottleneck_forward.6} parent=35 // pred_check_branch
          %1280 = sbr.rel (%p1278) target = $region72
        $region71: #{bottleneck_forward.6} parent=35 // pred_region
          %s1282 = ssub.s32 16, 16
          %1283 = vsyncadd %s1244, %s1282
          %s1284 = sadd.s32 %s35, %s34
          %s1285 = smul.addr %s1284, 16
          %s1286 = scalar_lea.hbm %s6, %s1285
          %s1288 = sshll.u32 %s1246, 4
          %s1289 = int_to_ptr.vmem [resolvable:$true] %s1288
          %1291 = dma.vmem_to_hbm [thread:$0]  %s1289, 16, %s1286, %s1244
        $region72: #{bottleneck_forward.6} parent=35 // pred_fallthru
          _
      $region36: #{bottleneck_forward.6} parent=5 // pred_fallthru
        _
      %p1292 = scmp.le.s32.totalorder 2, %s24
      // Predicated region
      $region73: #{bottleneck_forward.6} parent=5 // pred_check
        %p1293 = pneg %p1292
      $region74: #{bottleneck_forward.6} parent=5 // pred_check_branch
        %1295 = sbr.rel (%p1293) target = $region76
      $region75: #{bottleneck_forward.6} parent=5 // pred_region
        %s1296 = ssub.s32 %s24, 2
        // Predicated region
        $region77: #{bottleneck_forward.6} parent=75 // pred_check
          %p1297 = pneg %p182
        $region78: #{bottleneck_forward.6} parent=75 // pred_check_branch
          %1299 = sbr.rel (%p1297) target = $region80
        $region79: #{bottleneck_forward.6} parent=75 // pred_region
          %s1300 = sand.u32 %s167, 1
          %s1301 = scalar_lea.sflag [#allocation5], %s1300
          %s1302 = sand.u32 %s167, 1
          %s1303 = smul.addr %s1302, 128
          %s1304 = scalar_lea.vmem [#allocation11], %s1303
          %1305 = dma.done %s1301, 2048
        $region80: #{bottleneck_forward.6} parent=75 // pred_fallthru
          _
        // Predicated region
        $region81: #{bottleneck_forward.6} parent=75 // pred_check
          %p1306 = pneg %p210
        $region82: #{bottleneck_forward.6} parent=75 // pred_check_branch
          %1308 = sbr.rel (%p1306) target = $region84
        $region83: #{bottleneck_forward.6} parent=75 // pred_region
          %s1309 = sand.u32 %s30, 1
          %s1310 = scalar_lea.sflag [#allocation13], %s1309
          %s1311 = sand.u32 %s195, 1
          %s1312 = scalar_lea.vmem [#allocation12], %s1311
          %1313 = dma.done %s1310, 16
        $region84: #{bottleneck_forward.6} parent=75 // pred_fallthru
          _
        // Predicated region
        $region85: #{bottleneck_forward.6} parent=75 // pred_check
          %p1314 = pneg %p238
        $region86: #{bottleneck_forward.6} parent=75 // pred_check_branch
          %1316 = sbr.rel (%p1314) target = $region88
        $region87: #{bottleneck_forward.6} parent=75 // pred_region
          %s1317 = sand.u32 %s30, 1
          %s1318 = scalar_lea.sflag [#allocation13], %s1317
          %s1319 = sand.u32 %s223, 1
          %s1320 = scalar_lea.vmem [#allocation14], %s1319
          %1321 = dma.done %s1318, 16
        $region88: #{bottleneck_forward.6} parent=75 // pred_fallthru
          _
      $region76: #{bottleneck_forward.6} parent=5 // pred_fallthru
        _
    $region6: #{bottleneck_forward.6} parent=1 // loop_footer
      %s28 = sadd.s32 1, %s24
    $region7: #{bottleneck_forward.6} parent=1 // loop_footer_branch
      %23 = sbr.rel target = $region3
    $region8: #{bottleneck_forward.6} parent=1 // loop_exit
      _
    %1322 = vsyncpa [#allocation4], 1
    %s1323 = scalar_lea.sflag [#allocation4], 1
    %1324 = vsyncpa %s1323, 1
    %1325 = vsyncpa [#allocation7], 1
    %1326 = vsyncpa [#allocation10], 1
    %1327 = vsyncpa [#allocation5], 1
    %s1328 = scalar_lea.sflag [#allocation5], 1
    %1329 = vsyncpa %s1328, 1
    %1330 = vsyncpa [#allocation13], 1
    %s1331 = scalar_lea.sflag [#allocation13], 1
    %1332 = vsyncpa %s1331, 1

// kernel: bottleneck_forward.5
$region0: #{bottleneck_forward.5}
  #allocation0 [shape = 'u32[]', space=smem, size = 0x4, offset = 0x4, fixed_abs, tag = 'smem constant byte address 0x4 - core index']
  #allocation1 [shape = 'u32[144,128]{1,0:T(1,128)}', space=vmem, size = 0x12000, scoped, tag = 'internal scratch']
  #allocation2 [shape = 'bf16[20,20,32]{2,1,0:T(8,128)(2,1)}', space=vmem, size = 0x1e000, scoped, tag = 'scratch operand']
  #allocation3 [shape = 'f32[256,32]{1,0:T(8,128)}', space=vmem, size = 0x20000, scoped, tag = 'scratch operand']
  %s0 = inlined_call_operand.hbm [shape: bf16[2,16,16,32], index: 0, kind: input, shape index: {}]
  %s1 = inlined_call_operand.hbm [shape: bf16[9,32,32], index: 1, kind: input, shape index: {}]
  %s2 = inlined_call_operand.hbm [shape: f32[1,32], index: 2, kind: input, shape index: {}]
  %s3 = inlined_call_operand.hbm [shape: f32[1,32], index: 3, kind: input, shape index: {}]
  %s4 = inlined_call_operand.hbm [shape: bf16[2,16,16,32], index: 4, kind: output, shape index: {0}]
  %s5 = inlined_call_operand.hbm [shape: f32[2,1,32], index: 5, kind: output, shape index: {1}]
  %s6 = inlined_call_operand.hbm [shape: f32[2,1,32], index: 6, kind: output, shape index: {2}]
  %7 = xla_tuple %s4, %s5, %s6
  %s8 = sld [smem:[#allocation0]]
  $region85: #{bottleneck_forward.5} parent=0
    _
  %s10 = ssub.s32 1, %s8
  %s11 = scalar_select 0, %s10, %s8
  $region1: #{bottleneck_forward.5} parent=0
    #allocation4 [shape = 'u8[131072]{0}', space=vmem, size = 0x20000, scoped, tag = 'input window, operand 0']
    #allocation5 [shape = 's32[2]{0}', space=sflag, size = 0x8, scoped, tag = 'scoped memory for bottleneck_forward.5']
    #allocation6 [shape = 's32[2]{0}', space=sflag, size = 0x8, scoped, tag = 'scoped memory for bottleneck_forward.5']
    #allocation7 [shape = 'u8[73728]{0}', space=vmem, size = 0x12000, scoped, tag = 'input window, operand 1, single buffered']
    #allocation8 [shape = 's32[1]{0}', space=sflag, size = 0x4, scoped, tag = 'scoped memory for bottleneck_forward.5']
    #allocation9 [shape = 'u8[512]{0}', space=vmem, size = 0x400, scoped, tag = 'input window, operand 2, single buffered']
    #allocation10 [shape = 'u8[512]{0}', space=vmem, size = 0x400, scoped, tag = 'input window, operand 3, single buffered']
    #allocation11 [shape = 's32[1]{0}', space=sflag, size = 0x4, scoped, tag = 'scoped memory for bottleneck_forward.5']
    #allocation12 [shape = 'u8[131072]{0}', space=vmem, size = 0x20000, scoped, tag = 'output window, operand 0']
    #allocation13 [shape = 'u8[1024]{0}', space=vmem, size = 0x400, scoped, tag = 'output window, operand 1']
    #allocation14 [shape = 's32[2]{0}', space=sflag, size = 0x8, scoped, tag = 'scoped memory for bottleneck_forward.5']
    #allocation15 [shape = 'u8[1024]{0}', space=vmem, size = 0x400, scoped, tag = 'output window, operand 2']
    %12 = vsyncpa [#allocation5], 0
    %s13 = scalar_lea.sflag [#allocation5], 1
    %14 = vsyncpa %s13, 0
    %15 = vsyncpa [#allocation8], 0
    %16 = vsyncpa [#allocation11], 0
    %17 = vsyncpa [#allocation6], 0
    %s18 = scalar_lea.sflag [#allocation6], 1
    %19 = vsyncpa %s18, 0
    %20 = vsyncpa [#allocation14], 0
    %s21 = scalar_lea.sflag [#allocation14], 1
    %22 = vsyncpa %s21, 0
    loop: start=0, step=1, limit=4
    $region2: #{bottleneck_forward.5} parent=1 // loop_pre_header
      _
    $region3: #{bottleneck_forward.5} parent=1 // loop_header
      %s24 = sphi 0, %s28
      %p25 = scmp.ge.s32.totalorder %s24, 4
      %s31 = sphi 0, %s43
      %s32 = sphi 0, %s39
      %s33 = sphi 0, %s31
      %s34 = sphi 0, %s32
      %s35 = sphi 0, %s33
      %s36 = sphi 0, %s34
      %s46 = sphi 0, %s48
      %s49 = sphi 0, %s46
      %s50 = sphi 0, %s49
      %s66 = sphi 0, %s50
      %s72 = sphi 0, %s74
      %s75 = sphi 0, %s72
      %s76 = sphi 0, %s75
      %s92 = sphi 0, %s76
      %s96 = sphi 0, %s96
      %s98 = sphi 0, %s96
      %s99 = sphi 0, %s98
      %s113 = sphi 0, %s99
      %s117 = sphi 0, %s117
      %s119 = sphi 0, %s117
      %s120 = sphi 0, %s119
      %s134 = sphi 0, %s120
      %s142 = sphi 0, %s144
      %s145 = sphi 0, %s142
      %s146 = sphi 0, %s145
      %s162 = sphi 0, %s146
      %s170 = sphi 0, %s172
      %s173 = sphi 0, %s170
      %s174 = sphi 0, %s173
      %s190 = sphi 0, %s174
      %s198 = sphi 0, %s200
      %s201 = sphi 0, %s198
      %s202 = sphi 0, %s201
      %s218 = sphi 0, %s202
    $region4: #{bottleneck_forward.5} parent=1 // loop_header_branch
      %27 = sbr.rel (%p25) target = $region8
    $region5: #{bottleneck_forward.5} parent=1 // loop_body
      %s29 = ssub.s32 %s24, 1
      %s30 = ssub.s32 %s24, 2
      %s37 = sadd.s32 1, %s32
      %p38 = scmp.ge.s32.totalorder %s37, 1
      %s39 = scalar_select %p38, 0, %s37
      %s40 = sadd.s32 1, %s31
      %s41 = scalar_select %p38, %s40, %s31
      %p42 = scmp.ge.s32.totalorder %s41, 2
      %s43 = scalar_select %p42, 0, %s41
      %s44 = ssub.s32 %s31, %s43
      %p45 = scmp.eq.s32.totalorder %s44, 0
      %s47 = sadd.s32 %s46, 1
      %s48 = scalar_select %p45, %s46, %s47
      %p51 = pneg %p45
      %p52 = scmp.eq.s32.totalorder %s24, 1
      %p53 = por %p51, %p52
      %p54 = scmp.ne.s32.totalorder %s46, %s49
      %p55 = scmp.eq.s32.totalorder %s24, 0
      %p56 = por %p54, %p55
      %p57 = scmp.ne.s32.totalorder %s46, %s49
      %p58 = scmp.eq.s32.totalorder %s29, 1
      %p59 = por %p57, %p58
      %p60 = scmp.ne.s32.totalorder %s49, %s50
      %p61 = scmp.eq.s32.totalorder %s29, 0
      %p62 = por %p60, %p61
      %p63 = scmp.ne.s32.totalorder %s49, %s50
      %p64 = scmp.eq.s32.totalorder %s30, 1
      %p65 = por %p63, %p64
      %p67 = scmp.ne.s32.totalorder %s50, %s66
      %p68 = scmp.eq.s32.totalorder %s30, 0
      %p69 = por %p67, %p68
      %s70 = ssub.s32 %s32, %s39
      %p71 = scmp.eq.s32.totalorder %s70, 0
      %s73 = sadd.s32 %s72, 1
      %s74 = scalar_select %p71, %s72, %s73
      %p77 = pneg %p71
      %p78 = scmp.eq.s32.totalorder %s24, 1
      %p79 = por %p77, %p78
      %p80 = scmp.ne.s32.totalorder %s72, %s75
      %p81 = scmp.eq.s32.totalorder %s24, 0
      %p82 = por %p80, %p81
      %p83 = scmp.ne.s32.totalorder %s72, %s75
      %p84 = scmp.eq.s32.totalorder %s29, 1
      %p85 = por %p83, %p84
      %p86 = scmp.ne.s32.totalorder %s75, %s76
      %p87 = scmp.eq.s32.totalorder %s29, 0
      %p88 = por %p86, %p87
      %p89 = scmp.ne.s32.totalorder %s75, %s76
      %p90 = scmp.eq.s32.totalorder %s30, 1
      %p91 = por %p89, %p90
      %p93 = scmp.ne.s32.totalorder %s76, %s92
      %p94 = scmp.eq.s32.totalorder %s30, 0
      %p95 = por %p93, %p94
      %s97 = sadd.s32 %s96, 1
      %p100 = scmp.eq.s32.totalorder %s24, 1
      %p101 = scmp.ne.s32.totalorder %s96, %s98
      %p102 = scmp.eq.s32.totalorder %s24, 0
      %p103 = por %p101, %p102
      %p104 = scmp.ne.s32.totalorder %s96, %s98
      %p105 = scmp.eq.s32.totalorder %s29, 1
      %p106 = por %p104, %p105
      %p107 = scmp.ne.s32.totalorder %s98, %s99
      %p108 = scmp.eq.s32.totalorder %s29, 0
      %p109 = por %p107, %p108
      %p110 = scmp.ne.s32.totalorder %s98, %s99
      %p111 = scmp.eq.s32.totalorder %s30, 1
      %p112 = por %p110, %p111
      %p114 = scmp.ne.s32.totalorder %s99, %s113
      %p115 = scmp.eq.s32.totalorder %s30, 0
      %p116 = por %p114, %p115
      %s118 = sadd.s32 %s117, 1
      %p121 = scmp.eq.s32.totalorder %s24, 1
      %p122 = scmp.ne.s32.totalorder %s117, %s119
      %p123 = scmp.eq.s32.totalorder %s24, 0
      %p124 = por %p122, %p123
      %p125 = scmp.ne.s32.totalorder %s117, %s119
      %p126 = scmp.eq.s32.totalorder %s29, 1
      %p127 = por %p125, %p126
      %p128 = scmp.ne.s32.totalorder %s119, %s120
      %p129 = scmp.eq.s32.totalorder %s29, 0
      %p130 = por %p128, %p129
      %p131 = scmp.ne.s32.totalorder %s119, %s120
      %p132 = scmp.eq.s32.totalorder %s30, 1
      %p133 = por %p131, %p132
      %p135 = scmp.ne.s32.totalorder %s120, %s134
      %p136 = scmp.eq.s32.totalorder %s30, 0
      %p137 = por %p135, %p136
      %s138 = ssub.s32 %s31, %s43
      %s139 = ssub.s32 %s32, %s39
      %s140 = sor.u32 %s138, %s139
      %p141 = scmp.eq.s32.totalorder %s140, 0
      %s143 = sadd.s32 %s142, 1
      %s144 = scalar_select %p141, %s142, %s143
      %p147 = pneg %p141
      %p148 = scmp.eq.s32.totalorder %s24, 1
      %p149 = por %p147, %p148
      %p150 = scmp.ne.s32.totalorder %s142, %s145
      %p151 = scmp.eq.s32.totalorder %s24, 0
      %p152 = por %p150, %p151
      %p153 = scmp.ne.s32.totalorder %s142, %s145
      %p154 = scmp.eq.s32.totalorder %s29, 1
      %p155 = por %p153, %p154
      %p156 = scmp.ne.s32.totalorder %s145, %s146
      %p157 = scmp.eq.s32.totalorder %s29, 0
      %p158 = por %p156, %p157
      %p159 = scmp.ne.s32.totalorder %s145, %s146
      %p160 = scmp.eq.s32.totalorder %s30, 1
      %p161 = por %p159, %p160
      %p163 = scmp.ne.s32.totalorder %s146, %s162
      %p164 = scmp.eq.s32.totalorder %s30, 0
      %p165 = por %p163, %p164
      %s166 = ssub.s32 %s31, %s43
      %s167 = ssub.s32 %s32, %s39
      %s168 = sor.u32 %s166, %s167
      %p169 = scmp.eq.s32.totalorder %s168, 0
      %s171 = sadd.s32 %s170, 1
      %s172 = scalar_select %p169, %s170, %s171
      %p175 = pneg %p169
      %p176 = scmp.eq.s32.totalorder %s24, 1
      %p177 = por %p175, %p176
      %p178 = scmp.ne.s32.totalorder %s170, %s173
      %p179 = scmp.eq.s32.totalorder %s24, 0
      %p180 = por %p178, %p179
      %p181 = scmp.ne.s32.totalorder %s170, %s173
      %p182 = scmp.eq.s32.totalorder %s29, 1
      %p183 = por %p181, %p182
      %p184 = scmp.ne.s32.totalorder %s173, %s174
      %p185 = scmp.eq.s32.totalorder %s29, 0
      %p186 = por %p184, %p185
      %p187 = scmp.ne.s32.totalorder %s173, %s174
      %p188 = scmp.eq.s32.totalorder %s30, 1
      %p189 = por %p187, %p188
      %p191 = scmp.ne.s32.totalorder %s174, %s190
      %p192 = scmp.eq.s32.totalorder %s30, 0
      %p193 = por %p191, %p192
      %s194 = ssub.s32 %s31, %s43
      %s195 = ssub.s32 %s32, %s39
      %s196 = sor.u32 %s194, %s195
      %p197 = scmp.eq.s32.totalorder %s196, 0
      %s199 = sadd.s32 %s198, 1
      %s200 = scalar_select %p197, %s198, %s199
      %p203 = pneg %p197
      %p204 = scmp.eq.s32.totalorder %s24, 1
      %p205 = por %p203, %p204
      %p206 = scmp.ne.s32.totalorder %s198, %s201
      %p207 = scmp.eq.s32.totalorder %s24, 0
      %p208 = por %p206, %p207
      %p209 = scmp.ne.s32.totalorder %s198, %s201
      %p210 = scmp.eq.s32.totalorder %s29, 1
      %p211 = por %p209, %p210
      %p212 = scmp.ne.s32.totalorder %s201, %s202
      %p213 = scmp.eq.s32.totalorder %s29, 0
      %p214 = por %p212, %p213
      %p215 = scmp.ne.s32.totalorder %s201, %s202
      %p216 = scmp.eq.s32.totalorder %s30, 1
      %p217 = por %p215, %p216
      %p219 = scmp.ne.s32.totalorder %s202, %s218
      %p220 = scmp.eq.s32.totalorder %s30, 0
      %p221 = por %p219, %p220
      %p222 = scmp.le.s32.totalorder 1, %s24
      %p223 = scmp.lt.s32.totalorder %s24, 3
      %p224 = pnand %p222, %p223
      %p225 = pneg %p224
      // Predicated region
      $region9: #{bottleneck_forward.5} parent=5 // pred_check
        _
      $region10: #{bottleneck_forward.5} parent=5 // pred_check_branch
        %227 = sbr.rel (%p224) target = $region12
      $region11: #{bottleneck_forward.5} parent=5 // pred_region
        %s228 = ssub.s32 %s24, 1
        // Predicated region
        $region13: #{bottleneck_forward.5} parent=11 // pred_check
          %p229 = pneg %p88
        $region14: #{bottleneck_forward.5} parent=11 // pred_check_branch
          %231 = sbr.rel (%p229) target = $region16
        $region15: #{bottleneck_forward.5} parent=11 // pred_region
          %s233 = ssub.s32 2304, 2304
          %234 = vsyncadd [#allocation8], %s233
          %s235 = smul.addr %s34, 64
          %s236 = scalar_lea.hbm %s1, %s235
          %s237 = sshll.u32 [#allocation7], 4
          %s238 = int_to_ptr.vmem [resolvable:$true] %s237
          %243 = dma.hbm_to_vmem [thread:$0]  %s236, 2304, %s238, [#allocation8], 64, 64, 4
        $region16: #{bottleneck_forward.5} parent=11 // pred_fallthru
          _
        // Predicated region
        $region17: #{bottleneck_forward.5} parent=11 // pred_check
          %p244 = pneg %p109
        $region18: #{bottleneck_forward.5} parent=11 // pred_check_branch
          %246 = sbr.rel (%p244) target = $region20
        $region19: #{bottleneck_forward.5} parent=11 // pred_region
          %s248 = ssub.s32 16, 16
          %249 = vsyncadd [#allocation8], %s248
          %s251 = sshll.u32 [#allocation9], 4
          %s252 = int_to_ptr.vmem [resolvable:$true] %s251
          %254 = dma.hbm_to_vmem [thread:$0]  %s2, 16, %s252, [#allocation8]
        $region20: #{bottleneck_forward.5} parent=11 // pred_fallthru
          _
        // Predicated region
        $region21: #{bottleneck_forward.5} parent=11 // pred_check
          %p255 = pneg %p130
        $region22: #{bottleneck_forward.5} parent=11 // pred_check_branch
          %257 = sbr.rel (%p255) target = $region24
        $region23: #{bottleneck_forward.5} parent=11 // pred_region
          %s259 = ssub.s32 16, 16
          %260 = vsyncadd [#allocation11], %s259
          %s262 = sshll.u32 [#allocation10], 4
          %s263 = int_to_ptr.vmem [resolvable:$true] %s262
          %265 = dma.hbm_to_vmem [thread:$0]  %s3, 16, %s263, [#allocation11]
        $region24: #{bottleneck_forward.5} parent=11 // pred_fallthru
          _
      $region12: #{bottleneck_forward.5} parent=5 // pred_fallthru
        _
      %p266 = scmp.lt.s32.totalorder %s24, 2
      // Predicated region
      $region25: #{bottleneck_forward.5} parent=5 // pred_check
        %p267 = pneg %p266
      $region26: #{bottleneck_forward.5} parent=5 // pred_check_branch
        %269 = sbr.rel (%p267) target = $region28
      $region27: #{bottleneck_forward.5} parent=5 // pred_region
        // Predicated region
        $region29: #{bottleneck_forward.5} parent=27 // pred_check
          %p270 = pneg %p56
        $region30: #{bottleneck_forward.5} parent=27 // pred_check_branch
          %272 = sbr.rel (%p270) target = $region32
        $region31: #{bottleneck_forward.5} parent=27 // pred_region
          %s273 = sand.u32 %s46, 1
          %s274 = scalar_lea.sflag [#allocation5], %s273
          %s275 = sand.u32 %s46, 1
          %s276 = smul.addr %s275, 128
          %s277 = scalar_lea.vmem [#allocation4], %s276
          %s279 = ssub.s32 2048, 2048
          %280 = vsyncadd %s274, %s279
          %s281 = smul.addr %s31, 32
          %s282 = smul.addr %s281, 64
          %s283 = scalar_lea.hbm %s0, %s282
          %s284 = sshll.u32 %s277, 4
          %s285 = int_to_ptr.vmem [resolvable:$true] %s284
          %290 = dma.hbm_to_vmem [thread:$0]  %s283, 2048, %s285, %s274, 64, 64, 4
        $region32: #{bottleneck_forward.5} parent=27 // pred_fallthru
          _
      $region28: #{bottleneck_forward.5} parent=5 // pred_fallthru
        _
      %p291 = scmp.le.s32.totalorder 1, %s24
      %p292 = scmp.lt.s32.totalorder %s24, 3
      %p293 = pnand %p291, %p292
      %p294 = pneg %p293
      // Predicated region
      $region33: #{bottleneck_forward.5} parent=5 // pred_check
        _
      $region34: #{bottleneck_forward.5} parent=5 // pred_check_branch
        %296 = sbr.rel (%p293) target = $region36
      $region35: #{bottleneck_forward.5} parent=5 // pred_region
        %s297 = ssub.s32 %s24, 1
        %s298 = sand.u32 %s49, 1
        %s299 = scalar_lea.sflag [#allocation5], %s298
        %s300 = sand.u32 %s49, 1
        %s301 = smul.addr %s300, 128
        %s302 = scalar_lea.vmem [#allocation4], %s301
        // Predicated region
        $region37: #{bottleneck_forward.5} parent=35 // pred_check
          %p303 = pneg %p62
        $region38: #{bottleneck_forward.5} parent=35 // pred_check_branch
          %305 = sbr.rel (%p303) target = $region40
        $region39: #{bottleneck_forward.5} parent=35 // pred_region
          %306 = dma.done %s299, 2048
        $region40: #{bottleneck_forward.5} parent=35 // pred_fallthru
          _
        // Predicated region
        $region41: #{bottleneck_forward.5} parent=35 // pred_check
          %p307 = pneg %p88
        $region42: #{bottleneck_forward.5} parent=35 // pred_check_branch
          %309 = sbr.rel (%p307) target = $region44
        $region43: #{bottleneck_forward.5} parent=35 // pred_region
          %310 = dma.done [#allocation8], 2304
        $region44: #{bottleneck_forward.5} parent=35 // pred_fallthru
          _
        // Predicated region
        $region45: #{bottleneck_forward.5} parent=35 // pred_check
          %p311 = pneg %p109
        $region46: #{bottleneck_forward.5} parent=35 // pred_check_branch
          %313 = sbr.rel (%p311) target = $region48
        $region47: #{bottleneck_forward.5} parent=35 // pred_region
          %314 = dma.done [#allocation8], 16
        $region48: #{bottleneck_forward.5} parent=35 // pred_fallthru
          _
        // Predicated region
        $region49: #{bottleneck_forward.5} parent=35 // pred_check
          %p315 = pneg %p130
        $region50: #{bottleneck_forward.5} parent=35 // pred_check_branch
          %317 = sbr.rel (%p315) target = $region52
        $region51: #{bottleneck_forward.5} parent=35 // pred_region
          %318 = dma.done [#allocation11], 16
        $region52: #{bottleneck_forward.5} parent=35 // pred_fallthru
          _
        %s319 = sand.u32 %s49, 1
        %s320 = scalar_lea.sflag [#allocation5], %s319
        %s321 = sand.u32 %s49, 1
        %s322 = smul.addr %s321, 128
        %s323 = scalar_lea.vmem [#allocation4], %s322
        %p324 = pneg %p62
        %p325 = pneg %p59
        %p326 = pneg %p88
        %p327 = pneg %p85
        %p328 = pneg %p109
        %p329 = pneg %p106
        %p330 = pneg %p130
        %p331 = pneg %p127
        %p332 = pneg %p158
        %p333 = pneg %p155
        %s334 = sand.u32 %s145, 1
        %s335 = scalar_lea.sflag [#allocation6], %s334
        %s336 = sand.u32 %s145, 1
        %s337 = smul.addr %s336, 128
        %s338 = scalar_lea.vmem [#allocation12], %s337
        %p339 = pneg %p186
        %p340 = pneg %p183
        %s341 = sand.u32 %s29, 1
        %s342 = scalar_lea.sflag [#allocation14], %s341
        %s343 = sand.u32 %s173, 1
        %s344 = scalar_lea.vmem [#allocation13], %s343
        %p345 = pneg %p214
        %p346 = pneg %p211
        %s347 = sand.u32 %s29, 1
        %s348 = scalar_lea.sflag [#allocation14], %s347
        %s349 = sand.u32 %s201, 1
        %s350 = scalar_lea.vmem [#allocation15], %s349
        %p352 = scmp.eq.s32.totalorder %s34, 0
        // Predicated region
        $region53: #{bottleneck_forward.5} parent=35 // pred_check
          %p353 = pneg %p352
        $region54: #{bottleneck_forward.5} parent=35 // pred_check_branch
          %355 = sbr.rel (%p353) target = $region56
        $region55: #{bottleneck_forward.5} parent=35 // pred_region
          %vm356 = vcmask 257024
          %357 = vst.msk [vmem:[#allocation2] sm:$0xf] %vm356, 0
          %358 = vst.msk [vmem:[#allocation2 + $0x4] sm:$0xf] %vm356, 0
          %vm359 = vcmask 254976
          %360 = vst.msk [vmem:[#allocation2 + $0x8] sm:$0x3] %vm359, 0
          %361 = vst.msk [vmem:[#allocation2 + $0xc] sm:$0xf] %vm356, 0
          %362 = vst.msk [vmem:[#allocation2 + $0x10] sm:$0xf] %vm356, 0
          %363 = vst.msk [vmem:[#allocation2 + $0x14] sm:$0x3] %vm359, 0
          %364 = vst.msk [vmem:[#allocation2 + $0x18] sm:$0xf] %vm356, 0
          %365 = vst.msk [vmem:[#allocation2 + $0x1c] sm:$0xf] %vm356, 0
          %366 = vst.msk [vmem:[#allocation2 + $0x20] sm:$0x3] %vm359, 0
          %367 = vst.msk [vmem:[#allocation2 + $0x24] sm:$0xf] %vm356, 0
          %368 = vst.msk [vmem:[#allocation2 + $0x28] sm:$0xf] %vm356, 0
          %369 = vst.msk [vmem:[#allocation2 + $0x2c] sm:$0x3] %vm359, 0
          %370 = vst.msk [vmem:[#allocation2 + $0x30] sm:$0xf] %vm356, 0
          %371 = vst.msk [vmem:[#allocation2 + $0x34] sm:$0xf] %vm356, 0
          %372 = vst.msk [vmem:[#allocation2 + $0x38] sm:$0x3] %vm359, 0
          %373 = vst.msk [vmem:[#allocation2 + $0x3c] sm:$0xf] %vm356, 0
          %374 = vst.msk [vmem:[#allocation2 + $0x40] sm:$0xf] %vm356, 0
          %375 = vst.msk [vmem:[#allocation2 + $0x44] sm:$0x3] %vm359, 0
          %376 = vst.msk [vmem:[#allocation2 + $0x48] sm:$0xf] %vm356, 0
          %377 = vst.msk [vmem:[#allocation2 + $0x4c] sm:$0xf] %vm356, 0
          %378 = vst.msk [vmem:[#allocation2 + $0x50] sm:$0x3] %vm359, 0
          %379 = vst.msk [vmem:[#allocation2 + $0x54] sm:$0xf] %vm356, 0
          %380 = vst.msk [vmem:[#allocation2 + $0x58] sm:$0xf] %vm356, 0
          %381 = vst.msk [vmem:[#allocation2 + $0x5c] sm:$0x3] %vm359, 0
          %382 = vst.msk [vmem:[#allocation2 + $0x60] sm:$0xf] %vm356, 0
          %383 = vst.msk [vmem:[#allocation2 + $0x64] sm:$0xf] %vm356, 0
          %384 = vst.msk [vmem:[#allocation2 + $0x68] sm:$0x3] %vm359, 0
          %385 = vst.msk [vmem:[#allocation2 + $0x6c] sm:$0xf] %vm356, 0
          %386 = vst.msk [vmem:[#allocation2 + $0x70] sm:$0xf] %vm356, 0
          %387 = vst.msk [vmem:[#allocation2 + $0x74] sm:$0x3] %vm359, 0
          %388 = vst.msk [vmem:[#allocation2 + $0x78] sm:$0xf] %vm356, 0
          %389 = vst.msk [vmem:[#allocation2 + $0x7c] sm:$0xf] %vm356, 0
          %390 = vst.msk [vmem:[#allocation2 + $0x80] sm:$0x3] %vm359, 0
          %391 = vst.msk [vmem:[#allocation2 + $0x84] sm:$0xf] %vm356, 0
          %392 = vst.msk [vmem:[#allocation2 + $0x88] sm:$0xf] %vm356, 0
          %393 = vst.msk [vmem:[#allocation2 + $0x8c] sm:$0x3] %vm359, 0
          %394 = vst.msk [vmem:[#allocation2 + $0x90] sm:$0xf] %vm356, 0
          %395 = vst.msk [vmem:[#allocation2 + $0x94] sm:$0xf] %vm356, 0
          %396 = vst.msk [vmem:[#allocation2 + $0x98] sm:$0x3] %vm359, 0
          %397 = vst.msk [vmem:[#allocation2 + $0x9c] sm:$0xf] %vm356, 0
          %398 = vst.msk [vmem:[#allocation2 + $0xa0] sm:$0xf] %vm356, 0
          %399 = vst.msk [vmem:[#allocation2 + $0xa4] sm:$0x3] %vm359, 0
          %400 = vst.msk [vmem:[#allocation2 + $0xa8] sm:$0xf] %vm356, 0
          %401 = vst.msk [vmem:[#allocation2 + $0xac] sm:$0xf] %vm356, 0
          %402 = vst.msk [vmem:[#allocation2 + $0xb0] sm:$0x3] %vm359, 0
          %403 = vst.msk [vmem:[#allocation2 + $0xb4] sm:$0xf] %vm356, 0
          %404 = vst.msk [vmem:[#allocation2 + $0xb8] sm:$0xf] %vm356, 0
          %405 = vst.msk [vmem:[#allocation2 + $0xbc] sm:$0x3] %vm359, 0
          %406 = vst.msk [vmem:[#allocation2 + $0xc0] sm:$0xf] %vm356, 0
          %407 = vst.msk [vmem:[#allocation2 + $0xc4] sm:$0xf] %vm356, 0
          %408 = vst.msk [vmem:[#allocation2 + $0xc8] sm:$0x3] %vm359, 0
          %409 = vst.msk [vmem:[#allocation2 + $0xcc] sm:$0xf] %vm356, 0
          %410 = vst.msk [vmem:[#allocation2 + $0xd0] sm:$0xf] %vm356, 0
          %411 = vst.msk [vmem:[#allocation2 + $0xd4] sm:$0x3] %vm359, 0
          %412 = vst.msk [vmem:[#allocation2 + $0xd8] sm:$0xf] %vm356, 0
          %413 = vst.msk [vmem:[#allocation2 + $0xdc] sm:$0xf] %vm356, 0
          %414 = vst.msk [vmem:[#allocation2 + $0xe0] sm:$0x3] %vm359, 0
          %415 = vst.msk [vmem:[#allocation2 + $0xe4] sm:$0xf] %vm356, 0
          %416 = vst.msk [vmem:[#allocation2 + $0xe8] sm:$0xf] %vm356, 0
          %417 = vst.msk [vmem:[#allocation2 + $0xec] sm:$0x3] %vm359, 0
          %v418 = vld [vmem:[%s302] sm:$0xf]
          %v419 = vld [vmem:[%s302 + $0x4] sm:$0xf]
          %v420 = vld [vmem:[%s302 + $0x8] sm:$0xf]
          %v421 = vld [vmem:[%s302 + $0xc] sm:$0xf]
          %v422 = vld [vmem:[%s302 + $0x10] sm:$0xf]
          %v423 = vld [vmem:[%s302 + $0x14] sm:$0xf]
          %v424 = vld [vmem:[%s302 + $0x18] sm:$0xf]
          %v425 = vld [vmem:[%s302 + $0x1c] sm:$0xf]
          %v426 = vld [vmem:[%s302 + $0x20] sm:$0xf]
          %v427 = vld [vmem:[%s302 + $0x24] sm:$0xf]
          %v428 = vld [vmem:[%s302 + $0x28] sm:$0xf]
          %v429 = vld [vmem:[%s302 + $0x2c] sm:$0xf]
          %v430 = vld [vmem:[%s302 + $0x30] sm:$0xf]
          %v431 = vld [vmem:[%s302 + $0x34] sm:$0xf]
          %v432 = vld [vmem:[%s302 + $0x38] sm:$0xf]
          %v433 = vld [vmem:[%s302 + $0x3c] sm:$0xf]
          %v434 = vld [vmem:[%s302 + $0x40] sm:$0xf]
          %v435 = vld [vmem:[%s302 + $0x44] sm:$0xf]
          %v436 = vld [vmem:[%s302 + $0x48] sm:$0xf]
          %v437 = vld [vmem:[%s302 + $0x4c] sm:$0xf]
          %v438 = vld [vmem:[%s302 + $0x50] sm:$0xf]
          %v439 = vld [vmem:[%s302 + $0x54] sm:$0xf]
          %v440 = vld [vmem:[%s302 + $0x58] sm:$0xf]
          %v441 = vld [vmem:[%s302 + $0x5c] sm:$0xf]
          %v442 = vld [vmem:[%s302 + $0x60] sm:$0xf]
          %v443 = vld [vmem:[%s302 + $0x64] sm:$0xf]
          %v444 = vld [vmem:[%s302 + $0x68] sm:$0xf]
          %v445 = vld [vmem:[%s302 + $0x6c] sm:$0xf]
          %v446 = vld [vmem:[%s302 + $0x70] sm:$0xf]
          %v447 = vld [vmem:[%s302 + $0x74] sm:$0xf]
          %v448 = vld [vmem:[%s302 + $0x78] sm:$0xf]
          %v449 = vld [vmem:[%s302 + $0x7c] sm:$0xf]
          %v450 = vunpack.c.l.bf16 %v418
          %v451 = vunpack.c.l.bf16 %v419
          %v452 = vunpack.c.l.bf16 %v420
          %v453 = vunpack.c.l.bf16 %v421
          %v454 = vunpack.c.l.bf16 %v422
          %v455 = vunpack.c.l.bf16 %v423
          %v456 = vunpack.c.l.bf16 %v424
          %v457 = vunpack.c.l.bf16 %v425
          %v458 = vunpack.c.l.bf16 %v426
          %v459 = vunpack.c.l.bf16 %v427
          %v460 = vunpack.c.l.bf16 %v428
          %v461 = vunpack.c.l.bf16 %v429
          %v462 = vunpack.c.l.bf16 %v430
          %v463 = vunpack.c.l.bf16 %v431
          %v464 = vunpack.c.l.bf16 %v432
          %v465 = vunpack.c.l.bf16 %v433
          %v466 = vunpack.c.l.bf16 %v434
          %v467 = vunpack.c.l.bf16 %v435
          %v468 = vunpack.c.l.bf16 %v436
          %v469 = vunpack.c.l.bf16 %v437
          %v470 = vunpack.c.l.bf16 %v438
          %v471 = vunpack.c.l.bf16 %v439
          %v472 = vunpack.c.l.bf16 %v440
          %v473 = vunpack.c.l.bf16 %v441
          %v474 = vunpack.c.l.bf16 %v442
          %v475 = vunpack.c.l.bf16 %v443
          %v476 = vunpack.c.l.bf16 %v444
          %v477 = vunpack.c.l.bf16 %v445
          %v478 = vunpack.c.l.bf16 %v446
          %v479 = vunpack.c.l.bf16 %v447
          %v480 = vunpack.c.l.bf16 %v448
          %v481 = vunpack.c.l.bf16 %v449
          %v482 = vld [vmem:[#allocation9] sm:$0x1]
          %v484 = vlaneseq
          %v485 = vshrl.u32 %v484, 7
          %v486 = vsub.s32 0, %v485
          %v487 = vrot.slane %v482, %v486
          %v489 = vmul.f32 %v450, %v487
          %v490 = vmul.f32 %v451, %v487
          %v491 = vmul.f32 %v452, %v487
          %v492 = vmul.f32 %v453, %v487
          %v493 = vmul.f32 %v454, %v487
          %v494 = vmul.f32 %v455, %v487
          %v495 = vmul.f32 %v456, %v487
          %v496 = vmul.f32 %v457, %v487
          %v497 = vmul.f32 %v458, %v487
          %v498 = vmul.f32 %v459, %v487
          %v499 = vmul.f32 %v460, %v487
          %v500 = vmul.f32 %v461, %v487
          %v501 = vmul.f32 %v462, %v487
          %v502 = vmul.f32 %v463, %v487
          %v503 = vmul.f32 %v464, %v487
          %v504 = vmul.f32 %v465, %v487
          %v505 = vmul.f32 %v466, %v487
          %v506 = vmul.f32 %v467, %v487
          %v507 = vmul.f32 %v468, %v487
          %v508 = vmul.f32 %v469, %v487
          %v509 = vmul.f32 %v470, %v487
          %v510 = vmul.f32 %v471, %v487
          %v511 = vmul.f32 %v472, %v487
          %v512 = vmul.f32 %v473, %v487
          %v513 = vmul.f32 %v474, %v487
          %v514 = vmul.f32 %v475, %v487
          %v515 = vmul.f32 %v476, %v487
          %v516 = vmul.f32 %v477, %v487
          %v517 = vmul.f32 %v478, %v487
          %v518 = vmul.f32 %v479, %v487
          %v519 = vmul.f32 %v480, %v487
          %v520 = vmul.f32 %v481, %v487
          %v521 = vld [vmem:[#allocation10] sm:$0x1]
          %v523 = vlaneseq
          %v524 = vshrl.u32 %v523, 7
          %v525 = vsub.s32 0, %v524
          %v526 = vrot.slane %v521, %v525
          %v528 = vadd.f32 %v489, %v526
          %v529 = vadd.f32 %v490, %v526
          %v530 = vadd.f32 %v491, %v526
          %v531 = vadd.f32 %v492, %v526
          %v532 = vadd.f32 %v493, %v526
          %v533 = vadd.f32 %v494, %v526
          %v534 = vadd.f32 %v495, %v526
          %v535 = vadd.f32 %v496, %v526
          %v536 = vadd.f32 %v497, %v526
          %v537 = vadd.f32 %v498, %v526
          %v538 = vadd.f32 %v499, %v526
          %v539 = vadd.f32 %v500, %v526
          %v540 = vadd.f32 %v501, %v526
          %v541 = vadd.f32 %v502, %v526
          %v542 = vadd.f32 %v503, %v526
          %v543 = vadd.f32 %v504, %v526
          %v544 = vadd.f32 %v505, %v526
          %v545 = vadd.f32 %v506, %v526
          %v546 = vadd.f32 %v507, %v526
          %v547 = vadd.f32 %v508, %v526
          %v548 = vadd.f32 %v509, %v526
          %v549 = vadd.f32 %v510, %v526
          %v550 = vadd.f32 %v511, %v526
          %v551 = vadd.f32 %v512, %v526
          %v552 = vadd.f32 %v513, %v526
          %v553 = vadd.f32 %v514, %v526
          %v554 = vadd.f32 %v515, %v526
          %v555 = vadd.f32 %v516, %v526
          %v556 = vadd.f32 %v517, %v526
          %v557 = vadd.f32 %v518, %v526
          %v558 = vadd.f32 %v519, %v526
          %v559 = vadd.f32 %v520, %v526
          %v560 = vmax.f32 %v528, 0.0
          %v561 = vmax.f32 %v529, 0.0
          %v562 = vmax.f32 %v530, 0.0
          %v563 = vmax.f32 %v531, 0.0
          %v564 = vmax.f32 %v532, 0.0
          %v565 = vmax.f32 %v533, 0.0
          %v566 = vmax.f32 %v534, 0.0
          %v567 = vmax.f32 %v535, 0.0
          %v568 = vmax.f32 %v536, 0.0
          %v569 = vmax.f32 %v537, 0.0
          %v570 = vmax.f32 %v538, 0.0
          %v571 = vmax.f32 %v539, 0.0
          %v572 = vmax.f32 %v540, 0.0
          %v573 = vmax.f32 %v541, 0.0
          %v574 = vmax.f32 %v542, 0.0
          %v575 = vmax.f32 %v543, 0.0
          %v576 = vmax.f32 %v544, 0.0
          %v577 = vmax.f32 %v545, 0.0
          %v578 = vmax.f32 %v546, 0.0
          %v579 = vmax.f32 %v547, 0.0
          %v580 = vmax.f32 %v548, 0.0
          %v581 = vmax.f32 %v549, 0.0
          %v582 = vmax.f32 %v550, 0.0
          %v583 = vmax.f32 %v551, 0.0
          %v584 = vmax.f32 %v552, 0.0
          %v585 = vmax.f32 %v553, 0.0
          %v586 = vmax.f32 %v554, 0.0
          %v587 = vmax.f32 %v555, 0.0
          %v588 = vmax.f32 %v556, 0.0
          %v589 = vmax.f32 %v557, 0.0
          %v590 = vmax.f32 %v558, 0.0
          %v591 = vmax.f32 %v559, 0.0
          %v592 = vpack.c.bf16 %v561, %v560
          %v593 = vpack.c.bf16 %v563, %v562
          %v594 = vpack.c.bf16 %v565, %v564
          %v595 = vpack.c.bf16 %v567, %v566
          %v596 = vpack.c.bf16 %v569, %v568
          %v597 = vpack.c.bf16 %v571, %v570
          %v598 = vpack.c.bf16 %v573, %v572
          %v599 = vpack.c.bf16 %v575, %v574
          %v600 = vpack.c.bf16 %v577, %v576
          %v601 = vpack.c.bf16 %v579, %v578
          %v602 = vpack.c.bf16 %v581, %v580
          %v603 = vpack.c.bf16 %v583, %v582
          %v604 = vpack.c.bf16 %v585, %v584
          %v605 = vpack.c.bf16 %v587, %v586
          %v606 = vpack.c.bf16 %v589, %v588
          %v607 = vpack.c.bf16 %v591, %v590
          %v624 = vunpack.c.l.b16 %v592
          %v625 = vunpack.c.h.b16 %v592
          %v626 = vunpack.c.l.b16 %v593
          %v627 = vunpack.c.h.b16 %v593
          %v628 = vunpack.c.l.b16 %v594
          %v629 = vunpack.c.h.b16 %v594
          %v630 = vunpack.c.l.b16 %v595
          %v631 = vunpack.c.h.b16 %v595
          %v632 = vunpack.c.l.b16 %v596
          %v633 = vunpack.c.h.b16 %v596
          %v634 = vunpack.c.l.b16 %v597
          %v635 = vunpack.c.h.b16 %v597
          %v636 = vunpack.c.l.b16 %v598
          %v637 = vunpack.c.h.b16 %v598
          %v638 = vunpack.c.l.b16 %v599
          %v639 = vunpack.c.h.b16 %v599
          %v640 = vunpack.c.l.b16 %v600
          %v641 = vunpack.c.h.b16 %v600
          %v642 = vunpack.c.l.b16 %v601
          %v643 = vunpack.c.h.b16 %v601
          %v644 = vunpack.c.l.b16 %v602
          %v645 = vunpack.c.h.b16 %v602
          %v646 = vunpack.c.l.b16 %v603
          %v647 = vunpack.c.h.b16 %v603
          %v648 = vunpack.c.l.b16 %v604
          %v649 = vunpack.c.h.b16 %v604
          %v650 = vunpack.c.l.b16 %v605
          %v651 = vunpack.c.h.b16 %v605
          %v652 = vunpack.c.l.b16 %v606
          %v653 = vunpack.c.h.b16 %v606
          %v654 = vunpack.c.l.b16 %v607
          %v655 = vunpack.c.h.b16 %v607
          %v656 = vpack.c.b16 %v624, %v624
          %v657 = vpack.c.b16 %v625, %v625
          %v658 = vpack.c.b16 %v626, %v626
          %v659 = vpack.c.b16 %v627, %v627
          %v660 = vpack.c.b16 %v628, %v628
          %v661 = vpack.c.b16 %v629, %v629
          %v662 = vpack.c.b16 %v630, %v630
          %v663 = vpack.c.b16 %v631, %v631
          %v664 = vpack.c.b16 %v632, %v632
          %v665 = vpack.c.b16 %v633, %v633
          %v666 = vpack.c.b16 %v634, %v634
          %v667 = vpack.c.b16 %v635, %v635
          %v668 = vpack.c.b16 %v636, %v636
          %v669 = vpack.c.b16 %v637, %v637
          %v670 = vpack.c.b16 %v638, %v638
          %v671 = vpack.c.b16 %v639, %v639
          %v672 = vpack.c.b16 %v640, %v640
          %v673 = vpack.c.b16 %v641, %v641
          %v674 = vpack.c.b16 %v642, %v642
          %v675 = vpack.c.b16 %v643, %v643
          %v676 = vpack.c.b16 %v644, %v644
          %v677 = vpack.c.b16 %v645, %v645
          %v678 = vpack.c.b16 %v646, %v646
          %v679 = vpack.c.b16 %v647, %v647
          %v680 = vpack.c.b16 %v648, %v648
          %v681 = vpack.c.b16 %v649, %v649
          %v682 = vpack.c.b16 %v650, %v650
          %v683 = vpack.c.b16 %v651, %v651
          %v684 = vpack.c.b16 %v652, %v652
          %v685 = vpack.c.b16 %v653, %v653
          %v686 = vpack.c.b16 %v654, %v654
          %v687 = vpack.c.b16 %v655, %v655
          %vm688 = vcmask 1040384
          %vm689 = vcmask 1044484
          %vm690 = vmor %vm688, %vm689
          %v691 = vrot.slane %v656, 7
          %v692 = vrot.slane %v691, 4
          %v693 = vrot.slane %v657, 7
          %v694 = vsel %vm690, %v692, %v693
          %v695 = vrot.slane %v693, 4
          %v696 = vrot.slane %v658, 7
          %v697 = vrot.slane %v696, 4
          %v698 = vrot.slane %v659, 7
          %v699 = vsel %vm690, %v697, %v698
          %v700 = vrot.slane %v698, 4
          %v701 = vrot.slane %v660, 7
          %v702 = vrot.slane %v701, 4
          %v703 = vrot.slane %v661, 7
          %v704 = vsel %vm690, %v702, %v703
          %v705 = vrot.slane %v703, 4
          %v706 = vrot.slane %v662, 7
          %v707 = vrot.slane %v706, 4
          %v708 = vrot.slane %v663, 7
          %v709 = vsel %vm690, %v707, %v708
          %v710 = vrot.slane %v708, 4
          %v711 = vrot.slane %v664, 7
          %v712 = vrot.slane %v711, 4
          %v713 = vrot.slane %v665, 7
          %v714 = vsel %vm690, %v712, %v713
          %v715 = vrot.slane %v713, 4
          %v716 = vrot.slane %v666, 7
          %v717 = vrot.slane %v716, 4
          %v718 = vrot.slane %v667, 7
          %v719 = vsel %vm690, %v717, %v718
          %v720 = vrot.slane %v718, 4
          %v721 = vrot.slane %v668, 7
          %v722 = vrot.slane %v721, 4
          %v723 = vrot.slane %v669, 7
          %v724 = vsel %vm690, %v722, %v723
          %v725 = vrot.slane %v723, 4
          %v726 = vrot.slane %v670, 7
          %v727 = vrot.slane %v726, 4
          %v728 = vrot.slane %v671, 7
          %v729 = vsel %vm690, %v727, %v728
          %v730 = vrot.slane %v728, 4
          %v731 = vrot.slane %v672, 7
          %v732 = vrot.slane %v731, 4
          %v733 = vrot.slane %v673, 7
          %v734 = vsel %vm690, %v732, %v733
          %v735 = vrot.slane %v733, 4
          %v736 = vrot.slane %v674, 7
          %v737 = vrot.slane %v736, 4
          %v738 = vrot.slane %v675, 7
          %v739 = vsel %vm690, %v737, %v738
          %v740 = vrot.slane %v738, 4
          %v741 = vrot.slane %v676, 7
          %v742 = vrot.slane %v741, 4
          %v743 = vrot.slane %v677, 7
          %v744 = vsel %vm690, %v742, %v743
          %v745 = vrot.slane %v743, 4
          %v746 = vrot.slane %v678, 7
          %v747 = vrot.slane %v746, 4
          %v748 = vrot.slane %v679, 7
          %v749 = vsel %vm690, %v747, %v748
          %v750 = vrot.slane %v748, 4
          %v751 = vrot.slane %v680, 7
          %v752 = vrot.slane %v751, 4
          %v753 = vrot.slane %v681, 7
          %v754 = vsel %vm690, %v752, %v753
          %v755 = vrot.slane %v753, 4
          %v756 = vrot.slane %v682, 7
          %v757 = vrot.slane %v756, 4
          %v758 = vrot.slane %v683, 7
          %v759 = vsel %vm690, %v757, %v758
          %v760 = vrot.slane %v758, 4
          %v761 = vrot.slane %v684, 7
          %v762 = vrot.slane %v761, 4
          %v763 = vrot.slane %v685, 7
          %v764 = vsel %vm690, %v762, %v763
          %v765 = vrot.slane %v763, 4
          %v766 = vrot.slane %v686, 7
          %v767 = vrot.slane %v766, 4
          %v768 = vrot.slane %v687, 7
          %v769 = vsel %vm690, %v767, %v768
          %v770 = vrot.slane %v768, 4
          %s819 = scalar_lea.vmem [#allocation2], 24
          %vm820 = vcmask 257025
          %821 = vst.msk [vmem:[%s819] sm:$0xe] %vm820, %v691
          %822 = vst.msk [vmem:[%s819 + $0x4] sm:$0xf] %vm356, %v694
          %vm823 = vcmask 253952
          %824 = vst.msk [vmem:[%s819 + $0x8] sm:$0x1] %vm823, %v695
          %825 = vst.msk [vmem:[%s819 + $0xc] sm:$0xe] %vm820, %v696
          %826 = vst.msk [vmem:[%s819 + $0x10] sm:$0xf] %vm356, %v699
          %827 = vst.msk [vmem:[%s819 + $0x14] sm:$0x1] %vm823, %v700
          %828 = vst.msk [vmem:[%s819 + $0x18] sm:$0xe] %vm820, %v701
          %829 = vst.msk [vmem:[%s819 + $0x1c] sm:$0xf] %vm356, %v704
          %830 = vst.msk [vmem:[%s819 + $0x20] sm:$0x1] %vm823, %v705
          %831 = vst.msk [vmem:[%s819 + $0x24] sm:$0xe] %vm820, %v706
          %832 = vst.msk [vmem:[%s819 + $0x28] sm:$0xf] %vm356, %v709
          %833 = vst.msk [vmem:[%s819 + $0x2c] sm:$0x1] %vm823, %v710
          %834 = vst.msk [vmem:[%s819 + $0x30] sm:$0xe] %vm820, %v711
          %835 = vst.msk [vmem:[%s819 + $0x34] sm:$0xf] %vm356, %v714
          %836 = vst.msk [vmem:[%s819 + $0x38] sm:$0x1] %vm823, %v715
          %837 = vst.msk [vmem:[%s819 + $0x3c] sm:$0xe] %vm820, %v716
          %838 = vst.msk [vmem:[%s819 + $0x40] sm:$0xf] %vm356, %v719
          %839 = vst.msk [vmem:[%s819 + $0x44] sm:$0x1] %vm823, %v720
          %840 = vst.msk [vmem:[%s819 + $0x48] sm:$0xe] %vm820, %v721
          %841 = vst.msk [vmem:[%s819 + $0x4c] sm:$0xf] %vm356, %v724
          %842 = vst.msk [vmem:[%s819 + $0x50] sm:$0x1] %vm823, %v725
          %843 = vst.msk [vmem:[%s819 + $0x54] sm:$0xe] %vm820, %v726
          %844 = vst.msk [vmem:[%s819 + $0x58] sm:$0xf] %vm356, %v729
          %845 = vst.msk [vmem:[%s819 + $0x5c] sm:$0x1] %vm823, %v730
          %846 = vst.msk [vmem:[%s819 + $0x60] sm:$0xe] %vm820, %v731
          %847 = vst.msk [vmem:[%s819 + $0x64] sm:$0xf] %vm356, %v734
          %848 = vst.msk [vmem:[%s819 + $0x68] sm:$0x1] %vm823, %v735
          %849 = vst.msk [vmem:[%s819 + $0x6c] sm:$0xe] %vm820, %v736
          %850 = vst.msk [vmem:[%s819 + $0x70] sm:$0xf] %vm356, %v739
          %851 = vst.msk [vmem:[%s819 + $0x74] sm:$0x1] %vm823, %v740
          %852 = vst.msk [vmem:[%s819 + $0x78] sm:$0xe] %vm820, %v741
          %853 = vst.msk [vmem:[%s819 + $0x7c] sm:$0xf] %vm356, %v744
          %854 = vst.msk [vmem:[%s819 + $0x80] sm:$0x1] %vm823, %v745
          %855 = vst.msk [vmem:[%s819 + $0x84] sm:$0xe] %vm820, %v746
          %856 = vst.msk [vmem:[%s819 + $0x88] sm:$0xf] %vm356, %v749
          %857 = vst.msk [vmem:[%s819 + $0x8c] sm:$0x1] %vm823, %v750
          %858 = vst.msk [vmem:[%s819 + $0x90] sm:$0xe] %vm820, %v751
          %859 = vst.msk [vmem:[%s819 + $0x94] sm:$0xf] %vm356, %v754
          %860 = vst.msk [vmem:[%s819 + $0x98] sm:$0x1] %vm823, %v755
          %861 = vst.msk [vmem:[%s819 + $0x9c] sm:$0xe] %vm820, %v756
          %862 = vst.msk [vmem:[%s819 + $0xa0] sm:$0xf] %vm356, %v759
          %863 = vst.msk [vmem:[%s819 + $0xa4] sm:$0x1] %vm823, %v760
          %864 = vst.msk [vmem:[%s819 + $0xa8] sm:$0xe] %vm820, %v761
          %865 = vst.msk [vmem:[%s819 + $0xac] sm:$0xf] %vm356, %v764
          %866 = vst.msk [vmem:[%s819 + $0xb0] sm:$0x1] %vm823, %v765
          %867 = vst.msk [vmem:[%s819 + $0xb4] sm:$0xe] %vm820, %v766
          %868 = vst.msk [vmem:[%s819 + $0xb8] sm:$0xf] %vm356, %v769
          %869 = vst.msk [vmem:[%s819 + $0xbc] sm:$0x1] %vm823, %v770
        $region56: #{bottleneck_forward.5} parent=35 // pred_fallthru
          _
        %v870 = vld [vmem:[#allocation2] sm:$0xf]
        %v871 = vld [vmem:[#allocation2 + $0x4] sm:$0xf]
        %v872 = vld [vmem:[#allocation2 + $0xc] sm:$0xf]
        %v873 = vld [vmem:[#allocation2 + $0x10] sm:$0xf]
        %v874 = vld [vmem:[#allocation2 + $0x18] sm:$0xf]
        %v875 = vld [vmem:[#allocation2 + $0x1c] sm:$0xf]
        %v876 = vld [vmem:[#allocation2 + $0x24] sm:$0xf]
        %v877 = vld [vmem:[#allocation2 + $0x28] sm:$0xf]
        %v878 = vld [vmem:[#allocation2 + $0x30] sm:$0xf]
        %v879 = vld [vmem:[#allocation2 + $0x34] sm:$0xf]
        %v880 = vld [vmem:[#allocation2 + $0x3c] sm:$0xf]
        %v881 = vld [vmem:[#allocation2 + $0x40] sm:$0xf]
        %v882 = vld [vmem:[#allocation2 + $0x48] sm:$0xf]
        %v883 = vld [vmem:[#allocation2 + $0x4c] sm:$0xf]
        %v884 = vld [vmem:[#allocation2 + $0x54] sm:$0xf]
        %v885 = vld [vmem:[#allocation2 + $0x58] sm:$0xf]
        %v886 = vld [vmem:[#allocation2 + $0x60] sm:$0xf]
        %v887 = vld [vmem:[#allocation2 + $0x64] sm:$0xf]
        %v888 = vld [vmem:[#allocation2 + $0x6c] sm:$0xf]
        %v889 = vld [vmem:[#allocation2 + $0x70] sm:$0xf]
        %v890 = vld [vmem:[#allocation2 + $0x78] sm:$0xf]
        %v891 = vld [vmem:[#allocation2 + $0x7c] sm:$0xf]
        %v892 = vld [vmem:[#allocation2 + $0x84] sm:$0xf]
        %v893 = vld [vmem:[#allocation2 + $0x88] sm:$0xf]
        %v894 = vld [vmem:[#allocation2 + $0x90] sm:$0xf]
        %v895 = vld [vmem:[#allocation2 + $0x94] sm:$0xf]
        %v896 = vld [vmem:[#allocation2 + $0x9c] sm:$0xf]
        %v897 = vld [vmem:[#allocation2 + $0xa0] sm:$0xf]
        %v898 = vld [vmem:[#allocation2 + $0xa8] sm:$0xf]
        %v899 = vld [vmem:[#allocation2 + $0xac] sm:$0xf]
        %v900 = vld [vmem:[#allocation2 + $0xb4] sm:$0xf]
        %v901 = vld [vmem:[#allocation2 + $0xb8] sm:$0xf]
        %v902 = vld [vmem:[#allocation7] sm:$0xf]
        %v903 = vld [vmem:[#allocation7 + $0x4] sm:$0xf]
        %v904 = vld [vmem:[#allocation7 + $0x8] sm:$0xf]
        %v905 = vld [vmem:[#allocation7 + $0xc] sm:$0xf]
        %v938 = vunpack.c.l.b16 %v870
        %v939 = vunpack.c.l.b16 %v871
        %v940 = vunpack.c.l.b16 %v872
        %v941 = vunpack.c.l.b16 %v873
        %v942 = vunpack.c.l.b16 %v874
        %v943 = vunpack.c.l.b16 %v875
        %v944 = vunpack.c.l.b16 %v876
        %v945 = vunpack.c.l.b16 %v877
        %v946 = vunpack.c.l.b16 %v878
        %v947 = vunpack.c.l.b16 %v879
        %v948 = vunpack.c.l.b16 %v880
        %v949 = vunpack.c.l.b16 %v881
        %v950 = vunpack.c.l.b16 %v882
        %v951 = vunpack.c.l.b16 %v883
        %v952 = vunpack.c.l.b16 %v884
        %v953 = vunpack.c.l.b16 %v885
        %v954 = vunpack.c.l.b16 %v886
        %v955 = vunpack.c.l.b16 %v887
        %v956 = vunpack.c.l.b16 %v888
        %v957 = vunpack.c.l.b16 %v889
        %v958 = vunpack.c.l.b16 %v890
        %v959 = vunpack.c.l.b16 %v891
        %v960 = vunpack.c.l.b16 %v892
        %v961 = vunpack.c.l.b16 %v893
        %v962 = vunpack.c.l.b16 %v894
        %v963 = vunpack.c.l.b16 %v895
        %v964 = vunpack.c.l.b16 %v896
        %v965 = vunpack.c.l.b16 %v897
        %v966 = vunpack.c.l.b16 %v898
        %v967 = vunpack.c.l.b16 %v899
        %v968 = vunpack.c.l.b16 %v900
        %v969 = vunpack.c.l.b16 %v901
        %v970 = vpack.c.b16 %v939, %v938
        %v971 = vpack.c.b16 %v941, %v940
        %v972 = vpack.c.b16 %v943, %v942
        %v973 = vpack.c.b16 %v945, %v944
        %v974 = vpack.c.b16 %v947, %v946
        %v975 = vpack.c.b16 %v949, %v948
        %v976 = vpack.c.b16 %v951, %v950
        %v977 = vpack.c.b16 %v953, %v952
        %v978 = vpack.c.b16 %v955, %v954
        %v979 = vpack.c.b16 %v957, %v956
        %v980 = vpack.c.b16 %v959, %v958
        %v981 = vpack.c.b16 %v961, %v960
        %v982 = vpack.c.b16 %v963, %v962
        %v983 = vpack.c.b16 %v965, %v964
        %v984 = vpack.c.b16 %v967, %v966
        %v985 = vpack.c.b16 %v969, %v968
        %v990 = vunpack.c.l.b16 %v902
        %v991 = vunpack.c.l.b16 %v903
        %v992 = vunpack.c.l.b16 %v904
        %v993 = vunpack.c.l.b16 %v905
        %v994 = vpack.c.b16 %v991, %v990
        %v995 = vpack.c.b16 %v993, %v992
        %vm998 = vcmask 261120
        %v1000 = vsel %vm998, %v970, 0
        %v1003 = vsel %vm998, %v971, 0
        %v1006 = vsel %vm998, %v972, 0
        %v1009 = vsel %vm998, %v973, 0
        %v1012 = vsel %vm998, %v974, 0
        %v1015 = vsel %vm998, %v975, 0
        %v1018 = vsel %vm998, %v976, 0
        %v1021 = vsel %vm998, %v977, 0
        %v1024 = vsel %vm998, %v978, 0
        %v1027 = vsel %vm998, %v979, 0
        %v1030 = vsel %vm998, %v980, 0
        %v1033 = vsel %vm998, %v981, 0
        %v1036 = vsel %vm998, %v982, 0
        %v1039 = vsel %vm998, %v983, 0
        %v1042 = vsel %vm998, %v984, 0
        %v1045 = vsel %vm998, %v985, 0
        %1047 = vmatprep.subr.bf16.mxu0 0
        %1048 = vmatpush1.bf16.msra.mxu0 %v994
        %1049 = vmatprep.subr.bf16.mxu0 0
        %1050 = vmatpush1.bf16.msra.mxu0 %v995
        %1051 = vmatprep.subr.bf16.mxu0 0
        %1052 = vmatpush1.bf16.msra.mxu0 0
        %1053 = vmatprep.subr.bf16.mxu0 0
        %1054 = vmatpush1.bf16.msra.mxu0 0
        %1055 = vmatprep.subr.bf16.mxu0 0
        %1056 = vmatpush1.bf16.msra.mxu0 0
        %1057 = vmatprep.subr.bf16.mxu0 0
        %1058 = vmatpush1.bf16.msra.mxu0 0
        %1059 = vmatprep.subr.bf16.mxu0 0
        %1060 = vmatpush1.bf16.msra.mxu0 0
        %1061 = vmatprep.subr.bf16.mxu0 0
        %1062 = vmatpush1.bf16.msra.mxu0 0
        %1063 = vmatprep.subr.bf16.mxu0 0
        %1064 = vmatpush1.bf16.msra.mxu0 0
        %1065 = vmatprep.subr.bf16.mxu0 0
        %1066 = vmatpush1.bf16.msra.mxu0 0
        %1067 = vmatprep.subr.bf16.mxu0 0
        %1068 = vmatpush1.bf16.msra.mxu0 0
        %1069 = vmatprep.subr.bf16.mxu0 0
        %1070 = vmatpush1.bf16.msra.mxu0 0
        %1071 = vmatprep.subr.bf16.mxu0 0
        %1072 = vmatpush1.bf16.msra.mxu0 0
        %1073 = vmatprep.subr.bf16.mxu0 0
        %1074 = vmatpush1.bf16.msra.mxu0 0
        %1075 = vmatprep.subr.bf16.mxu0 0
        %1076 = vmatpush1.bf16.msra.mxu0 0
        %1077 = vmatprep.subr.bf16.mxu0 0
        %1078 = vmatpush1.bf16.msra.mxu0 0
        %1079 = vmatprep.mubr.bf16.mxu0 0
        %1080 = vmatmul.mubr.bf16.gmra.mrb[0].mxu0 %v1000
        %v1081 = vpop.f32.mrb[0].mxu0
        %v1082 = vadd.f32 0.0, %v1081
        %v1083 = vpop.f32.mrb[0].mxu0
        %v1084 = vpop.f32.mrb[0].mxu0
        %v1085 = vadd.f32 0.0, %v1084
        %v1086 = vpop.f32.mrb[0].mxu0
        %1087 = vmatprep.mubr.bf16.mxu0 0
        %1088 = vmatmul.mubr.bf16.gmra.mrb[0].mxu0 %v1003
        %v1089 = vpop.f32.mrb[0].mxu0
        %v1090 = vadd.f32 0.0, %v1089
        %v1091 = vpop.f32.mrb[0].mxu0
        %v1092 = vpop.f32.mrb[0].mxu0
        %v1093 = vadd.f32 0.0, %v1092
        %v1094 = vpop.f32.mrb[0].mxu0
        %1095 = vmatprep.mubr.bf16.mxu0 0
        %1096 = vmatmul.mubr.bf16.gmra.mrb[0].mxu0 %v1006
        %v1097 = vpop.f32.mrb[0].mxu0
        %v1098 = vadd.f32 0.0, %v1097
        %v1099 = vpop.f32.mrb[0].mxu0
        %v1100 = vpop.f32.mrb[0].mxu0
        %v1101 = vadd.f32 0.0, %v1100
        %v1102 = vpop.f32.mrb[0].mxu0
        %1103 = vmatprep.mubr.bf16.mxu0 0
        %1104 = vmatmul.mubr.bf16.gmra.mrb[0].mxu0 %v1009
        %v1105 = vpop.f32.mrb[0].mxu0
        %v1106 = vadd.f32 0.0, %v1105
        %v1107 = vpop.f32.mrb[0].mxu0
        %v1108 = vpop.f32.mrb[0].mxu0
        %v1109 = vadd.f32 0.0, %v1108
        %v1110 = vpop.f32.mrb[0].mxu0
        %1111 = vmatprep.mubr.bf16.mxu0 0
        %1112 = vmatmul.mubr.bf16.gmra.mrb[0].mxu0 %v1012
        %v1113 = vpop.f32.mrb[0].mxu0
        %v1114 = vadd.f32 0.0, %v1113
        %v1115 = vpop.f32.mrb[0].mxu0
        %v1116 = vpop.f32.mrb[0].mxu0
        %v1117 = vadd.f32 0.0, %v1116
        %v1118 = vpop.f32.mrb[0].mxu0
        %1119 = vmatprep.mubr.bf16.mxu0 0
        %1120 = vmatmul.mubr.bf16.gmra.mrb[0].mxu0 %v1015
        %v1121 = vpop.f32.mrb[0].mxu0
        %v1122 = vadd.f32 0.0, %v1121
        %v1123 = vpop.f32.mrb[0].mxu0
        %v1124 = vpop.f32.mrb[0].mxu0
        %v1125 = vadd.f32 0.0, %v1124
        %v1126 = vpop.f32.mrb[0].mxu0
        %1127 = vmatprep.mubr.bf16.mxu0 0
        %1128 = vmatmul.mubr.bf16.gmra.mrb[0].mxu0 %v1018
        %v1129 = vpop.f32.mrb[0].mxu0
        %v1130 = vadd.f32 0.0, %v1129
        %v1131 = vpop.f32.mrb[0].mxu0
        %v1132 = vpop.f32.mrb[0].mxu0
        %v1133 = vadd.f32 0.0, %v1132
        %v1134 = vpop.f32.mrb[0].mxu0
        %1135 = vmatprep.mubr.bf16.mxu0 0
        %1136 = vmatmul.mubr.bf16.gmra.mrb[0].mxu0 %v1021
        %v1137 = vpop.f32.mrb[0].mxu0
        %v1138 = vadd.f32 0.0, %v1137
        %v1139 = vpop.f32.mrb[0].mxu0
        %v1140 = vpop.f32.mrb[0].mxu0
        %v1141 = vadd.f32 0.0, %v1140
        %v1142 = vpop.f32.mrb[0].mxu0
        %1143 = vmatprep.mubr.bf16.mxu0 0
        %1144 = vmatmul.mubr.bf16.gmra.mrb[0].mxu0 %v1024
        %v1145 = vpop.f32.mrb[0].mxu0
        %v1146 = vadd.f32 0.0, %v1145
        %v1147 = vpop.f32.mrb[0].mxu0
        %v1148 = vpop.f32.mrb[0].mxu0
        %v1149 = vadd.f32 0.0, %v1148
        %v1150 = vpop.f32.mrb[0].mxu0
        %1151 = vmatprep.mubr.bf16.mxu0 0
        %1152 = vmatmul.mubr.bf16.gmra.mrb[0].mxu0 %v1027
        %v1153 = vpop.f32.mrb[0].mxu0
        %v1154 = vadd.f32 0.0, %v1153
        %v1155 = vpop.f32.mrb[0].mxu0
        %v1156 = vpop.f32.mrb[0].mxu0
        %v1157 = vadd.f32 0.0, %v1156
        %v1158 = vpop.f32.mrb[0].mxu0
        %1159 = vmatprep.mubr.bf16.mxu0 0
        %1160 = vmatmul.mubr.bf16.gmra.mrb[0].mxu0 %v1030
        %v1161 = vpop.f32.mrb[0].mxu0
        %v1162 = vadd.f32 0.0, %v1161
        %v1163 = vpop.f32.mrb[0].mxu0
        %v1164 = vpop.f32.mrb[0].mxu0
        %v1165 = vadd.f32 0.0, %v1164
        %v1166 = vpop.f32.mrb[0].mxu0
        %1167 = vmatprep.mubr.bf16.mxu0 0
        %1168 = vmatmul.mubr.bf16.gmra.mrb[0].mxu0 %v1033
        %v1169 = vpop.f32.mrb[0].mxu0
        %v1170 = vadd.f32 0.0, %v1169
        %v1171 = vpop.f32.mrb[0].mxu0
        %v1172 = vpop.f32.mrb[0].mxu0
        %v1173 = vadd.f32 0.0, %v1172
        %v1174 = vpop.f32.mrb[0].mxu0
        %1175 = vmatprep.mubr.bf16.mxu0 0
        %1176 = vmatmul.mubr.bf16.gmra.mrb[0].mxu0 %v1036
        %v1177 = vpop.f32.mrb[0].mxu0
        %v1178 = vadd.f32 0.0, %v1177
        %v1179 = vpop.f32.mrb[0].mxu0
        %v1180 = vpop.f32.mrb[0].mxu0
        %v1181 = vadd.f32 0.0, %v1180
        %v1182 = vpop.f32.mrb[0].mxu0
        %1183 = vmatprep.mubr.bf16.mxu0 0
        %1184 = vmatmul.mubr.bf16.gmra.mrb[0].mxu0 %v1039
        %v1185 = vpop.f32.mrb[0].mxu0
        %v1186 = vadd.f32 0.0, %v1185
        %v1187 = vpop.f32.mrb[0].mxu0
        %v1188 = vpop.f32.mrb[0].mxu0
        %v1189 = vadd.f32 0.0, %v1188
        %v1190 = vpop.f32.mrb[0].mxu0
        %1191 = vmatprep.mubr.bf16.mxu0 0
        %1192 = vmatmul.mubr.bf16.gmra.mrb[0].mxu0 %v1042
        %v1193 = vpop.f32.mrb[0].mxu0
        %v1194 = vadd.f32 0.0, %v1193
        %v1195 = vpop.f32.mrb[0].mxu0
        %v1196 = vpop.f32.mrb[0].mxu0
        %v1197 = vadd.f32 0.0, %v1196
        %v1198 = vpop.f32.mrb[0].mxu0
        %1199 = vmatprep.mubr.bf16.mxu0 0
        %1200 = vmatmul.mubr.bf16.gmra.mrb[0].mxu0 %v1045
        %v1201 = vpop.f32.mrb[0].mxu0
        %v1202 = vadd.f32 0.0, %v1201
        %v1203 = vpop.f32.mrb[0].mxu0
        %v1204 = vpop.f32.mrb[0].mxu0
        %v1205 = vadd.f32 0.0, %v1204
        %v1206 = vpop.f32.mrb[0].mxu0
        %1207 = vdwg.mxu0
        %1208 = vst.msk [vmem:[#allocation3] sm:$0xff] %vm998, %v1082
        %1209 = vst.msk [vmem:[#allocation3 + $0x8] sm:$0xff] %vm998, %v1085
        %1210 = vst.msk [vmem:[#allocation3 + $0x10] sm:$0xff] %vm998, %v1090
        %1211 = vst.msk [vmem:[#allocation3 + $0x18] sm:$0xff] %vm998, %v1093
        %1212 = vst.msk [vmem:[#allocation3 + $0x20] sm:$0xff] %vm998, %v1098
        %1213 = vst.msk [vmem:[#allocation3 + $0x28] sm:$0xff] %vm998, %v1101
        %1214 = vst.msk [vmem:[#allocation3 + $0x30] sm:$0xff] %vm998, %v1106
        %1215 = vst.msk [vmem:[#allocation3 + $0x38] sm:$0xff] %vm998, %v1109
        %1216 = vst.msk [vmem:[#allocation3 + $0x40] sm:$0xff] %vm998, %v1114
        %1217 = vst.msk [vmem:[#allocation3 + $0x48] sm:$0xff] %vm998, %v1117
        %1218 = vst.msk [vmem:[#allocation3 + $0x50] sm:$0xff] %vm998, %v1122
        %1219 = vst.msk [vmem:[#allocation3 + $0x58] sm:$0xff] %vm998, %v1125
        %1220 = vst.msk [vmem:[#allocation3 + $0x60] sm:$0xff] %vm998, %v1130
        %1221 = vst.msk [vmem:[#allocation3 + $0x68] sm:$0xff] %vm998, %v1133
        %1222 = vst.msk [vmem:[#allocation3 + $0x70] sm:$0xff] %vm998, %v1138
        %1223 = vst.msk [vmem:[#allocation3 + $0x78] sm:$0xff] %vm998, %v1141
        %1224 = vst.msk [vmem:[#allocation3 + $0x80] sm:$0xff] %vm998, %v1146
        %1225 = vst.msk [vmem:[#allocation3 + $0x88] sm:$0xff] %vm998, %v1149
        %1226 = vst.msk [vmem:[#allocation3 + $0x90] sm:$0xff] %vm998, %v1154
        %1227 = vst.msk [vmem:[#allocation3 + $0x98] sm:$0xff] %vm998, %v1157
        %1228 = vst.msk [vmem:[#allocation3 + $0xa0] sm:$0xff] %vm998, %v1162
        %1229 = vst.msk [vmem:[#allocation3 + $0xa8] sm:$0xff] %vm998, %v1165
        %1230 = vst.msk [vmem:[#allocation3 + $0xb0] sm:$0xff] %vm998, %v1170
        %1231 = vst.msk [vmem:[#allocation3 + $0xb8] sm:$0xff] %vm998, %v1173
        %1232 = vst.msk [vmem:[#allocation3 + $0xc0] sm:$0xff] %vm998, %v1178
        %1233 = vst.msk [vmem:[#allocation3 + $0xc8] sm:$0xff] %vm998, %v1181
        %1234 = vst.msk [vmem:[#allocation3 + $0xd0] sm:$0xff] %vm998, %v1186
        %1235 = vst.msk [vmem:[#allocation3 + $0xd8] sm:$0xff] %vm998, %v1189
        %1236 = vst.msk [vmem:[#allocation3 + $0xe0] sm:$0xff] %vm998, %v1194
        %1237 = vst.msk [vmem:[#allocation3 + $0xe8] sm:$0xff] %vm998, %v1197
        %1238 = vst.msk [vmem:[#allocation3 + $0xf0] sm:$0xff] %vm998, %v1202
        %1239 = vst.msk [vmem:[#allocation3 + $0xf8] sm:$0xff] %vm998, %v1205
        %v1240 = vld [vmem:[#allocation2] sm:$0xe]
        %v1241 = vld [vmem:[#allocation2 + $0x4] sm:$0xf]
        %v1242 = vld [vmem:[#allocation2 + $0x8] sm:$0x1]
        %v1243 = vld [vmem:[#allocation2 + $0xc] sm:$0xe]
        %v1244 = vld [vmem:[#allocation2 + $0x10] sm:$0xf]
        %v1245 = vld [vmem:[#allocation2 + $0x14] sm:$0x1]
        %v1246 = vld [vmem:[#allocation2 + $0x18] sm:$0xe]
        %v1247 = vld [vmem:[#allocation2 + $0x1c] sm:$0xf]
        %v1248 = vld [vmem:[#allocation2 + $0x20] sm:$0x1]
        %v1249 = vld [vmem:[#allocation2 + $0x24] sm:$0xe]
        %v1250 = vld [vmem:[#allocation2 + $0x28] sm:$0xf]
        %v1251 = vld [vmem:[#allocation2 + $0x2c] sm:$0x1]
        %v1252 = vld [vmem:[#allocation2 + $0x30] sm:$0xe]
        %v1253 = vld [vmem:[#allocation2 + $0x34] sm:$0xf]
        %v1254 = vld [vmem:[#allocation2 + $0x38] sm:$0x1]
        %v1255 = vld [vmem:[#allocation2 + $0x3c] sm:$0xe]
        %v1256 = vld [vmem:[#allocation2 + $0x40] sm:$0xf]
        %v1257 = vld [vmem:[#allocation2 + $0x44] sm:$0x1]
        %v1258 = vld [vmem:[#allocation2 + $0x48] sm:$0xe]
        %v1259 = vld [vmem:[#allocation2 + $0x4c] sm:$0xf]
        %v1260 = vld [vmem:[#allocation2 + $0x50] sm:$0x1]
        %v1261 = vld [vmem:[#allocation2 + $0x54] sm:$0xe]
        %v1262 = vld [vmem:[#allocation2 + $0x58] sm:$0xf]
        %v1263 = vld [vmem:[#allocation2 + $0x5c] sm:$0x1]
        %v1264 = vld [vmem:[#allocation2 + $0x60] sm:$0xe]
        %v1265 = vld [vmem:[#allocation2 + $0x64] sm:$0xf]
        %v1266 = vld [vmem:[#allocation2 + $0x68] sm:$0x1]
        %v1267 = vld [vmem:[#allocation2 + $0x6c] sm:$0xe]
        %v1268 = vld [vmem:[#allocation2 + $0x70] sm:$0xf]
        %v1269 = vld [vmem:[#allocation2 + $0x74] sm:$0x1]
        %v1270 = vld [vmem:[#allocation2 + $0x78] sm:$0xe]
        %v1271 = vld [vmem:[#allocation2 + $0x7c] sm:$0xf]
        %v1272 = vld [vmem:[#allocation2 + $0x80] sm:$0x1]
        %v1273 = vld [vmem:[#allocation2 + $0x84] sm:$0xe]
        %v1274 = vld [vmem:[#allocation2 + $0x88] sm:$0xf]
        %v1275 = vld [vmem:[#allocation2 + $0x8c] sm:$0x1]
        %v1276 = vld [vmem:[#allocation2 + $0x90] sm:$0xe]
        %v1277 = vld [vmem:[#allocation2 + $0x94] sm:$0xf]
        %v1278 = vld [vmem:[#allocation2 + $0x98] sm:$0x1]
        %v1279 = vld [vmem:[#allocation2 + $0x9c] sm:$0xe]
        %v1280 = vld [vmem:[#allocation2 + $0xa0] sm:$0xf]
        %v1281 = vld [vmem:[#allocation2 + $0xa4] sm:$0x1]
        %v1282 = vld [vmem:[#allocation2 + $0xa8] sm:$0xe]
        %v1283 = vld [vmem:[#allocation2 + $0xac] sm:$0xf]
        %v1284 = vld [vmem:[#allocation2 + $0xb0] sm:$0x1]
        %v1285 = vld [vmem:[#allocation2 + $0xb4] sm:$0xe]
        %v1286 = vld [vmem:[#allocation2 + $0xb8] sm:$0xf]
        %v1287 = vld [vmem:[#allocation2 + $0xbc] sm:$0x1]
        %vm1336 = vcmask 1042432
        %vm1337 = vcmask 1046532
        %vm1338 = vmor %vm1336, %vm1337
        %v1339 = vrot.slane %v1240, 5
        %v1340 = vrot.slane %v1339, 4
        %v1341 = vrot.slane %v1241, 5
        %v1342 = vsel %vm1338, %v1340, %v1341
        %v1343 = vrot.slane %v1341, 4
        %v1344 = vrot.slane %v1242, 5
        %v1345 = vsel %vm1338, %v1343, %v1344
        %v1346 = vrot.slane %v1243, 5
        %v1347 = vrot.slane %v1346, 4
        %v1348 = vrot.slane %v1244, 5
        %v1349 = vsel %vm1338, %v1347, %v1348
        %v1350 = vrot.slane %v1348, 4
        %v1351 = vrot.slane %v1245, 5
        %v1352 = vsel %vm1338, %v1350, %v1351
        %v1353 = vrot.slane %v1246, 5
        %v1354 = vrot.slane %v1353, 4
        %v1355 = vrot.slane %v1247, 5
        %v1356 = vsel %vm1338, %v1354, %v1355
        %v1357 = vrot.slane %v1355, 4
        %v1358 = vrot.slane %v1248, 5
        %v1359 = vsel %vm1338, %v1357, %v1358
        %v1360 = vrot.slane %v1249, 5
        %v1361 = vrot.slane %v1360, 4
        %v1362 = vrot.slane %v1250, 5
        %v1363 = vsel %vm1338, %v1361, %v1362
        %v1364 = vrot.slane %v1362, 4
        %v1365 = vrot.slane %v1251, 5
        %v1366 = vsel %vm1338, %v1364, %v1365
        %v1367 = vrot.slane %v1252, 5
        %v1368 = vrot.slane %v1367, 4
        %v1369 = vrot.slane %v1253, 5
        %v1370 = vsel %vm1338, %v1368, %v1369
        %v1371 = vrot.slane %v1369, 4
        %v1372 = vrot.slane %v1254, 5
        %v1373 = vsel %vm1338, %v1371, %v1372
        %v1374 = vrot.slane %v1255, 5
        %v1375 = vrot.slane %v1374, 4
        %v1376 = vrot.slane %v1256, 5
        %v1377 = vsel %vm1338, %v1375, %v1376
        %v1378 = vrot.slane %v1376, 4
        %v1379 = vrot.slane %v1257, 5
        %v1380 = vsel %vm1338, %v1378, %v1379
        %v1381 = vrot.slane %v1258, 5
        %v1382 = vrot.slane %v1381, 4
        %v1383 = vrot.slane %v1259, 5
        %v1384 = vsel %vm1338, %v1382, %v1383
        %v1385 = vrot.slane %v1383, 4
        %v1386 = vrot.slane %v1260, 5
        %v1387 = vsel %vm1338, %v1385, %v1386
        %v1388 = vrot.slane %v1261, 5
        %v1389 = vrot.slane %v1388, 4
        %v1390 = vrot.slane %v1262, 5
        %v1391 = vsel %vm1338, %v1389, %v1390
        %v1392 = vrot.slane %v1390, 4
        %v1393 = vrot.slane %v1263, 5
        %v1394 = vsel %vm1338, %v1392, %v1393
        %v1395 = vrot.slane %v1264, 5
        %v1396 = vrot.slane %v1395, 4
        %v1397 = vrot.slane %v1265, 5
        %v1398 = vsel %vm1338, %v1396, %v1397
        %v1399 = vrot.slane %v1397, 4
        %v1400 = vrot.slane %v1266, 5
        %v1401 = vsel %vm1338, %v1399, %v1400
        %v1402 = vrot.slane %v1267, 5
        %v1403 = vrot.slane %v1402, 4
        %v1404 = vrot.slane %v1268, 5
        %v1405 = vsel %vm1338, %v1403, %v1404
        %v1406 = vrot.slane %v1404, 4
        %v1407 = vrot.slane %v1269, 5
        %v1408 = vsel %vm1338, %v1406, %v1407
        %v1409 = vrot.slane %v1270, 5
        %v1410 = vrot.slane %v1409, 4
        %v1411 = vrot.slane %v1271, 5
        %v1412 = vsel %vm1338, %v1410, %v1411
        %v1413 = vrot.slane %v1411, 4
        %v1414 = vrot.slane %v1272, 5
        %v1415 = vsel %vm1338, %v1413, %v1414
        %v1416 = vrot.slane %v1273, 5
        %v1417 = vrot.slane %v1416, 4
        %v1418 = vrot.slane %v1274, 5
        %v1419 = vsel %vm1338, %v1417, %v1418
        %v1420 = vrot.slane %v1418, 4
        %v1421 = vrot.slane %v1275, 5
        %v1422 = vsel %vm1338, %v1420, %v1421
        %v1423 = vrot.slane %v1276, 5
        %v1424 = vrot.slane %v1423, 4
        %v1425 = vrot.slane %v1277, 5
        %v1426 = vsel %vm1338, %v1424, %v1425
        %v1427 = vrot.slane %v1425, 4
        %v1428 = vrot.slane %v1278, 5
        %v1429 = vsel %vm1338, %v1427, %v1428
        %v1430 = vrot.slane %v1279, 5
        %v1431 = vrot.slane %v1430, 4
        %v1432 = vrot.slane %v1280, 5
        %v1433 = vsel %vm1338, %v1431, %v1432
        %v1434 = vrot.slane %v1432, 4
        %v1435 = vrot.slane %v1281, 5
        %v1436 = vsel %vm1338, %v1434, %v1435
        %v1437 = vrot.slane %v1282, 5
        %v1438 = vrot.slane %v1437, 4
        %v1439 = vrot.slane %v1283, 5
        %v1440 = vsel %vm1338, %v1438, %v1439
        %v1441 = vrot.slane %v1439, 4
        %v1442 = vrot.slane %v1284, 5
        %v1443 = vsel %vm1338, %v1441, %v1442
        %v1444 = vrot.slane %v1285, 5
        %v1445 = vrot.slane %v1444, 4
        %v1446 = vrot.slane %v1286, 5
        %v1447 = vsel %vm1338, %v1445, %v1446
        %v1448 = vrot.slane %v1446, 4
        %v1449 = vrot.slane %v1287, 5
        %v1450 = vsel %vm1338, %v1448, %v1449
        %s1451 = scalar_lea.vmem [#allocation7], 16
        %v1452 = vld [vmem:[%s1451] sm:$0xf]
        %v1453 = vld [vmem:[%s1451 + $0x4] sm:$0xf]
        %v1454 = vld [vmem:[%s1451 + $0x8] sm:$0xf]
        %v1455 = vld [vmem:[%s1451 + $0xc] sm:$0xf]
        %v1456 = vunpack.c.l.b16 %v1342
        %v1457 = vunpack.c.l.b16 %v1345
        %v1458 = vunpack.c.l.b16 %v1349
        %v1459 = vunpack.c.l.b16 %v1352
        %v1460 = vunpack.c.l.b16 %v1356
        %v1461 = vunpack.c.l.b16 %v1359
        %v1462 = vunpack.c.l.b16 %v1363
        %v1463 = vunpack.c.l.b16 %v1366
        %v1464 = vunpack.c.l.b16 %v1370
        %v1465 = vunpack.c.l.b16 %v1373
        %v1466 = vunpack.c.l.b16 %v1377
        %v1467 = vunpack.c.l.b16 %v1380
        %v1468 = vunpack.c.l.b16 %v1384
        %v1469 = vunpack.c.l.b16 %v1387
        %v1470 = vunpack.c.l.b16 %v1391
        %v1471 = vunpack.c.l.b16 %v1394
        %v1472 = vunpack.c.l.b16 %v1398
        %v1473 = vunpack.c.l.b16 %v1401
        %v1474 = vunpack.c.l.b16 %v1405
        %v1475 = vunpack.c.l.b16 %v1408
        %v1476 = vunpack.c.l.b16 %v1412
        %v1477 = vunpack.c.l.b16 %v1415
        %v1478 = vunpack.c.l.b16 %v1419
        %v1479 = vunpack.c.l.b16 %v1422
        %v1480 = vunpack.c.l.b16 %v1426
        %v1481 = vunpack.c.l.b16 %v1429
        %v1482 = vunpack.c.l.b16 %v1433
        %v1483 = vunpack.c.l.b16 %v1436
        %v1484 = vunpack.c.l.b16 %v1440
        %v1485 = vunpack.c.l.b16 %v1443
        %v1486 = vunpack.c.l.b16 %v1447
        %v1487 = vunpack.c.l.b16 %v1450
        %v1488 = vpack.c.b16 %v1457, %v1456
        %v1489 = vpack.c.b16 %v1459, %v1458
        %v1490 = vpack.c.b16 %v1461, %v1460
        %v1491 = vpack.c.b16 %v1463, %v1462
        %v1492 = vpack.c.b16 %v1465, %v1464
        %v1493 = vpack.c.b16 %v1467, %v1466
        %v1494 = vpack.c.b16 %v1469, %v1468
        %v1495 = vpack.c.b16 %v1471, %v1470
        %v1496 = vpack.c.b16 %v1473, %v1472
        %v1497 = vpack.c.b16 %v1475, %v1474
        %v1498 = vpack.c.b16 %v1477, %v1476
        %v1499 = vpack.c.b16 %v1479, %v1478
        %v1500 = vpack.c.b16 %v1481, %v1480
        %v1501 = vpack.c.b16 %v1483, %v1482
        %v1502 = vpack.c.b16 %v1485, %v1484
        %v1503 = vpack.c.b16 %v1487, %v1486
        %v1508 = vunpack.c.l.b16 %v1452
        %v1509 = vunpack.c.l.b16 %v1453
        %v1510 = vunpack.c.l.b16 %v1454
        %v1511 = vunpack.c.l.b16 %v1455
        %v1512 = vpack.c.b16 %v1509, %v1508
        %v1513 = vpack.c.b16 %v1511, %v1510
        %v1517 = vsel %vm998, %v1488, 0
        %v1520 = vsel %vm998, %v1489, 0
        %v1523 = vsel %vm998, %v1490, 0
        %v1526 = vsel %vm998, %v1491, 0
        %v1529 = vsel %vm998, %v1492, 0
        %v1532 = vsel %vm998, %v1493, 0
        %v1535 = vsel %vm998, %v1494, 0
        %v1538 = vsel %vm998, %v1495, 0
        %v1541 = vsel %vm998, %v1496, 0
        %v1544 = vsel %vm998, %v1497, 0
        %v1547 = vsel %vm998, %v1498, 0
        %v1550 = vsel %vm998, %v1499, 0
        %v1553 = vsel %vm998, %v1500, 0
        %v1556 = vsel %vm998, %v1501, 0
        %v1559 = vsel %vm998, %v1502, 0
        %v1562 = vsel %vm998, %v1503, 0
        %1564 = vmatprep.subr.bf16.mxu0 0
        %1565 = vmatpush1.bf16.msra.mxu0 %v1512
        %1566 = vmatprep.subr.bf16.mxu0 0
        %1567 = vmatpush1.bf16.msra.mxu0 %v1513
        %1568 = vmatprep.subr.bf16.mxu0 0
        %1569 = vmatpush1.bf16.msra.mxu0 0
        %1570 = vmatprep.subr.bf16.mxu0 0
        %1571 = vmatpush1.bf16.msra.mxu0 0
        %1572 = vmatprep.subr.bf16.mxu0 0
        %1573 = vmatpush1.bf16.msra.mxu0 0
        %1574 = vmatprep.subr.bf16.mxu0 0
        %1575 = vmatpush1.bf16.msra.mxu0 0
        %1576 = vmatprep.subr.bf16.mxu0 0
        %1577 = vmatpush1.bf16.msra.mxu0 0
        %1578 = vmatprep.subr.bf16.mxu0 0
        %1579 = vmatpush1.bf16.msra.mxu0 0
        %1580 = vmatprep.subr.bf16.mxu0 0
        %1581 = vmatpush1.bf16.msra.mxu0 0
        %1582 = vmatprep.subr.bf16.mxu0 0
        %1583 = vmatpush1.bf16.msra.mxu0 0
        %1584 = vmatprep.subr.bf16.mxu0 0
        %1585 = vmatpush1.bf16.msra.mxu0 0
        %1586 = vmatprep.subr.bf16.mxu0 0
        %1587 = vmatpush1.bf16.msra.mxu0 0
        %1588 = vmatprep.subr.bf16.mxu0 0
        %1589 = vmatpush1.bf16.msra.mxu0 0
        %1590 = vmatprep.subr.bf16.mxu0 0
        %1591 = vmatpush1.bf16.msra.mxu0 0
        %1592 = vmatprep.subr.bf16.mxu0 0
        %1593 = vmatpush1.bf16.msra.mxu0 0
        %1594 = vmatprep.subr.bf16.mxu0 0
        %1595 = vmatpush1.bf16.msra.mxu0 0
        %1596 = vmatprep.mubr.bf16.mxu0 0
        %1597 = vmatmul.mubr.bf16.gmra.mrb[0].mxu0 %v1517
        %v1598 = vpop.f32.mrb[0].mxu0
        %v1599 = vadd.f32 0.0, %v1598
        %v1600 = vpop.f32.mrb[0].mxu0
        %v1601 = vpop.f32.mrb[0].mxu0
        %v1602 = vadd.f32 0.0, %v1601
        %v1603 = vpop.f32.mrb[0].mxu0
        %1604 = vmatprep.mubr.bf16.mxu0 0
        %1605 = vmatmul.mubr.bf16.gmra.mrb[0].mxu0 %v1520
        %v1606 = vpop.f32.mrb[0].mxu0
        %v1607 = vadd.f32 0.0, %v1606
        %v1608 = vpop.f32.mrb[0].mxu0
        %v1609 = vpop.f32.mrb[0].mxu0
        %v1610 = vadd.f32 0.0, %v1609
        %v1611 = vpop.f32.mrb[0].mxu0
        %1612 = vmatprep.mubr.bf16.mxu0 0
        %1613 = vmatmul.mubr.bf16.gmra.mrb[0].mxu0 %v1523
        %v1614 = vpop.f32.mrb[0].mxu0
        %v1615 = vadd.f32 0.0, %v1614
        %v1616 = vpop.f32.mrb[0].mxu0
        %v1617 = vpop.f32.mrb[0].mxu0
        %v1618 = vadd.f32 0.0, %v1617
        %v1619 = vpop.f32.mrb[0].mxu0
        %1620 = vmatprep.mubr.bf16.mxu0 0
        %1621 = vmatmul.mubr.bf16.gmra.mrb[0].mxu0 %v1526
        %v1622 = vpop.f32.mrb[0].mxu0
        %v1623 = vadd.f32 0.0, %v1622
        %v1624 = vpop.f32.mrb[0].mxu0
        %v1625 = vpop.f32.mrb[0].mxu0
        %v1626 = vadd.f32 0.0, %v1625
        %v1627 = vpop.f32.mrb[0].mxu0
        %1628 = vmatprep.mubr.bf16.mxu0 0
        %1629 = vmatmul.mubr.bf16.gmra.mrb[0].mxu0 %v1529
        %v1630 = vpop.f32.mrb[0].mxu0
        %v1631 = vadd.f32 0.0, %v1630
        %v1632 = vpop.f32.mrb[0].mxu0
        %v1633 = vpop.f32.mrb[0].mxu0
        %v1634 = vadd.f32 0.0, %v1633
        %v1635 = vpop.f32.mrb[0].mxu0
        %1636 = vmatprep.mubr.bf16.mxu0 0
        %1637 = vmatmul.mubr.bf16.gmra.mrb[0].mxu0 %v1532
        %v1638 = vpop.f32.mrb[0].mxu0
        %v1639 = vadd.f32 0.0, %v1638
        %v1640 = vpop.f32.mrb[0].mxu0
        %v1641 = vpop.f32.mrb[0].mxu0
        %v1642 = vadd.f32 0.0, %v1641
        %v1643 = vpop.f32.mrb[0].mxu0
        %1644 = vmatprep.mubr.bf16.mxu0 0
        %1645 = vmatmul.mubr.bf16.gmra.mrb[0].mxu0 %v1535
        %v1646 = vpop.f32.mrb[0].mxu0
        %v1647 = vadd.f32 0.0, %v1646
        %v1648 = vpop.f32.mrb[0].mxu0
        %v1649 = vpop.f32.mrb[0].mxu0
        %v1650 = vadd.f32 0.0, %v1649
        %v1651 = vpop.f32.mrb[0].mxu0
        %1652 = vmatprep.mubr.bf16.mxu0 0
        %1653 = vmatmul.mubr.bf16.gmra.mrb[0].mxu0 %v1538
        %v1654 = vpop.f32.mrb[0].mxu0
        %v1655 = vadd.f32 0.0, %v1654
        %v1656 = vpop.f32.mrb[0].mxu0
        %v1657 = vpop.f32.mrb[0].mxu0
        %v1658 = vadd.f32 0.0, %v1657
        %v1659 = vpop.f32.mrb[0].mxu0
        %1660 = vmatprep.mubr.bf16.mxu0 0
        %1661 = vmatmul.mubr.bf16.gmra.mrb[0].mxu0 %v1541
        %v1662 = vpop.f32.mrb[0].mxu0
        %v1663 = vadd.f32 0.0, %v1662
        %v1664 = vpop.f32.mrb[0].mxu0
        %v1665 = vpop.f32.mrb[0].mxu0
        %v1666 = vadd.f32 0.0, %v1665
        %v1667 = vpop.f32.mrb[0].mxu0
        %1668 = vmatprep.mubr.bf16.mxu0 0
        %1669 = vmatmul.mubr.bf16.gmra.mrb[0].mxu0 %v1544
        %v1670 = vpop.f32.mrb[0].mxu0
        %v1671 = vadd.f32 0.0, %v1670
        %v1672 = vpop.f32.mrb[0].mxu0
        %v1673 = vpop.f32.mrb[0].mxu0
        %v1674 = vadd.f32 0.0, %v1673
        %v1675 = vpop.f32.mrb[0].mxu0
        %1676 = vmatprep.mubr.bf16.mxu0 0
        %1677 = vmatmul.mubr.bf16.gmra.mrb[0].mxu0 %v1547
        %v1678 = vpop.f32.mrb[0].mxu0
        %v1679 = vadd.f32 0.0, %v1678
        %v1680 = vpop.f32.mrb[0].mxu0
        %v1681 = vpop.f32.mrb[0].mxu0
        %v1682 = vadd.f32 0.0, %v1681
        %v1683 = vpop.f32.mrb[0].mxu0
        %1684 = vmatprep.mubr.bf16.mxu0 0
        %1685 = vmatmul.mubr.bf16.gmra.mrb[0].mxu0 %v1550
        %v1686 = vpop.f32.mrb[0].mxu0
        %v1687 = vadd.f32 0.0, %v1686
        %v1688 = vpop.f32.mrb[0].mxu0
        %v1689 = vpop.f32.mrb[0].mxu0
        %v1690 = vadd.f32 0.0, %v1689
        %v1691 = vpop.f32.mrb[0].mxu0
        %1692 = vmatprep.mubr.bf16.mxu0 0
        %1693 = vmatmul.mubr.bf16.gmra.mrb[0].mxu0 %v1553
        %v1694 = vpop.f32.mrb[0].mxu0
        %v1695 = vadd.f32 0.0, %v1694
        %v1696 = vpop.f32.mrb[0].mxu0
        %v1697 = vpop.f32.mrb[0].mxu0
        %v1698 = vadd.f32 0.0, %v1697
        %v1699 = vpop.f32.mrb[0].mxu0
        %1700 = vmatprep.mubr.bf16.mxu0 0
        %1701 = vmatmul.mubr.bf16.gmra.mrb[0].mxu0 %v1556
        %v1702 = vpop.f32.mrb[0].mxu0
        %v1703 = vadd.f32 0.0, %v1702
        %v1704 = vpop.f32.mrb[0].mxu0
        %v1705 = vpop.f32.mrb[0].mxu0
        %v1706 = vadd.f32 0.0, %v1705
        %v1707 = vpop.f32.mrb[0].mxu0
        %1708 = vmatprep.mubr.bf16.mxu0 0
        %1709 = vmatmul.mubr.bf16.gmra.mrb[0].mxu0 %v1559
        %v1710 = vpop.f32.mrb[0].mxu0
        %v1711 = vadd.f32 0.0, %v1710
        %v1712 = vpop.f32.mrb[0].mxu0
        %v1713 = vpop.f32.mrb[0].mxu0
        %v1714 = vadd.f32 0.0, %v1713
        %v1715 = vpop.f32.mrb[0].mxu0
        %1716 = vmatprep.mubr.bf16.mxu0 0
        %1717 = vmatmul.mubr.bf16.gmra.mrb[0].mxu0 %v1562
        %v1718 = vpop.f32.mrb[0].mxu0
        %v1719 = vadd.f32 0.0, %v1718
        %v1720 = vpop.f32.mrb[0].mxu0
        %v1721 = vpop.f32.mrb[0].mxu0
        %v1722 = vadd.f32 0.0, %v1721
        %v1723 = vpop.f32.mrb[0].mxu0
        %1724 = vdwg.mxu0
        %v1725 = vld [vmem:[#allocation3] sm:$0xff]
        %v1726 = vld [vmem:[#allocation3 + $0x8] sm:$0xff]
        %v1727 = vld [vmem:[#allocation3 + $0x10] sm:$0xff]
        %v1728 = vld [vmem:[#allocation3 + $0x18] sm:$0xff]
        %v1729 = vld [vmem:[#allocation3 + $0x20] sm:$0xff]
        %v1730 = vld [vmem:[#allocation3 + $0x28] sm:$0xff]
        %v1731 = vld [vmem:[#allocation3 + $0x30] sm:$0xff]
        %v1732 = vld [vmem:[#allocation3 + $0x38] sm:$0xff]
        %v1733 = vld [vmem:[#allocation3 + $0x40] sm:$0xff]
        %v1734 = vld [vmem:[#allocation3 + $0x48] sm:$0xff]
        %v1735 = vld [vmem:[#allocation3 + $0x50] sm:$0xff]
        %v1736 = vld [vmem:[#allocation3 + $0x58] sm:$0xff]
        %v1737 = vld [vmem:[#allocation3 + $0x60] sm:$0xff]
        %v1738 = vld [vmem:[#allocation3 + $0x68] sm:$0xff]
        %v1739 = vld [vmem:[#allocation3 + $0x70] sm:$0xff]
        %v1740 = vld [vmem:[#allocation3 + $0x78] sm:$0xff]
        %v1741 = vld [vmem:[#allocation3 + $0x80] sm:$0xff]
        %v1742 = vld [vmem:[#allocation3 + $0x88] sm:$0xff]
        %v1743 = vld [vmem:[#allocation3 + $0x90] sm:$0xff]
        %v1744 = vld [vmem:[#allocation3 + $0x98] sm:$0xff]
        %v1745 = vld [vmem:[#allocation3 + $0xa0] sm:$0xff]
        %v1746 = vld [vmem:[#allocation3 + $0xa8] sm:$0xff]
        %v1747 = vld [vmem:[#allocation3 + $0xb0] sm:$0xff]
        %v1748 = vld [vmem:[#allocation3 + $0xb8] sm:$0xff]
        %v1749 = vld [vmem:[#allocation3 + $0xc0] sm:$0xff]
        %v1750 = vld [vmem:[#allocation3 + $0xc8] sm:$0xff]
        %v1751 = vld [vmem:[#allocation3 + $0xd0] sm:$0xff]
        %v1752 = vld [vmem:[#allocation3 + $0xd8] sm:$0xff]
        %v1753 = vld [vmem:[#allocation3 + $0xe0] sm:$0xff]
        %v1754 = vld [vmem:[#allocation3 + $0xe8] sm:$0xff]
        %v1755 = vld [vmem:[#allocation3 + $0xf0] sm:$0xff]
        %v1756 = vld [vmem:[#allocation3 + $0xf8] sm:$0xff]
        %v1757 = vadd.f32 %v1725, %v1599
        %v1758 = vadd.f32 %v1726, %v1602
        %v1759 = vadd.f32 %v1727, %v1607
        %v1760 = vadd.f32 %v1728, %v1610
        %v1761 = vadd.f32 %v1729, %v1615
        %v1762 = vadd.f32 %v1730, %v1618
        %v1763 = vadd.f32 %v1731, %v1623
        %v1764 = vadd.f32 %v1732, %v1626
        %v1765 = vadd.f32 %v1733, %v1631
        %v1766 = vadd.f32 %v1734, %v1634
        %v1767 = vadd.f32 %v1735, %v1639
        %v1768 = vadd.f32 %v1736, %v1642
        %v1769 = vadd.f32 %v1737, %v1647
        %v1770 = vadd.f32 %v1738, %v1650
        %v1771 = vadd.f32 %v1739, %v1655
        %v1772 = vadd.f32 %v1740, %v1658
        %v1773 = vadd.f32 %v1741, %v1663
        %v1774 = vadd.f32 %v1742, %v1666
        %v1775 = vadd.f32 %v1743, %v1671
        %v1776 = vadd.f32 %v1744, %v1674
        %v1777 = vadd.f32 %v1745, %v1679
        %v1778 = vadd.f32 %v1746, %v1682
        %v1779 = vadd.f32 %v1747, %v1687
        %v1780 = vadd.f32 %v1748, %v1690
        %v1781 = vadd.f32 %v1749, %v1695
        %v1782 = vadd.f32 %v1750, %v1698
        %v1783 = vadd.f32 %v1751, %v1703
        %v1784 = vadd.f32 %v1752, %v1706
        %v1785 = vadd.f32 %v1753, %v1711
        %v1786 = vadd.f32 %v1754, %v1714
        %v1787 = vadd.f32 %v1755, %v1719
        %v1788 = vadd.f32 %v1756, %v1722
        %1789 = vst.msk [vmem:[#allocation3] sm:$0xff] %vm998, %v1757
        %1790 = vst.msk [vmem:[#allocation3 + $0x8] sm:$0xff] %vm998, %v1758
        %1791 = vst.msk [vmem:[#allocation3 + $0x10] sm:$0xff] %vm998, %v1759
        %1792 = vst.msk [vmem:[#allocation3 + $0x18] sm:$0xff] %vm998, %v1760
        %1793 = vst.msk [vmem:[#allocation3 + $0x20] sm:$0xff] %vm998, %v1761
        %1794 = vst.msk [vmem:[#allocation3 + $0x28] sm:$0xff] %vm998, %v1762
        %1795 = vst.msk [vmem:[#allocation3 + $0x30] sm:$0xff] %vm998, %v1763
        %1796 = vst.msk [vmem:[#allocation3 + $0x38] sm:$0xff] %vm998, %v1764
        %1797 = vst.msk [vmem:[#allocation3 + $0x40] sm:$0xff] %vm998, %v1765
        %1798 = vst.msk [vmem:[#allocation3 + $0x48] sm:$0xff] %vm998, %v1766
        %1799 = vst.msk [vmem:[#allocation3 + $0x50] sm:$0xff] %vm998, %v1767
        %1800 = vst.msk [vmem:[#allocation3 + $0x58] sm:$0xff] %vm998, %v1768
        %1801 = vst.msk [vmem:[#allocation3 + $0x60] sm:$0xff] %vm998, %v1769
        %1802 = vst.msk [vmem:[#allocation3 + $0x68] sm:$0xff] %vm998, %v1770
        %1803 = vst.msk [vmem:[#allocation3 + $0x70] sm:$0xff] %vm998, %v1771
        %1804 = vst.msk [vmem:[#allocation3 + $0x78] sm:$0xff] %vm998, %v1772
        %1805 = vst.msk [vmem:[#allocation3 + $0x80] sm:$0xff] %vm998, %v1773
        %1806 = vst.msk [vmem:[#allocation3 + $0x88] sm:$0xff] %vm998, %v1774
        %1807 = vst.msk [vmem:[#allocation3 + $0x90] sm:$0xff] %vm998, %v1775
        %1808 = vst.msk [vmem:[#allocation3 + $0x98] sm:$0xff] %vm998, %v1776
        %1809 = vst.msk [vmem:[#allocation3 + $0xa0] sm:$0xff] %vm998, %v1777
        %1810 = vst.msk [vmem:[#allocation3 + $0xa8] sm:$0xff] %vm998, %v1778
        %1811 = vst.msk [vmem:[#allocation3 + $0xb0] sm:$0xff] %vm998, %v1779
        %1812 = vst.msk [vmem:[#allocation3 + $0xb8] sm:$0xff] %vm998, %v1780
        %1813 = vst.msk [vmem:[#allocation3 + $0xc0] sm:$0xff] %vm998, %v1781
        %1814 = vst.msk [vmem:[#allocation3 + $0xc8] sm:$0xff] %vm998, %v1782
        %1815 = vst.msk [vmem:[#allocation3 + $0xd0] sm:$0xff] %vm998, %v1783
        %1816 = vst.msk [vmem:[#allocation3 + $0xd8] sm:$0xff] %vm998, %v1784
        %1817 = vst.msk [vmem:[#allocation3 + $0xe0] sm:$0xff] %vm998, %v1785
        %1818 = vst.msk [vmem:[#allocation3 + $0xe8] sm:$0xff] %vm998, %v1786
        %1819 = vst.msk [vmem:[#allocation3 + $0xf0] sm:$0xff] %vm998, %v1787
        %1820 = vst.msk [vmem:[#allocation3 + $0xf8] sm:$0xff] %vm998, %v1788
        %v1821 = vld [vmem:[#allocation2] sm:$0xc]
        %v1822 = vld [vmem:[#allocation2 + $0x4] sm:$0xf]
        %v1823 = vld [vmem:[#allocation2 + $0x8] sm:$0x3]
        %v1824 = vld [vmem:[#allocation2 + $0xc] sm:$0xc]
        %v1825 = vld [vmem:[#allocation2 + $0x10] sm:$0xf]
        %v1826 = vld [vmem:[#allocation2 + $0x14] sm:$0x3]
        %v1827 = vld [vmem:[#allocation2 + $0x18] sm:$0xc]
        %v1828 = vld [vmem:[#allocation2 + $0x1c] sm:$0xf]
        %v1829 = vld [vmem:[#allocation2 + $0x20] sm:$0x3]
        %v1830 = vld [vmem:[#allocation2 + $0x24] sm:$0xc]
        %v1831 = vld [vmem:[#allocation2 + $0x28] sm:$0xf]
        %v1832 = vld [vmem:[#allocation2 + $0x2c] sm:$0x3]
        %v1833 = vld [vmem:[#allocation2 + $0x30] sm:$0xc]
        %v1834 = vld [vmem:[#allocation2 + $0x34] sm:$0xf]
        %v1835 = vld [vmem:[#allocation2 + $0x38] sm:$0x3]
        %v1836 = vld [vmem:[#allocation2 + $0x3c] sm:$0xc]
        %v1837 = vld [vmem:[#allocation2 + $0x40] sm:$0xf]
        %v1838 = vld [vmem:[#allocation2 + $0x44] sm:$0x3]
        %v1839 = vld [vmem:[#allocation2 + $0x48] sm:$0xc]
        %v1840 = vld [vmem:[#allocation2 + $0x4c] sm:$0xf]
        %v1841 = vld [vmem:[#allocation2 + $0x50] sm:$0x3]
        %v1842 = vld [vmem:[#allocation2 + $0x54] sm:$0xc]
        %v1843 = vld [vmem:[#allocation2 + $0x58] sm:$0xf]
        %v1844 = vld [vmem:[#allocation2 + $0x5c] sm:$0x3]
        %v1845 = vld [vmem:[#allocation2 + $0x60] sm:$0xc]
        %v1846 = vld [vmem:[#allocation2 + $0x64] sm:$0xf]
        %v1847 = vld [vmem:[#allocation2 + $0x68] sm:$0x3]
        %v1848 = vld [vmem:[#allocation2 + $0x6c] sm:$0xc]
        %v1849 = vld [vmem:[#allocation2 + $0x70] sm:$0xf]
        %v1850 = vld [vmem:[#allocation2 + $0x74] sm:$0x3]
        %v1851 = vld [vmem:[#allocation2 + $0x78] sm:$0xc]
        %v1852 = vld [vmem:[#allocation2 + $0x7c] sm:$0xf]
        %v1853 = vld [vmem:[#allocation2 + $0x80] sm:$0x3]
        %v1854 = vld [vmem:[#allocation2 + $0x84] sm:$0xc]
        %v1855 = vld [vmem:[#allocation2 + $0x88] sm:$0xf]
        %v1856 = vld [vmem:[#allocation2 + $0x8c] sm:$0x3]
        %v1857 = vld [vmem:[#allocation2 + $0x90] sm:$0xc]
        %v1858 = vld [vmem:[#allocation2 + $0x94] sm:$0xf]
        %v1859 = vld [vmem:[#allocation2 + $0x98] sm:$0x3]
        %v1860 = vld [vmem:[#allocation2 + $0x9c] sm:$0xc]
        %v1861 = vld [vmem:[#allocation2 + $0xa0] sm:$0xf]
        %v1862 = vld [vmem:[#allocation2 + $0xa4] sm:$0x3]
        %v1863 = vld [vmem:[#allocation2 + $0xa8] sm:$0xc]
        %v1864 = vld [vmem:[#allocation2 + $0xac] sm:$0xf]
        %v1865 = vld [vmem:[#allocation2 + $0xb0] sm:$0x3]
        %v1866 = vld [vmem:[#allocation2 + $0xb4] sm:$0xc]
        %v1867 = vld [vmem:[#allocation2 + $0xb8] sm:$0xf]
        %v1868 = vld [vmem:[#allocation2 + $0xbc] sm:$0x3]
        %vm1917 = vcmask 1041408
        %vm1918 = vcmask 1045508
        %vm1919 = vmor %vm1917, %vm1918
        %v1920 = vrot.slane %v1821, 6
        %v1921 = vrot.slane %v1920, 4
        %v1922 = vrot.slane %v1822, 6
        %v1923 = vsel %vm1919, %v1921, %v1922
        %v1924 = vrot.slane %v1922, 4
        %v1925 = vrot.slane %v1823, 6
        %v1926 = vsel %vm1919, %v1924, %v1925
        %v1927 = vrot.slane %v1824, 6
        %v1928 = vrot.slane %v1927, 4
        %v1929 = vrot.slane %v1825, 6
        %v1930 = vsel %vm1919, %v1928, %v1929
        %v1931 = vrot.slane %v1929, 4
        %v1932 = vrot.slane %v1826, 6
        %v1933 = vsel %vm1919, %v1931, %v1932
        %v1934 = vrot.slane %v1827, 6
        %v1935 = vrot.slane %v1934, 4
        %v1936 = vrot.slane %v1828, 6
        %v1937 = vsel %vm1919, %v1935, %v1936
        %v1938 = vrot.slane %v1936, 4
        %v1939 = vrot.slane %v1829, 6
        %v1940 = vsel %vm1919, %v1938, %v1939
        %v1941 = vrot.slane %v1830, 6
        %v1942 = vrot.slane %v1941, 4
        %v1943 = vrot.slane %v1831, 6
        %v1944 = vsel %vm1919, %v1942, %v1943
        %v1945 = vrot.slane %v1943, 4
        %v1946 = vrot.slane %v1832, 6
        %v1947 = vsel %vm1919, %v1945, %v1946
        %v1948 = vrot.slane %v1833, 6
        %v1949 = vrot.slane %v1948, 4
        %v1950 = vrot.slane %v1834, 6
        %v1951 = vsel %vm1919, %v1949, %v1950
        %v1952 = vrot.slane %v1950, 4
        %v1953 = vrot.slane %v1835, 6
        %v1954 = vsel %vm1919, %v1952, %v1953
        %v1955 = vrot.slane %v1836, 6
        %v1956 = vrot.slane %v1955, 4
        %v1957 = vrot.slane %v1837, 6
        %v1958 = vsel %vm1919, %v1956, %v1957
        %v1959 = vrot.slane %v1957, 4
        %v1960 = vrot.slane %v1838, 6
        %v1961 = vsel %vm1919, %v1959, %v1960
        %v1962 = vrot.slane %v1839, 6
        %v1963 = vrot.slane %v1962, 4
        %v1964 = vrot.slane %v1840, 6
        %v1965 = vsel %vm1919, %v1963, %v1964
        %v1966 = vrot.slane %v1964, 4
        %v1967 = vrot.slane %v1841, 6
        %v1968 = vsel %vm1919, %v1966, %v1967
        %v1969 = vrot.slane %v1842, 6
        %v1970 = vrot.slane %v1969, 4
        %v1971 = vrot.slane %v1843, 6
        %v1972 = vsel %vm1919, %v1970, %v1971
        %v1973 = vrot.slane %v1971, 4
        %v1974 = vrot.slane %v1844, 6
        %v1975 = vsel %vm1919, %v1973, %v1974
        %v1976 = vrot.slane %v1845, 6
        %v1977 = vrot.slane %v1976, 4
        %v1978 = vrot.slane %v1846, 6
        %v1979 = vsel %vm1919, %v1977, %v1978
        %v1980 = vrot.slane %v1978, 4
        %v1981 = vrot.slane %v1847, 6
        %v1982 = vsel %vm1919, %v1980, %v1981
        %v1983 = vrot.slane %v1848, 6
        %v1984 = vrot.slane %v1983, 4
        %v1985 = vrot.slane %v1849, 6
        %v1986 = vsel %vm1919, %v1984, %v1985
        %v1987 = vrot.slane %v1985, 4
        %v1988 = vrot.slane %v1850, 6
        %v1989 = vsel %vm1919, %v1987, %v1988
        %v1990 = vrot.slane %v1851, 6
        %v1991 = vrot.slane %v1990, 4
        %v1992 = vrot.slane %v1852, 6
        %v1993 = vsel %vm1919, %v1991, %v1992
        %v1994 = vrot.slane %v1992, 4
        %v1995 = vrot.slane %v1853, 6
        %v1996 = vsel %vm1919, %v1994, %v1995
        %v1997 = vrot.slane %v1854, 6
        %v1998 = vrot.slane %v1997, 4
        %v1999 = vrot.slane %v1855, 6
        %v2000 = vsel %vm1919, %v1998, %v1999
        %v2001 = vrot.slane %v1999, 4
        %v2002 = vrot.slane %v1856, 6
        %v2003 = vsel %vm1919, %v2001, %v2002
        %v2004 = vrot.slane %v1857, 6
        %v2005 = vrot.slane %v2004, 4
        %v2006 = vrot.slane %v1858, 6
        %v2007 = vsel %vm1919, %v2005, %v2006
        %v2008 = vrot.slane %v2006, 4
        %v2009 = vrot.slane %v1859, 6
        %v2010 = vsel %vm1919, %v2008, %v2009
        %v2011 = vrot.slane %v1860, 6
        %v2012 = vrot.slane %v2011, 4
        %v2013 = vrot.slane %v1861, 6
        %v2014 = vsel %vm1919, %v2012, %v2013
        %v2015 = vrot.slane %v2013, 4
        %v2016 = vrot.slane %v1862, 6
        %v2017 = vsel %vm1919, %v2015, %v2016
        %v2018 = vrot.slane %v1863, 6
        %v2019 = vrot.slane %v2018, 4
        %v2020 = vrot.slane %v1864, 6
        %v2021 = vsel %vm1919, %v2019, %v2020
        %v2022 = vrot.slane %v2020, 4
        %v2023 = vrot.slane %v1865, 6
        %v2024 = vsel %vm1919, %v2022, %v2023
        %v2025 = vrot.slane %v1866, 6
        %v2026 = vrot.slane %v2025, 4
        %v2027 = vrot.slane %v1867, 6
        %v2028 = vsel %vm1919, %v2026, %v2027
        %v2029 = vrot.slane %v2027, 4
        %v2030 = vrot.slane %v1868, 6
        %v2031 = vsel %vm1919, %v2029, %v2030
        %s2032 = scalar_lea.vmem [#allocation7], 32
        %v2033 = vld [vmem:[%s2032] sm:$0xf]
        %v2034 = vld [vmem:[%s2032 + $0x4] sm:$0xf]
        %v2035 = vld [vmem:[%s2032 + $0x8] sm:$0xf]
        %v2036 = vld [vmem:[%s2032 + $0xc] sm:$0xf]
        %v2037 = vunpack.c.l.b16 %v1923
        %v2038 = vunpack.c.l.b16 %v1926
        %v2039 = vunpack.c.l.b16 %v1930
        %v2040 = vunpack.c.l.b16 %v1933
        %v2041 = vunpack.c.l.b16 %v1937
        %v2042 = vunpack.c.l.b16 %v1940
        %v2043 = vunpack.c.l.b16 %v1944
        %v2044 = vunpack.c.l.b16 %v1947
        %v2045 = vunpack.c.l.b16 %v1951
        %v2046 = vunpack.c.l.b16 %v1954
        %v2047 = vunpack.c.l.b16 %v1958
        %v2048 = vunpack.c.l.b16 %v1961
        %v2049 = vunpack.c.l.b16 %v1965
        %v2050 = vunpack.c.l.b16 %v1968
        %v2051 = vunpack.c.l.b16 %v1972
        %v2052 = vunpack.c.l.b16 %v1975
        %v2053 = vunpack.c.l.b16 %v1979
        %v2054 = vunpack.c.l.b16 %v1982
        %v2055 = vunpack.c.l.b16 %v1986
        %v2056 = vunpack.c.l.b16 %v1989
        %v2057 = vunpack.c.l.b16 %v1993
        %v2058 = vunpack.c.l.b16 %v1996
        %v2059 = vunpack.c.l.b16 %v2000
        %v2060 = vunpack.c.l.b16 %v2003
        %v2061 = vunpack.c.l.b16 %v2007
        %v2062 = vunpack.c.l.b16 %v2010
        %v2063 = vunpack.c.l.b16 %v2014
        %v2064 = vunpack.c.l.b16 %v2017
        %v2065 = vunpack.c.l.b16 %v2021
        %v2066 = vunpack.c.l.b16 %v2024
        %v2067 = vunpack.c.l.b16 %v2028
        %v2068 = vunpack.c.l.b16 %v2031
        %v2069 = vpack.c.b16 %v2038, %v2037
        %v2070 = vpack.c.b16 %v2040, %v2039
        %v2071 = vpack.c.b16 %v2042, %v2041
        %v2072 = vpack.c.b16 %v2044, %v2043
        %v2073 = vpack.c.b16 %v2046, %v2045
        %v2074 = vpack.c.b16 %v2048, %v2047
        %v2075 = vpack.c.b16 %v2050, %v2049
        %v2076 = vpack.c.b16 %v2052, %v2051
        %v2077 = vpack.c.b16 %v2054, %v2053
        %v2078 = vpack.c.b16 %v2056, %v2055
        %v2079 = vpack.c.b16 %v2058, %v2057
        %v2080 = vpack.c.b16 %v2060, %v2059
        %v2081 = vpack.c.b16 %v2062, %v2061
        %v2082 = vpack.c.b16 %v2064, %v2063
        %v2083 = vpack.c.b16 %v2066, %v2065
        %v2084 = vpack.c.b16 %v2068, %v2067
        %v2089 = vunpack.c.l.b16 %v2033
        %v2090 = vunpack.c.l.b16 %v2034
        %v2091 = vunpack.c.l.b16 %v2035
        %v2092 = vunpack.c.l.b16 %v2036
        %v2093 = vpack.c.b16 %v2090, %v2089
        %v2094 = vpack.c.b16 %v2092, %v2091
        %v2098 = vsel %vm998, %v2069, 0
        %v2101 = vsel %vm998, %v2070, 0
        %v2104 = vsel %vm998, %v2071, 0
        %v2107 = vsel %vm998, %v2072, 0
        %v2110 = vsel %vm998, %v2073, 0
        %v2113 = vsel %vm998, %v2074, 0
        %v2116 = vsel %vm998, %v2075, 0
        %v2119 = vsel %vm998, %v2076, 0
        %v2122 = vsel %vm998, %v2077, 0
        %v2125 = vsel %vm998, %v2078, 0
        %v2128 = vsel %vm998, %v2079, 0
        %v2131 = vsel %vm998, %v2080, 0
        %v2134 = vsel %vm998, %v2081, 0
        %v2137 = vsel %vm998, %v2082, 0
        %v2140 = vsel %vm998, %v2083, 0
        %v2143 = vsel %vm998, %v2084, 0
        %2145 = vmatprep.subr.bf16.mxu0 0
        %2146 = vmatpush1.bf16.msra.mxu0 %v2093
        %2147 = vmatprep.subr.bf16.mxu0 0
        %2148 = vmatpush1.bf16.msra.mxu0 %v2094
        %2149 = vmatprep.subr.bf16.mxu0 0
        %2150 = vmatpush1.bf16.msra.mxu0 0
        %2151 = vmatprep.subr.bf16.mxu0 0
        %2152 = vmatpush1.bf16.msra.mxu0 0
        %2153 = vmatprep.subr.bf16.mxu0 0
        %2154 = vmatpush1.bf16.msra.mxu0 0
        %2155 = vmatprep.subr.bf16.mxu0 0
        %2156 = vmatpush1.bf16.msra.mxu0 0
        %2157 = vmatprep.subr.bf16.mxu0 0
        %2158 = vmatpush1.bf16.msra.mxu0 0
        %2159 = vmatprep.subr.bf16.mxu0 0
        %2160 = vmatpush1.bf16.msra.mxu0 0
        %2161 = vmatprep.subr.bf16.mxu0 0
        %2162 = vmatpush1.bf16.msra.mxu0 0
        %2163 = vmatprep.subr.bf16.mxu0 0
        %2164 = vmatpush1.bf16.msra.mxu0 0
        %2165 = vmatprep.subr.bf16.mxu0 0
        %2166 = vmatpush1.bf16.msra.mxu0 0
        %2167 = vmatprep.subr.bf16.mxu0 0
        %2168 = vmatpush1.bf16.msra.mxu0 0
        %2169 = vmatprep.subr.bf16.mxu0 0
        %2170 = vmatpush1.bf16.msra.mxu0 0
        %2171 = vmatprep.subr.bf16.mxu0 0
        %2172 = vmatpush1.bf16.msra.mxu0 0
        %2173 = vmatprep.subr.bf16.mxu0 0
        %2174 = vmatpush1.bf16.msra.mxu0 0
        %2175 = vmatprep.subr.bf16.mxu0 0
        %2176 = vmatpush1.bf16.msra.mxu0 0
        %2177 = vmatprep.mubr.bf16.mxu0 0
        %2178 = vmatmul.mubr.bf16.gmra.mrb[0].mxu0 %v2098
        %v2179 = vpop.f32.mrb[0].mxu0
        %v2180 = vadd.f32 0.0, %v2179
        %v2181 = vpop.f32.mrb[0].mxu0
        %v2182 = vpop.f32.mrb[0].mxu0
        %v2183 = vadd.f32 0.0, %v2182
        %v2184 = vpop.f32.mrb[0].mxu0
        %2185 = vmatprep.mubr.bf16.mxu0 0
        %2186 = vmatmul.mubr.bf16.gmra.mrb[0].mxu0 %v2101
        %v2187 = vpop.f32.mrb[0].mxu0
        %v2188 = vadd.f32 0.0, %v2187
        %v2189 = vpop.f32.mrb[0].mxu0
        %v2190 = vpop.f32.mrb[0].mxu0
        %v2191 = vadd.f32 0.0, %v2190
        %v2192 = vpop.f32.mrb[0].mxu0
        %2193 = vmatprep.mubr.bf16.mxu0 0
        %2194 = vmatmul.mubr.bf16.gmra.mrb[0].mxu0 %v2104
        %v2195 = vpop.f32.mrb[0].mxu0
        %v2196 = vadd.f32 0.0, %v2195
        %v2197 = vpop.f32.mrb[0].mxu0
        %v2198 = vpop.f32.mrb[0].mxu0
        %v2199 = vadd.f32 0.0, %v2198
        %v2200 = vpop.f32.mrb[0].mxu0
        %2201 = vmatprep.mubr.bf16.mxu0 0
        %2202 = vmatmul.mubr.bf16.gmra.mrb[0].mxu0 %v2107
        %v2203 = vpop.f32.mrb[0].mxu0
        %v2204 = vadd.f32 0.0, %v2203
        %v2205 = vpop.f32.mrb[0].mxu0
        %v2206 = vpop.f32.mrb[0].mxu0
        %v2207 = vadd.f32 0.0, %v2206
        %v2208 = vpop.f32.mrb[0].mxu0
        %2209 = vmatprep.mubr.bf16.mxu0 0
        %2210 = vmatmul.mubr.bf16.gmra.mrb[0].mxu0 %v2110
        %v2211 = vpop.f32.mrb[0].mxu0
        %v2212 = vadd.f32 0.0, %v2211
        %v2213 = vpop.f32.mrb[0].mxu0
        %v2214 = vpop.f32.mrb[0].mxu0
        %v2215 = vadd.f32 0.0, %v2214
        %v2216 = vpop.f32.mrb[0].mxu0
        %2217 = vmatprep.mubr.bf16.mxu0 0
        %2218 = vmatmul.mubr.bf16.gmra.mrb[0].mxu0 %v2113
        %v2219 = vpop.f32.mrb[0].mxu0
        %v2220 = vadd.f32 0.0, %v2219
        %v2221 = vpop.f32.mrb[0].mxu0
        %v2222 = vpop.f32.mrb[0].mxu0
        %v2223 = vadd.f32 0.0, %v2222
        %v2224 = vpop.f32.mrb[0].mxu0
        %2225 = vmatprep.mubr.bf16.mxu0 0
        %2226 = vmatmul.mubr.bf16.gmra.mrb[0].mxu0 %v2116
        %v2227 = vpop.f32.mrb[0].mxu0
        %v2228 = vadd.f32 0.0, %v2227
        %v2229 = vpop.f32.mrb[0].mxu0
        %v2230 = vpop.f32.mrb[0].mxu0
        %v2231 = vadd.f32 0.0, %v2230
        %v2232 = vpop.f32.mrb[0].mxu0
        %2233 = vmatprep.mubr.bf16.mxu0 0
        %2234 = vmatmul.mubr.bf16.gmra.mrb[0].mxu0 %v2119
        %v2235 = vpop.f32.mrb[0].mxu0
        %v2236 = vadd.f32 0.0, %v2235
        %v2237 = vpop.f32.mrb[0].mxu0
        %v2238 = vpop.f32.mrb[0].mxu0
        %v2239 = vadd.f32 0.0, %v2238
        %v2240 = vpop.f32.mrb[0].mxu0
        %2241 = vmatprep.mubr.bf16.mxu0 0
        %2242 = vmatmul.mubr.bf16.gmra.mrb[0].mxu0 %v2122
        %v2243 = vpop.f32.mrb[0].mxu0
        %v2244 = vadd.f32 0.0, %v2243
        %v2245 = vpop.f32.mrb[0].mxu0
        %v2246 = vpop.f32.mrb[0].mxu0
        %v2247 = vadd.f32 0.0, %v2246
        %v2248 = vpop.f32.mrb[0].mxu0
        %2249 = vmatprep.mubr.bf16.mxu0 0
        %2250 = vmatmul.mubr.bf16.gmra.mrb[0].mxu0 %v2125
        %v2251 = vpop.f32.mrb[0].mxu0
        %v2252 = vadd.f32 0.0, %v2251
        %v2253 = vpop.f32.mrb[0].mxu0
        %v2254 = vpop.f32.mrb[0].mxu0
        %v2255 = vadd.f32 0.0, %v2254
        %v2256 = vpop.f32.mrb[0].mxu0
        %2257 = vmatprep.mubr.bf16.mxu0 0
        %2258 = vmatmul.mubr.bf16.gmra.mrb[0].mxu0 %v2128
        %v2259 = vpop.f32.mrb[0].mxu0
        %v2260 = vadd.f32 0.0, %v2259
        %v2261 = vpop.f32.mrb[0].mxu0
        %v2262 = vpop.f32.mrb[0].mxu0
        %v2263 = vadd.f32 0.0, %v2262
        %v2264 = vpop.f32.mrb[0].mxu0
        %2265 = vmatprep.mubr.bf16.mxu0 0
        %2266 = vmatmul.mubr.bf16.gmra.mrb[0].mxu0 %v2131
        %v2267 = vpop.f32.mrb[0].mxu0
        %v2268 = vadd.f32 0.0, %v2267
        %v2269 = vpop.f32.mrb[0].mxu0
        %v2270 = vpop.f32.mrb[0].mxu0
        %v2271 = vadd.f32 0.0, %v2270
        %v2272 = vpop.f32.mrb[0].mxu0
        %2273 = vmatprep.mubr.bf16.mxu0 0
        %2274 = vmatmul.mubr.bf16.gmra.mrb[0].mxu0 %v2134
        %v2275 = vpop.f32.mrb[0].mxu0
        %v2276 = vadd.f32 0.0, %v2275
        %v2277 = vpop.f32.mrb[0].mxu0
        %v2278 = vpop.f32.mrb[0].mxu0
        %v2279 = vadd.f32 0.0, %v2278
        %v2280 = vpop.f32.mrb[0].mxu0
        %2281 = vmatprep.mubr.bf16.mxu0 0
        %2282 = vmatmul.mubr.bf16.gmra.mrb[0].mxu0 %v2137
        %v2283 = vpop.f32.mrb[0].mxu0
        %v2284 = vadd.f32 0.0, %v2283
        %v2285 = vpop.f32.mrb[0].mxu0
        %v2286 = vpop.f32.mrb[0].mxu0
        %v2287 = vadd.f32 0.0, %v2286
        %v2288 = vpop.f32.mrb[0].mxu0
        %2289 = vmatprep.mubr.bf16.mxu0 0
        %2290 = vmatmul.mubr.bf16.gmra.mrb[0].mxu0 %v2140
        %v2291 = vpop.f32.mrb[0].mxu0
        %v2292 = vadd.f32 0.0, %v2291
        %v2293 = vpop.f32.mrb[0].mxu0
        %v2294 = vpop.f32.mrb[0].mxu0
        %v2295 = vadd.f32 0.0, %v2294
        %v2296 = vpop.f32.mrb[0].mxu0
        %2297 = vmatprep.mubr.bf16.mxu0 0
        %2298 = vmatmul.mubr.bf16.gmra.mrb[0].mxu0 %v2143
        %v2299 = vpop.f32.mrb[0].mxu0
        %v2300 = vadd.f32 0.0, %v2299
        %v2301 = vpop.f32.mrb[0].mxu0
        %v2302 = vpop.f32.mrb[0].mxu0
        %v2303 = vadd.f32 0.0, %v2302
        %v2304 = vpop.f32.mrb[0].mxu0
        %2305 = vdwg.mxu0
        %v2306 = vld [vmem:[#allocation3] sm:$0xff]
        %v2307 = vld [vmem:[#allocation3 + $0x8] sm:$0xff]
        %v2308 = vld [vmem:[#allocation3 + $0x10] sm:$0xff]
        %v2309 = vld [vmem:[#allocation3 + $0x18] sm:$0xff]
        %v2310 = vld [vmem:[#allocation3 + $0x20] sm:$0xff]
        %v2311 = vld [vmem:[#allocation3 + $0x28] sm:$0xff]
        %v2312 = vld [vmem:[#allocation3 + $0x30] sm:$0xff]
        %v2313 = vld [vmem:[#allocation3 + $0x38] sm:$0xff]
        %v2314 = vld [vmem:[#allocation3 + $0x40] sm:$0xff]
        %v2315 = vld [vmem:[#allocation3 + $0x48] sm:$0xff]
        %v2316 = vld [vmem:[#allocation3 + $0x50] sm:$0xff]
        %v2317 = vld [vmem:[#allocation3 + $0x58] sm:$0xff]
        %v2318 = vld [vmem:[#allocation3 + $0x60] sm:$0xff]
        %v2319 = vld [vmem:[#allocation3 + $0x68] sm:$0xff]
        %v2320 = vld [vmem:[#allocation3 + $0x70] sm:$0xff]
        %v2321 = vld [vmem:[#allocation3 + $0x78] sm:$0xff]
        %v2322 = vld [vmem:[#allocation3 + $0x80] sm:$0xff]
        %v2323 = vld [vmem:[#allocation3 + $0x88] sm:$0xff]
        %v2324 = vld [vmem:[#allocation3 + $0x90] sm:$0xff]
        %v2325 = vld [vmem:[#allocation3 + $0x98] sm:$0xff]
        %v2326 = vld [vmem:[#allocation3 + $0xa0] sm:$0xff]
        %v2327 = vld [vmem:[#allocation3 + $0xa8] sm:$0xff]
        %v2328 = vld [vmem:[#allocation3 + $0xb0] sm:$0xff]
        %v2329 = vld [vmem:[#allocation3 + $0xb8] sm:$0xff]
        %v2330 = vld [vmem:[#allocation3 + $0xc0] sm:$0xff]
        %v2331 = vld [vmem:[#allocation3 + $0xc8] sm:$0xff]
        %v2332 = vld [vmem:[#allocation3 + $0xd0] sm:$0xff]
        %v2333 = vld [vmem:[#allocation3 + $0xd8] sm:$0xff]
        %v2334 = vld [vmem:[#allocation3 + $0xe0] sm:$0xff]
        %v2335 = vld [vmem:[#allocation3 + $0xe8] sm:$0xff]
        %v2336 = vld [vmem:[#allocation3 + $0xf0] sm:$0xff]
        %v2337 = vld [vmem:[#allocation3 + $0xf8] sm:$0xff]
        %v2338 = vadd.f32 %v2306, %v2180
        %v2339 = vadd.f32 %v2307, %v2183
        %v2340 = vadd.f32 %v2308, %v2188
        %v2341 = vadd.f32 %v2309, %v2191
        %v2342 = vadd.f32 %v2310, %v2196
        %v2343 = vadd.f32 %v2311, %v2199
        %v2344 = vadd.f32 %v2312, %v2204
        %v2345 = vadd.f32 %v2313, %v2207
        %v2346 = vadd.f32 %v2314, %v2212
        %v2347 = vadd.f32 %v2315, %v2215
        %v2348 = vadd.f32 %v2316, %v2220
        %v2349 = vadd.f32 %v2317, %v2223
        %v2350 = vadd.f32 %v2318, %v2228
        %v2351 = vadd.f32 %v2319, %v2231
        %v2352 = vadd.f32 %v2320, %v2236
        %v2353 = vadd.f32 %v2321, %v2239
        %v2354 = vadd.f32 %v2322, %v2244
        %v2355 = vadd.f32 %v2323, %v2247
        %v2356 = vadd.f32 %v2324, %v2252
        %v2357 = vadd.f32 %v2325, %v2255
        %v2358 = vadd.f32 %v2326, %v2260
        %v2359 = vadd.f32 %v2327, %v2263
        %v2360 = vadd.f32 %v2328, %v2268
        %v2361 = vadd.f32 %v2329, %v2271
        %v2362 = vadd.f32 %v2330, %v2276
        %v2363 = vadd.f32 %v2331, %v2279
        %v2364 = vadd.f32 %v2332, %v2284
        %v2365 = vadd.f32 %v2333, %v2287
        %v2366 = vadd.f32 %v2334, %v2292
        %v2367 = vadd.f32 %v2335, %v2295
        %v2368 = vadd.f32 %v2336, %v2300
        %v2369 = vadd.f32 %v2337, %v2303
        %2370 = vst.msk [vmem:[#allocation3] sm:$0xff] %vm998, %v2338
        %2371 = vst.msk [vmem:[#allocation3 + $0x8] sm:$0xff] %vm998, %v2339
        %2372 = vst.msk [vmem:[#allocation3 + $0x10] sm:$0xff] %vm998, %v2340
        %2373 = vst.msk [vmem:[#allocation3 + $0x18] sm:$0xff] %vm998, %v2341
        %2374 = vst.msk [vmem:[#allocation3 + $0x20] sm:$0xff] %vm998, %v2342
        %2375 = vst.msk [vmem:[#allocation3 + $0x28] sm:$0xff] %vm998, %v2343
        %2376 = vst.msk [vmem:[#allocation3 + $0x30] sm:$0xff] %vm998, %v2344
        %2377 = vst.msk [vmem:[#allocation3 + $0x38] sm:$0xff] %vm998, %v2345
        %2378 = vst.msk [vmem:[#allocation3 + $0x40] sm:$0xff] %vm998, %v2346
        %2379 = vst.msk [vmem:[#allocation3 + $0x48] sm:$0xff] %vm998, %v2347
        %2380 = vst.msk [vmem:[#allocation3 + $0x50] sm:$0xff] %vm998, %v2348
        %2381 = vst.msk [vmem:[#allocation3 + $0x58] sm:$0xff] %vm998, %v2349
        %2382 = vst.msk [vmem:[#allocation3 + $0x60] sm:$0xff] %vm998, %v2350
        %2383 = vst.msk [vmem:[#allocation3 + $0x68] sm:$0xff] %vm998, %v2351
        %2384 = vst.msk [vmem:[#allocation3 + $0x70] sm:$0xff] %vm998, %v2352
        %2385 = vst.msk [vmem:[#allocation3 + $0x78] sm:$0xff] %vm998, %v2353
        %2386 = vst.msk [vmem:[#allocation3 + $0x80] sm:$0xff] %vm998, %v2354
        %2387 = vst.msk [vmem:[#allocation3 + $0x88] sm:$0xff] %vm998, %v2355
        %2388 = vst.msk [vmem:[#allocation3 + $0x90] sm:$0xff] %vm998, %v2356
        %2389 = vst.msk [vmem:[#allocation3 + $0x98] sm:$0xff] %vm998, %v2357
        %2390 = vst.msk [vmem:[#allocation3 + $0xa0] sm:$0xff] %vm998, %v2358
        %2391 = vst.msk [vmem:[#allocation3 + $0xa8] sm:$0xff] %vm998, %v2359
        %2392 = vst.msk [vmem:[#allocation3 + $0xb0] sm:$0xff] %vm998, %v2360
        %2393 = vst.msk [vmem:[#allocation3 + $0xb8] sm:$0xff] %vm998, %v2361
        %2394 = vst.msk [vmem:[#allocation3 + $0xc0] sm:$0xff] %vm998, %v2362
        %2395 = vst.msk [vmem:[#allocation3 + $0xc8] sm:$0xff] %vm998, %v2363
        %2396 = vst.msk [vmem:[#allocation3 + $0xd0] sm:$0xff] %vm998, %v2364
        %2397 = vst.msk [vmem:[#allocation3 + $0xd8] sm:$0xff] %vm998, %v2365
        %2398 = vst.msk [vmem:[#allocation3 + $0xe0] sm:$0xff] %vm998, %v2366
        %2399 = vst.msk [vmem:[#allocation3 + $0xe8] sm:$0xff] %vm998, %v2367
        %2400 = vst.msk [vmem:[#allocation3 + $0xf0] sm:$0xff] %vm998, %v2368
        %2401 = vst.msk [vmem:[#allocation3 + $0xf8] sm:$0xff] %vm998, %v2369
        %s2402 = scalar_lea.vmem [#allocation2], 24
        %v2403 = vld [vmem:[%s2402] sm:$0xf]
        %v2404 = vld [vmem:[%s2402 + $0x4] sm:$0xf]
        %v2405 = vld [vmem:[%s2402 + $0xc] sm:$0xf]
        %v2406 = vld [vmem:[%s2402 + $0x10] sm:$0xf]
        %v2407 = vld [vmem:[%s2402 + $0x18] sm:$0xf]
        %v2408 = vld [vmem:[%s2402 + $0x1c] sm:$0xf]
        %v2409 = vld [vmem:[%s2402 + $0x24] sm:$0xf]
        %v2410 = vld [vmem:[%s2402 + $0x28] sm:$0xf]
        %v2411 = vld [vmem:[%s2402 + $0x30] sm:$0xf]
        %v2412 = vld [vmem:[%s2402 + $0x34] sm:$0xf]
        %v2413 = vld [vmem:[%s2402 + $0x3c] sm:$0xf]
        %v2414 = vld [vmem:[%s2402 + $0x40] sm:$0xf]
        %v2415 = vld [vmem:[%s2402 + $0x48] sm:$0xf]
        %v2416 = vld [vmem:[%s2402 + $0x4c] sm:$0xf]
        %v2417 = vld [vmem:[%s2402 + $0x54] sm:$0xf]
        %v2418 = vld [vmem:[%s2402 + $0x58] sm:$0xf]
        %v2419 = vld [vmem:[%s2402 + $0x60] sm:$0xf]
        %v2420 = vld [vmem:[%s2402 + $0x64] sm:$0xf]
        %v2421 = vld [vmem:[%s2402 + $0x6c] sm:$0xf]
        %v2422 = vld [vmem:[%s2402 + $0x70] sm:$0xf]
        %v2423 = vld [vmem:[%s2402 + $0x78] sm:$0xf]
        %v2424 = vld [vmem:[%s2402 + $0x7c] sm:$0xf]
        %v2425 = vld [vmem:[%s2402 + $0x84] sm:$0xf]
        %v2426 = vld [vmem:[%s2402 + $0x88] sm:$0xf]
        %v2427 = vld [vmem:[%s2402 + $0x90] sm:$0xf]
        %v2428 = vld [vmem:[%s2402 + $0x94] sm:$0xf]
        %v2429 = vld [vmem:[%s2402 + $0x9c] sm:$0xf]
        %v2430 = vld [vmem:[%s2402 + $0xa0] sm:$0xf]
        %v2431 = vld [vmem:[%s2402 + $0xa8] sm:$0xf]
        %v2432 = vld [vmem:[%s2402 + $0xac] sm:$0xf]
        %v2433 = vld [vmem:[%s2402 + $0xb4] sm:$0xf]
        %v2434 = vld [vmem:[%s2402 + $0xb8] sm:$0xf]
        %s2435 = scalar_lea.vmem [#allocation7], 48
        %v2436 = vld [vmem:[%s2435] sm:$0xf]
        %v2437 = vld [vmem:[%s2435 + $0x4] sm:$0xf]
        %v2438 = vld [vmem:[%s2435 + $0x8] sm:$0xf]
        %v2439 = vld [vmem:[%s2435 + $0xc] sm:$0xf]
        %v2472 = vunpack.c.l.b16 %v2403
        %v2473 = vunpack.c.l.b16 %v2404
        %v2474 = vunpack.c.l.b16 %v2405
        %v2475 = vunpack.c.l.b16 %v2406
        %v2476 = vunpack.c.l.b16 %v2407
        %v2477 = vunpack.c.l.b16 %v2408
        %v2478 = vunpack.c.l.b16 %v2409
        %v2479 = vunpack.c.l.b16 %v2410
        %v2480 = vunpack.c.l.b16 %v2411
        %v2481 = vunpack.c.l.b16 %v2412
        %v2482 = vunpack.c.l.b16 %v2413
        %v2483 = vunpack.c.l.b16 %v2414
        %v2484 = vunpack.c.l.b16 %v2415
        %v2485 = vunpack.c.l.b16 %v2416
        %v2486 = vunpack.c.l.b16 %v2417
        %v2487 = vunpack.c.l.b16 %v2418
        %v2488 = vunpack.c.l.b16 %v2419
        %v2489 = vunpack.c.l.b16 %v2420
        %v2490 = vunpack.c.l.b16 %v2421
        %v2491 = vunpack.c.l.b16 %v2422
        %v2492 = vunpack.c.l.b16 %v2423
        %v2493 = vunpack.c.l.b16 %v2424
        %v2494 = vunpack.c.l.b16 %v2425
        %v2495 = vunpack.c.l.b16 %v2426
        %v2496 = vunpack.c.l.b16 %v2427
        %v2497 = vunpack.c.l.b16 %v2428
        %v2498 = vunpack.c.l.b16 %v2429
        %v2499 = vunpack.c.l.b16 %v2430
        %v2500 = vunpack.c.l.b16 %v2431
        %v2501 = vunpack.c.l.b16 %v2432
        %v2502 = vunpack.c.l.b16 %v2433
        %v2503 = vunpack.c.l.b16 %v2434
        %v2504 = vpack.c.b16 %v2473, %v2472
        %v2505 = vpack.c.b16 %v2475, %v2474
        %v2506 = vpack.c.b16 %v2477, %v2476
        %v2507 = vpack.c.b16 %v2479, %v2478
        %v2508 = vpack.c.b16 %v2481, %v2480
        %v2509 = vpack.c.b16 %v2483, %v2482
        %v2510 = vpack.c.b16 %v2485, %v2484
        %v2511 = vpack.c.b16 %v2487, %v2486
        %v2512 = vpack.c.b16 %v2489, %v2488
        %v2513 = vpack.c.b16 %v2491, %v2490
        %v2514 = vpack.c.b16 %v2493, %v2492
        %v2515 = vpack.c.b16 %v2495, %v2494
        %v2516 = vpack.c.b16 %v2497, %v2496
        %v2517 = vpack.c.b16 %v2499, %v2498
        %v2518 = vpack.c.b16 %v2501, %v2500
        %v2519 = vpack.c.b16 %v2503, %v2502
        %v2524 = vunpack.c.l.b16 %v2436
        %v2525 = vunpack.c.l.b16 %v2437
        %v2526 = vunpack.c.l.b16 %v2438
        %v2527 = vunpack.c.l.b16 %v2439
        %v2528 = vpack.c.b16 %v2525, %v2524
        %v2529 = vpack.c.b16 %v2527, %v2526
        %v2533 = vsel %vm998, %v2504, 0
        %v2536 = vsel %vm998, %v2505, 0
        %v2539 = vsel %vm998, %v2506, 0
        %v2542 = vsel %vm998, %v2507, 0
        %v2545 = vsel %vm998, %v2508, 0
        %v2548 = vsel %vm998, %v2509, 0
        %v2551 = vsel %vm998, %v2510, 0
        %v2554 = vsel %vm998, %v2511, 0
        %v2557 = vsel %vm998, %v2512, 0
        %v2560 = vsel %vm998, %v2513, 0
        %v2563 = vsel %vm998, %v2514, 0
        %v2566 = vsel %vm998, %v2515, 0
        %v2569 = vsel %vm998, %v2516, 0
        %v2572 = vsel %vm998, %v2517, 0
        %v2575 = vsel %vm998, %v2518, 0
        %v2578 = vsel %vm998, %v2519, 0
        %2580 = vmatprep.subr.bf16.mxu0 0
        %2581 = vmatpush1.bf16.msra.mxu0 %v2528
        %2582 = vmatprep.subr.bf16.mxu0 0
        %2583 = vmatpush1.bf16.msra.mxu0 %v2529
        %2584 = vmatprep.subr.bf16.mxu0 0
        %2585 = vmatpush1.bf16.msra.mxu0 0
        %2586 = vmatprep.subr.bf16.mxu0 0
        %2587 = vmatpush1.bf16.msra.mxu0 0
        %2588 = vmatprep.subr.bf16.mxu0 0
        %2589 = vmatpush1.bf16.msra.mxu0 0
        %2590 = vmatprep.subr.bf16.mxu0 0
        %2591 = vmatpush1.bf16.msra.mxu0 0
        %2592 = vmatprep.subr.bf16.mxu0 0
        %2593 = vmatpush1.bf16.msra.mxu0 0
        %2594 = vmatprep.subr.bf16.mxu0 0
        %2595 = vmatpush1.bf16.msra.mxu0 0
        %2596 = vmatprep.subr.bf16.mxu0 0
        %2597 = vmatpush1.bf16.msra.mxu0 0
        %2598 = vmatprep.subr.bf16.mxu0 0
        %2599 = vmatpush1.bf16.msra.mxu0 0
        %2600 = vmatprep.subr.bf16.mxu0 0
        %2601 = vmatpush1.bf16.msra.mxu0 0
        %2602 = vmatprep.subr.bf16.mxu0 0
        %2603 = vmatpush1.bf16.msra.mxu0 0
        %2604 = vmatprep.subr.bf16.mxu0 0
        %2605 = vmatpush1.bf16.msra.mxu0 0
        %2606 = vmatprep.subr.bf16.mxu0 0
        %2607 = vmatpush1.bf16.msra.mxu0 0
        %2608 = vmatprep.subr.bf16.mxu0 0
        %2609 = vmatpush1.bf16.msra.mxu0 0
        %2610 = vmatprep.subr.bf16.mxu0 0
        %2611 = vmatpush1.bf16.msra.mxu0 0
        %2612 = vmatprep.mubr.bf16.mxu0 0
        %2613 = vmatmul.mubr.bf16.gmra.mrb[0].mxu0 %v2533
        %v2614 = vpop.f32.mrb[0].mxu0
        %v2615 = vadd.f32 0.0, %v2614
        %v2616 = vpop.f32.mrb[0].mxu0
        %v2617 = vpop.f32.mrb[0].mxu0
        %v2618 = vadd.f32 0.0, %v2617
        %v2619 = vpop.f32.mrb[0].mxu0
        %2620 = vmatprep.mubr.bf16.mxu0 0
        %2621 = vmatmul.mubr.bf16.gmra.mrb[0].mxu0 %v2536
        %v2622 = vpop.f32.mrb[0].mxu0
        %v2623 = vadd.f32 0.0, %v2622
        %v2624 = vpop.f32.mrb[0].mxu0
        %v2625 = vpop.f32.mrb[0].mxu0
        %v2626 = vadd.f32 0.0, %v2625
        %v2627 = vpop.f32.mrb[0].mxu0
        %2628 = vmatprep.mubr.bf16.mxu0 0
        %2629 = vmatmul.mubr.bf16.gmra.mrb[0].mxu0 %v2539
        %v2630 = vpop.f32.mrb[0].mxu0
        %v2631 = vadd.f32 0.0, %v2630
        %v2632 = vpop.f32.mrb[0].mxu0
        %v2633 = vpop.f32.mrb[0].mxu0
        %v2634 = vadd.f32 0.0, %v2633
        %v2635 = vpop.f32.mrb[0].mxu0
        %2636 = vmatprep.mubr.bf16.mxu0 0
        %2637 = vmatmul.mubr.bf16.gmra.mrb[0].mxu0 %v2542
        %v2638 = vpop.f32.mrb[0].mxu0
        %v2639 = vadd.f32 0.0, %v2638
        %v2640 = vpop.f32.mrb[0].mxu0
        %v2641 = vpop.f32.mrb[0].mxu0
        %v2642 = vadd.f32 0.0, %v2641
        %v2643 = vpop.f32.mrb[0].mxu0
        %2644 = vmatprep.mubr.bf16.mxu0 0
        %2645 = vmatmul.mubr.bf16.gmra.mrb[0].mxu0 %v2545
        %v2646 = vpop.f32.mrb[0].mxu0
        %v2647 = vadd.f32 0.0, %v2646
        %v2648 = vpop.f32.mrb[0].mxu0
        %v2649 = vpop.f32.mrb[0].mxu0
        %v2650 = vadd.f32 0.0, %v2649
        %v2651 = vpop.f32.mrb[0].mxu0
        %2652 = vmatprep.mubr.bf16.mxu0 0
        %2653 = vmatmul.mubr.bf16.gmra.mrb[0].mxu0 %v2548
        %v2654 = vpop.f32.mrb[0].mxu0
        %v2655 = vadd.f32 0.0, %v2654
        %v2656 = vpop.f32.mrb[0].mxu0
        %v2657 = vpop.f32.mrb[0].mxu0
        %v2658 = vadd.f32 0.0, %v2657
        %v2659 = vpop.f32.mrb[0].mxu0
        %2660 = vmatprep.mubr.bf16.mxu0 0
        %2661 = vmatmul.mubr.bf16.gmra.mrb[0].mxu0 %v2551
        %v2662 = vpop.f32.mrb[0].mxu0
        %v2663 = vadd.f32 0.0, %v2662
        %v2664 = vpop.f32.mrb[0].mxu0
        %v2665 = vpop.f32.mrb[0].mxu0
        %v2666 = vadd.f32 0.0, %v2665
        %v2667 = vpop.f32.mrb[0].mxu0
        %2668 = vmatprep.mubr.bf16.mxu0 0
        %2669 = vmatmul.mubr.bf16.gmra.mrb[0].mxu0 %v2554
        %v2670 = vpop.f32.mrb[0].mxu0
        %v2671 = vadd.f32 0.0, %v2670
        %v2672 = vpop.f32.mrb[0].mxu0
        %v2673 = vpop.f32.mrb[0].mxu0
        %v2674 = vadd.f32 0.0, %v2673
        %v2675 = vpop.f32.mrb[0].mxu0
        %2676 = vmatprep.mubr.bf16.mxu0 0
        %2677 = vmatmul.mubr.bf16.gmra.mrb[0].mxu0 %v2557
        %v2678 = vpop.f32.mrb[0].mxu0
        %v2679 = vadd.f32 0.0, %v2678
        %v2680 = vpop.f32.mrb[0].mxu0
        %v2681 = vpop.f32.mrb[0].mxu0
        %v2682 = vadd.f32 0.0, %v2681
        %v2683 = vpop.f32.mrb[0].mxu0
        %2684 = vmatprep.mubr.bf16.mxu0 0
        %2685 = vmatmul.mubr.bf16.gmra.mrb[0].mxu0 %v2560
        %v2686 = vpop.f32.mrb[0].mxu0
        %v2687 = vadd.f32 0.0, %v2686
        %v2688 = vpop.f32.mrb[0].mxu0
        %v2689 = vpop.f32.mrb[0].mxu0
        %v2690 = vadd.f32 0.0, %v2689
        %v2691 = vpop.f32.mrb[0].mxu0
        %2692 = vmatprep.mubr.bf16.mxu0 0
        %2693 = vmatmul.mubr.bf16.gmra.mrb[0].mxu0 %v2563
        %v2694 = vpop.f32.mrb[0].mxu0
        %v2695 = vadd.f32 0.0, %v2694
        %v2696 = vpop.f32.mrb[0].mxu0
        %v2697 = vpop.f32.mrb[0].mxu0
        %v2698 = vadd.f32 0.0, %v2697
        %v2699 = vpop.f32.mrb[0].mxu0
        %2700 = vmatprep.mubr.bf16.mxu0 0
        %2701 = vmatmul.mubr.bf16.gmra.mrb[0].mxu0 %v2566
        %v2702 = vpop.f32.mrb[0].mxu0
        %v2703 = vadd.f32 0.0, %v2702
        %v2704 = vpop.f32.mrb[0].mxu0
        %v2705 = vpop.f32.mrb[0].mxu0
        %v2706 = vadd.f32 0.0, %v2705
        %v2707 = vpop.f32.mrb[0].mxu0
        %2708 = vmatprep.mubr.bf16.mxu0 0
        %2709 = vmatmul.mubr.bf16.gmra.mrb[0].mxu0 %v2569
        %v2710 = vpop.f32.mrb[0].mxu0
        %v2711 = vadd.f32 0.0, %v2710
        %v2712 = vpop.f32.mrb[0].mxu0
        %v2713 = vpop.f32.mrb[0].mxu0
        %v2714 = vadd.f32 0.0, %v2713
        %v2715 = vpop.f32.mrb[0].mxu0
        %2716 = vmatprep.mubr.bf16.mxu0 0
        %2717 = vmatmul.mubr.bf16.gmra.mrb[0].mxu0 %v2572
        %v2718 = vpop.f32.mrb[0].mxu0
        %v2719 = vadd.f32 0.0, %v2718
        %v2720 = vpop.f32.mrb[0].mxu0
        %v2721 = vpop.f32.mrb[0].mxu0
        %v2722 = vadd.f32 0.0, %v2721
        %v2723 = vpop.f32.mrb[0].mxu0
        %2724 = vmatprep.mubr.bf16.mxu0 0
        %2725 = vmatmul.mubr.bf16.gmra.mrb[0].mxu0 %v2575
        %v2726 = vpop.f32.mrb[0].mxu0
        %v2727 = vadd.f32 0.0, %v2726
        %v2728 = vpop.f32.mrb[0].mxu0
        %v2729 = vpop.f32.mrb[0].mxu0
        %v2730 = vadd.f32 0.0, %v2729
        %v2731 = vpop.f32.mrb[0].mxu0
        %2732 = vmatprep.mubr.bf16.mxu0 0
        %2733 = vmatmul.mubr.bf16.gmra.mrb[0].mxu0 %v2578
        %v2734 = vpop.f32.mrb[0].mxu0
        %v2735 = vadd.f32 0.0, %v2734
        %v2736 = vpop.f32.mrb[0].mxu0
        %v2737 = vpop.f32.mrb[0].mxu0
        %v2738 = vadd.f32 0.0, %v2737
        %v2739 = vpop.f32.mrb[0].mxu0
        %2740 = vdwg.mxu0
        %v2741 = vld [vmem:[#allocation3] sm:$0xff]
        %v2742 = vld [vmem:[#allocation3 + $0x8] sm:$0xff]
        %v2743 = vld [vmem:[#allocation3 + $0x10] sm:$0xff]
        %v2744 = vld [vmem:[#allocation3 + $0x18] sm:$0xff]
        %v2745 = vld [vmem:[#allocation3 + $0x20] sm:$0xff]
        %v2746 = vld [vmem:[#allocation3 + $0x28] sm:$0xff]
        %v2747 = vld [vmem:[#allocation3 + $0x30] sm:$0xff]
        %v2748 = vld [vmem:[#allocation3 + $0x38] sm:$0xff]
        %v2749 = vld [vmem:[#allocation3 + $0x40] sm:$0xff]
        %v2750 = vld [vmem:[#allocation3 + $0x48] sm:$0xff]
        %v2751 = vld [vmem:[#allocation3 + $0x50] sm:$0xff]
        %v2752 = vld [vmem:[#allocation3 + $0x58] sm:$0xff]
        %v2753 = vld [vmem:[#allocation3 + $0x60] sm:$0xff]
        %v2754 = vld [vmem:[#allocation3 + $0x68] sm:$0xff]
        %v2755 = vld [vmem:[#allocation3 + $0x70] sm:$0xff]
        %v2756 = vld [vmem:[#allocation3 + $0x78] sm:$0xff]
        %v2757 = vld [vmem:[#allocation3 + $0x80] sm:$0xff]
        %v2758 = vld [vmem:[#allocation3 + $0x88] sm:$0xff]
        %v2759 = vld [vmem:[#allocation3 + $0x90] sm:$0xff]
        %v2760 = vld [vmem:[#allocation3 + $0x98] sm:$0xff]
        %v2761 = vld [vmem:[#allocation3 + $0xa0] sm:$0xff]
        %v2762 = vld [vmem:[#allocation3 + $0xa8] sm:$0xff]
        %v2763 = vld [vmem:[#allocation3 + $0xb0] sm:$0xff]
        %v2764 = vld [vmem:[#allocation3 + $0xb8] sm:$0xff]
        %v2765 = vld [vmem:[#allocation3 + $0xc0] sm:$0xff]
        %v2766 = vld [vmem:[#allocation3 + $0xc8] sm:$0xff]
        %v2767 = vld [vmem:[#allocation3 + $0xd0] sm:$0xff]
        %v2768 = vld [vmem:[#allocation3 + $0xd8] sm:$0xff]
        %v2769 = vld [vmem:[#allocation3 + $0xe0] sm:$0xff]
        %v2770 = vld [vmem:[#allocation3 + $0xe8] sm:$0xff]
        %v2771 = vld [vmem:[#allocation3 + $0xf0] sm:$0xff]
        %v2772 = vld [vmem:[#allocation3 + $0xf8] sm:$0xff]
        %v2773 = vadd.f32 %v2741, %v2615
        %v2774 = vadd.f32 %v2742, %v2618
        %v2775 = vadd.f32 %v2743, %v2623
        %v2776 = vadd.f32 %v2744, %v2626
        %v2777 = vadd.f32 %v2745, %v2631
        %v2778 = vadd.f32 %v2746, %v2634
        %v2779 = vadd.f32 %v2747, %v2639
        %v2780 = vadd.f32 %v2748, %v2642
        %v2781 = vadd.f32 %v2749, %v2647
        %v2782 = vadd.f32 %v2750, %v2650
        %v2783 = vadd.f32 %v2751, %v2655
        %v2784 = vadd.f32 %v2752, %v2658
        %v2785 = vadd.f32 %v2753, %v2663
        %v2786 = vadd.f32 %v2754, %v2666
        %v2787 = vadd.f32 %v2755, %v2671
        %v2788 = vadd.f32 %v2756, %v2674
        %v2789 = vadd.f32 %v2757, %v2679
        %v2790 = vadd.f32 %v2758, %v2682
        %v2791 = vadd.f32 %v2759, %v2687
        %v2792 = vadd.f32 %v2760, %v2690
        %v2793 = vadd.f32 %v2761, %v2695
        %v2794 = vadd.f32 %v2762, %v2698
        %v2795 = vadd.f32 %v2763, %v2703
        %v2796 = vadd.f32 %v2764, %v2706
        %v2797 = vadd.f32 %v2765, %v2711
        %v2798 = vadd.f32 %v2766, %v2714
        %v2799 = vadd.f32 %v2767, %v2719
        %v2800 = vadd.f32 %v2768, %v2722
        %v2801 = vadd.f32 %v2769, %v2727
        %v2802 = vadd.f32 %v2770, %v2730
        %v2803 = vadd.f32 %v2771, %v2735
        %v2804 = vadd.f32 %v2772, %v2738
        %2805 = vst.msk [vmem:[#allocation3] sm:$0xff] %vm998, %v2773
        %2806 = vst.msk [vmem:[#allocation3 + $0x8] sm:$0xff] %vm998, %v2774
        %2807 = vst.msk [vmem:[#allocation3 + $0x10] sm:$0xff] %vm998, %v2775
        %2808 = vst.msk [vmem:[#allocation3 + $0x18] sm:$0xff] %vm998, %v2776
        %2809 = vst.msk [vmem:[#allocation3 + $0x20] sm:$0xff] %vm998, %v2777
        %2810 = vst.msk [vmem:[#allocation3 + $0x28] sm:$0xff] %vm998, %v2778
        %2811 = vst.msk [vmem:[#allocation3 + $0x30] sm:$0xff] %vm998, %v2779
        %2812 = vst.msk [vmem:[#allocation3 + $0x38] sm:$0xff] %vm998, %v2780
        %2813 = vst.msk [vmem:[#allocation3 + $0x40] sm:$0xff] %vm998, %v2781
        %2814 = vst.msk [vmem:[#allocation3 + $0x48] sm:$0xff] %vm998, %v2782
        %2815 = vst.msk [vmem:[#allocation3 + $0x50] sm:$0xff] %vm998, %v2783
        %2816 = vst.msk [vmem:[#allocation3 + $0x58] sm:$0xff] %vm998, %v2784
        %2817 = vst.msk [vmem:[#allocation3 + $0x60] sm:$0xff] %vm998, %v2785
        %2818 = vst.msk [vmem:[#allocation3 + $0x68] sm:$0xff] %vm998, %v2786
        %2819 = vst.msk [vmem:[#allocation3 + $0x70] sm:$0xff] %vm998, %v2787
        %2820 = vst.msk [vmem:[#allocation3 + $0x78] sm:$0xff] %vm998, %v2788
        %2821 = vst.msk [vmem:[#allocation3 + $0x80] sm:$0xff] %vm998, %v2789
        %2822 = vst.msk [vmem:[#allocation3 + $0x88] sm:$0xff] %vm998, %v2790
        %2823 = vst.msk [vmem:[#allocation3 + $0x90] sm:$0xff] %vm998, %v2791
        %2824 = vst.msk [vmem:[#allocation3 + $0x98] sm:$0xff] %vm998, %v2792
        %2825 = vst.msk [vmem:[#allocation3 + $0xa0] sm:$0xff] %vm998, %v2793
        %2826 = vst.msk [vmem:[#allocation3 + $0xa8] sm:$0xff] %vm998, %v2794
        %2827 = vst.msk [vmem:[#allocation3 + $0xb0] sm:$0xff] %vm998, %v2795
        %2828 = vst.msk [vmem:[#allocation3 + $0xb8] sm:$0xff] %vm998, %v2796
        %2829 = vst.msk [vmem:[#allocation3 + $0xc0] sm:$0xff] %vm998, %v2797
        %2830 = vst.msk [vmem:[#allocation3 + $0xc8] sm:$0xff] %vm998, %v2798
        %2831 = vst.msk [vmem:[#allocation3 + $0xd0] sm:$0xff] %vm998, %v2799
        %2832 = vst.msk [vmem:[#allocation3 + $0xd8] sm:$0xff] %vm998, %v2800
        %2833 = vst.msk [vmem:[#allocation3 + $0xe0] sm:$0xff] %vm998, %v2801
        %2834 = vst.msk [vmem:[#allocation3 + $0xe8] sm:$0xff] %vm998, %v2802
        %2835 = vst.msk [vmem:[#allocation3 + $0xf0] sm:$0xff] %vm998, %v2803
        %2836 = vst.msk [vmem:[#allocation3 + $0xf8] sm:$0xff] %vm998, %v2804
        %v2837 = vld [vmem:[%s2402] sm:$0xe]
        %v2838 = vld [vmem:[%s2402 + $0x4] sm:$0xf]
        %v2839 = vld [vmem:[%s2402 + $0x8] sm:$0x1]
        %v2840 = vld [vmem:[%s2402 + $0xc] sm:$0xe]
        %v2841 = vld [vmem:[%s2402 + $0x10] sm:$0xf]
        %v2842 = vld [vmem:[%s2402 + $0x14] sm:$0x1]
        %v2843 = vld [vmem:[%s2402 + $0x18] sm:$0xe]
        %v2844 = vld [vmem:[%s2402 + $0x1c] sm:$0xf]
        %v2845 = vld [vmem:[%s2402 + $0x20] sm:$0x1]
        %v2846 = vld [vmem:[%s2402 + $0x24] sm:$0xe]
        %v2847 = vld [vmem:[%s2402 + $0x28] sm:$0xf]
        %v2848 = vld [vmem:[%s2402 + $0x2c] sm:$0x1]
        %v2849 = vld [vmem:[%s2402 + $0x30] sm:$0xe]
        %v2850 = vld [vmem:[%s2402 + $0x34] sm:$0xf]
        %v2851 = vld [vmem:[%s2402 + $0x38] sm:$0x1]
        %v2852 = vld [vmem:[%s2402 + $0x3c] sm:$0xe]
        %v2853 = vld [vmem:[%s2402 + $0x40] sm:$0xf]
        %v2854 = vld [vmem:[%s2402 + $0x44] sm:$0x1]
        %v2855 = vld [vmem:[%s2402 + $0x48] sm:$0xe]
        %v2856 = vld [vmem:[%s2402 + $0x4c] sm:$0xf]
        %v2857 = vld [vmem:[%s2402 + $0x50] sm:$0x1]
        %v2858 = vld [vmem:[%s2402 + $0x54] sm:$0xe]
        %v2859 = vld [vmem:[%s2402 + $0x58] sm:$0xf]
        %v2860 = vld [vmem:[%s2402 + $0x5c] sm:$0x1]
        %v2861 = vld [vmem:[%s2402 + $0x60] sm:$0xe]
        %v2862 = vld [vmem:[%s2402 + $0x64] sm:$0xf]
        %v2863 = vld [vmem:[%s2402 + $0x68] sm:$0x1]
        %v2864 = vld [vmem:[%s2402 + $0x6c] sm:$0xe]
        %v2865 = vld [vmem:[%s2402 + $0x70] sm:$0xf]
        %v2866 = vld [vmem:[%s2402 + $0x74] sm:$0x1]
        %v2867 = vld [vmem:[%s2402 + $0x78] sm:$0xe]
        %v2868 = vld [vmem:[%s2402 + $0x7c] sm:$0xf]
        %v2869 = vld [vmem:[%s2402 + $0x80] sm:$0x1]
        %v2870 = vld [vmem:[%s2402 + $0x84] sm:$0xe]
        %v2871 = vld [vmem:[%s2402 + $0x88] sm:$0xf]
        %v2872 = vld [vmem:[%s2402 + $0x8c] sm:$0x1]
        %v2873 = vld [vmem:[%s2402 + $0x90] sm:$0xe]
        %v2874 = vld [vmem:[%s2402 + $0x94] sm:$0xf]
        %v2875 = vld [vmem:[%s2402 + $0x98] sm:$0x1]
        %v2876 = vld [vmem:[%s2402 + $0x9c] sm:$0xe]
        %v2877 = vld [vmem:[%s2402 + $0xa0] sm:$0xf]
        %v2878 = vld [vmem:[%s2402 + $0xa4] sm:$0x1]
        %v2879 = vld [vmem:[%s2402 + $0xa8] sm:$0xe]
        %v2880 = vld [vmem:[%s2402 + $0xac] sm:$0xf]
        %v2881 = vld [vmem:[%s2402 + $0xb0] sm:$0x1]
        %v2882 = vld [vmem:[%s2402 + $0xb4] sm:$0xe]
        %v2883 = vld [vmem:[%s2402 + $0xb8] sm:$0xf]
        %v2884 = vld [vmem:[%s2402 + $0xbc] sm:$0x1]
        %v2933 = vrot.slane %v2837, 5
        %v2934 = vrot.slane %v2933, 4
        %v2935 = vrot.slane %v2838, 5
        %v2936 = vsel %vm1338, %v2934, %v2935
        %v2937 = vrot.slane %v2935, 4
        %v2938 = vrot.slane %v2839, 5
        %v2939 = vsel %vm1338, %v2937, %v2938
        %v2940 = vrot.slane %v2840, 5
        %v2941 = vrot.slane %v2940, 4
        %v2942 = vrot.slane %v2841, 5
        %v2943 = vsel %vm1338, %v2941, %v2942
        %v2944 = vrot.slane %v2942, 4
        %v2945 = vrot.slane %v2842, 5
        %v2946 = vsel %vm1338, %v2944, %v2945
        %v2947 = vrot.slane %v2843, 5
        %v2948 = vrot.slane %v2947, 4
        %v2949 = vrot.slane %v2844, 5
        %v2950 = vsel %vm1338, %v2948, %v2949
        %v2951 = vrot.slane %v2949, 4
        %v2952 = vrot.slane %v2845, 5
        %v2953 = vsel %vm1338, %v2951, %v2952
        %v2954 = vrot.slane %v2846, 5
        %v2955 = vrot.slane %v2954, 4
        %v2956 = vrot.slane %v2847, 5
        %v2957 = vsel %vm1338, %v2955, %v2956
        %v2958 = vrot.slane %v2956, 4
        %v2959 = vrot.slane %v2848, 5
        %v2960 = vsel %vm1338, %v2958, %v2959
        %v2961 = vrot.slane %v2849, 5
        %v2962 = vrot.slane %v2961, 4
        %v2963 = vrot.slane %v2850, 5
        %v2964 = vsel %vm1338, %v2962, %v2963
        %v2965 = vrot.slane %v2963, 4
        %v2966 = vrot.slane %v2851, 5
        %v2967 = vsel %vm1338, %v2965, %v2966
        %v2968 = vrot.slane %v2852, 5
        %v2969 = vrot.slane %v2968, 4
        %v2970 = vrot.slane %v2853, 5
        %v2971 = vsel %vm1338, %v2969, %v2970
        %v2972 = vrot.slane %v2970, 4
        %v2973 = vrot.slane %v2854, 5
        %v2974 = vsel %vm1338, %v2972, %v2973
        %v2975 = vrot.slane %v2855, 5
        %v2976 = vrot.slane %v2975, 4
        %v2977 = vrot.slane %v2856, 5
        %v2978 = vsel %vm1338, %v2976, %v2977
        %v2979 = vrot.slane %v2977, 4
        %v2980 = vrot.slane %v2857, 5
        %v2981 = vsel %vm1338, %v2979, %v2980
        %v2982 = vrot.slane %v2858, 5
        %v2983 = vrot.slane %v2982, 4
        %v2984 = vrot.slane %v2859, 5
        %v2985 = vsel %vm1338, %v2983, %v2984
        %v2986 = vrot.slane %v2984, 4
        %v2987 = vrot.slane %v2860, 5
        %v2988 = vsel %vm1338, %v2986, %v2987
        %v2989 = vrot.slane %v2861, 5
        %v2990 = vrot.slane %v2989, 4
        %v2991 = vrot.slane %v2862, 5
        %v2992 = vsel %vm1338, %v2990, %v2991
        %v2993 = vrot.slane %v2991, 4
        %v2994 = vrot.slane %v2863, 5
        %v2995 = vsel %vm1338, %v2993, %v2994
        %v2996 = vrot.slane %v2864, 5
        %v2997 = vrot.slane %v2996, 4
        %v2998 = vrot.slane %v2865, 5
        %v2999 = vsel %vm1338, %v2997, %v2998
        %v3000 = vrot.slane %v2998, 4
        %v3001 = vrot.slane %v2866, 5
        %v3002 = vsel %vm1338, %v3000, %v3001
        %v3003 = vrot.slane %v2867, 5
        %v3004 = vrot.slane %v3003, 4
        %v3005 = vrot.slane %v2868, 5
        %v3006 = vsel %vm1338, %v3004, %v3005
        %v3007 = vrot.slane %v3005, 4
        %v3008 = vrot.slane %v2869, 5
        %v3009 = vsel %vm1338, %v3007, %v3008
        %v3010 = vrot.slane %v2870, 5
        %v3011 = vrot.slane %v3010, 4
        %v3012 = vrot.slane %v2871, 5
        %v3013 = vsel %vm1338, %v3011, %v3012
        %v3014 = vrot.slane %v3012, 4
        %v3015 = vrot.slane %v2872, 5
        %v3016 = vsel %vm1338, %v3014, %v3015
        %v3017 = vrot.slane %v2873, 5
        %v3018 = vrot.slane %v3017, 4
        %v3019 = vrot.slane %v2874, 5
        %v3020 = vsel %vm1338, %v3018, %v3019
        %v3021 = vrot.slane %v3019, 4
        %v3022 = vrot.slane %v2875, 5
        %v3023 = vsel %vm1338, %v3021, %v3022
        %v3024 = vrot.slane %v2876, 5
        %v3025 = vrot.slane %v3024, 4
        %v3026 = vrot.slane %v2877, 5
        %v3027 = vsel %vm1338, %v3025, %v3026
        %v3028 = vrot.slane %v3026, 4
        %v3029 = vrot.slane %v2878, 5
        %v3030 = vsel %vm1338, %v3028, %v3029
        %v3031 = vrot.slane %v2879, 5
        %v3032 = vrot.slane %v3031, 4
        %v3033 = vrot.slane %v2880, 5
        %v3034 = vsel %vm1338, %v3032, %v3033
        %v3035 = vrot.slane %v3033, 4
        %v3036 = vrot.slane %v2881, 5
        %v3037 = vsel %vm1338, %v3035, %v3036
        %v3038 = vrot.slane %v2882, 5
        %v3039 = vrot.slane %v3038, 4
        %v3040 = vrot.slane %v2883, 5
        %v3041 = vsel %vm1338, %v3039, %v3040
        %v3042 = vrot.slane %v3040, 4
        %v3043 = vrot.slane %v2884, 5
        %v3044 = vsel %vm1338, %v3042, %v3043
        %s3045 = scalar_lea.vmem [#allocation7], 64
        %v3046 = vld [vmem:[%s3045] sm:$0xf]
        %v3047 = vld [vmem:[%s3045 + $0x4] sm:$0xf]
        %v3048 = vld [vmem:[%s3045 + $0x8] sm:$0xf]
        %v3049 = vld [vmem:[%s3045 + $0xc] sm:$0xf]
        %v3050 = vunpack.c.l.b16 %v2936
        %v3051 = vunpack.c.l.b16 %v2939
        %v3052 = vunpack.c.l.b16 %v2943
        %v3053 = vunpack.c.l.b16 %v2946
        %v3054 = vunpack.c.l.b16 %v2950
        %v3055 = vunpack.c.l.b16 %v2953
        %v3056 = vunpack.c.l.b16 %v2957
        %v3057 = vunpack.c.l.b16 %v2960
        %v3058 = vunpack.c.l.b16 %v2964
        %v3059 = vunpack.c.l.b16 %v2967
        %v3060 = vunpack.c.l.b16 %v2971
        %v3061 = vunpack.c.l.b16 %v2974
        %v3062 = vunpack.c.l.b16 %v2978
        %v3063 = vunpack.c.l.b16 %v2981
        %v3064 = vunpack.c.l.b16 %v2985
        %v3065 = vunpack.c.l.b16 %v2988
        %v3066 = vunpack.c.l.b16 %v2992
        %v3067 = vunpack.c.l.b16 %v2995
        %v3068 = vunpack.c.l.b16 %v2999
        %v3069 = vunpack.c.l.b16 %v3002
        %v3070 = vunpack.c.l.b16 %v3006
        %v3071 = vunpack.c.l.b16 %v3009
        %v3072 = vunpack.c.l.b16 %v3013
        %v3073 = vunpack.c.l.b16 %v3016
        %v3074 = vunpack.c.l.b16 %v3020
        %v3075 = vunpack.c.l.b16 %v3023
        %v3076 = vunpack.c.l.b16 %v3027
        %v3077 = vunpack.c.l.b16 %v3030
        %v3078 = vunpack.c.l.b16 %v3034
        %v3079 = vunpack.c.l.b16 %v3037
        %v3080 = vunpack.c.l.b16 %v3041
        %v3081 = vunpack.c.l.b16 %v3044
        %v3082 = vpack.c.b16 %v3051, %v3050
        %v3083 = vpack.c.b16 %v3053, %v3052
        %v3084 = vpack.c.b16 %v3055, %v3054
        %v3085 = vpack.c.b16 %v3057, %v3056
        %v3086 = vpack.c.b16 %v3059, %v3058
        %v3087 = vpack.c.b16 %v3061, %v3060
        %v3088 = vpack.c.b16 %v3063, %v3062
        %v3089 = vpack.c.b16 %v3065, %v3064
        %v3090 = vpack.c.b16 %v3067, %v3066
        %v3091 = vpack.c.b16 %v3069, %v3068
        %v3092 = vpack.c.b16 %v3071, %v3070
        %v3093 = vpack.c.b16 %v3073, %v3072
        %v3094 = vpack.c.b16 %v3075, %v3074
        %v3095 = vpack.c.b16 %v3077, %v3076
        %v3096 = vpack.c.b16 %v3079, %v3078
        %v3097 = vpack.c.b16 %v3081, %v3080
        %v3102 = vunpack.c.l.b16 %v3046
        %v3103 = vunpack.c.l.b16 %v3047
        %v3104 = vunpack.c.l.b16 %v3048
        %v3105 = vunpack.c.l.b16 %v3049
        %v3106 = vpack.c.b16 %v3103, %v3102
        %v3107 = vpack.c.b16 %v3105, %v3104
        %v3111 = vsel %vm998, %v3082, 0
        %v3114 = vsel %vm998, %v3083, 0
        %v3117 = vsel %vm998, %v3084, 0
        %v3120 = vsel %vm998, %v3085, 0
        %v3123 = vsel %vm998, %v3086, 0
        %v3126 = vsel %vm998, %v3087, 0
        %v3129 = vsel %vm998, %v3088, 0
        %v3132 = vsel %vm998, %v3089, 0
        %v3135 = vsel %vm998, %v3090, 0
        %v3138 = vsel %vm998, %v3091, 0
        %v3141 = vsel %vm998, %v3092, 0
        %v3144 = vsel %vm998, %v3093, 0
        %v3147 = vsel %vm998, %v3094, 0
        %v3150 = vsel %vm998, %v3095, 0
        %v3153 = vsel %vm998, %v3096, 0
        %v3156 = vsel %vm998, %v3097, 0
        %3158 = vmatprep.subr.bf16.mxu0 0
        %3159 = vmatpush1.bf16.msra.mxu0 %v3106
        %3160 = vmatprep.subr.bf16.mxu0 0
        %3161 = vmatpush1.bf16.msra.mxu0 %v3107
        %3162 = vmatprep.subr.bf16.mxu0 0
        %3163 = vmatpush1.bf16.msra.mxu0 0
        %3164 = vmatprep.subr.bf16.mxu0 0
        %3165 = vmatpush1.bf16.msra.mxu0 0
        %3166 = vmatprep.subr.bf16.mxu0 0
        %3167 = vmatpush1.bf16.msra.mxu0 0
        %3168 = vmatprep.subr.bf16.mxu0 0
        %3169 = vmatpush1.bf16.msra.mxu0 0
        %3170 = vmatprep.subr.bf16.mxu0 0
        %3171 = vmatpush1.bf16.msra.mxu0 0
        %3172 = vmatprep.subr.bf16.mxu0 0
        %3173 = vmatpush1.bf16.msra.mxu0 0
        %3174 = vmatprep.subr.bf16.mxu0 0
        %3175 = vmatpush1.bf16.msra.mxu0 0
        %3176 = vmatprep.subr.bf16.mxu0 0
        %3177 = vmatpush1.bf16.msra.mxu0 0
        %3178 = vmatprep.subr.bf16.mxu0 0
        %3179 = vmatpush1.bf16.msra.mxu0 0
        %3180 = vmatprep.subr.bf16.mxu0 0
        %3181 = vmatpush1.bf16.msra.mxu0 0
        %3182 = vmatprep.subr.bf16.mxu0 0
        %3183 = vmatpush1.bf16.msra.mxu0 0
        %3184 = vmatprep.subr.bf16.mxu0 0
        %3185 = vmatpush1.bf16.msra.mxu0 0
        %3186 = vmatprep.subr.bf16.mxu0 0
        %3187 = vmatpush1.bf16.msra.mxu0 0
        %3188 = vmatprep.subr.bf16.mxu0 0
        %3189 = vmatpush1.bf16.msra.mxu0 0
        %3190 = vmatprep.mubr.bf16.mxu0 0
        %3191 = vmatmul.mubr.bf16.gmra.mrb[0].mxu0 %v3111
        %v3192 = vpop.f32.mrb[0].mxu0
        %v3193 = vadd.f32 0.0, %v3192
        %v3194 = vpop.f32.mrb[0].mxu0
        %v3195 = vpop.f32.mrb[0].mxu0
        %v3196 = vadd.f32 0.0, %v3195
        %v3197 = vpop.f32.mrb[0].mxu0
        %3198 = vmatprep.mubr.bf16.mxu0 0
        %3199 = vmatmul.mubr.bf16.gmra.mrb[0].mxu0 %v3114
        %v3200 = vpop.f32.mrb[0].mxu0
        %v3201 = vadd.f32 0.0, %v3200
        %v3202 = vpop.f32.mrb[0].mxu0
        %v3203 = vpop.f32.mrb[0].mxu0
        %v3204 = vadd.f32 0.0, %v3203
        %v3205 = vpop.f32.mrb[0].mxu0
        %3206 = vmatprep.mubr.bf16.mxu0 0
        %3207 = vmatmul.mubr.bf16.gmra.mrb[0].mxu0 %v3117
        %v3208 = vpop.f32.mrb[0].mxu0
        %v3209 = vadd.f32 0.0, %v3208
        %v3210 = vpop.f32.mrb[0].mxu0
        %v3211 = vpop.f32.mrb[0].mxu0
        %v3212 = vadd.f32 0.0, %v3211
        %v3213 = vpop.f32.mrb[0].mxu0
        %3214 = vmatprep.mubr.bf16.mxu0 0
        %3215 = vmatmul.mubr.bf16.gmra.mrb[0].mxu0 %v3120
        %v3216 = vpop.f32.mrb[0].mxu0
        %v3217 = vadd.f32 0.0, %v3216
        %v3218 = vpop.f32.mrb[0].mxu0
        %v3219 = vpop.f32.mrb[0].mxu0
        %v3220 = vadd.f32 0.0, %v3219
        %v3221 = vpop.f32.mrb[0].mxu0
        %3222 = vmatprep.mubr.bf16.mxu0 0
        %3223 = vmatmul.mubr.bf16.gmra.mrb[0].mxu0 %v3123
        %v3224 = vpop.f32.mrb[0].mxu0
        %v3225 = vadd.f32 0.0, %v3224
        %v3226 = vpop.f32.mrb[0].mxu0
        %v3227 = vpop.f32.mrb[0].mxu0
        %v3228 = vadd.f32 0.0, %v3227
        %v3229 = vpop.f32.mrb[0].mxu0
        %3230 = vmatprep.mubr.bf16.mxu0 0
        %3231 = vmatmul.mubr.bf16.gmra.mrb[0].mxu0 %v3126
        %v3232 = vpop.f32.mrb[0].mxu0
        %v3233 = vadd.f32 0.0, %v3232
        %v3234 = vpop.f32.mrb[0].mxu0
        %v3235 = vpop.f32.mrb[0].mxu0
        %v3236 = vadd.f32 0.0, %v3235
        %v3237 = vpop.f32.mrb[0].mxu0
        %3238 = vmatprep.mubr.bf16.mxu0 0
        %3239 = vmatmul.mubr.bf16.gmra.mrb[0].mxu0 %v3129
        %v3240 = vpop.f32.mrb[0].mxu0
        %v3241 = vadd.f32 0.0, %v3240
        %v3242 = vpop.f32.mrb[0].mxu0
        %v3243 = vpop.f32.mrb[0].mxu0
        %v3244 = vadd.f32 0.0, %v3243
        %v3245 = vpop.f32.mrb[0].mxu0
        %3246 = vmatprep.mubr.bf16.mxu0 0
        %3247 = vmatmul.mubr.bf16.gmra.mrb[0].mxu0 %v3132
        %v3248 = vpop.f32.mrb[0].mxu0
        %v3249 = vadd.f32 0.0, %v3248
        %v3250 = vpop.f32.mrb[0].mxu0
        %v3251 = vpop.f32.mrb[0].mxu0
        %v3252 = vadd.f32 0.0, %v3251
        %v3253 = vpop.f32.mrb[0].mxu0
        %3254 = vmatprep.mubr.bf16.mxu0 0
        %3255 = vmatmul.mubr.bf16.gmra.mrb[0].mxu0 %v3135
        %v3256 = vpop.f32.mrb[0].mxu0
        %v3257 = vadd.f32 0.0, %v3256
        %v3258 = vpop.f32.mrb[0].mxu0
        %v3259 = vpop.f32.mrb[0].mxu0
        %v3260 = vadd.f32 0.0, %v3259
        %v3261 = vpop.f32.mrb[0].mxu0
        %3262 = vmatprep.mubr.bf16.mxu0 0
        %3263 = vmatmul.mubr.bf16.gmra.mrb[0].mxu0 %v3138
        %v3264 = vpop.f32.mrb[0].mxu0
        %v3265 = vadd.f32 0.0, %v3264
        %v3266 = vpop.f32.mrb[0].mxu0
        %v3267 = vpop.f32.mrb[0].mxu0
        %v3268 = vadd.f32 0.0, %v3267
        %v3269 = vpop.f32.mrb[0].mxu0
        %3270 = vmatprep.mubr.bf16.mxu0 0
        %3271 = vmatmul.mubr.bf16.gmra.mrb[0].mxu0 %v3141
        %v3272 = vpop.f32.mrb[0].mxu0
        %v3273 = vadd.f32 0.0, %v3272
        %v3274 = vpop.f32.mrb[0].mxu0
        %v3275 = vpop.f32.mrb[0].mxu0
        %v3276 = vadd.f32 0.0, %v3275
        %v3277 = vpop.f32.mrb[0].mxu0
        %3278 = vmatprep.mubr.bf16.mxu0 0
        %3279 = vmatmul.mubr.bf16.gmra.mrb[0].mxu0 %v3144
        %v3280 = vpop.f32.mrb[0].mxu0
        %v3281 = vadd.f32 0.0, %v3280
        %v3282 = vpop.f32.mrb[0].mxu0
        %v3283 = vpop.f32.mrb[0].mxu0
        %v3284 = vadd.f32 0.0, %v3283
        %v3285 = vpop.f32.mrb[0].mxu0
        %3286 = vmatprep.mubr.bf16.mxu0 0
        %3287 = vmatmul.mubr.bf16.gmra.mrb[0].mxu0 %v3147
        %v3288 = vpop.f32.mrb[0].mxu0
        %v3289 = vadd.f32 0.0, %v3288
        %v3290 = vpop.f32.mrb[0].mxu0
        %v3291 = vpop.f32.mrb[0].mxu0
        %v3292 = vadd.f32 0.0, %v3291
        %v3293 = vpop.f32.mrb[0].mxu0
        %3294 = vmatprep.mubr.bf16.mxu0 0
        %3295 = vmatmul.mubr.bf16.gmra.mrb[0].mxu0 %v3150
        %v3296 = vpop.f32.mrb[0].mxu0
        %v3297 = vadd.f32 0.0, %v3296
        %v3298 = vpop.f32.mrb[0].mxu0
        %v3299 = vpop.f32.mrb[0].mxu0
        %v3300 = vadd.f32 0.0, %v3299
        %v3301 = vpop.f32.mrb[0].mxu0
        %3302 = vmatprep.mubr.bf16.mxu0 0
        %3303 = vmatmul.mubr.bf16.gmra.mrb[0].mxu0 %v3153
        %v3304 = vpop.f32.mrb[0].mxu0
        %v3305 = vadd.f32 0.0, %v3304
        %v3306 = vpop.f32.mrb[0].mxu0
        %v3307 = vpop.f32.mrb[0].mxu0
        %v3308 = vadd.f32 0.0, %v3307
        %v3309 = vpop.f32.mrb[0].mxu0
        %3310 = vmatprep.mubr.bf16.mxu0 0
        %3311 = vmatmul.mubr.bf16.gmra.mrb[0].mxu0 %v3156
        %v3312 = vpop.f32.mrb[0].mxu0
        %v3313 = vadd.f32 0.0, %v3312
        %v3314 = vpop.f32.mrb[0].mxu0
        %v3315 = vpop.f32.mrb[0].mxu0
        %v3316 = vadd.f32 0.0, %v3315
        %v3317 = vpop.f32.mrb[0].mxu0
        %3318 = vdwg.mxu0
        %v3319 = vld [vmem:[#allocation3] sm:$0xff]
        %v3320 = vld [vmem:[#allocation3 + $0x8] sm:$0xff]
        %v3321 = vld [vmem:[#allocation3 + $0x10] sm:$0xff]
        %v3322 = vld [vmem:[#allocation3 + $0x18] sm:$0xff]
        %v3323 = vld [vmem:[#allocation3 + $0x20] sm:$0xff]
        %v3324 = vld [vmem:[#allocation3 + $0x28] sm:$0xff]
        %v3325 = vld [vmem:[#allocation3 + $0x30] sm:$0xff]
        %v3326 = vld [vmem:[#allocation3 + $0x38] sm:$0xff]
        %v3327 = vld [vmem:[#allocation3 + $0x40] sm:$0xff]
        %v3328 = vld [vmem:[#allocation3 + $0x48] sm:$0xff]
        %v3329 = vld [vmem:[#allocation3 + $0x50] sm:$0xff]
        %v3330 = vld [vmem:[#allocation3 + $0x58] sm:$0xff]
        %v3331 = vld [vmem:[#allocation3 + $0x60] sm:$0xff]
        %v3332 = vld [vmem:[#allocation3 + $0x68] sm:$0xff]
        %v3333 = vld [vmem:[#allocation3 + $0x70] sm:$0xff]
        %v3334 = vld [vmem:[#allocation3 + $0x78] sm:$0xff]
        %v3335 = vld [vmem:[#allocation3 + $0x80] sm:$0xff]
        %v3336 = vld [vmem:[#allocation3 + $0x88] sm:$0xff]
        %v3337 = vld [vmem:[#allocation3 + $0x90] sm:$0xff]
        %v3338 = vld [vmem:[#allocation3 + $0x98] sm:$0xff]
        %v3339 = vld [vmem:[#allocation3 + $0xa0] sm:$0xff]
        %v3340 = vld [vmem:[#allocation3 + $0xa8] sm:$0xff]
        %v3341 = vld [vmem:[#allocation3 + $0xb0] sm:$0xff]
        %v3342 = vld [vmem:[#allocation3 + $0xb8] sm:$0xff]
        %v3343 = vld [vmem:[#allocation3 + $0xc0] sm:$0xff]
        %v3344 = vld [vmem:[#allocation3 + $0xc8] sm:$0xff]
        %v3345 = vld [vmem:[#allocation3 + $0xd0] sm:$0xff]
        %v3346 = vld [vmem:[#allocation3 + $0xd8] sm:$0xff]
        %v3347 = vld [vmem:[#allocation3 + $0xe0] sm:$0xff]
        %v3348 = vld [vmem:[#allocation3 + $0xe8] sm:$0xff]
        %v3349 = vld [vmem:[#allocation3 + $0xf0] sm:$0xff]
        %v3350 = vld [vmem:[#allocation3 + $0xf8] sm:$0xff]
        %v3351 = vadd.f32 %v3319, %v3193
        %v3352 = vadd.f32 %v3320, %v3196
        %v3353 = vadd.f32 %v3321, %v3201
        %v3354 = vadd.f32 %v3322, %v3204
        %v3355 = vadd.f32 %v3323, %v3209
        %v3356 = vadd.f32 %v3324, %v3212
        %v3357 = vadd.f32 %v3325, %v3217
        %v3358 = vadd.f32 %v3326, %v3220
        %v3359 = vadd.f32 %v3327, %v3225
        %v3360 = vadd.f32 %v3328, %v3228
        %v3361 = vadd.f32 %v3329, %v3233
        %v3362 = vadd.f32 %v3330, %v3236
        %v3363 = vadd.f32 %v3331, %v3241
        %v3364 = vadd.f32 %v3332, %v3244
        %v3365 = vadd.f32 %v3333, %v3249
        %v3366 = vadd.f32 %v3334, %v3252
        %v3367 = vadd.f32 %v3335, %v3257
        %v3368 = vadd.f32 %v3336, %v3260
        %v3369 = vadd.f32 %v3337, %v3265
        %v3370 = vadd.f32 %v3338, %v3268
        %v3371 = vadd.f32 %v3339, %v3273
        %v3372 = vadd.f32 %v3340, %v3276
        %v3373 = vadd.f32 %v3341, %v3281
        %v3374 = vadd.f32 %v3342, %v3284
        %v3375 = vadd.f32 %v3343, %v3289
        %v3376 = vadd.f32 %v3344, %v3292
        %v3377 = vadd.f32 %v3345, %v3297
        %v3378 = vadd.f32 %v3346, %v3300
        %v3379 = vadd.f32 %v3347, %v3305
        %v3380 = vadd.f32 %v3348, %v3308
        %v3381 = vadd.f32 %v3349, %v3313
        %v3382 = vadd.f32 %v3350, %v3316
        %3383 = vst.msk [vmem:[#allocation3] sm:$0xff] %vm998, %v3351
        %3384 = vst.msk [vmem:[#allocation3 + $0x8] sm:$0xff] %vm998, %v3352
        %3385 = vst.msk [vmem:[#allocation3 + $0x10] sm:$0xff] %vm998, %v3353
        %3386 = vst.msk [vmem:[#allocation3 + $0x18] sm:$0xff] %vm998, %v3354
        %3387 = vst.msk [vmem:[#allocation3 + $0x20] sm:$0xff] %vm998, %v3355
        %3388 = vst.msk [vmem:[#allocation3 + $0x28] sm:$0xff] %vm998, %v3356
        %3389 = vst.msk [vmem:[#allocation3 + $0x30] sm:$0xff] %vm998, %v3357
        %3390 = vst.msk [vmem:[#allocation3 + $0x38] sm:$0xff] %vm998, %v3358
        %3391 = vst.msk [vmem:[#allocation3 + $0x40] sm:$0xff] %vm998, %v3359
        %3392 = vst.msk [vmem:[#allocation3 + $0x48] sm:$0xff] %vm998, %v3360
        %3393 = vst.msk [vmem:[#allocation3 + $0x50] sm:$0xff] %vm998, %v3361
        %3394 = vst.msk [vmem:[#allocation3 + $0x58] sm:$0xff] %vm998, %v3362
        %3395 = vst.msk [vmem:[#allocation3 + $0x60] sm:$0xff] %vm998, %v3363
        %3396 = vst.msk [vmem:[#allocation3 + $0x68] sm:$0xff] %vm998, %v3364
        %3397 = vst.msk [vmem:[#allocation3 + $0x70] sm:$0xff] %vm998, %v3365
        %3398 = vst.msk [vmem:[#allocation3 + $0x78] sm:$0xff] %vm998, %v3366
        %3399 = vst.msk [vmem:[#allocation3 + $0x80] sm:$0xff] %vm998, %v3367
        %3400 = vst.msk [vmem:[#allocation3 + $0x88] sm:$0xff] %vm998, %v3368
        %3401 = vst.msk [vmem:[#allocation3 + $0x90] sm:$0xff] %vm998, %v3369
        %3402 = vst.msk [vmem:[#allocation3 + $0x98] sm:$0xff] %vm998, %v3370
        %3403 = vst.msk [vmem:[#allocation3 + $0xa0] sm:$0xff] %vm998, %v3371
        %3404 = vst.msk [vmem:[#allocation3 + $0xa8] sm:$0xff] %vm998, %v3372
        %3405 = vst.msk [vmem:[#allocation3 + $0xb0] sm:$0xff] %vm998, %v3373
        %3406 = vst.msk [vmem:[#allocation3 + $0xb8] sm:$0xff] %vm998, %v3374
        %3407 = vst.msk [vmem:[#allocation3 + $0xc0] sm:$0xff] %vm998, %v3375
        %3408 = vst.msk [vmem:[#allocation3 + $0xc8] sm:$0xff] %vm998, %v3376
        %3409 = vst.msk [vmem:[#allocation3 + $0xd0] sm:$0xff] %vm998, %v3377
        %3410 = vst.msk [vmem:[#allocation3 + $0xd8] sm:$0xff] %vm998, %v3378
        %3411 = vst.msk [vmem:[#allocation3 + $0xe0] sm:$0xff] %vm998, %v3379
        %3412 = vst.msk [vmem:[#allocation3 + $0xe8] sm:$0xff] %vm998, %v3380
        %3413 = vst.msk [vmem:[#allocation3 + $0xf0] sm:$0xff] %vm998, %v3381
        %3414 = vst.msk [vmem:[#allocation3 + $0xf8] sm:$0xff] %vm998, %v3382
        %v3415 = vld [vmem:[%s2402] sm:$0xc]
        %v3416 = vld [vmem:[%s2402 + $0x4] sm:$0xf]
        %v3417 = vld [vmem:[%s2402 + $0x8] sm:$0x3]
        %v3418 = vld [vmem:[%s2402 + $0xc] sm:$0xc]
        %v3419 = vld [vmem:[%s2402 + $0x10] sm:$0xf]
        %v3420 = vld [vmem:[%s2402 + $0x14] sm:$0x3]
        %v3421 = vld [vmem:[%s2402 + $0x18] sm:$0xc]
        %v3422 = vld [vmem:[%s2402 + $0x1c] sm:$0xf]
        %v3423 = vld [vmem:[%s2402 + $0x20] sm:$0x3]
        %v3424 = vld [vmem:[%s2402 + $0x24] sm:$0xc]
        %v3425 = vld [vmem:[%s2402 + $0x28] sm:$0xf]
        %v3426 = vld [vmem:[%s2402 + $0x2c] sm:$0x3]
        %v3427 = vld [vmem:[%s2402 + $0x30] sm:$0xc]
        %v3428 = vld [vmem:[%s2402 + $0x34] sm:$0xf]
        %v3429 = vld [vmem:[%s2402 + $0x38] sm:$0x3]
        %v3430 = vld [vmem:[%s2402 + $0x3c] sm:$0xc]
        %v3431 = vld [vmem:[%s2402 + $0x40] sm:$0xf]
        %v3432 = vld [vmem:[%s2402 + $0x44] sm:$0x3]
        %v3433 = vld [vmem:[%s2402 + $0x48] sm:$0xc]
        %v3434 = vld [vmem:[%s2402 + $0x4c] sm:$0xf]
        %v3435 = vld [vmem:[%s2402 + $0x50] sm:$0x3]
        %v3436 = vld [vmem:[%s2402 + $0x54] sm:$0xc]
        %v3437 = vld [vmem:[%s2402 + $0x58] sm:$0xf]
        %v3438 = vld [vmem:[%s2402 + $0x5c] sm:$0x3]
        %v3439 = vld [vmem:[%s2402 + $0x60] sm:$0xc]
        %v3440 = vld [vmem:[%s2402 + $0x64] sm:$0xf]
        %v3441 = vld [vmem:[%s2402 + $0x68] sm:$0x3]
        %v3442 = vld [vmem:[%s2402 + $0x6c] sm:$0xc]
        %v3443 = vld [vmem:[%s2402 + $0x70] sm:$0xf]
        %v3444 = vld [vmem:[%s2402 + $0x74] sm:$0x3]
        %v3445 = vld [vmem:[%s2402 + $0x78] sm:$0xc]
        %v3446 = vld [vmem:[%s2402 + $0x7c] sm:$0xf]
        %v3447 = vld [vmem:[%s2402 + $0x80] sm:$0x3]
        %v3448 = vld [vmem:[%s2402 + $0x84] sm:$0xc]
        %v3449 = vld [vmem:[%s2402 + $0x88] sm:$0xf]
        %v3450 = vld [vmem:[%s2402 + $0x8c] sm:$0x3]
        %v3451 = vld [vmem:[%s2402 + $0x90] sm:$0xc]
        %v3452 = vld [vmem:[%s2402 + $0x94] sm:$0xf]
        %v3453 = vld [vmem:[%s2402 + $0x98] sm:$0x3]
        %v3454 = vld [vmem:[%s2402 + $0x9c] sm:$0xc]
        %v3455 = vld [vmem:[%s2402 + $0xa0] sm:$0xf]
        %v3456 = vld [vmem:[%s2402 + $0xa4] sm:$0x3]
        %v3457 = vld [vmem:[%s2402 + $0xa8] sm:$0xc]
        %v3458 = vld [vmem:[%s2402 + $0xac] sm:$0xf]
        %v3459 = vld [vmem:[%s2402 + $0xb0] sm:$0x3]
        %v3460 = vld [vmem:[%s2402 + $0xb4] sm:$0xc]
        %v3461 = vld [vmem:[%s2402 + $0xb8] sm:$0xf]
        %v3462 = vld [vmem:[%s2402 + $0xbc] sm:$0x3]
        %v3511 = vrot.slane %v3415, 6
        %v3512 = vrot.slane %v3511, 4
        %v3513 = vrot.slane %v3416, 6
        %v3514 = vsel %vm1919, %v3512, %v3513
        %v3515 = vrot.slane %v3513, 4
        %v3516 = vrot.slane %v3417, 6
        %v3517 = vsel %vm1919, %v3515, %v3516
        %v3518 = vrot.slane %v3418, 6
        %v3519 = vrot.slane %v3518, 4
        %v3520 = vrot.slane %v3419, 6
        %v3521 = vsel %vm1919, %v3519, %v3520
        %v3522 = vrot.slane %v3520, 4
        %v3523 = vrot.slane %v3420, 6
        %v3524 = vsel %vm1919, %v3522, %v3523
        %v3525 = vrot.slane %v3421, 6
        %v3526 = vrot.slane %v3525, 4
        %v3527 = vrot.slane %v3422, 6
        %v3528 = vsel %vm1919, %v3526, %v3527
        %v3529 = vrot.slane %v3527, 4
        %v3530 = vrot.slane %v3423, 6
        %v3531 = vsel %vm1919, %v3529, %v3530
        %v3532 = vrot.slane %v3424, 6
        %v3533 = vrot.slane %v3532, 4
        %v3534 = vrot.slane %v3425, 6
        %v3535 = vsel %vm1919, %v3533, %v3534
        %v3536 = vrot.slane %v3534, 4
        %v3537 = vrot.slane %v3426, 6
        %v3538 = vsel %vm1919, %v3536, %v3537
        %v3539 = vrot.slane %v3427, 6
        %v3540 = vrot.slane %v3539, 4
        %v3541 = vrot.slane %v3428, 6
        %v3542 = vsel %vm1919, %v3540, %v3541
        %v3543 = vrot.slane %v3541, 4
        %v3544 = vrot.slane %v3429, 6
        %v3545 = vsel %vm1919, %v3543, %v3544
        %v3546 = vrot.slane %v3430, 6
        %v3547 = vrot.slane %v3546, 4
        %v3548 = vrot.slane %v3431, 6
        %v3549 = vsel %vm1919, %v3547, %v3548
        %v3550 = vrot.slane %v3548, 4
        %v3551 = vrot.slane %v3432, 6
        %v3552 = vsel %vm1919, %v3550, %v3551
        %v3553 = vrot.slane %v3433, 6
        %v3554 = vrot.slane %v3553, 4
        %v3555 = vrot.slane %v3434, 6
        %v3556 = vsel %vm1919, %v3554, %v3555
        %v3557 = vrot.slane %v3555, 4
        %v3558 = vrot.slane %v3435, 6
        %v3559 = vsel %vm1919, %v3557, %v3558
        %v3560 = vrot.slane %v3436, 6
        %v3561 = vrot.slane %v3560, 4
        %v3562 = vrot.slane %v3437, 6
        %v3563 = vsel %vm1919, %v3561, %v3562
        %v3564 = vrot.slane %v3562, 4
        %v3565 = vrot.slane %v3438, 6
        %v3566 = vsel %vm1919, %v3564, %v3565
        %v3567 = vrot.slane %v3439, 6
        %v3568 = vrot.slane %v3567, 4
        %v3569 = vrot.slane %v3440, 6
        %v3570 = vsel %vm1919, %v3568, %v3569
        %v3571 = vrot.slane %v3569, 4
        %v3572 = vrot.slane %v3441, 6
        %v3573 = vsel %vm1919, %v3571, %v3572
        %v3574 = vrot.slane %v3442, 6
        %v3575 = vrot.slane %v3574, 4
        %v3576 = vrot.slane %v3443, 6
        %v3577 = vsel %vm1919, %v3575, %v3576
        %v3578 = vrot.slane %v3576, 4
        %v3579 = vrot.slane %v3444, 6
        %v3580 = vsel %vm1919, %v3578, %v3579
        %v3581 = vrot.slane %v3445, 6
        %v3582 = vrot.slane %v3581, 4
        %v3583 = vrot.slane %v3446, 6
        %v3584 = vsel %vm1919, %v3582, %v3583
        %v3585 = vrot.slane %v3583, 4
        %v3586 = vrot.slane %v3447, 6
        %v3587 = vsel %vm1919, %v3585, %v3586
        %v3588 = vrot.slane %v3448, 6
        %v3589 = vrot.slane %v3588, 4
        %v3590 = vrot.slane %v3449, 6
        %v3591 = vsel %vm1919, %v3589, %v3590
        %v3592 = vrot.slane %v3590, 4
        %v3593 = vrot.slane %v3450, 6
        %v3594 = vsel %vm1919, %v3592, %v3593
        %v3595 = vrot.slane %v3451, 6
        %v3596 = vrot.slane %v3595, 4
        %v3597 = vrot.slane %v3452, 6
        %v3598 = vsel %vm1919, %v3596, %v3597
        %v3599 = vrot.slane %v3597, 4
        %v3600 = vrot.slane %v3453, 6
        %v3601 = vsel %vm1919, %v3599, %v3600
        %v3602 = vrot.slane %v3454, 6
        %v3603 = vrot.slane %v3602, 4
        %v3604 = vrot.slane %v3455, 6
        %v3605 = vsel %vm1919, %v3603, %v3604
        %v3606 = vrot.slane %v3604, 4
        %v3607 = vrot.slane %v3456, 6
        %v3608 = vsel %vm1919, %v3606, %v3607
        %v3609 = vrot.slane %v3457, 6
        %v3610 = vrot.slane %v3609, 4
        %v3611 = vrot.slane %v3458, 6
        %v3612 = vsel %vm1919, %v3610, %v3611
        %v3613 = vrot.slane %v3611, 4
        %v3614 = vrot.slane %v3459, 6
        %v3615 = vsel %vm1919, %v3613, %v3614
        %v3616 = vrot.slane %v3460, 6
        %v3617 = vrot.slane %v3616, 4
        %v3618 = vrot.slane %v3461, 6
        %v3619 = vsel %vm1919, %v3617, %v3618
        %v3620 = vrot.slane %v3618, 4
        %v3621 = vrot.slane %v3462, 6
        %v3622 = vsel %vm1919, %v3620, %v3621
        %s3623 = scalar_lea.vmem [#allocation7], 80
        %v3624 = vld [vmem:[%s3623] sm:$0xf]
        %v3625 = vld [vmem:[%s3623 + $0x4] sm:$0xf]
        %v3626 = vld [vmem:[%s3623 + $0x8] sm:$0xf]
        %v3627 = vld [vmem:[%s3623 + $0xc] sm:$0xf]
        %v3628 = vunpack.c.l.b16 %v3514
        %v3629 = vunpack.c.l.b16 %v3517
        %v3630 = vunpack.c.l.b16 %v3521
        %v3631 = vunpack.c.l.b16 %v3524
        %v3632 = vunpack.c.l.b16 %v3528
        %v3633 = vunpack.c.l.b16 %v3531
        %v3634 = vunpack.c.l.b16 %v3535
        %v3635 = vunpack.c.l.b16 %v3538
        %v3636 = vunpack.c.l.b16 %v3542
        %v3637 = vunpack.c.l.b16 %v3545
        %v3638 = vunpack.c.l.b16 %v3549
        %v3639 = vunpack.c.l.b16 %v3552
        %v3640 = vunpack.c.l.b16 %v3556
        %v3641 = vunpack.c.l.b16 %v3559
        %v3642 = vunpack.c.l.b16 %v3563
        %v3643 = vunpack.c.l.b16 %v3566
        %v3644 = vunpack.c.l.b16 %v3570
        %v3645 = vunpack.c.l.b16 %v3573
        %v3646 = vunpack.c.l.b16 %v3577
        %v3647 = vunpack.c.l.b16 %v3580
        %v3648 = vunpack.c.l.b16 %v3584
        %v3649 = vunpack.c.l.b16 %v3587
        %v3650 = vunpack.c.l.b16 %v3591
        %v3651 = vunpack.c.l.b16 %v3594
        %v3652 = vunpack.c.l.b16 %v3598
        %v3653 = vunpack.c.l.b16 %v3601
        %v3654 = vunpack.c.l.b16 %v3605
        %v3655 = vunpack.c.l.b16 %v3608
        %v3656 = vunpack.c.l.b16 %v3612
        %v3657 = vunpack.c.l.b16 %v3615
        %v3658 = vunpack.c.l.b16 %v3619
        %v3659 = vunpack.c.l.b16 %v3622
        %v3660 = vpack.c.b16 %v3629, %v3628
        %v3661 = vpack.c.b16 %v3631, %v3630
        %v3662 = vpack.c.b16 %v3633, %v3632
        %v3663 = vpack.c.b16 %v3635, %v3634
        %v3664 = vpack.c.b16 %v3637, %v3636
        %v3665 = vpack.c.b16 %v3639, %v3638
        %v3666 = vpack.c.b16 %v3641, %v3640
        %v3667 = vpack.c.b16 %v3643, %v3642
        %v3668 = vpack.c.b16 %v3645, %v3644
        %v3669 = vpack.c.b16 %v3647, %v3646
        %v3670 = vpack.c.b16 %v3649, %v3648
        %v3671 = vpack.c.b16 %v3651, %v3650
        %v3672 = vpack.c.b16 %v3653, %v3652
        %v3673 = vpack.c.b16 %v3655, %v3654
        %v3674 = vpack.c.b16 %v3657, %v3656
        %v3675 = vpack.c.b16 %v3659, %v3658
        %v3680 = vunpack.c.l.b16 %v3624
        %v3681 = vunpack.c.l.b16 %v3625
        %v3682 = vunpack.c.l.b16 %v3626
        %v3683 = vunpack.c.l.b16 %v3627
        %v3684 = vpack.c.b16 %v3681, %v3680
        %v3685 = vpack.c.b16 %v3683, %v3682
        %v3689 = vsel %vm998, %v3660, 0
        %v3692 = vsel %vm998, %v3661, 0
        %v3695 = vsel %vm998, %v3662, 0
        %v3698 = vsel %vm998, %v3663, 0
        %v3701 = vsel %vm998, %v3664, 0
        %v3704 = vsel %vm998, %v3665, 0
        %v3707 = vsel %vm998, %v3666, 0
        %v3710 = vsel %vm998, %v3667, 0
        %v3713 = vsel %vm998, %v3668, 0
        %v3716 = vsel %vm998, %v3669, 0
        %v3719 = vsel %vm998, %v3670, 0
        %v3722 = vsel %vm998, %v3671, 0
        %v3725 = vsel %vm998, %v3672, 0
        %v3728 = vsel %vm998, %v3673, 0
        %v3731 = vsel %vm998, %v3674, 0
        %v3734 = vsel %vm998, %v3675, 0
        %3736 = vmatprep.subr.bf16.mxu0 0
        %3737 = vmatpush1.bf16.msra.mxu0 %v3684
        %3738 = vmatprep.subr.bf16.mxu0 0
        %3739 = vmatpush1.bf16.msra.mxu0 %v3685
        %3740 = vmatprep.subr.bf16.mxu0 0
        %3741 = vmatpush1.bf16.msra.mxu0 0
        %3742 = vmatprep.subr.bf16.mxu0 0
        %3743 = vmatpush1.bf16.msra.mxu0 0
        %3744 = vmatprep.subr.bf16.mxu0 0
        %3745 = vmatpush1.bf16.msra.mxu0 0
        %3746 = vmatprep.subr.bf16.mxu0 0
        %3747 = vmatpush1.bf16.msra.mxu0 0
        %3748 = vmatprep.subr.bf16.mxu0 0
        %3749 = vmatpush1.bf16.msra.mxu0 0
        %3750 = vmatprep.subr.bf16.mxu0 0
        %3751 = vmatpush1.bf16.msra.mxu0 0
        %3752 = vmatprep.subr.bf16.mxu0 0
        %3753 = vmatpush1.bf16.msra.mxu0 0
        %3754 = vmatprep.subr.bf16.mxu0 0
        %3755 = vmatpush1.bf16.msra.mxu0 0
        %3756 = vmatprep.subr.bf16.mxu0 0
        %3757 = vmatpush1.bf16.msra.mxu0 0
        %3758 = vmatprep.subr.bf16.mxu0 0
        %3759 = vmatpush1.bf16.msra.mxu0 0
        %3760 = vmatprep.subr.bf16.mxu0 0
        %3761 = vmatpush1.bf16.msra.mxu0 0
        %3762 = vmatprep.subr.bf16.mxu0 0
        %3763 = vmatpush1.bf16.msra.mxu0 0
        %3764 = vmatprep.subr.bf16.mxu0 0
        %3765 = vmatpush1.bf16.msra.mxu0 0
        %3766 = vmatprep.subr.bf16.mxu0 0
        %3767 = vmatpush1.bf16.msra.mxu0 0
        %3768 = vmatprep.mubr.bf16.mxu0 0
        %3769 = vmatmul.mubr.bf16.gmra.mrb[0].mxu0 %v3689
        %v3770 = vpop.f32.mrb[0].mxu0
        %v3771 = vadd.f32 0.0, %v3770
        %v3772 = vpop.f32.mrb[0].mxu0
        %v3773 = vpop.f32.mrb[0].mxu0
        %v3774 = vadd.f32 0.0, %v3773
        %v3775 = vpop.f32.mrb[0].mxu0
        %3776 = vmatprep.mubr.bf16.mxu0 0
        %3777 = vmatmul.mubr.bf16.gmra.mrb[0].mxu0 %v3692
        %v3778 = vpop.f32.mrb[0].mxu0
        %v3779 = vadd.f32 0.0, %v3778
        %v3780 = vpop.f32.mrb[0].mxu0
        %v3781 = vpop.f32.mrb[0].mxu0
        %v3782 = vadd.f32 0.0, %v3781
        %v3783 = vpop.f32.mrb[0].mxu0
        %3784 = vmatprep.mubr.bf16.mxu0 0
        %3785 = vmatmul.mubr.bf16.gmra.mrb[0].mxu0 %v3695
        %v3786 = vpop.f32.mrb[0].mxu0
        %v3787 = vadd.f32 0.0, %v3786
        %v3788 = vpop.f32.mrb[0].mxu0
        %v3789 = vpop.f32.mrb[0].mxu0
        %v3790 = vadd.f32 0.0, %v3789
        %v3791 = vpop.f32.mrb[0].mxu0
        %3792 = vmatprep.mubr.bf16.mxu0 0
        %3793 = vmatmul.mubr.bf16.gmra.mrb[0].mxu0 %v3698
        %v3794 = vpop.f32.mrb[0].mxu0
        %v3795 = vadd.f32 0.0, %v3794
        %v3796 = vpop.f32.mrb[0].mxu0
        %v3797 = vpop.f32.mrb[0].mxu0
        %v3798 = vadd.f32 0.0, %v3797
        %v3799 = vpop.f32.mrb[0].mxu0
        %3800 = vmatprep.mubr.bf16.mxu0 0
        %3801 = vmatmul.mubr.bf16.gmra.mrb[0].mxu0 %v3701
        %v3802 = vpop.f32.mrb[0].mxu0
        %v3803 = vadd.f32 0.0, %v3802
        %v3804 = vpop.f32.mrb[0].mxu0
        %v3805 = vpop.f32.mrb[0].mxu0
        %v3806 = vadd.f32 0.0, %v3805
        %v3807 = vpop.f32.mrb[0].mxu0
        %3808 = vmatprep.mubr.bf16.mxu0 0
        %3809 = vmatmul.mubr.bf16.gmra.mrb[0].mxu0 %v3704
        %v3810 = vpop.f32.mrb[0].mxu0
        %v3811 = vadd.f32 0.0, %v3810
        %v3812 = vpop.f32.mrb[0].mxu0
        %v3813 = vpop.f32.mrb[0].mxu0
        %v3814 = vadd.f32 0.0, %v3813
        %v3815 = vpop.f32.mrb[0].mxu0
        %3816 = vmatprep.mubr.bf16.mxu0 0
        %3817 = vmatmul.mubr.bf16.gmra.mrb[0].mxu0 %v3707
        %v3818 = vpop.f32.mrb[0].mxu0
        %v3819 = vadd.f32 0.0, %v3818
        %v3820 = vpop.f32.mrb[0].mxu0
        %v3821 = vpop.f32.mrb[0].mxu0
        %v3822 = vadd.f32 0.0, %v3821
        %v3823 = vpop.f32.mrb[0].mxu0
        %3824 = vmatprep.mubr.bf16.mxu0 0
        %3825 = vmatmul.mubr.bf16.gmra.mrb[0].mxu0 %v3710
        %v3826 = vpop.f32.mrb[0].mxu0
        %v3827 = vadd.f32 0.0, %v3826
        %v3828 = vpop.f32.mrb[0].mxu0
        %v3829 = vpop.f32.mrb[0].mxu0
        %v3830 = vadd.f32 0.0, %v3829
        %v3831 = vpop.f32.mrb[0].mxu0
        %3832 = vmatprep.mubr.bf16.mxu0 0
        %3833 = vmatmul.mubr.bf16.gmra.mrb[0].mxu0 %v3713
        %v3834 = vpop.f32.mrb[0].mxu0
        %v3835 = vadd.f32 0.0, %v3834
        %v3836 = vpop.f32.mrb[0].mxu0
        %v3837 = vpop.f32.mrb[0].mxu0
        %v3838 = vadd.f32 0.0, %v3837
        %v3839 = vpop.f32.mrb[0].mxu0
        %3840 = vmatprep.mubr.bf16.mxu0 0
        %3841 = vmatmul.mubr.bf16.gmra.mrb[0].mxu0 %v3716
        %v3842 = vpop.f32.mrb[0].mxu0
        %v3843 = vadd.f32 0.0, %v3842
        %v3844 = vpop.f32.mrb[0].mxu0
        %v3845 = vpop.f32.mrb[0].mxu0
        %v3846 = vadd.f32 0.0, %v3845
        %v3847 = vpop.f32.mrb[0].mxu0
        %3848 = vmatprep.mubr.bf16.mxu0 0
        %3849 = vmatmul.mubr.bf16.gmra.mrb[0].mxu0 %v3719
        %v3850 = vpop.f32.mrb[0].mxu0
        %v3851 = vadd.f32 0.0, %v3850
        %v3852 = vpop.f32.mrb[0].mxu0
        %v3853 = vpop.f32.mrb[0].mxu0
        %v3854 = vadd.f32 0.0, %v3853
        %v3855 = vpop.f32.mrb[0].mxu0
        %3856 = vmatprep.mubr.bf16.mxu0 0
        %3857 = vmatmul.mubr.bf16.gmra.mrb[0].mxu0 %v3722
        %v3858 = vpop.f32.mrb[0].mxu0
        %v3859 = vadd.f32 0.0, %v3858
        %v3860 = vpop.f32.mrb[0].mxu0
        %v3861 = vpop.f32.mrb[0].mxu0
        %v3862 = vadd.f32 0.0, %v3861
        %v3863 = vpop.f32.mrb[0].mxu0
        %3864 = vmatprep.mubr.bf16.mxu0 0
        %3865 = vmatmul.mubr.bf16.gmra.mrb[0].mxu0 %v3725
        %v3866 = vpop.f32.mrb[0].mxu0
        %v3867 = vadd.f32 0.0, %v3866
        %v3868 = vpop.f32.mrb[0].mxu0
        %v3869 = vpop.f32.mrb[0].mxu0
        %v3870 = vadd.f32 0.0, %v3869
        %v3871 = vpop.f32.mrb[0].mxu0
        %3872 = vmatprep.mubr.bf16.mxu0 0
        %3873 = vmatmul.mubr.bf16.gmra.mrb[0].mxu0 %v3728
        %v3874 = vpop.f32.mrb[0].mxu0
        %v3875 = vadd.f32 0.0, %v3874
        %v3876 = vpop.f32.mrb[0].mxu0
        %v3877 = vpop.f32.mrb[0].mxu0
        %v3878 = vadd.f32 0.0, %v3877
        %v3879 = vpop.f32.mrb[0].mxu0
        %3880 = vmatprep.mubr.bf16.mxu0 0
        %3881 = vmatmul.mubr.bf16.gmra.mrb[0].mxu0 %v3731
        %v3882 = vpop.f32.mrb[0].mxu0
        %v3883 = vadd.f32 0.0, %v3882
        %v3884 = vpop.f32.mrb[0].mxu0
        %v3885 = vpop.f32.mrb[0].mxu0
        %v3886 = vadd.f32 0.0, %v3885
        %v3887 = vpop.f32.mrb[0].mxu0
        %3888 = vmatprep.mubr.bf16.mxu0 0
        %3889 = vmatmul.mubr.bf16.gmra.mrb[0].mxu0 %v3734
        %v3890 = vpop.f32.mrb[0].mxu0
        %v3891 = vadd.f32 0.0, %v3890
        %v3892 = vpop.f32.mrb[0].mxu0
        %v3893 = vpop.f32.mrb[0].mxu0
        %v3894 = vadd.f32 0.0, %v3893
        %v3895 = vpop.f32.mrb[0].mxu0
        %3896 = vdwg.mxu0
        %v3897 = vld [vmem:[#allocation3] sm:$0xff]
        %v3898 = vld [vmem:[#allocation3 + $0x8] sm:$0xff]
        %v3899 = vld [vmem:[#allocation3 + $0x10] sm:$0xff]
        %v3900 = vld [vmem:[#allocation3 + $0x18] sm:$0xff]
        %v3901 = vld [vmem:[#allocation3 + $0x20] sm:$0xff]
        %v3902 = vld [vmem:[#allocation3 + $0x28] sm:$0xff]
        %v3903 = vld [vmem:[#allocation3 + $0x30] sm:$0xff]
        %v3904 = vld [vmem:[#allocation3 + $0x38] sm:$0xff]
        %v3905 = vld [vmem:[#allocation3 + $0x40] sm:$0xff]
        %v3906 = vld [vmem:[#allocation3 + $0x48] sm:$0xff]
        %v3907 = vld [vmem:[#allocation3 + $0x50] sm:$0xff]
        %v3908 = vld [vmem:[#allocation3 + $0x58] sm:$0xff]
        %v3909 = vld [vmem:[#allocation3 + $0x60] sm:$0xff]
        %v3910 = vld [vmem:[#allocation3 + $0x68] sm:$0xff]
        %v3911 = vld [vmem:[#allocation3 + $0x70] sm:$0xff]
        %v3912 = vld [vmem:[#allocation3 + $0x78] sm:$0xff]
        %v3913 = vld [vmem:[#allocation3 + $0x80] sm:$0xff]
        %v3914 = vld [vmem:[#allocation3 + $0x88] sm:$0xff]
        %v3915 = vld [vmem:[#allocation3 + $0x90] sm:$0xff]
        %v3916 = vld [vmem:[#allocation3 + $0x98] sm:$0xff]
        %v3917 = vld [vmem:[#allocation3 + $0xa0] sm:$0xff]
        %v3918 = vld [vmem:[#allocation3 + $0xa8] sm:$0xff]
        %v3919 = vld [vmem:[#allocation3 + $0xb0] sm:$0xff]
        %v3920 = vld [vmem:[#allocation3 + $0xb8] sm:$0xff]
        %v3921 = vld [vmem:[#allocation3 + $0xc0] sm:$0xff]
        %v3922 = vld [vmem:[#allocation3 + $0xc8] sm:$0xff]
        %v3923 = vld [vmem:[#allocation3 + $0xd0] sm:$0xff]
        %v3924 = vld [vmem:[#allocation3 + $0xd8] sm:$0xff]
        %v3925 = vld [vmem:[#allocation3 + $0xe0] sm:$0xff]
        %v3926 = vld [vmem:[#allocation3 + $0xe8] sm:$0xff]
        %v3927 = vld [vmem:[#allocation3 + $0xf0] sm:$0xff]
        %v3928 = vld [vmem:[#allocation3 + $0xf8] sm:$0xff]
        %v3929 = vadd.f32 %v3897, %v3771
        %v3930 = vadd.f32 %v3898, %v3774
        %v3931 = vadd.f32 %v3899, %v3779
        %v3932 = vadd.f32 %v3900, %v3782
        %v3933 = vadd.f32 %v3901, %v3787
        %v3934 = vadd.f32 %v3902, %v3790
        %v3935 = vadd.f32 %v3903, %v3795
        %v3936 = vadd.f32 %v3904, %v3798
        %v3937 = vadd.f32 %v3905, %v3803
        %v3938 = vadd.f32 %v3906, %v3806
        %v3939 = vadd.f32 %v3907, %v3811
        %v3940 = vadd.f32 %v3908, %v3814
        %v3941 = vadd.f32 %v3909, %v3819
        %v3942 = vadd.f32 %v3910, %v3822
        %v3943 = vadd.f32 %v3911, %v3827
        %v3944 = vadd.f32 %v3912, %v3830
        %v3945 = vadd.f32 %v3913, %v3835
        %v3946 = vadd.f32 %v3914, %v3838
        %v3947 = vadd.f32 %v3915, %v3843
        %v3948 = vadd.f32 %v3916, %v3846
        %v3949 = vadd.f32 %v3917, %v3851
        %v3950 = vadd.f32 %v3918, %v3854
        %v3951 = vadd.f32 %v3919, %v3859
        %v3952 = vadd.f32 %v3920, %v3862
        %v3953 = vadd.f32 %v3921, %v3867
        %v3954 = vadd.f32 %v3922, %v3870
        %v3955 = vadd.f32 %v3923, %v3875
        %v3956 = vadd.f32 %v3924, %v3878
        %v3957 = vadd.f32 %v3925, %v3883
        %v3958 = vadd.f32 %v3926, %v3886
        %v3959 = vadd.f32 %v3927, %v3891
        %v3960 = vadd.f32 %v3928, %v3894
        %3961 = vst.msk [vmem:[#allocation3] sm:$0xff] %vm998, %v3929
        %3962 = vst.msk [vmem:[#allocation3 + $0x8] sm:$0xff] %vm998, %v3930
        %3963 = vst.msk [vmem:[#allocation3 + $0x10] sm:$0xff] %vm998, %v3931
        %3964 = vst.msk [vmem:[#allocation3 + $0x18] sm:$0xff] %vm998, %v3932
        %3965 = vst.msk [vmem:[#allocation3 + $0x20] sm:$0xff] %vm998, %v3933
        %3966 = vst.msk [vmem:[#allocation3 + $0x28] sm:$0xff] %vm998, %v3934
        %3967 = vst.msk [vmem:[#allocation3 + $0x30] sm:$0xff] %vm998, %v3935
        %3968 = vst.msk [vmem:[#allocation3 + $0x38] sm:$0xff] %vm998, %v3936
        %3969 = vst.msk [vmem:[#allocation3 + $0x40] sm:$0xff] %vm998, %v3937
        %3970 = vst.msk [vmem:[#allocation3 + $0x48] sm:$0xff] %vm998, %v3938
        %3971 = vst.msk [vmem:[#allocation3 + $0x50] sm:$0xff] %vm998, %v3939
        %3972 = vst.msk [vmem:[#allocation3 + $0x58] sm:$0xff] %vm998, %v3940
        %3973 = vst.msk [vmem:[#allocation3 + $0x60] sm:$0xff] %vm998, %v3941
        %3974 = vst.msk [vmem:[#allocation3 + $0x68] sm:$0xff] %vm998, %v3942
        %3975 = vst.msk [vmem:[#allocation3 + $0x70] sm:$0xff] %vm998, %v3943
        %3976 = vst.msk [vmem:[#allocation3 + $0x78] sm:$0xff] %vm998, %v3944
        %3977 = vst.msk [vmem:[#allocation3 + $0x80] sm:$0xff] %vm998, %v3945
        %3978 = vst.msk [vmem:[#allocation3 + $0x88] sm:$0xff] %vm998, %v3946
        %3979 = vst.msk [vmem:[#allocation3 + $0x90] sm:$0xff] %vm998, %v3947
        %3980 = vst.msk [vmem:[#allocation3 + $0x98] sm:$0xff] %vm998, %v3948
        %3981 = vst.msk [vmem:[#allocation3 + $0xa0] sm:$0xff] %vm998, %v3949
        %3982 = vst.msk [vmem:[#allocation3 + $0xa8] sm:$0xff] %vm998, %v3950
        %3983 = vst.msk [vmem:[#allocation3 + $0xb0] sm:$0xff] %vm998, %v3951
        %3984 = vst.msk [vmem:[#allocation3 + $0xb8] sm:$0xff] %vm998, %v3952
        %3985 = vst.msk [vmem:[#allocation3 + $0xc0] sm:$0xff] %vm998, %v3953
        %3986 = vst.msk [vmem:[#allocation3 + $0xc8] sm:$0xff] %vm998, %v3954
        %3987 = vst.msk [vmem:[#allocation3 + $0xd0] sm:$0xff] %vm998, %v3955
        %3988 = vst.msk [vmem:[#allocation3 + $0xd8] sm:$0xff] %vm998, %v3956
        %3989 = vst.msk [vmem:[#allocation3 + $0xe0] sm:$0xff] %vm998, %v3957
        %3990 = vst.msk [vmem:[#allocation3 + $0xe8] sm:$0xff] %vm998, %v3958
        %3991 = vst.msk [vmem:[#allocation3 + $0xf0] sm:$0xff] %vm998, %v3959
        %3992 = vst.msk [vmem:[#allocation3 + $0xf8] sm:$0xff] %vm998, %v3960
        %s3993 = scalar_lea.vmem [#allocation2], 48
        %v3994 = vld [vmem:[%s3993] sm:$0xf]
        %v3995 = vld [vmem:[%s3993 + $0x4] sm:$0xf]
        %v3996 = vld [vmem:[%s3993 + $0xc] sm:$0xf]
        %v3997 = vld [vmem:[%s3993 + $0x10] sm:$0xf]
        %v3998 = vld [vmem:[%s3993 + $0x18] sm:$0xf]
        %v3999 = vld [vmem:[%s3993 + $0x1c] sm:$0xf]
        %v4000 = vld [vmem:[%s3993 + $0x24] sm:$0xf]
        %v4001 = vld [vmem:[%s3993 + $0x28] sm:$0xf]
        %v4002 = vld [vmem:[%s3993 + $0x30] sm:$0xf]
        %v4003 = vld [vmem:[%s3993 + $0x34] sm:$0xf]
        %v4004 = vld [vmem:[%s3993 + $0x3c] sm:$0xf]
        %v4005 = vld [vmem:[%s3993 + $0x40] sm:$0xf]
        %v4006 = vld [vmem:[%s3993 + $0x48] sm:$0xf]
        %v4007 = vld [vmem:[%s3993 + $0x4c] sm:$0xf]
        %v4008 = vld [vmem:[%s3993 + $0x54] sm:$0xf]
        %v4009 = vld [vmem:[%s3993 + $0x58] sm:$0xf]
        %v4010 = vld [vmem:[%s3993 + $0x60] sm:$0xf]
        %v4011 = vld [vmem:[%s3993 + $0x64] sm:$0xf]
        %v4012 = vld [vmem:[%s3993 + $0x6c] sm:$0xf]
        %v4013 = vld [vmem:[%s3993 + $0x70] sm:$0xf]
        %v4014 = vld [vmem:[%s3993 + $0x78] sm:$0xf]
        %v4015 = vld [vmem:[%s3993 + $0x7c] sm:$0xf]
        %v4016 = vld [vmem:[%s3993 + $0x84] sm:$0xf]
        %v4017 = vld [vmem:[%s3993 + $0x88] sm:$0xf]
        %v4018 = vld [vmem:[%s3993 + $0x90] sm:$0xf]
        %v4019 = vld [vmem:[%s3993 + $0x94] sm:$0xf]
        %v4020 = vld [vmem:[%s3993 + $0x9c] sm:$0xf]
        %v4021 = vld [vmem:[%s3993 + $0xa0] sm:$0xf]
        %v4022 = vld [vmem:[%s3993 + $0xa8] sm:$0xf]
        %v4023 = vld [vmem:[%s3993 + $0xac] sm:$0xf]
        %v4024 = vld [vmem:[%s3993 + $0xb4] sm:$0xf]
        %v4025 = vld [vmem:[%s3993 + $0xb8] sm:$0xf]
        %s4026 = scalar_lea.vmem [#allocation7], 96
        %v4027 = vld [vmem:[%s4026] sm:$0xf]
        %v4028 = vld [vmem:[%s4026 + $0x4] sm:$0xf]
        %v4029 = vld [vmem:[%s4026 + $0x8] sm:$0xf]
        %v4030 = vld [vmem:[%s4026 + $0xc] sm:$0xf]
        %v4063 = vunpack.c.l.b16 %v3994
        %v4064 = vunpack.c.l.b16 %v3995
        %v4065 = vunpack.c.l.b16 %v3996
        %v4066 = vunpack.c.l.b16 %v3997
        %v4067 = vunpack.c.l.b16 %v3998
        %v4068 = vunpack.c.l.b16 %v3999
        %v4069 = vunpack.c.l.b16 %v4000
        %v4070 = vunpack.c.l.b16 %v4001
        %v4071 = vunpack.c.l.b16 %v4002
        %v4072 = vunpack.c.l.b16 %v4003
        %v4073 = vunpack.c.l.b16 %v4004
        %v4074 = vunpack.c.l.b16 %v4005
        %v4075 = vunpack.c.l.b16 %v4006
        %v4076 = vunpack.c.l.b16 %v4007
        %v4077 = vunpack.c.l.b16 %v4008
        %v4078 = vunpack.c.l.b16 %v4009
        %v4079 = vunpack.c.l.b16 %v4010
        %v4080 = vunpack.c.l.b16 %v4011
        %v4081 = vunpack.c.l.b16 %v4012
        %v4082 = vunpack.c.l.b16 %v4013
        %v4083 = vunpack.c.l.b16 %v4014
        %v4084 = vunpack.c.l.b16 %v4015
        %v4085 = vunpack.c.l.b16 %v4016
        %v4086 = vunpack.c.l.b16 %v4017
        %v4087 = vunpack.c.l.b16 %v4018
        %v4088 = vunpack.c.l.b16 %v4019
        %v4089 = vunpack.c.l.b16 %v4020
        %v4090 = vunpack.c.l.b16 %v4021
        %v4091 = vunpack.c.l.b16 %v4022
        %v4092 = vunpack.c.l.b16 %v4023
        %v4093 = vunpack.c.l.b16 %v4024
        %v4094 = vunpack.c.l.b16 %v4025
        %v4095 = vpack.c.b16 %v4064, %v4063
        %v4096 = vpack.c.b16 %v4066, %v4065
        %v4097 = vpack.c.b16 %v4068, %v4067
        %v4098 = vpack.c.b16 %v4070, %v4069
        %v4099 = vpack.c.b16 %v4072, %v4071
        %v4100 = vpack.c.b16 %v4074, %v4073
        %v4101 = vpack.c.b16 %v4076, %v4075
        %v4102 = vpack.c.b16 %v4078, %v4077
        %v4103 = vpack.c.b16 %v4080, %v4079
        %v4104 = vpack.c.b16 %v4082, %v4081
        %v4105 = vpack.c.b16 %v4084, %v4083
        %v4106 = vpack.c.b16 %v4086, %v4085
        %v4107 = vpack.c.b16 %v4088, %v4087
        %v4108 = vpack.c.b16 %v4090, %v4089
        %v4109 = vpack.c.b16 %v4092, %v4091
        %v4110 = vpack.c.b16 %v4094, %v4093
        %v4115 = vunpack.c.l.b16 %v4027
        %v4116 = vunpack.c.l.b16 %v4028
        %v4117 = vunpack.c.l.b16 %v4029
        %v4118 = vunpack.c.l.b16 %v4030
        %v4119 = vpack.c.b16 %v4116, %v4115
        %v4120 = vpack.c.b16 %v4118, %v4117
        %v4124 = vsel %vm998, %v4095, 0
        %v4127 = vsel %vm998, %v4096, 0
        %v4130 = vsel %vm998, %v4097, 0
        %v4133 = vsel %vm998, %v4098, 0
        %v4136 = vsel %vm998, %v4099, 0
        %v4139 = vsel %vm998, %v4100, 0
        %v4142 = vsel %vm998, %v4101, 0
        %v4145 = vsel %vm998, %v4102, 0
        %v4148 = vsel %vm998, %v4103, 0
        %v4151 = vsel %vm998, %v4104, 0
        %v4154 = vsel %vm998, %v4105, 0
        %v4157 = vsel %vm998, %v4106, 0
        %v4160 = vsel %vm998, %v4107, 0
        %v4163 = vsel %vm998, %v4108, 0
        %v4166 = vsel %vm998, %v4109, 0
        %v4169 = vsel %vm998, %v4110, 0
        %4171 = vmatprep.subr.bf16.mxu0 0
        %4172 = vmatpush1.bf16.msra.mxu0 %v4119
        %4173 = vmatprep.subr.bf16.mxu0 0
        %4174 = vmatpush1.bf16.msra.mxu0 %v4120
        %4175 = vmatprep.subr.bf16.mxu0 0
        %4176 = vmatpush1.bf16.msra.mxu0 0
        %4177 = vmatprep.subr.bf16.mxu0 0
        %4178 = vmatpush1.bf16.msra.mxu0 0
        %4179 = vmatprep.subr.bf16.mxu0 0
        %4180 = vmatpush1.bf16.msra.mxu0 0
        %4181 = vmatprep.subr.bf16.mxu0 0
        %4182 = vmatpush1.bf16.msra.mxu0 0
        %4183 = vmatprep.subr.bf16.mxu0 0
        %4184 = vmatpush1.bf16.msra.mxu0 0
        %4185 = vmatprep.subr.bf16.mxu0 0
        %4186 = vmatpush1.bf16.msra.mxu0 0
        %4187 = vmatprep.subr.bf16.mxu0 0
        %4188 = vmatpush1.bf16.msra.mxu0 0
        %4189 = vmatprep.subr.bf16.mxu0 0
        %4190 = vmatpush1.bf16.msra.mxu0 0
        %4191 = vmatprep.subr.bf16.mxu0 0
        %4192 = vmatpush1.bf16.msra.mxu0 0
        %4193 = vmatprep.subr.bf16.mxu0 0
        %4194 = vmatpush1.bf16.msra.mxu0 0
        %4195 = vmatprep.subr.bf16.mxu0 0
        %4196 = vmatpush1.bf16.msra.mxu0 0
        %4197 = vmatprep.subr.bf16.mxu0 0
        %4198 = vmatpush1.bf16.msra.mxu0 0
        %4199 = vmatprep.subr.bf16.mxu0 0
        %4200 = vmatpush1.bf16.msra.mxu0 0
        %4201 = vmatprep.subr.bf16.mxu0 0
        %4202 = vmatpush1.bf16.msra.mxu0 0
        %4203 = vmatprep.mubr.bf16.mxu0 0
        %4204 = vmatmul.mubr.bf16.gmra.mrb[0].mxu0 %v4124
        %v4205 = vpop.f32.mrb[0].mxu0
        %v4206 = vadd.f32 0.0, %v4205
        %v4207 = vpop.f32.mrb[0].mxu0
        %v4208 = vpop.f32.mrb[0].mxu0
        %v4209 = vadd.f32 0.0, %v4208
        %v4210 = vpop.f32.mrb[0].mxu0
        %4211 = vmatprep.mubr.bf16.mxu0 0
        %4212 = vmatmul.mubr.bf16.gmra.mrb[0].mxu0 %v4127
        %v4213 = vpop.f32.mrb[0].mxu0
        %v4214 = vadd.f32 0.0, %v4213
        %v4215 = vpop.f32.mrb[0].mxu0
        %v4216 = vpop.f32.mrb[0].mxu0
        %v4217 = vadd.f32 0.0, %v4216
        %v4218 = vpop.f32.mrb[0].mxu0
        %4219 = vmatprep.mubr.bf16.mxu0 0
        %4220 = vmatmul.mubr.bf16.gmra.mrb[0].mxu0 %v4130
        %v4221 = vpop.f32.mrb[0].mxu0
        %v4222 = vadd.f32 0.0, %v4221
        %v4223 = vpop.f32.mrb[0].mxu0
        %v4224 = vpop.f32.mrb[0].mxu0
        %v4225 = vadd.f32 0.0, %v4224
        %v4226 = vpop.f32.mrb[0].mxu0
        %4227 = vmatprep.mubr.bf16.mxu0 0
        %4228 = vmatmul.mubr.bf16.gmra.mrb[0].mxu0 %v4133
        %v4229 = vpop.f32.mrb[0].mxu0
        %v4230 = vadd.f32 0.0, %v4229
        %v4231 = vpop.f32.mrb[0].mxu0
        %v4232 = vpop.f32.mrb[0].mxu0
        %v4233 = vadd.f32 0.0, %v4232
        %v4234 = vpop.f32.mrb[0].mxu0
        %4235 = vmatprep.mubr.bf16.mxu0 0
        %4236 = vmatmul.mubr.bf16.gmra.mrb[0].mxu0 %v4136
        %v4237 = vpop.f32.mrb[0].mxu0
        %v4238 = vadd.f32 0.0, %v4237
        %v4239 = vpop.f32.mrb[0].mxu0
        %v4240 = vpop.f32.mrb[0].mxu0
        %v4241 = vadd.f32 0.0, %v4240
        %v4242 = vpop.f32.mrb[0].mxu0
        %4243 = vmatprep.mubr.bf16.mxu0 0
        %4244 = vmatmul.mubr.bf16.gmra.mrb[0].mxu0 %v4139
        %v4245 = vpop.f32.mrb[0].mxu0
        %v4246 = vadd.f32 0.0, %v4245
        %v4247 = vpop.f32.mrb[0].mxu0
        %v4248 = vpop.f32.mrb[0].mxu0
        %v4249 = vadd.f32 0.0, %v4248
        %v4250 = vpop.f32.mrb[0].mxu0
        %4251 = vmatprep.mubr.bf16.mxu0 0
        %4252 = vmatmul.mubr.bf16.gmra.mrb[0].mxu0 %v4142
        %v4253 = vpop.f32.mrb[0].mxu0
        %v4254 = vadd.f32 0.0, %v4253
        %v4255 = vpop.f32.mrb[0].mxu0
        %v4256 = vpop.f32.mrb[0].mxu0
        %v4257 = vadd.f32 0.0, %v4256
        %v4258 = vpop.f32.mrb[0].mxu0
        %4259 = vmatprep.mubr.bf16.mxu0 0
        %4260 = vmatmul.mubr.bf16.gmra.mrb[0].mxu0 %v4145
        %v4261 = vpop.f32.mrb[0].mxu0
        %v4262 = vadd.f32 0.0, %v4261
        %v4263 = vpop.f32.mrb[0].mxu0
        %v4264 = vpop.f32.mrb[0].mxu0
        %v4265 = vadd.f32 0.0, %v4264
        %v4266 = vpop.f32.mrb[0].mxu0
        %4267 = vmatprep.mubr.bf16.mxu0 0
        %4268 = vmatmul.mubr.bf16.gmra.mrb[0].mxu0 %v4148
        %v4269 = vpop.f32.mrb[0].mxu0
        %v4270 = vadd.f32 0.0, %v4269
        %v4271 = vpop.f32.mrb[0].mxu0
        %v4272 = vpop.f32.mrb[0].mxu0
        %v4273 = vadd.f32 0.0, %v4272
        %v4274 = vpop.f32.mrb[0].mxu0
        %4275 = vmatprep.mubr.bf16.mxu0 0
        %4276 = vmatmul.mubr.bf16.gmra.mrb[0].mxu0 %v4151
        %v4277 = vpop.f32.mrb[0].mxu0
        %v4278 = vadd.f32 0.0, %v4277
        %v4279 = vpop.f32.mrb[0].mxu0
        %v4280 = vpop.f32.mrb[0].mxu0
        %v4281 = vadd.f32 0.0, %v4280
        %v4282 = vpop.f32.mrb[0].mxu0
        %4283 = vmatprep.mubr.bf16.mxu0 0
        %4284 = vmatmul.mubr.bf16.gmra.mrb[0].mxu0 %v4154
        %v4285 = vpop.f32.mrb[0].mxu0
        %v4286 = vadd.f32 0.0, %v4285
        %v4287 = vpop.f32.mrb[0].mxu0
        %v4288 = vpop.f32.mrb[0].mxu0
        %v4289 = vadd.f32 0.0, %v4288
        %v4290 = vpop.f32.mrb[0].mxu0
        %4291 = vmatprep.mubr.bf16.mxu0 0
        %4292 = vmatmul.mubr.bf16.gmra.mrb[0].mxu0 %v4157
        %v4293 = vpop.f32.mrb[0].mxu0
        %v4294 = vadd.f32 0.0, %v4293
        %v4295 = vpop.f32.mrb[0].mxu0
        %v4296 = vpop.f32.mrb[0].mxu0
        %v4297 = vadd.f32 0.0, %v4296
        %v4298 = vpop.f32.mrb[0].mxu0
        %4299 = vmatprep.mubr.bf16.mxu0 0
        %4300 = vmatmul.mubr.bf16.gmra.mrb[0].mxu0 %v4160
        %v4301 = vpop.f32.mrb[0].mxu0
        %v4302 = vadd.f32 0.0, %v4301
        %v4303 = vpop.f32.mrb[0].mxu0
        %v4304 = vpop.f32.mrb[0].mxu0
        %v4305 = vadd.f32 0.0, %v4304
        %v4306 = vpop.f32.mrb[0].mxu0
        %4307 = vmatprep.mubr.bf16.mxu0 0
        %4308 = vmatmul.mubr.bf16.gmra.mrb[0].mxu0 %v4163
        %v4309 = vpop.f32.mrb[0].mxu0
        %v4310 = vadd.f32 0.0, %v4309
        %v4311 = vpop.f32.mrb[0].mxu0
        %v4312 = vpop.f32.mrb[0].mxu0
        %v4313 = vadd.f32 0.0, %v4312
        %v4314 = vpop.f32.mrb[0].mxu0
        %4315 = vmatprep.mubr.bf16.mxu0 0
        %4316 = vmatmul.mubr.bf16.gmra.mrb[0].mxu0 %v4166
        %v4317 = vpop.f32.mrb[0].mxu0
        %v4318 = vadd.f32 0.0, %v4317
        %v4319 = vpop.f32.mrb[0].mxu0
        %v4320 = vpop.f32.mrb[0].mxu0
        %v4321 = vadd.f32 0.0, %v4320
        %v4322 = vpop.f32.mrb[0].mxu0
        %4323 = vmatprep.mubr.bf16.mxu0 0
        %4324 = vmatmul.mubr.bf16.gmra.mrb[0].mxu0 %v4169
        %v4325 = vpop.f32.mrb[0].mxu0
        %v4326 = vadd.f32 0.0, %v4325
        %v4327 = vpop.f32.mrb[0].mxu0
        %v4328 = vpop.f32.mrb[0].mxu0
        %v4329 = vadd.f32 0.0, %v4328
        %v4330 = vpop.f32.mrb[0].mxu0
        %4331 = vdwg.mxu0
        %v4332 = vld [vmem:[#allocation3] sm:$0xff]
        %v4333 = vld [vmem:[#allocation3 + $0x8] sm:$0xff]
        %v4334 = vld [vmem:[#allocation3 + $0x10] sm:$0xff]
        %v4335 = vld [vmem:[#allocation3 + $0x18] sm:$0xff]
        %v4336 = vld [vmem:[#allocation3 + $0x20] sm:$0xff]
        %v4337 = vld [vmem:[#allocation3 + $0x28] sm:$0xff]
        %v4338 = vld [vmem:[#allocation3 + $0x30] sm:$0xff]
        %v4339 = vld [vmem:[#allocation3 + $0x38] sm:$0xff]
        %v4340 = vld [vmem:[#allocation3 + $0x40] sm:$0xff]
        %v4341 = vld [vmem:[#allocation3 + $0x48] sm:$0xff]
        %v4342 = vld [vmem:[#allocation3 + $0x50] sm:$0xff]
        %v4343 = vld [vmem:[#allocation3 + $0x58] sm:$0xff]
        %v4344 = vld [vmem:[#allocation3 + $0x60] sm:$0xff]
        %v4345 = vld [vmem:[#allocation3 + $0x68] sm:$0xff]
        %v4346 = vld [vmem:[#allocation3 + $0x70] sm:$0xff]
        %v4347 = vld [vmem:[#allocation3 + $0x78] sm:$0xff]
        %v4348 = vld [vmem:[#allocation3 + $0x80] sm:$0xff]
        %v4349 = vld [vmem:[#allocation3 + $0x88] sm:$0xff]
        %v4350 = vld [vmem:[#allocation3 + $0x90] sm:$0xff]
        %v4351 = vld [vmem:[#allocation3 + $0x98] sm:$0xff]
        %v4352 = vld [vmem:[#allocation3 + $0xa0] sm:$0xff]
        %v4353 = vld [vmem:[#allocation3 + $0xa8] sm:$0xff]
        %v4354 = vld [vmem:[#allocation3 + $0xb0] sm:$0xff]
        %v4355 = vld [vmem:[#allocation3 + $0xb8] sm:$0xff]
        %v4356 = vld [vmem:[#allocation3 + $0xc0] sm:$0xff]
        %v4357 = vld [vmem:[#allocation3 + $0xc8] sm:$0xff]
        %v4358 = vld [vmem:[#allocation3 + $0xd0] sm:$0xff]
        %v4359 = vld [vmem:[#allocation3 + $0xd8] sm:$0xff]
        %v4360 = vld [vmem:[#allocation3 + $0xe0] sm:$0xff]
        %v4361 = vld [vmem:[#allocation3 + $0xe8] sm:$0xff]
        %v4362 = vld [vmem:[#allocation3 + $0xf0] sm:$0xff]
        %v4363 = vld [vmem:[#allocation3 + $0xf8] sm:$0xff]
        %v4364 = vadd.f32 %v4332, %v4206
        %v4365 = vadd.f32 %v4333, %v4209
        %v4366 = vadd.f32 %v4334, %v4214
        %v4367 = vadd.f32 %v4335, %v4217
        %v4368 = vadd.f32 %v4336, %v4222
        %v4369 = vadd.f32 %v4337, %v4225
        %v4370 = vadd.f32 %v4338, %v4230
        %v4371 = vadd.f32 %v4339, %v4233
        %v4372 = vadd.f32 %v4340, %v4238
        %v4373 = vadd.f32 %v4341, %v4241
        %v4374 = vadd.f32 %v4342, %v4246
        %v4375 = vadd.f32 %v4343, %v4249
        %v4376 = vadd.f32 %v4344, %v4254
        %v4377 = vadd.f32 %v4345, %v4257
        %v4378 = vadd.f32 %v4346, %v4262
        %v4379 = vadd.f32 %v4347, %v4265
        %v4380 = vadd.f32 %v4348, %v4270
        %v4381 = vadd.f32 %v4349, %v4273
        %v4382 = vadd.f32 %v4350, %v4278
        %v4383 = vadd.f32 %v4351, %v4281
        %v4384 = vadd.f32 %v4352, %v4286
        %v4385 = vadd.f32 %v4353, %v4289
        %v4386 = vadd.f32 %v4354, %v4294
        %v4387 = vadd.f32 %v4355, %v4297
        %v4388 = vadd.f32 %v4356, %v4302
        %v4389 = vadd.f32 %v4357, %v4305
        %v4390 = vadd.f32 %v4358, %v4310
        %v4391 = vadd.f32 %v4359, %v4313
        %v4392 = vadd.f32 %v4360, %v4318
        %v4393 = vadd.f32 %v4361, %v4321
        %v4394 = vadd.f32 %v4362, %v4326
        %v4395 = vadd.f32 %v4363, %v4329
        %4396 = vst.msk [vmem:[#allocation3] sm:$0xff] %vm998, %v4364
        %4397 = vst.msk [vmem:[#allocation3 + $0x8] sm:$0xff] %vm998, %v4365
        %4398 = vst.msk [vmem:[#allocation3 + $0x10] sm:$0xff] %vm998, %v4366
        %4399 = vst.msk [vmem:[#allocation3 + $0x18] sm:$0xff] %vm998, %v4367
        %4400 = vst.msk [vmem:[#allocation3 + $0x20] sm:$0xff] %vm998, %v4368
        %4401 = vst.msk [vmem:[#allocation3 + $0x28] sm:$0xff] %vm998, %v4369
        %4402 = vst.msk [vmem:[#allocation3 + $0x30] sm:$0xff] %vm998, %v4370
        %4403 = vst.msk [vmem:[#allocation3 + $0x38] sm:$0xff] %vm998, %v4371
        %4404 = vst.msk [vmem:[#allocation3 + $0x40] sm:$0xff] %vm998, %v4372
        %4405 = vst.msk [vmem:[#allocation3 + $0x48] sm:$0xff] %vm998, %v4373
        %4406 = vst.msk [vmem:[#allocation3 + $0x50] sm:$0xff] %vm998, %v4374
        %4407 = vst.msk [vmem:[#allocation3 + $0x58] sm:$0xff] %vm998, %v4375
        %4408 = vst.msk [vmem:[#allocation3 + $0x60] sm:$0xff] %vm998, %v4376
        %4409 = vst.msk [vmem:[#allocation3 + $0x68] sm:$0xff] %vm998, %v4377
        %4410 = vst.msk [vmem:[#allocation3 + $0x70] sm:$0xff] %vm998, %v4378
        %4411 = vst.msk [vmem:[#allocation3 + $0x78] sm:$0xff] %vm998, %v4379
        %4412 = vst.msk [vmem:[#allocation3 + $0x80] sm:$0xff] %vm998, %v4380
        %4413 = vst.msk [vmem:[#allocation3 + $0x88] sm:$0xff] %vm998, %v4381
        %4414 = vst.msk [vmem:[#allocation3 + $0x90] sm:$0xff] %vm998, %v4382
        %4415 = vst.msk [vmem:[#allocation3 + $0x98] sm:$0xff] %vm998, %v4383
        %4416 = vst.msk [vmem:[#allocation3 + $0xa0] sm:$0xff] %vm998, %v4384
        %4417 = vst.msk [vmem:[#allocation3 + $0xa8] sm:$0xff] %vm998, %v4385
        %4418 = vst.msk [vmem:[#allocation3 + $0xb0] sm:$0xff] %vm998, %v4386
        %4419 = vst.msk [vmem:[#allocation3 + $0xb8] sm:$0xff] %vm998, %v4387
        %4420 = vst.msk [vmem:[#allocation3 + $0xc0] sm:$0xff] %vm998, %v4388
        %4421 = vst.msk [vmem:[#allocation3 + $0xc8] sm:$0xff] %vm998, %v4389
        %4422 = vst.msk [vmem:[#allocation3 + $0xd0] sm:$0xff] %vm998, %v4390
        %4423 = vst.msk [vmem:[#allocation3 + $0xd8] sm:$0xff] %vm998, %v4391
        %4424 = vst.msk [vmem:[#allocation3 + $0xe0] sm:$0xff] %vm998, %v4392
        %4425 = vst.msk [vmem:[#allocation3 + $0xe8] sm:$0xff] %vm998, %v4393
        %4426 = vst.msk [vmem:[#allocation3 + $0xf0] sm:$0xff] %vm998, %v4394
        %4427 = vst.msk [vmem:[#allocation3 + $0xf8] sm:$0xff] %vm998, %v4395
        %v4428 = vld [vmem:[%s3993] sm:$0xe]
        %v4429 = vld [vmem:[%s3993 + $0x4] sm:$0xf]
        %v4430 = vld [vmem:[%s3993 + $0x8] sm:$0x1]
        %v4431 = vld [vmem:[%s3993 + $0xc] sm:$0xe]
        %v4432 = vld [vmem:[%s3993 + $0x10] sm:$0xf]
        %v4433 = vld [vmem:[%s3993 + $0x14] sm:$0x1]
        %v4434 = vld [vmem:[%s3993 + $0x18] sm:$0xe]
        %v4435 = vld [vmem:[%s3993 + $0x1c] sm:$0xf]
        %v4436 = vld [vmem:[%s3993 + $0x20] sm:$0x1]
        %v4437 = vld [vmem:[%s3993 + $0x24] sm:$0xe]
        %v4438 = vld [vmem:[%s3993 + $0x28] sm:$0xf]
        %v4439 = vld [vmem:[%s3993 + $0x2c] sm:$0x1]
        %v4440 = vld [vmem:[%s3993 + $0x30] sm:$0xe]
        %v4441 = vld [vmem:[%s3993 + $0x34] sm:$0xf]
        %v4442 = vld [vmem:[%s3993 + $0x38] sm:$0x1]
        %v4443 = vld [vmem:[%s3993 + $0x3c] sm:$0xe]
        %v4444 = vld [vmem:[%s3993 + $0x40] sm:$0xf]
        %v4445 = vld [vmem:[%s3993 + $0x44] sm:$0x1]
        %v4446 = vld [vmem:[%s3993 + $0x48] sm:$0xe]
        %v4447 = vld [vmem:[%s3993 + $0x4c] sm:$0xf]
        %v4448 = vld [vmem:[%s3993 + $0x50] sm:$0x1]
        %v4449 = vld [vmem:[%s3993 + $0x54] sm:$0xe]
        %v4450 = vld [vmem:[%s3993 + $0x58] sm:$0xf]
        %v4451 = vld [vmem:[%s3993 + $0x5c] sm:$0x1]
        %v4452 = vld [vmem:[%s3993 + $0x60] sm:$0xe]
        %v4453 = vld [vmem:[%s3993 + $0x64] sm:$0xf]
        %v4454 = vld [vmem:[%s3993 + $0x68] sm:$0x1]
        %v4455 = vld [vmem:[%s3993 + $0x6c] sm:$0xe]
        %v4456 = vld [vmem:[%s3993 + $0x70] sm:$0xf]
        %v4457 = vld [vmem:[%s3993 + $0x74] sm:$0x1]
        %v4458 = vld [vmem:[%s3993 + $0x78] sm:$0xe]
        %v4459 = vld [vmem:[%s3993 + $0x7c] sm:$0xf]
        %v4460 = vld [vmem:[%s3993 + $0x80] sm:$0x1]
        %v4461 = vld [vmem:[%s3993 + $0x84] sm:$0xe]
        %v4462 = vld [vmem:[%s3993 + $0x88] sm:$0xf]
        %v4463 = vld [vmem:[%s3993 + $0x8c] sm:$0x1]
        %v4464 = vld [vmem:[%s3993 + $0x90] sm:$0xe]
        %v4465 = vld [vmem:[%s3993 + $0x94] sm:$0xf]
        %v4466 = vld [vmem:[%s3993 + $0x98] sm:$0x1]
        %v4467 = vld [vmem:[%s3993 + $0x9c] sm:$0xe]
        %v4468 = vld [vmem:[%s3993 + $0xa0] sm:$0xf]
        %v4469 = vld [vmem:[%s3993 + $0xa4] sm:$0x1]
        %v4470 = vld [vmem:[%s3993 + $0xa8] sm:$0xe]
        %v4471 = vld [vmem:[%s3993 + $0xac] sm:$0xf]
        %v4472 = vld [vmem:[%s3993 + $0xb0] sm:$0x1]
        %v4473 = vld [vmem:[%s3993 + $0xb4] sm:$0xe]
        %v4474 = vld [vmem:[%s3993 + $0xb8] sm:$0xf]
        %v4475 = vld [vmem:[%s3993 + $0xbc] sm:$0x1]
        %v4524 = vrot.slane %v4428, 5
        %v4525 = vrot.slane %v4524, 4
        %v4526 = vrot.slane %v4429, 5
        %v4527 = vsel %vm1338, %v4525, %v4526
        %v4528 = vrot.slane %v4526, 4
        %v4529 = vrot.slane %v4430, 5
        %v4530 = vsel %vm1338, %v4528, %v4529
        %v4531 = vrot.slane %v4431, 5
        %v4532 = vrot.slane %v4531, 4
        %v4533 = vrot.slane %v4432, 5
        %v4534 = vsel %vm1338, %v4532, %v4533
        %v4535 = vrot.slane %v4533, 4
        %v4536 = vrot.slane %v4433, 5
        %v4537 = vsel %vm1338, %v4535, %v4536
        %v4538 = vrot.slane %v4434, 5
        %v4539 = vrot.slane %v4538, 4
        %v4540 = vrot.slane %v4435, 5
        %v4541 = vsel %vm1338, %v4539, %v4540
        %v4542 = vrot.slane %v4540, 4
        %v4543 = vrot.slane %v4436, 5
        %v4544 = vsel %vm1338, %v4542, %v4543
        %v4545 = vrot.slane %v4437, 5
        %v4546 = vrot.slane %v4545, 4
        %v4547 = vrot.slane %v4438, 5
        %v4548 = vsel %vm1338, %v4546, %v4547
        %v4549 = vrot.slane %v4547, 4
        %v4550 = vrot.slane %v4439, 5
        %v4551 = vsel %vm1338, %v4549, %v4550
        %v4552 = vrot.slane %v4440, 5
        %v4553 = vrot.slane %v4552, 4
        %v4554 = vrot.slane %v4441, 5
        %v4555 = vsel %vm1338, %v4553, %v4554
        %v4556 = vrot.slane %v4554, 4
        %v4557 = vrot.slane %v4442, 5
        %v4558 = vsel %vm1338, %v4556, %v4557
        %v4559 = vrot.slane %v4443, 5
        %v4560 = vrot.slane %v4559, 4
        %v4561 = vrot.slane %v4444, 5
        %v4562 = vsel %vm1338, %v4560, %v4561
        %v4563 = vrot.slane %v4561, 4
        %v4564 = vrot.slane %v4445, 5
        %v4565 = vsel %vm1338, %v4563, %v4564
        %v4566 = vrot.slane %v4446, 5
        %v4567 = vrot.slane %v4566, 4
        %v4568 = vrot.slane %v4447, 5
        %v4569 = vsel %vm1338, %v4567, %v4568
        %v4570 = vrot.slane %v4568, 4
        %v4571 = vrot.slane %v4448, 5
        %v4572 = vsel %vm1338, %v4570, %v4571
        %v4573 = vrot.slane %v4449, 5
        %v4574 = vrot.slane %v4573, 4
        %v4575 = vrot.slane %v4450, 5
        %v4576 = vsel %vm1338, %v4574, %v4575
        %v4577 = vrot.slane %v4575, 4
        %v4578 = vrot.slane %v4451, 5
        %v4579 = vsel %vm1338, %v4577, %v4578
        %v4580 = vrot.slane %v4452, 5
        %v4581 = vrot.slane %v4580, 4
        %v4582 = vrot.slane %v4453, 5
        %v4583 = vsel %vm1338, %v4581, %v4582
        %v4584 = vrot.slane %v4582, 4
        %v4585 = vrot.slane %v4454, 5
        %v4586 = vsel %vm1338, %v4584, %v4585
        %v4587 = vrot.slane %v4455, 5
        %v4588 = vrot.slane %v4587, 4
        %v4589 = vrot.slane %v4456, 5
        %v4590 = vsel %vm1338, %v4588, %v4589
        %v4591 = vrot.slane %v4589, 4
        %v4592 = vrot.slane %v4457, 5
        %v4593 = vsel %vm1338, %v4591, %v4592
        %v4594 = vrot.slane %v4458, 5
        %v4595 = vrot.slane %v4594, 4
        %v4596 = vrot.slane %v4459, 5
        %v4597 = vsel %vm1338, %v4595, %v4596
        %v4598 = vrot.slane %v4596, 4
        %v4599 = vrot.slane %v4460, 5
        %v4600 = vsel %vm1338, %v4598, %v4599
        %v4601 = vrot.slane %v4461, 5
        %v4602 = vrot.slane %v4601, 4
        %v4603 = vrot.slane %v4462, 5
        %v4604 = vsel %vm1338, %v4602, %v4603
        %v4605 = vrot.slane %v4603, 4
        %v4606 = vrot.slane %v4463, 5
        %v4607 = vsel %vm1338, %v4605, %v4606
        %v4608 = vrot.slane %v4464, 5
        %v4609 = vrot.slane %v4608, 4
        %v4610 = vrot.slane %v4465, 5
        %v4611 = vsel %vm1338, %v4609, %v4610
        %v4612 = vrot.slane %v4610, 4
        %v4613 = vrot.slane %v4466, 5
        %v4614 = vsel %vm1338, %v4612, %v4613
        %v4615 = vrot.slane %v4467, 5
        %v4616 = vrot.slane %v4615, 4
        %v4617 = vrot.slane %v4468, 5
        %v4618 = vsel %vm1338, %v4616, %v4617
        %v4619 = vrot.slane %v4617, 4
        %v4620 = vrot.slane %v4469, 5
        %v4621 = vsel %vm1338, %v4619, %v4620
        %v4622 = vrot.slane %v4470, 5
        %v4623 = vrot.slane %v4622, 4
        %v4624 = vrot.slane %v4471, 5
        %v4625 = vsel %vm1338, %v4623, %v4624
        %v4626 = vrot.slane %v4624, 4
        %v4627 = vrot.slane %v4472, 5
        %v4628 = vsel %vm1338, %v4626, %v4627
        %v4629 = vrot.slane %v4473, 5
        %v4630 = vrot.slane %v4629, 4
        %v4631 = vrot.slane %v4474, 5
        %v4632 = vsel %vm1338, %v4630, %v4631
        %v4633 = vrot.slane %v4631, 4
        %v4634 = vrot.slane %v4475, 5
        %v4635 = vsel %vm1338, %v4633, %v4634
        %s4636 = scalar_lea.vmem [#allocation7], 112
        %v4637 = vld [vmem:[%s4636] sm:$0xf]
        %v4638 = vld [vmem:[%s4636 + $0x4] sm:$0xf]
        %v4639 = vld [vmem:[%s4636 + $0x8] sm:$0xf]
        %v4640 = vld [vmem:[%s4636 + $0xc] sm:$0xf]
        %v4641 = vunpack.c.l.b16 %v4527
        %v4642 = vunpack.c.l.b16 %v4530
        %v4643 = vunpack.c.l.b16 %v4534
        %v4644 = vunpack.c.l.b16 %v4537
        %v4645 = vunpack.c.l.b16 %v4541
        %v4646 = vunpack.c.l.b16 %v4544
        %v4647 = vunpack.c.l.b16 %v4548
        %v4648 = vunpack.c.l.b16 %v4551
        %v4649 = vunpack.c.l.b16 %v4555
        %v4650 = vunpack.c.l.b16 %v4558
        %v4651 = vunpack.c.l.b16 %v4562
        %v4652 = vunpack.c.l.b16 %v4565
        %v4653 = vunpack.c.l.b16 %v4569
        %v4654 = vunpack.c.l.b16 %v4572
        %v4655 = vunpack.c.l.b16 %v4576
        %v4656 = vunpack.c.l.b16 %v4579
        %v4657 = vunpack.c.l.b16 %v4583
        %v4658 = vunpack.c.l.b16 %v4586
        %v4659 = vunpack.c.l.b16 %v4590
        %v4660 = vunpack.c.l.b16 %v4593
        %v4661 = vunpack.c.l.b16 %v4597
        %v4662 = vunpack.c.l.b16 %v4600
        %v4663 = vunpack.c.l.b16 %v4604
        %v4664 = vunpack.c.l.b16 %v4607
        %v4665 = vunpack.c.l.b16 %v4611
        %v4666 = vunpack.c.l.b16 %v4614
        %v4667 = vunpack.c.l.b16 %v4618
        %v4668 = vunpack.c.l.b16 %v4621
        %v4669 = vunpack.c.l.b16 %v4625
        %v4670 = vunpack.c.l.b16 %v4628
        %v4671 = vunpack.c.l.b16 %v4632
        %v4672 = vunpack.c.l.b16 %v4635
        %v4673 = vpack.c.b16 %v4642, %v4641
        %v4674 = vpack.c.b16 %v4644, %v4643
        %v4675 = vpack.c.b16 %v4646, %v4645
        %v4676 = vpack.c.b16 %v4648, %v4647
        %v4677 = vpack.c.b16 %v4650, %v4649
        %v4678 = vpack.c.b16 %v4652, %v4651
        %v4679 = vpack.c.b16 %v4654, %v4653
        %v4680 = vpack.c.b16 %v4656, %v4655
        %v4681 = vpack.c.b16 %v4658, %v4657
        %v4682 = vpack.c.b16 %v4660, %v4659
        %v4683 = vpack.c.b16 %v4662, %v4661
        %v4684 = vpack.c.b16 %v4664, %v4663
        %v4685 = vpack.c.b16 %v4666, %v4665
        %v4686 = vpack.c.b16 %v4668, %v4667
        %v4687 = vpack.c.b16 %v4670, %v4669
        %v4688 = vpack.c.b16 %v4672, %v4671
        %v4693 = vunpack.c.l.b16 %v4637
        %v4694 = vunpack.c.l.b16 %v4638
        %v4695 = vunpack.c.l.b16 %v4639
        %v4696 = vunpack.c.l.b16 %v4640
        %v4697 = vpack.c.b16 %v4694, %v4693
        %v4698 = vpack.c.b16 %v4696, %v4695
        %v4702 = vsel %vm998, %v4673, 0
        %v4705 = vsel %vm998, %v4674, 0
        %v4708 = vsel %vm998, %v4675, 0
        %v4711 = vsel %vm998, %v4676, 0
        %v4714 = vsel %vm998, %v4677, 0
        %v4717 = vsel %vm998, %v4678, 0
        %v4720 = vsel %vm998, %v4679, 0
        %v4723 = vsel %vm998, %v4680, 0
        %v4726 = vsel %vm998, %v4681, 0
        %v4729 = vsel %vm998, %v4682, 0
        %v4732 = vsel %vm998, %v4683, 0
        %v4735 = vsel %vm998, %v4684, 0
        %v4738 = vsel %vm998, %v4685, 0
        %v4741 = vsel %vm998, %v4686, 0
        %v4744 = vsel %vm998, %v4687, 0
        %v4747 = vsel %vm998, %v4688, 0
        %4749 = vmatprep.subr.bf16.mxu0 0
        %4750 = vmatpush1.bf16.msra.mxu0 %v4697
        %4751 = vmatprep.subr.bf16.mxu0 0
        %4752 = vmatpush1.bf16.msra.mxu0 %v4698
        %4753 = vmatprep.subr.bf16.mxu0 0
        %4754 = vmatpush1.bf16.msra.mxu0 0
        %4755 = vmatprep.subr.bf16.mxu0 0
        %4756 = vmatpush1.bf16.msra.mxu0 0
        %4757 = vmatprep.subr.bf16.mxu0 0
        %4758 = vmatpush1.bf16.msra.mxu0 0
        %4759 = vmatprep.subr.bf16.mxu0 0
        %4760 = vmatpush1.bf16.msra.mxu0 0
        %4761 = vmatprep.subr.bf16.mxu0 0
        %4762 = vmatpush1.bf16.msra.mxu0 0
        %4763 = vmatprep.subr.bf16.mxu0 0
        %4764 = vmatpush1.bf16.msra.mxu0 0
        %4765 = vmatprep.subr.bf16.mxu0 0
        %4766 = vmatpush1.bf16.msra.mxu0 0
        %4767 = vmatprep.subr.bf16.mxu0 0
        %4768 = vmatpush1.bf16.msra.mxu0 0
        %4769 = vmatprep.subr.bf16.mxu0 0
        %4770 = vmatpush1.bf16.msra.mxu0 0
        %4771 = vmatprep.subr.bf16.mxu0 0
        %4772 = vmatpush1.bf16.msra.mxu0 0
        %4773 = vmatprep.subr.bf16.mxu0 0
        %4774 = vmatpush1.bf16.msra.mxu0 0
        %4775 = vmatprep.subr.bf16.mxu0 0
        %4776 = vmatpush1.bf16.msra.mxu0 0
        %4777 = vmatprep.subr.bf16.mxu0 0
        %4778 = vmatpush1.bf16.msra.mxu0 0
        %4779 = vmatprep.subr.bf16.mxu0 0
        %4780 = vmatpush1.bf16.msra.mxu0 0
        %4781 = vmatprep.mubr.bf16.mxu0 0
        %4782 = vmatmul.mubr.bf16.gmra.mrb[0].mxu0 %v4702
        %v4783 = vpop.f32.mrb[0].mxu0
        %v4784 = vadd.f32 0.0, %v4783
        %v4785 = vpop.f32.mrb[0].mxu0
        %v4786 = vpop.f32.mrb[0].mxu0
        %v4787 = vadd.f32 0.0, %v4786
        %v4788 = vpop.f32.mrb[0].mxu0
        %4789 = vmatprep.mubr.bf16.mxu0 0
        %4790 = vmatmul.mubr.bf16.gmra.mrb[0].mxu0 %v4705
        %v4791 = vpop.f32.mrb[0].mxu0
        %v4792 = vadd.f32 0.0, %v4791
        %v4793 = vpop.f32.mrb[0].mxu0
        %v4794 = vpop.f32.mrb[0].mxu0
        %v4795 = vadd.f32 0.0, %v4794
        %v4796 = vpop.f32.mrb[0].mxu0
        %4797 = vmatprep.mubr.bf16.mxu0 0
        %4798 = vmatmul.mubr.bf16.gmra.mrb[0].mxu0 %v4708
        %v4799 = vpop.f32.mrb[0].mxu0
        %v4800 = vadd.f32 0.0, %v4799
        %v4801 = vpop.f32.mrb[0].mxu0
        %v4802 = vpop.f32.mrb[0].mxu0
        %v4803 = vadd.f32 0.0, %v4802
        %v4804 = vpop.f32.mrb[0].mxu0
        %4805 = vmatprep.mubr.bf16.mxu0 0
        %4806 = vmatmul.mubr.bf16.gmra.mrb[0].mxu0 %v4711
        %v4807 = vpop.f32.mrb[0].mxu0
        %v4808 = vadd.f32 0.0, %v4807
        %v4809 = vpop.f32.mrb[0].mxu0
        %v4810 = vpop.f32.mrb[0].mxu0
        %v4811 = vadd.f32 0.0, %v4810
        %v4812 = vpop.f32.mrb[0].mxu0
        %4813 = vmatprep.mubr.bf16.mxu0 0
        %4814 = vmatmul.mubr.bf16.gmra.mrb[0].mxu0 %v4714
        %v4815 = vpop.f32.mrb[0].mxu0
        %v4816 = vadd.f32 0.0, %v4815
        %v4817 = vpop.f32.mrb[0].mxu0
        %v4818 = vpop.f32.mrb[0].mxu0
        %v4819 = vadd.f32 0.0, %v4818
        %v4820 = vpop.f32.mrb[0].mxu0
        %4821 = vmatprep.mubr.bf16.mxu0 0
        %4822 = vmatmul.mubr.bf16.gmra.mrb[0].mxu0 %v4717
        %v4823 = vpop.f32.mrb[0].mxu0
        %v4824 = vadd.f32 0.0, %v4823
        %v4825 = vpop.f32.mrb[0].mxu0
        %v4826 = vpop.f32.mrb[0].mxu0
        %v4827 = vadd.f32 0.0, %v4826
        %v4828 = vpop.f32.mrb[0].mxu0
        %4829 = vmatprep.mubr.bf16.mxu0 0
        %4830 = vmatmul.mubr.bf16.gmra.mrb[0].mxu0 %v4720
        %v4831 = vpop.f32.mrb[0].mxu0
        %v4832 = vadd.f32 0.0, %v4831
        %v4833 = vpop.f32.mrb[0].mxu0
        %v4834 = vpop.f32.mrb[0].mxu0
        %v4835 = vadd.f32 0.0, %v4834
        %v4836 = vpop.f32.mrb[0].mxu0
        %4837 = vmatprep.mubr.bf16.mxu0 0
        %4838 = vmatmul.mubr.bf16.gmra.mrb[0].mxu0 %v4723
        %v4839 = vpop.f32.mrb[0].mxu0
        %v4840 = vadd.f32 0.0, %v4839
        %v4841 = vpop.f32.mrb[0].mxu0
        %v4842 = vpop.f32.mrb[0].mxu0
        %v4843 = vadd.f32 0.0, %v4842
        %v4844 = vpop.f32.mrb[0].mxu0
        %4845 = vmatprep.mubr.bf16.mxu0 0
        %4846 = vmatmul.mubr.bf16.gmra.mrb[0].mxu0 %v4726
        %v4847 = vpop.f32.mrb[0].mxu0
        %v4848 = vadd.f32 0.0, %v4847
        %v4849 = vpop.f32.mrb[0].mxu0
        %v4850 = vpop.f32.mrb[0].mxu0
        %v4851 = vadd.f32 0.0, %v4850
        %v4852 = vpop.f32.mrb[0].mxu0
        %4853 = vmatprep.mubr.bf16.mxu0 0
        %4854 = vmatmul.mubr.bf16.gmra.mrb[0].mxu0 %v4729
        %v4855 = vpop.f32.mrb[0].mxu0
        %v4856 = vadd.f32 0.0, %v4855
        %v4857 = vpop.f32.mrb[0].mxu0
        %v4858 = vpop.f32.mrb[0].mxu0
        %v4859 = vadd.f32 0.0, %v4858
        %v4860 = vpop.f32.mrb[0].mxu0
        %4861 = vmatprep.mubr.bf16.mxu0 0
        %4862 = vmatmul.mubr.bf16.gmra.mrb[0].mxu0 %v4732
        %v4863 = vpop.f32.mrb[0].mxu0
        %v4864 = vadd.f32 0.0, %v4863
        %v4865 = vpop.f32.mrb[0].mxu0
        %v4866 = vpop.f32.mrb[0].mxu0
        %v4867 = vadd.f32 0.0, %v4866
        %v4868 = vpop.f32.mrb[0].mxu0
        %4869 = vmatprep.mubr.bf16.mxu0 0
        %4870 = vmatmul.mubr.bf16.gmra.mrb[0].mxu0 %v4735
        %v4871 = vpop.f32.mrb[0].mxu0
        %v4872 = vadd.f32 0.0, %v4871
        %v4873 = vpop.f32.mrb[0].mxu0
        %v4874 = vpop.f32.mrb[0].mxu0
        %v4875 = vadd.f32 0.0, %v4874
        %v4876 = vpop.f32.mrb[0].mxu0
        %4877 = vmatprep.mubr.bf16.mxu0 0
        %4878 = vmatmul.mubr.bf16.gmra.mrb[0].mxu0 %v4738
        %v4879 = vpop.f32.mrb[0].mxu0
        %v4880 = vadd.f32 0.0, %v4879
        %v4881 = vpop.f32.mrb[0].mxu0
        %v4882 = vpop.f32.mrb[0].mxu0
        %v4883 = vadd.f32 0.0, %v4882
        %v4884 = vpop.f32.mrb[0].mxu0
        %4885 = vmatprep.mubr.bf16.mxu0 0
        %4886 = vmatmul.mubr.bf16.gmra.mrb[0].mxu0 %v4741
        %v4887 = vpop.f32.mrb[0].mxu0
        %v4888 = vadd.f32 0.0, %v4887
        %v4889 = vpop.f32.mrb[0].mxu0
        %v4890 = vpop.f32.mrb[0].mxu0
        %v4891 = vadd.f32 0.0, %v4890
        %v4892 = vpop.f32.mrb[0].mxu0
        %4893 = vmatprep.mubr.bf16.mxu0 0
        %4894 = vmatmul.mubr.bf16.gmra.mrb[0].mxu0 %v4744
        %v4895 = vpop.f32.mrb[0].mxu0
        %v4896 = vadd.f32 0.0, %v4895
        %v4897 = vpop.f32.mrb[0].mxu0
        %v4898 = vpop.f32.mrb[0].mxu0
        %v4899 = vadd.f32 0.0, %v4898
        %v4900 = vpop.f32.mrb[0].mxu0
        %4901 = vmatprep.mubr.bf16.mxu0 0
        %4902 = vmatmul.mubr.bf16.gmra.mrb[0].mxu0 %v4747
        %v4903 = vpop.f32.mrb[0].mxu0
        %v4904 = vadd.f32 0.0, %v4903
        %v4905 = vpop.f32.mrb[0].mxu0
        %v4906 = vpop.f32.mrb[0].mxu0
        %v4907 = vadd.f32 0.0, %v4906
        %v4908 = vpop.f32.mrb[0].mxu0
        %4909 = vdwg.mxu0
        %v4910 = vld [vmem:[#allocation3] sm:$0xff]
        %v4911 = vld [vmem:[#allocation3 + $0x8] sm:$0xff]
        %v4912 = vld [vmem:[#allocation3 + $0x10] sm:$0xff]
        %v4913 = vld [vmem:[#allocation3 + $0x18] sm:$0xff]
        %v4914 = vld [vmem:[#allocation3 + $0x20] sm:$0xff]
        %v4915 = vld [vmem:[#allocation3 + $0x28] sm:$0xff]
        %v4916 = vld [vmem:[#allocation3 + $0x30] sm:$0xff]
        %v4917 = vld [vmem:[#allocation3 + $0x38] sm:$0xff]
        %v4918 = vld [vmem:[#allocation3 + $0x40] sm:$0xff]
        %v4919 = vld [vmem:[#allocation3 + $0x48] sm:$0xff]
        %v4920 = vld [vmem:[#allocation3 + $0x50] sm:$0xff]
        %v4921 = vld [vmem:[#allocation3 + $0x58] sm:$0xff]
        %v4922 = vld [vmem:[#allocation3 + $0x60] sm:$0xff]
        %v4923 = vld [vmem:[#allocation3 + $0x68] sm:$0xff]
        %v4924 = vld [vmem:[#allocation3 + $0x70] sm:$0xff]
        %v4925 = vld [vmem:[#allocation3 + $0x78] sm:$0xff]
        %v4926 = vld [vmem:[#allocation3 + $0x80] sm:$0xff]
        %v4927 = vld [vmem:[#allocation3 + $0x88] sm:$0xff]
        %v4928 = vld [vmem:[#allocation3 + $0x90] sm:$0xff]
        %v4929 = vld [vmem:[#allocation3 + $0x98] sm:$0xff]
        %v4930 = vld [vmem:[#allocation3 + $0xa0] sm:$0xff]
        %v4931 = vld [vmem:[#allocation3 + $0xa8] sm:$0xff]
        %v4932 = vld [vmem:[#allocation3 + $0xb0] sm:$0xff]
        %v4933 = vld [vmem:[#allocation3 + $0xb8] sm:$0xff]
        %v4934 = vld [vmem:[#allocation3 + $0xc0] sm:$0xff]
        %v4935 = vld [vmem:[#allocation3 + $0xc8] sm:$0xff]
        %v4936 = vld [vmem:[#allocation3 + $0xd0] sm:$0xff]
        %v4937 = vld [vmem:[#allocation3 + $0xd8] sm:$0xff]
        %v4938 = vld [vmem:[#allocation3 + $0xe0] sm:$0xff]
        %v4939 = vld [vmem:[#allocation3 + $0xe8] sm:$0xff]
        %v4940 = vld [vmem:[#allocation3 + $0xf0] sm:$0xff]
        %v4941 = vld [vmem:[#allocation3 + $0xf8] sm:$0xff]
        %v4942 = vadd.f32 %v4910, %v4784
        %v4943 = vadd.f32 %v4911, %v4787
        %v4944 = vadd.f32 %v4912, %v4792
        %v4945 = vadd.f32 %v4913, %v4795
        %v4946 = vadd.f32 %v4914, %v4800
        %v4947 = vadd.f32 %v4915, %v4803
        %v4948 = vadd.f32 %v4916, %v4808
        %v4949 = vadd.f32 %v4917, %v4811
        %v4950 = vadd.f32 %v4918, %v4816
        %v4951 = vadd.f32 %v4919, %v4819
        %v4952 = vadd.f32 %v4920, %v4824
        %v4953 = vadd.f32 %v4921, %v4827
        %v4954 = vadd.f32 %v4922, %v4832
        %v4955 = vadd.f32 %v4923, %v4835
        %v4956 = vadd.f32 %v4924, %v4840
        %v4957 = vadd.f32 %v4925, %v4843
        %v4958 = vadd.f32 %v4926, %v4848
        %v4959 = vadd.f32 %v4927, %v4851
        %v4960 = vadd.f32 %v4928, %v4856
        %v4961 = vadd.f32 %v4929, %v4859
        %v4962 = vadd.f32 %v4930, %v4864
        %v4963 = vadd.f32 %v4931, %v4867
        %v4964 = vadd.f32 %v4932, %v4872
        %v4965 = vadd.f32 %v4933, %v4875
        %v4966 = vadd.f32 %v4934, %v4880
        %v4967 = vadd.f32 %v4935, %v4883
        %v4968 = vadd.f32 %v4936, %v4888
        %v4969 = vadd.f32 %v4937, %v4891
        %v4970 = vadd.f32 %v4938, %v4896
        %v4971 = vadd.f32 %v4939, %v4899
        %v4972 = vadd.f32 %v4940, %v4904
        %v4973 = vadd.f32 %v4941, %v4907
        %4974 = vst.msk [vmem:[#allocation3] sm:$0xff] %vm998, %v4942
        %4975 = vst.msk [vmem:[#allocation3 + $0x8] sm:$0xff] %vm998, %v4943
        %4976 = vst.msk [vmem:[#allocation3 + $0x10] sm:$0xff] %vm998, %v4944
        %4977 = vst.msk [vmem:[#allocation3 + $0x18] sm:$0xff] %vm998, %v4945
        %4978 = vst.msk [vmem:[#allocation3 + $0x20] sm:$0xff] %vm998, %v4946
        %4979 = vst.msk [vmem:[#allocation3 + $0x28] sm:$0xff] %vm998, %v4947
        %4980 = vst.msk [vmem:[#allocation3 + $0x30] sm:$0xff] %vm998, %v4948
        %4981 = vst.msk [vmem:[#allocation3 + $0x38] sm:$0xff] %vm998, %v4949
        %4982 = vst.msk [vmem:[#allocation3 + $0x40] sm:$0xff] %vm998, %v4950
        %4983 = vst.msk [vmem:[#allocation3 + $0x48] sm:$0xff] %vm998, %v4951
        %4984 = vst.msk [vmem:[#allocation3 + $0x50] sm:$0xff] %vm998, %v4952
        %4985 = vst.msk [vmem:[#allocation3 + $0x58] sm:$0xff] %vm998, %v4953
        %4986 = vst.msk [vmem:[#allocation3 + $0x60] sm:$0xff] %vm998, %v4954
        %4987 = vst.msk [vmem:[#allocation3 + $0x68] sm:$0xff] %vm998, %v4955
        %4988 = vst.msk [vmem:[#allocation3 + $0x70] sm:$0xff] %vm998, %v4956
        %4989 = vst.msk [vmem:[#allocation3 + $0x78] sm:$0xff] %vm998, %v4957
        %4990 = vst.msk [vmem:[#allocation3 + $0x80] sm:$0xff] %vm998, %v4958
        %4991 = vst.msk [vmem:[#allocation3 + $0x88] sm:$0xff] %vm998, %v4959
        %4992 = vst.msk [vmem:[#allocation3 + $0x90] sm:$0xff] %vm998, %v4960
        %4993 = vst.msk [vmem:[#allocation3 + $0x98] sm:$0xff] %vm998, %v4961
        %4994 = vst.msk [vmem:[#allocation3 + $0xa0] sm:$0xff] %vm998, %v4962
        %4995 = vst.msk [vmem:[#allocation3 + $0xa8] sm:$0xff] %vm998, %v4963
        %4996 = vst.msk [vmem:[#allocation3 + $0xb0] sm:$0xff] %vm998, %v4964
        %4997 = vst.msk [vmem:[#allocation3 + $0xb8] sm:$0xff] %vm998, %v4965
        %4998 = vst.msk [vmem:[#allocation3 + $0xc0] sm:$0xff] %vm998, %v4966
        %4999 = vst.msk [vmem:[#allocation3 + $0xc8] sm:$0xff] %vm998, %v4967
        %5000 = vst.msk [vmem:[#allocation3 + $0xd0] sm:$0xff] %vm998, %v4968
        %5001 = vst.msk [vmem:[#allocation3 + $0xd8] sm:$0xff] %vm998, %v4969
        %5002 = vst.msk [vmem:[#allocation3 + $0xe0] sm:$0xff] %vm998, %v4970
        %5003 = vst.msk [vmem:[#allocation3 + $0xe8] sm:$0xff] %vm998, %v4971
        %5004 = vst.msk [vmem:[#allocation3 + $0xf0] sm:$0xff] %vm998, %v4972
        %5005 = vst.msk [vmem:[#allocation3 + $0xf8] sm:$0xff] %vm998, %v4973
        %v5006 = vld [vmem:[%s3993] sm:$0xc]
        %v5007 = vld [vmem:[%s3993 + $0x4] sm:$0xf]
        %v5008 = vld [vmem:[%s3993 + $0x8] sm:$0x3]
        %v5009 = vld [vmem:[%s3993 + $0xc] sm:$0xc]
        %v5010 = vld [vmem:[%s3993 + $0x10] sm:$0xf]
        %v5011 = vld [vmem:[%s3993 + $0x14] sm:$0x3]
        %v5012 = vld [vmem:[%s3993 + $0x18] sm:$0xc]
        %v5013 = vld [vmem:[%s3993 + $0x1c] sm:$0xf]
        %v5014 = vld [vmem:[%s3993 + $0x20] sm:$0x3]
        %v5015 = vld [vmem:[%s3993 + $0x24] sm:$0xc]
        %v5016 = vld [vmem:[%s3993 + $0x28] sm:$0xf]
        %v5017 = vld [vmem:[%s3993 + $0x2c] sm:$0x3]
        %v5018 = vld [vmem:[%s3993 + $0x30] sm:$0xc]
        %v5019 = vld [vmem:[%s3993 + $0x34] sm:$0xf]
        %v5020 = vld [vmem:[%s3993 + $0x38] sm:$0x3]
        %v5021 = vld [vmem:[%s3993 + $0x3c] sm:$0xc]
        %v5022 = vld [vmem:[%s3993 + $0x40] sm:$0xf]
        %v5023 = vld [vmem:[%s3993 + $0x44] sm:$0x3]
        %v5024 = vld [vmem:[%s3993 + $0x48] sm:$0xc]
        %v5025 = vld [vmem:[%s3993 + $0x4c] sm:$0xf]
        %v5026 = vld [vmem:[%s3993 + $0x50] sm:$0x3]
        %v5027 = vld [vmem:[%s3993 + $0x54] sm:$0xc]
        %v5028 = vld [vmem:[%s3993 + $0x58] sm:$0xf]
        %v5029 = vld [vmem:[%s3993 + $0x5c] sm:$0x3]
        %v5030 = vld [vmem:[%s3993 + $0x60] sm:$0xc]
        %v5031 = vld [vmem:[%s3993 + $0x64] sm:$0xf]
        %v5032 = vld [vmem:[%s3993 + $0x68] sm:$0x3]
        %v5033 = vld [vmem:[%s3993 + $0x6c] sm:$0xc]
        %v5034 = vld [vmem:[%s3993 + $0x70] sm:$0xf]
        %v5035 = vld [vmem:[%s3993 + $0x74] sm:$0x3]
        %v5036 = vld [vmem:[%s3993 + $0x78] sm:$0xc]
        %v5037 = vld [vmem:[%s3993 + $0x7c] sm:$0xf]
        %v5038 = vld [vmem:[%s3993 + $0x80] sm:$0x3]
        %v5039 = vld [vmem:[%s3993 + $0x84] sm:$0xc]
        %v5040 = vld [vmem:[%s3993 + $0x88] sm:$0xf]
        %v5041 = vld [vmem:[%s3993 + $0x8c] sm:$0x3]
        %v5042 = vld [vmem:[%s3993 + $0x90] sm:$0xc]
        %v5043 = vld [vmem:[%s3993 + $0x94] sm:$0xf]
        %v5044 = vld [vmem:[%s3993 + $0x98] sm:$0x3]
        %v5045 = vld [vmem:[%s3993 + $0x9c] sm:$0xc]
        %v5046 = vld [vmem:[%s3993 + $0xa0] sm:$0xf]
        %v5047 = vld [vmem:[%s3993 + $0xa4] sm:$0x3]
        %v5048 = vld [vmem:[%s3993 + $0xa8] sm:$0xc]
        %v5049 = vld [vmem:[%s3993 + $0xac] sm:$0xf]
        %v5050 = vld [vmem:[%s3993 + $0xb0] sm:$0x3]
        %v5051 = vld [vmem:[%s3993 + $0xb4] sm:$0xc]
        %v5052 = vld [vmem:[%s3993 + $0xb8] sm:$0xf]
        %v5053 = vld [vmem:[%s3993 + $0xbc] sm:$0x3]
        %v5102 = vrot.slane %v5006, 6
        %v5103 = vrot.slane %v5102, 4
        %v5104 = vrot.slane %v5007, 6
        %v5105 = vsel %vm1919, %v5103, %v5104
        %v5106 = vrot.slane %v5104, 4
        %v5107 = vrot.slane %v5008, 6
        %v5108 = vsel %vm1919, %v5106, %v5107
        %v5109 = vrot.slane %v5009, 6
        %v5110 = vrot.slane %v5109, 4
        %v5111 = vrot.slane %v5010, 6
        %v5112 = vsel %vm1919, %v5110, %v5111
        %v5113 = vrot.slane %v5111, 4
        %v5114 = vrot.slane %v5011, 6
        %v5115 = vsel %vm1919, %v5113, %v5114
        %v5116 = vrot.slane %v5012, 6
        %v5117 = vrot.slane %v5116, 4
        %v5118 = vrot.slane %v5013, 6
        %v5119 = vsel %vm1919, %v5117, %v5118
        %v5120 = vrot.slane %v5118, 4
        %v5121 = vrot.slane %v5014, 6
        %v5122 = vsel %vm1919, %v5120, %v5121
        %v5123 = vrot.slane %v5015, 6
        %v5124 = vrot.slane %v5123, 4
        %v5125 = vrot.slane %v5016, 6
        %v5126 = vsel %vm1919, %v5124, %v5125
        %v5127 = vrot.slane %v5125, 4
        %v5128 = vrot.slane %v5017, 6
        %v5129 = vsel %vm1919, %v5127, %v5128
        %v5130 = vrot.slane %v5018, 6
        %v5131 = vrot.slane %v5130, 4
        %v5132 = vrot.slane %v5019, 6
        %v5133 = vsel %vm1919, %v5131, %v5132
        %v5134 = vrot.slane %v5132, 4
        %v5135 = vrot.slane %v5020, 6
        %v5136 = vsel %vm1919, %v5134, %v5135
        %v5137 = vrot.slane %v5021, 6
        %v5138 = vrot.slane %v5137, 4
        %v5139 = vrot.slane %v5022, 6
        %v5140 = vsel %vm1919, %v5138, %v5139
        %v5141 = vrot.slane %v5139, 4
        %v5142 = vrot.slane %v5023, 6
        %v5143 = vsel %vm1919, %v5141, %v5142
        %v5144 = vrot.slane %v5024, 6
        %v5145 = vrot.slane %v5144, 4
        %v5146 = vrot.slane %v5025, 6
        %v5147 = vsel %vm1919, %v5145, %v5146
        %v5148 = vrot.slane %v5146, 4
        %v5149 = vrot.slane %v5026, 6
        %v5150 = vsel %vm1919, %v5148, %v5149
        %v5151 = vrot.slane %v5027, 6
        %v5152 = vrot.slane %v5151, 4
        %v5153 = vrot.slane %v5028, 6
        %v5154 = vsel %vm1919, %v5152, %v5153
        %v5155 = vrot.slane %v5153, 4
        %v5156 = vrot.slane %v5029, 6
        %v5157 = vsel %vm1919, %v5155, %v5156
        %v5158 = vrot.slane %v5030, 6
        %v5159 = vrot.slane %v5158, 4
        %v5160 = vrot.slane %v5031, 6
        %v5161 = vsel %vm1919, %v5159, %v5160
        %v5162 = vrot.slane %v5160, 4
        %v5163 = vrot.slane %v5032, 6
        %v5164 = vsel %vm1919, %v5162, %v5163
        %v5165 = vrot.slane %v5033, 6
        %v5166 = vrot.slane %v5165, 4
        %v5167 = vrot.slane %v5034, 6
        %v5168 = vsel %vm1919, %v5166, %v5167
        %v5169 = vrot.slane %v5167, 4
        %v5170 = vrot.slane %v5035, 6
        %v5171 = vsel %vm1919, %v5169, %v5170
        %v5172 = vrot.slane %v5036, 6
        %v5173 = vrot.slane %v5172, 4
        %v5174 = vrot.slane %v5037, 6
        %v5175 = vsel %vm1919, %v5173, %v5174
        %v5176 = vrot.slane %v5174, 4
        %v5177 = vrot.slane %v5038, 6
        %v5178 = vsel %vm1919, %v5176, %v5177
        %v5179 = vrot.slane %v5039, 6
        %v5180 = vrot.slane %v5179, 4
        %v5181 = vrot.slane %v5040, 6
        %v5182 = vsel %vm1919, %v5180, %v5181
        %v5183 = vrot.slane %v5181, 4
        %v5184 = vrot.slane %v5041, 6
        %v5185 = vsel %vm1919, %v5183, %v5184
        %v5186 = vrot.slane %v5042, 6
        %v5187 = vrot.slane %v5186, 4
        %v5188 = vrot.slane %v5043, 6
        %v5189 = vsel %vm1919, %v5187, %v5188
        %v5190 = vrot.slane %v5188, 4
        %v5191 = vrot.slane %v5044, 6
        %v5192 = vsel %vm1919, %v5190, %v5191
        %v5193 = vrot.slane %v5045, 6
        %v5194 = vrot.slane %v5193, 4
        %v5195 = vrot.slane %v5046, 6
        %v5196 = vsel %vm1919, %v5194, %v5195
        %v5197 = vrot.slane %v5195, 4
        %v5198 = vrot.slane %v5047, 6
        %v5199 = vsel %vm1919, %v5197, %v5198
        %v5200 = vrot.slane %v5048, 6
        %v5201 = vrot.slane %v5200, 4
        %v5202 = vrot.slane %v5049, 6
        %v5203 = vsel %vm1919, %v5201, %v5202
        %v5204 = vrot.slane %v5202, 4
        %v5205 = vrot.slane %v5050, 6
        %v5206 = vsel %vm1919, %v5204, %v5205
        %v5207 = vrot.slane %v5051, 6
        %v5208 = vrot.slane %v5207, 4
        %v5209 = vrot.slane %v5052, 6
        %v5210 = vsel %vm1919, %v5208, %v5209
        %v5211 = vrot.slane %v5209, 4
        %v5212 = vrot.slane %v5053, 6
        %v5213 = vsel %vm1919, %v5211, %v5212
        %s5214 = scalar_lea.vmem [#allocation7], 128
        %v5215 = vld [vmem:[%s5214] sm:$0xf]
        %v5216 = vld [vmem:[%s5214 + $0x4] sm:$0xf]
        %v5217 = vld [vmem:[%s5214 + $0x8] sm:$0xf]
        %v5218 = vld [vmem:[%s5214 + $0xc] sm:$0xf]
        %v5219 = vunpack.c.l.b16 %v5105
        %v5220 = vunpack.c.l.b16 %v5108
        %v5221 = vunpack.c.l.b16 %v5112
        %v5222 = vunpack.c.l.b16 %v5115
        %v5223 = vunpack.c.l.b16 %v5119
        %v5224 = vunpack.c.l.b16 %v5122
        %v5225 = vunpack.c.l.b16 %v5126
        %v5226 = vunpack.c.l.b16 %v5129
        %v5227 = vunpack.c.l.b16 %v5133
        %v5228 = vunpack.c.l.b16 %v5136
        %v5229 = vunpack.c.l.b16 %v5140
        %v5230 = vunpack.c.l.b16 %v5143
        %v5231 = vunpack.c.l.b16 %v5147
        %v5232 = vunpack.c.l.b16 %v5150
        %v5233 = vunpack.c.l.b16 %v5154
        %v5234 = vunpack.c.l.b16 %v5157
        %v5235 = vunpack.c.l.b16 %v5161
        %v5236 = vunpack.c.l.b16 %v5164
        %v5237 = vunpack.c.l.b16 %v5168
        %v5238 = vunpack.c.l.b16 %v5171
        %v5239 = vunpack.c.l.b16 %v5175
        %v5240 = vunpack.c.l.b16 %v5178
        %v5241 = vunpack.c.l.b16 %v5182
        %v5242 = vunpack.c.l.b16 %v5185
        %v5243 = vunpack.c.l.b16 %v5189
        %v5244 = vunpack.c.l.b16 %v5192
        %v5245 = vunpack.c.l.b16 %v5196
        %v5246 = vunpack.c.l.b16 %v5199
        %v5247 = vunpack.c.l.b16 %v5203
        %v5248 = vunpack.c.l.b16 %v5206
        %v5249 = vunpack.c.l.b16 %v5210
        %v5250 = vunpack.c.l.b16 %v5213
        %v5251 = vpack.c.b16 %v5220, %v5219
        %v5252 = vpack.c.b16 %v5222, %v5221
        %v5253 = vpack.c.b16 %v5224, %v5223
        %v5254 = vpack.c.b16 %v5226, %v5225
        %v5255 = vpack.c.b16 %v5228, %v5227
        %v5256 = vpack.c.b16 %v5230, %v5229
        %v5257 = vpack.c.b16 %v5232, %v5231
        %v5258 = vpack.c.b16 %v5234, %v5233
        %v5259 = vpack.c.b16 %v5236, %v5235
        %v5260 = vpack.c.b16 %v5238, %v5237
        %v5261 = vpack.c.b16 %v5240, %v5239
        %v5262 = vpack.c.b16 %v5242, %v5241
        %v5263 = vpack.c.b16 %v5244, %v5243
        %v5264 = vpack.c.b16 %v5246, %v5245
        %v5265 = vpack.c.b16 %v5248, %v5247
        %v5266 = vpack.c.b16 %v5250, %v5249
        %v5271 = vunpack.c.l.b16 %v5215
        %v5272 = vunpack.c.l.b16 %v5216
        %v5273 = vunpack.c.l.b16 %v5217
        %v5274 = vunpack.c.l.b16 %v5218
        %v5275 = vpack.c.b16 %v5272, %v5271
        %v5276 = vpack.c.b16 %v5274, %v5273
        %v5280 = vsel %vm998, %v5251, 0
        %v5283 = vsel %vm998, %v5252, 0
        %v5286 = vsel %vm998, %v5253, 0
        %v5289 = vsel %vm998, %v5254, 0
        %v5292 = vsel %vm998, %v5255, 0
        %v5295 = vsel %vm998, %v5256, 0
        %v5298 = vsel %vm998, %v5257, 0
        %v5301 = vsel %vm998, %v5258, 0
        %v5304 = vsel %vm998, %v5259, 0
        %v5307 = vsel %vm998, %v5260, 0
        %v5310 = vsel %vm998, %v5261, 0
        %v5313 = vsel %vm998, %v5262, 0
        %v5316 = vsel %vm998, %v5263, 0
        %v5319 = vsel %vm998, %v5264, 0
        %v5322 = vsel %vm998, %v5265, 0
        %v5325 = vsel %vm998, %v5266, 0
        %5327 = vmatprep.subr.bf16.mxu0 0
        %5328 = vmatpush1.bf16.msra.mxu0 %v5275
        %5329 = vmatprep.subr.bf16.mxu0 0
        %5330 = vmatpush1.bf16.msra.mxu0 %v5276
        %5331 = vmatprep.subr.bf16.mxu0 0
        %5332 = vmatpush1.bf16.msra.mxu0 0
        %5333 = vmatprep.subr.bf16.mxu0 0
        %5334 = vmatpush1.bf16.msra.mxu0 0
        %5335 = vmatprep.subr.bf16.mxu0 0
        %5336 = vmatpush1.bf16.msra.mxu0 0
        %5337 = vmatprep.subr.bf16.mxu0 0
        %5338 = vmatpush1.bf16.msra.mxu0 0
        %5339 = vmatprep.subr.bf16.mxu0 0
        %5340 = vmatpush1.bf16.msra.mxu0 0
        %5341 = vmatprep.subr.bf16.mxu0 0
        %5342 = vmatpush1.bf16.msra.mxu0 0
        %5343 = vmatprep.subr.bf16.mxu0 0
        %5344 = vmatpush1.bf16.msra.mxu0 0
        %5345 = vmatprep.subr.bf16.mxu0 0
        %5346 = vmatpush1.bf16.msra.mxu0 0
        %5347 = vmatprep.subr.bf16.mxu0 0
        %5348 = vmatpush1.bf16.msra.mxu0 0
        %5349 = vmatprep.subr.bf16.mxu0 0
        %5350 = vmatpush1.bf16.msra.mxu0 0
        %5351 = vmatprep.subr.bf16.mxu0 0
        %5352 = vmatpush1.bf16.msra.mxu0 0
        %5353 = vmatprep.subr.bf16.mxu0 0
        %5354 = vmatpush1.bf16.msra.mxu0 0
        %5355 = vmatprep.subr.bf16.mxu0 0
        %5356 = vmatpush1.bf16.msra.mxu0 0
        %5357 = vmatprep.subr.bf16.mxu0 0
        %5358 = vmatpush1.bf16.msra.mxu0 0
        %5359 = vmatprep.mubr.bf16.mxu0 0
        %5360 = vmatmul.mubr.bf16.gmra.mrb[0].mxu0 %v5280
        %v5361 = vpop.f32.mrb[0].mxu0
        %v5362 = vadd.f32 0.0, %v5361
        %v5363 = vpop.f32.mrb[0].mxu0
        %v5364 = vpop.f32.mrb[0].mxu0
        %v5365 = vadd.f32 0.0, %v5364
        %v5366 = vpop.f32.mrb[0].mxu0
        %5367 = vmatprep.mubr.bf16.mxu0 0
        %5368 = vmatmul.mubr.bf16.gmra.mrb[0].mxu0 %v5283
        %v5369 = vpop.f32.mrb[0].mxu0
        %v5370 = vadd.f32 0.0, %v5369
        %v5371 = vpop.f32.mrb[0].mxu0
        %v5372 = vpop.f32.mrb[0].mxu0
        %v5373 = vadd.f32 0.0, %v5372
        %v5374 = vpop.f32.mrb[0].mxu0
        %5375 = vmatprep.mubr.bf16.mxu0 0
        %5376 = vmatmul.mubr.bf16.gmra.mrb[0].mxu0 %v5286
        %v5377 = vpop.f32.mrb[0].mxu0
        %v5378 = vadd.f32 0.0, %v5377
        %v5379 = vpop.f32.mrb[0].mxu0
        %v5380 = vpop.f32.mrb[0].mxu0
        %v5381 = vadd.f32 0.0, %v5380
        %v5382 = vpop.f32.mrb[0].mxu0
        %5383 = vmatprep.mubr.bf16.mxu0 0
        %5384 = vmatmul.mubr.bf16.gmra.mrb[0].mxu0 %v5289
        %v5385 = vpop.f32.mrb[0].mxu0
        %v5386 = vadd.f32 0.0, %v5385
        %v5387 = vpop.f32.mrb[0].mxu0
        %v5388 = vpop.f32.mrb[0].mxu0
        %v5389 = vadd.f32 0.0, %v5388
        %v5390 = vpop.f32.mrb[0].mxu0
        %5391 = vmatprep.mubr.bf16.mxu0 0
        %5392 = vmatmul.mubr.bf16.gmra.mrb[0].mxu0 %v5292
        %v5393 = vpop.f32.mrb[0].mxu0
        %v5394 = vadd.f32 0.0, %v5393
        %v5395 = vpop.f32.mrb[0].mxu0
        %v5396 = vpop.f32.mrb[0].mxu0
        %v5397 = vadd.f32 0.0, %v5396
        %v5398 = vpop.f32.mrb[0].mxu0
        %5399 = vmatprep.mubr.bf16.mxu0 0
        %5400 = vmatmul.mubr.bf16.gmra.mrb[0].mxu0 %v5295
        %v5401 = vpop.f32.mrb[0].mxu0
        %v5402 = vadd.f32 0.0, %v5401
        %v5403 = vpop.f32.mrb[0].mxu0
        %v5404 = vpop.f32.mrb[0].mxu0
        %v5405 = vadd.f32 0.0, %v5404
        %v5406 = vpop.f32.mrb[0].mxu0
        %5407 = vmatprep.mubr.bf16.mxu0 0
        %5408 = vmatmul.mubr.bf16.gmra.mrb[0].mxu0 %v5298
        %v5409 = vpop.f32.mrb[0].mxu0
        %v5410 = vadd.f32 0.0, %v5409
        %v5411 = vpop.f32.mrb[0].mxu0
        %v5412 = vpop.f32.mrb[0].mxu0
        %v5413 = vadd.f32 0.0, %v5412
        %v5414 = vpop.f32.mrb[0].mxu0
        %5415 = vmatprep.mubr.bf16.mxu0 0
        %5416 = vmatmul.mubr.bf16.gmra.mrb[0].mxu0 %v5301
        %v5417 = vpop.f32.mrb[0].mxu0
        %v5418 = vadd.f32 0.0, %v5417
        %v5419 = vpop.f32.mrb[0].mxu0
        %v5420 = vpop.f32.mrb[0].mxu0
        %v5421 = vadd.f32 0.0, %v5420
        %v5422 = vpop.f32.mrb[0].mxu0
        %5423 = vmatprep.mubr.bf16.mxu0 0
        %5424 = vmatmul.mubr.bf16.gmra.mrb[0].mxu0 %v5304
        %v5425 = vpop.f32.mrb[0].mxu0
        %v5426 = vadd.f32 0.0, %v5425
        %v5427 = vpop.f32.mrb[0].mxu0
        %v5428 = vpop.f32.mrb[0].mxu0
        %v5429 = vadd.f32 0.0, %v5428
        %v5430 = vpop.f32.mrb[0].mxu0
        %5431 = vmatprep.mubr.bf16.mxu0 0
        %5432 = vmatmul.mubr.bf16.gmra.mrb[0].mxu0 %v5307
        %v5433 = vpop.f32.mrb[0].mxu0
        %v5434 = vadd.f32 0.0, %v5433
        %v5435 = vpop.f32.mrb[0].mxu0
        %v5436 = vpop.f32.mrb[0].mxu0
        %v5437 = vadd.f32 0.0, %v5436
        %v5438 = vpop.f32.mrb[0].mxu0
        %5439 = vmatprep.mubr.bf16.mxu0 0
        %5440 = vmatmul.mubr.bf16.gmra.mrb[0].mxu0 %v5310
        %v5441 = vpop.f32.mrb[0].mxu0
        %v5442 = vadd.f32 0.0, %v5441
        %v5443 = vpop.f32.mrb[0].mxu0
        %v5444 = vpop.f32.mrb[0].mxu0
        %v5445 = vadd.f32 0.0, %v5444
        %v5446 = vpop.f32.mrb[0].mxu0
        %5447 = vmatprep.mubr.bf16.mxu0 0
        %5448 = vmatmul.mubr.bf16.gmra.mrb[0].mxu0 %v5313
        %v5449 = vpop.f32.mrb[0].mxu0
        %v5450 = vadd.f32 0.0, %v5449
        %v5451 = vpop.f32.mrb[0].mxu0
        %v5452 = vpop.f32.mrb[0].mxu0
        %v5453 = vadd.f32 0.0, %v5452
        %v5454 = vpop.f32.mrb[0].mxu0
        %5455 = vmatprep.mubr.bf16.mxu0 0
        %5456 = vmatmul.mubr.bf16.gmra.mrb[0].mxu0 %v5316
        %v5457 = vpop.f32.mrb[0].mxu0
        %v5458 = vadd.f32 0.0, %v5457
        %v5459 = vpop.f32.mrb[0].mxu0
        %v5460 = vpop.f32.mrb[0].mxu0
        %v5461 = vadd.f32 0.0, %v5460
        %v5462 = vpop.f32.mrb[0].mxu0
        %5463 = vmatprep.mubr.bf16.mxu0 0
        %5464 = vmatmul.mubr.bf16.gmra.mrb[0].mxu0 %v5319
        %v5465 = vpop.f32.mrb[0].mxu0
        %v5466 = vadd.f32 0.0, %v5465
        %v5467 = vpop.f32.mrb[0].mxu0
        %v5468 = vpop.f32.mrb[0].mxu0
        %v5469 = vadd.f32 0.0, %v5468
        %v5470 = vpop.f32.mrb[0].mxu0
        %5471 = vmatprep.mubr.bf16.mxu0 0
        %5472 = vmatmul.mubr.bf16.gmra.mrb[0].mxu0 %v5322
        %v5473 = vpop.f32.mrb[0].mxu0
        %v5474 = vadd.f32 0.0, %v5473
        %v5475 = vpop.f32.mrb[0].mxu0
        %v5476 = vpop.f32.mrb[0].mxu0
        %v5477 = vadd.f32 0.0, %v5476
        %v5478 = vpop.f32.mrb[0].mxu0
        %5479 = vmatprep.mubr.bf16.mxu0 0
        %5480 = vmatmul.mubr.bf16.gmra.mrb[0].mxu0 %v5325
        %v5481 = vpop.f32.mrb[0].mxu0
        %v5482 = vadd.f32 0.0, %v5481
        %v5483 = vpop.f32.mrb[0].mxu0
        %v5484 = vpop.f32.mrb[0].mxu0
        %v5485 = vadd.f32 0.0, %v5484
        %v5486 = vpop.f32.mrb[0].mxu0
        %5487 = vdwg.mxu0
        %v5488 = vld [vmem:[#allocation3] sm:$0xff]
        %v5489 = vld [vmem:[#allocation3 + $0x8] sm:$0xff]
        %v5490 = vld [vmem:[#allocation3 + $0x10] sm:$0xff]
        %v5491 = vld [vmem:[#allocation3 + $0x18] sm:$0xff]
        %v5492 = vld [vmem:[#allocation3 + $0x20] sm:$0xff]
        %v5493 = vld [vmem:[#allocation3 + $0x28] sm:$0xff]
        %v5494 = vld [vmem:[#allocation3 + $0x30] sm:$0xff]
        %v5495 = vld [vmem:[#allocation3 + $0x38] sm:$0xff]
        %v5496 = vld [vmem:[#allocation3 + $0x40] sm:$0xff]
        %v5497 = vld [vmem:[#allocation3 + $0x48] sm:$0xff]
        %v5498 = vld [vmem:[#allocation3 + $0x50] sm:$0xff]
        %v5499 = vld [vmem:[#allocation3 + $0x58] sm:$0xff]
        %v5500 = vld [vmem:[#allocation3 + $0x60] sm:$0xff]
        %v5501 = vld [vmem:[#allocation3 + $0x68] sm:$0xff]
        %v5502 = vld [vmem:[#allocation3 + $0x70] sm:$0xff]
        %v5503 = vld [vmem:[#allocation3 + $0x78] sm:$0xff]
        %v5504 = vld [vmem:[#allocation3 + $0x80] sm:$0xff]
        %v5505 = vld [vmem:[#allocation3 + $0x88] sm:$0xff]
        %v5506 = vld [vmem:[#allocation3 + $0x90] sm:$0xff]
        %v5507 = vld [vmem:[#allocation3 + $0x98] sm:$0xff]
        %v5508 = vld [vmem:[#allocation3 + $0xa0] sm:$0xff]
        %v5509 = vld [vmem:[#allocation3 + $0xa8] sm:$0xff]
        %v5510 = vld [vmem:[#allocation3 + $0xb0] sm:$0xff]
        %v5511 = vld [vmem:[#allocation3 + $0xb8] sm:$0xff]
        %v5512 = vld [vmem:[#allocation3 + $0xc0] sm:$0xff]
        %v5513 = vld [vmem:[#allocation3 + $0xc8] sm:$0xff]
        %v5514 = vld [vmem:[#allocation3 + $0xd0] sm:$0xff]
        %v5515 = vld [vmem:[#allocation3 + $0xd8] sm:$0xff]
        %v5516 = vld [vmem:[#allocation3 + $0xe0] sm:$0xff]
        %v5517 = vld [vmem:[#allocation3 + $0xe8] sm:$0xff]
        %v5518 = vld [vmem:[#allocation3 + $0xf0] sm:$0xff]
        %v5519 = vld [vmem:[#allocation3 + $0xf8] sm:$0xff]
        %v5520 = vadd.f32 %v5488, %v5362
        %v5521 = vadd.f32 %v5489, %v5365
        %v5522 = vadd.f32 %v5490, %v5370
        %v5523 = vadd.f32 %v5491, %v5373
        %v5524 = vadd.f32 %v5492, %v5378
        %v5525 = vadd.f32 %v5493, %v5381
        %v5526 = vadd.f32 %v5494, %v5386
        %v5527 = vadd.f32 %v5495, %v5389
        %v5528 = vadd.f32 %v5496, %v5394
        %v5529 = vadd.f32 %v5497, %v5397
        %v5530 = vadd.f32 %v5498, %v5402
        %v5531 = vadd.f32 %v5499, %v5405
        %v5532 = vadd.f32 %v5500, %v5410
        %v5533 = vadd.f32 %v5501, %v5413
        %v5534 = vadd.f32 %v5502, %v5418
        %v5535 = vadd.f32 %v5503, %v5421
        %v5536 = vadd.f32 %v5504, %v5426
        %v5537 = vadd.f32 %v5505, %v5429
        %v5538 = vadd.f32 %v5506, %v5434
        %v5539 = vadd.f32 %v5507, %v5437
        %v5540 = vadd.f32 %v5508, %v5442
        %v5541 = vadd.f32 %v5509, %v5445
        %v5542 = vadd.f32 %v5510, %v5450
        %v5543 = vadd.f32 %v5511, %v5453
        %v5544 = vadd.f32 %v5512, %v5458
        %v5545 = vadd.f32 %v5513, %v5461
        %v5546 = vadd.f32 %v5514, %v5466
        %v5547 = vadd.f32 %v5515, %v5469
        %v5548 = vadd.f32 %v5516, %v5474
        %v5549 = vadd.f32 %v5517, %v5477
        %v5550 = vadd.f32 %v5518, %v5482
        %v5551 = vadd.f32 %v5519, %v5485
        %5552 = vst.msk [vmem:[#allocation3] sm:$0xff] %vm998, %v5520
        %5553 = vst.msk [vmem:[#allocation3 + $0x8] sm:$0xff] %vm998, %v5521
        %5554 = vst.msk [vmem:[#allocation3 + $0x10] sm:$0xff] %vm998, %v5522
        %5555 = vst.msk [vmem:[#allocation3 + $0x18] sm:$0xff] %vm998, %v5523
        %5556 = vst.msk [vmem:[#allocation3 + $0x20] sm:$0xff] %vm998, %v5524
        %5557 = vst.msk [vmem:[#allocation3 + $0x28] sm:$0xff] %vm998, %v5525
        %5558 = vst.msk [vmem:[#allocation3 + $0x30] sm:$0xff] %vm998, %v5526
        %5559 = vst.msk [vmem:[#allocation3 + $0x38] sm:$0xff] %vm998, %v5527
        %5560 = vst.msk [vmem:[#allocation3 + $0x40] sm:$0xff] %vm998, %v5528
        %5561 = vst.msk [vmem:[#allocation3 + $0x48] sm:$0xff] %vm998, %v5529
        %5562 = vst.msk [vmem:[#allocation3 + $0x50] sm:$0xff] %vm998, %v5530
        %5563 = vst.msk [vmem:[#allocation3 + $0x58] sm:$0xff] %vm998, %v5531
        %5564 = vst.msk [vmem:[#allocation3 + $0x60] sm:$0xff] %vm998, %v5532
        %5565 = vst.msk [vmem:[#allocation3 + $0x68] sm:$0xff] %vm998, %v5533
        %5566 = vst.msk [vmem:[#allocation3 + $0x70] sm:$0xff] %vm998, %v5534
        %5567 = vst.msk [vmem:[#allocation3 + $0x78] sm:$0xff] %vm998, %v5535
        %5568 = vst.msk [vmem:[#allocation3 + $0x80] sm:$0xff] %vm998, %v5536
        %5569 = vst.msk [vmem:[#allocation3 + $0x88] sm:$0xff] %vm998, %v5537
        %5570 = vst.msk [vmem:[#allocation3 + $0x90] sm:$0xff] %vm998, %v5538
        %5571 = vst.msk [vmem:[#allocation3 + $0x98] sm:$0xff] %vm998, %v5539
        %5572 = vst.msk [vmem:[#allocation3 + $0xa0] sm:$0xff] %vm998, %v5540
        %5573 = vst.msk [vmem:[#allocation3 + $0xa8] sm:$0xff] %vm998, %v5541
        %5574 = vst.msk [vmem:[#allocation3 + $0xb0] sm:$0xff] %vm998, %v5542
        %5575 = vst.msk [vmem:[#allocation3 + $0xb8] sm:$0xff] %vm998, %v5543
        %5576 = vst.msk [vmem:[#allocation3 + $0xc0] sm:$0xff] %vm998, %v5544
        %5577 = vst.msk [vmem:[#allocation3 + $0xc8] sm:$0xff] %vm998, %v5545
        %5578 = vst.msk [vmem:[#allocation3 + $0xd0] sm:$0xff] %vm998, %v5546
        %5579 = vst.msk [vmem:[#allocation3 + $0xd8] sm:$0xff] %vm998, %v5547
        %5580 = vst.msk [vmem:[#allocation3 + $0xe0] sm:$0xff] %vm998, %v5548
        %5581 = vst.msk [vmem:[#allocation3 + $0xe8] sm:$0xff] %vm998, %v5549
        %5582 = vst.msk [vmem:[#allocation3 + $0xf0] sm:$0xff] %vm998, %v5550
        %5583 = vst.msk [vmem:[#allocation3 + $0xf8] sm:$0xff] %vm998, %v5551
        %v5584 = vld [vmem:[#allocation3] sm:$0xff]
        %v5585 = vld [vmem:[#allocation3 + $0x8] sm:$0xff]
        %v5586 = vld [vmem:[#allocation3 + $0x10] sm:$0xff]
        %v5587 = vld [vmem:[#allocation3 + $0x18] sm:$0xff]
        %v5588 = vld [vmem:[#allocation3 + $0x20] sm:$0xff]
        %v5589 = vld [vmem:[#allocation3 + $0x28] sm:$0xff]
        %v5590 = vld [vmem:[#allocation3 + $0x30] sm:$0xff]
        %v5591 = vld [vmem:[#allocation3 + $0x38] sm:$0xff]
        %v5592 = vld [vmem:[#allocation3 + $0x40] sm:$0xff]
        %v5593 = vld [vmem:[#allocation3 + $0x48] sm:$0xff]
        %v5594 = vld [vmem:[#allocation3 + $0x50] sm:$0xff]
        %v5595 = vld [vmem:[#allocation3 + $0x58] sm:$0xff]
        %v5596 = vld [vmem:[#allocation3 + $0x60] sm:$0xff]
        %v5597 = vld [vmem:[#allocation3 + $0x68] sm:$0xff]
        %v5598 = vld [vmem:[#allocation3 + $0x70] sm:$0xff]
        %v5599 = vld [vmem:[#allocation3 + $0x78] sm:$0xff]
        %v5600 = vld [vmem:[#allocation3 + $0x80] sm:$0xff]
        %v5601 = vld [vmem:[#allocation3 + $0x88] sm:$0xff]
        %v5602 = vld [vmem:[#allocation3 + $0x90] sm:$0xff]
        %v5603 = vld [vmem:[#allocation3 + $0x98] sm:$0xff]
        %v5604 = vld [vmem:[#allocation3 + $0xa0] sm:$0xff]
        %v5605 = vld [vmem:[#allocation3 + $0xa8] sm:$0xff]
        %v5606 = vld [vmem:[#allocation3 + $0xb0] sm:$0xff]
        %v5607 = vld [vmem:[#allocation3 + $0xb8] sm:$0xff]
        %v5608 = vld [vmem:[#allocation3 + $0xc0] sm:$0xff]
        %v5609 = vld [vmem:[#allocation3 + $0xc8] sm:$0xff]
        %v5610 = vld [vmem:[#allocation3 + $0xd0] sm:$0xff]
        %v5611 = vld [vmem:[#allocation3 + $0xd8] sm:$0xff]
        %v5612 = vld [vmem:[#allocation3 + $0xe0] sm:$0xff]
        %v5613 = vld [vmem:[#allocation3 + $0xe8] sm:$0xff]
        %v5614 = vld [vmem:[#allocation3 + $0xf0] sm:$0xff]
        %v5615 = vld [vmem:[#allocation3 + $0xf8] sm:$0xff]
        %v5616 = vpack.c.bf16 %v5585, %v5584
        %v5617 = vpack.c.bf16 %v5587, %v5586
        %v5618 = vpack.c.bf16 %v5589, %v5588
        %v5619 = vpack.c.bf16 %v5591, %v5590
        %v5620 = vpack.c.bf16 %v5593, %v5592
        %v5621 = vpack.c.bf16 %v5595, %v5594
        %v5622 = vpack.c.bf16 %v5597, %v5596
        %v5623 = vpack.c.bf16 %v5599, %v5598
        %v5624 = vpack.c.bf16 %v5601, %v5600
        %v5625 = vpack.c.bf16 %v5603, %v5602
        %v5626 = vpack.c.bf16 %v5605, %v5604
        %v5627 = vpack.c.bf16 %v5607, %v5606
        %v5628 = vpack.c.bf16 %v5609, %v5608
        %v5629 = vpack.c.bf16 %v5611, %v5610
        %v5630 = vpack.c.bf16 %v5613, %v5612
        %v5631 = vpack.c.bf16 %v5615, %v5614
        %v5648 = vunpack.c.l.b16 %v5616
        %v5649 = vunpack.c.h.b16 %v5616
        %v5650 = vunpack.c.l.b16 %v5617
        %v5651 = vunpack.c.h.b16 %v5617
        %v5652 = vunpack.c.l.b16 %v5618
        %v5653 = vunpack.c.h.b16 %v5618
        %v5654 = vunpack.c.l.b16 %v5619
        %v5655 = vunpack.c.h.b16 %v5619
        %v5656 = vunpack.c.l.b16 %v5620
        %v5657 = vunpack.c.h.b16 %v5620
        %v5658 = vunpack.c.l.b16 %v5621
        %v5659 = vunpack.c.h.b16 %v5621
        %v5660 = vunpack.c.l.b16 %v5622
        %v5661 = vunpack.c.h.b16 %v5622
        %v5662 = vunpack.c.l.b16 %v5623
        %v5663 = vunpack.c.h.b16 %v5623
        %v5664 = vunpack.c.l.b16 %v5624
        %v5665 = vunpack.c.h.b16 %v5624
        %v5666 = vunpack.c.l.b16 %v5625
        %v5667 = vunpack.c.h.b16 %v5625
        %v5668 = vunpack.c.l.b16 %v5626
        %v5669 = vunpack.c.h.b16 %v5626
        %v5670 = vunpack.c.l.b16 %v5627
        %v5671 = vunpack.c.h.b16 %v5627
        %v5672 = vunpack.c.l.b16 %v5628
        %v5673 = vunpack.c.h.b16 %v5628
        %v5674 = vunpack.c.l.b16 %v5629
        %v5675 = vunpack.c.h.b16 %v5629
        %v5676 = vunpack.c.l.b16 %v5630
        %v5677 = vunpack.c.h.b16 %v5630
        %v5678 = vunpack.c.l.b16 %v5631
        %v5679 = vunpack.c.h.b16 %v5631
        %v5680 = vpack.c.b16 %v5648, %v5648
        %v5681 = vpack.c.b16 %v5649, %v5649
        %v5682 = vpack.c.b16 %v5650, %v5650
        %v5683 = vpack.c.b16 %v5651, %v5651
        %v5684 = vpack.c.b16 %v5652, %v5652
        %v5685 = vpack.c.b16 %v5653, %v5653
        %v5686 = vpack.c.b16 %v5654, %v5654
        %v5687 = vpack.c.b16 %v5655, %v5655
        %v5688 = vpack.c.b16 %v5656, %v5656
        %v5689 = vpack.c.b16 %v5657, %v5657
        %v5690 = vpack.c.b16 %v5658, %v5658
        %v5691 = vpack.c.b16 %v5659, %v5659
        %v5692 = vpack.c.b16 %v5660, %v5660
        %v5693 = vpack.c.b16 %v5661, %v5661
        %v5694 = vpack.c.b16 %v5662, %v5662
        %v5695 = vpack.c.b16 %v5663, %v5663
        %v5696 = vpack.c.b16 %v5664, %v5664
        %v5697 = vpack.c.b16 %v5665, %v5665
        %v5698 = vpack.c.b16 %v5666, %v5666
        %v5699 = vpack.c.b16 %v5667, %v5667
        %v5700 = vpack.c.b16 %v5668, %v5668
        %v5701 = vpack.c.b16 %v5669, %v5669
        %v5702 = vpack.c.b16 %v5670, %v5670
        %v5703 = vpack.c.b16 %v5671, %v5671
        %v5704 = vpack.c.b16 %v5672, %v5672
        %v5705 = vpack.c.b16 %v5673, %v5673
        %v5706 = vpack.c.b16 %v5674, %v5674
        %v5707 = vpack.c.b16 %v5675, %v5675
        %v5708 = vpack.c.b16 %v5676, %v5676
        %v5709 = vpack.c.b16 %v5677, %v5677
        %v5710 = vpack.c.b16 %v5678, %v5678
        %v5711 = vpack.c.b16 %v5679, %v5679
        %vm5744 = vcmask 257024
        %5745 = vst.msk [vmem:[%s338] sm:$0xf] %vm5744, %v5680
        %5746 = vst.msk [vmem:[%s338 + $0x4] sm:$0xf] %vm5744, %v5681
        %5747 = vst.msk [vmem:[%s338 + $0x8] sm:$0xf] %vm5744, %v5682
        %5748 = vst.msk [vmem:[%s338 + $0xc] sm:$0xf] %vm5744, %v5683
        %5749 = vst.msk [vmem:[%s338 + $0x10] sm:$0xf] %vm5744, %v5684
        %5750 = vst.msk [vmem:[%s338 + $0x14] sm:$0xf] %vm5744, %v5685
        %5751 = vst.msk [vmem:[%s338 + $0x18] sm:$0xf] %vm5744, %v5686
        %5752 = vst.msk [vmem:[%s338 + $0x1c] sm:$0xf] %vm5744, %v5687
        %5753 = vst.msk [vmem:[%s338 + $0x20] sm:$0xf] %vm5744, %v5688
        %5754 = vst.msk [vmem:[%s338 + $0x24] sm:$0xf] %vm5744, %v5689
        %5755 = vst.msk [vmem:[%s338 + $0x28] sm:$0xf] %vm5744, %v5690
        %5756 = vst.msk [vmem:[%s338 + $0x2c] sm:$0xf] %vm5744, %v5691
        %5757 = vst.msk [vmem:[%s338 + $0x30] sm:$0xf] %vm5744, %v5692
        %5758 = vst.msk [vmem:[%s338 + $0x34] sm:$0xf] %vm5744, %v5693
        %5759 = vst.msk [vmem:[%s338 + $0x38] sm:$0xf] %vm5744, %v5694
        %5760 = vst.msk [vmem:[%s338 + $0x3c] sm:$0xf] %vm5744, %v5695
        %5761 = vst.msk [vmem:[%s338 + $0x40] sm:$0xf] %vm5744, %v5696
        %5762 = vst.msk [vmem:[%s338 + $0x44] sm:$0xf] %vm5744, %v5697
        %5763 = vst.msk [vmem:[%s338 + $0x48] sm:$0xf] %vm5744, %v5698
        %5764 = vst.msk [vmem:[%s338 + $0x4c] sm:$0xf] %vm5744, %v5699
        %5765 = vst.msk [vmem:[%s338 + $0x50] sm:$0xf] %vm5744, %v5700
        %5766 = vst.msk [vmem:[%s338 + $0x54] sm:$0xf] %vm5744, %v5701
        %5767 = vst.msk [vmem:[%s338 + $0x58] sm:$0xf] %vm5744, %v5702
        %5768 = vst.msk [vmem:[%s338 + $0x5c] sm:$0xf] %vm5744, %v5703
        %5769 = vst.msk [vmem:[%s338 + $0x60] sm:$0xf] %vm5744, %v5704
        %5770 = vst.msk [vmem:[%s338 + $0x64] sm:$0xf] %vm5744, %v5705
        %5771 = vst.msk [vmem:[%s338 + $0x68] sm:$0xf] %vm5744, %v5706
        %5772 = vst.msk [vmem:[%s338 + $0x6c] sm:$0xf] %vm5744, %v5707
        %5773 = vst.msk [vmem:[%s338 + $0x70] sm:$0xf] %vm5744, %v5708
        %5774 = vst.msk [vmem:[%s338 + $0x74] sm:$0xf] %vm5744, %v5709
        %5775 = vst.msk [vmem:[%s338 + $0x78] sm:$0xf] %vm5744, %v5710
        %5776 = vst.msk [vmem:[%s338 + $0x7c] sm:$0xf] %vm5744, %v5711
        %v5777 = vsel %vm998, %v5584, 0.0
        %v5778 = vsel %vm998, %v5585, 0.0
        %v5779 = vadd.f32 %v5777, %v5778
        %v5780 = vsel %vm998, %v5586, 0.0
        %v5781 = vadd.f32 %v5779, %v5780
        %v5782 = vsel %vm998, %v5587, 0.0
        %v5783 = vadd.f32 %v5781, %v5782
        %v5784 = vsel %vm998, %v5588, 0.0
        %v5785 = vadd.f32 %v5783, %v5784
        %v5786 = vsel %vm998, %v5589, 0.0
        %v5787 = vadd.f32 %v5785, %v5786
        %v5788 = vsel %vm998, %v5590, 0.0
        %v5789 = vadd.f32 %v5787, %v5788
        %v5790 = vsel %vm998, %v5591, 0.0
        %v5791 = vadd.f32 %v5789, %v5790
        %v5792 = vsel %vm998, %v5592, 0.0
        %v5793 = vadd.f32 %v5791, %v5792
        %v5794 = vsel %vm998, %v5593, 0.0
        %v5795 = vadd.f32 %v5793, %v5794
        %v5796 = vsel %vm998, %v5594, 0.0
        %v5797 = vadd.f32 %v5795, %v5796
        %v5798 = vsel %vm998, %v5595, 0.0
        %v5799 = vadd.f32 %v5797, %v5798
        %v5800 = vsel %vm998, %v5596, 0.0
        %v5801 = vadd.f32 %v5799, %v5800
        %v5802 = vsel %vm998, %v5597, 0.0
        %v5803 = vadd.f32 %v5801, %v5802
        %v5804 = vsel %vm998, %v5598, 0.0
        %v5805 = vadd.f32 %v5803, %v5804
        %v5806 = vsel %vm998, %v5599, 0.0
        %v5807 = vadd.f32 %v5805, %v5806
        %v5808 = vsel %vm998, %v5600, 0.0
        %v5809 = vadd.f32 %v5807, %v5808
        %v5810 = vsel %vm998, %v5601, 0.0
        %v5811 = vadd.f32 %v5809, %v5810
        %v5812 = vsel %vm998, %v5602, 0.0
        %v5813 = vadd.f32 %v5811, %v5812
        %v5814 = vsel %vm998, %v5603, 0.0
        %v5815 = vadd.f32 %v5813, %v5814
        %v5816 = vsel %vm998, %v5604, 0.0
        %v5817 = vadd.f32 %v5815, %v5816
        %v5818 = vsel %vm998, %v5605, 0.0
        %v5819 = vadd.f32 %v5817, %v5818
        %v5820 = vsel %vm998, %v5606, 0.0
        %v5821 = vadd.f32 %v5819, %v5820
        %v5822 = vsel %vm998, %v5607, 0.0
        %v5823 = vadd.f32 %v5821, %v5822
        %v5824 = vsel %vm998, %v5608, 0.0
        %v5825 = vadd.f32 %v5823, %v5824
        %v5826 = vsel %vm998, %v5609, 0.0
        %v5827 = vadd.f32 %v5825, %v5826
        %v5828 = vsel %vm998, %v5610, 0.0
        %v5829 = vadd.f32 %v5827, %v5828
        %v5830 = vsel %vm998, %v5611, 0.0
        %v5831 = vadd.f32 %v5829, %v5830
        %v5832 = vsel %vm998, %v5612, 0.0
        %v5833 = vadd.f32 %v5831, %v5832
        %v5834 = vsel %vm998, %v5613, 0.0
        %v5835 = vadd.f32 %v5833, %v5834
        %v5836 = vsel %vm998, %v5614, 0.0
        %v5837 = vadd.f32 %v5835, %v5836
        %v5838 = vsel %vm998, %v5615, 0.0
        %v5839 = vadd.f32 %v5837, %v5838
        %v5840 = vrot.slane %v5839, 4
        %v5841 = vadd.f32 %v5839, %v5840
        %v5842 = vrot.slane %v5841, 2
        %v5843 = vadd.f32 %v5841, %v5842
        %v5844 = vrot.slane %v5843, 1
        %v5845 = vadd.f32 %v5843, %v5844
        %vm5846 = vcmask 253952
        %5847 = vst.msk [vmem:[%s344] sm:$0x1] %vm5846, %v5845
        %v5848 = vmul.f32 %v5584, %v5584
        %v5849 = vmul.f32 %v5585, %v5585
        %v5850 = vmul.f32 %v5586, %v5586
        %v5851 = vmul.f32 %v5587, %v5587
        %v5852 = vmul.f32 %v5588, %v5588
        %v5853 = vmul.f32 %v5589, %v5589
        %v5854 = vmul.f32 %v5590, %v5590
        %v5855 = vmul.f32 %v5591, %v5591
        %v5856 = vmul.f32 %v5592, %v5592
        %v5857 = vmul.f32 %v5593, %v5593
        %v5858 = vmul.f32 %v5594, %v5594
        %v5859 = vmul.f32 %v5595, %v5595
        %v5860 = vmul.f32 %v5596, %v5596
        %v5861 = vmul.f32 %v5597, %v5597
        %v5862 = vmul.f32 %v5598, %v5598
        %v5863 = vmul.f32 %v5599, %v5599
        %v5864 = vmul.f32 %v5600, %v5600
        %v5865 = vmul.f32 %v5601, %v5601
        %v5866 = vmul.f32 %v5602, %v5602
        %v5867 = vmul.f32 %v5603, %v5603
        %v5868 = vmul.f32 %v5604, %v5604
        %v5869 = vmul.f32 %v5605, %v5605
        %v5870 = vmul.f32 %v5606, %v5606
        %v5871 = vmul.f32 %v5607, %v5607
        %v5872 = vmul.f32 %v5608, %v5608
        %v5873 = vmul.f32 %v5609, %v5609
        %v5874 = vmul.f32 %v5610, %v5610
        %v5875 = vmul.f32 %v5611, %v5611
        %v5876 = vmul.f32 %v5612, %v5612
        %v5877 = vmul.f32 %v5613, %v5613
        %v5878 = vmul.f32 %v5614, %v5614
        %v5879 = vmul.f32 %v5615, %v5615
        %v5880 = vsel %vm998, %v5848, 0.0
        %v5881 = vsel %vm998, %v5849, 0.0
        %v5882 = vadd.f32 %v5880, %v5881
        %v5883 = vsel %vm998, %v5850, 0.0
        %v5884 = vadd.f32 %v5882, %v5883
        %v5885 = vsel %vm998, %v5851, 0.0
        %v5886 = vadd.f32 %v5884, %v5885
        %v5887 = vsel %vm998, %v5852, 0.0
        %v5888 = vadd.f32 %v5886, %v5887
        %v5889 = vsel %vm998, %v5853, 0.0
        %v5890 = vadd.f32 %v5888, %v5889
        %v5891 = vsel %vm998, %v5854, 0.0
        %v5892 = vadd.f32 %v5890, %v5891
        %v5893 = vsel %vm998, %v5855, 0.0
        %v5894 = vadd.f32 %v5892, %v5893
        %v5895 = vsel %vm998, %v5856, 0.0
        %v5896 = vadd.f32 %v5894, %v5895
        %v5897 = vsel %vm998, %v5857, 0.0
        %v5898 = vadd.f32 %v5896, %v5897
        %v5899 = vsel %vm998, %v5858, 0.0
        %v5900 = vadd.f32 %v5898, %v5899
        %v5901 = vsel %vm998, %v5859, 0.0
        %v5902 = vadd.f32 %v5900, %v5901
        %v5903 = vsel %vm998, %v5860, 0.0
        %v5904 = vadd.f32 %v5902, %v5903
        %v5905 = vsel %vm998, %v5861, 0.0
        %v5906 = vadd.f32 %v5904, %v5905
        %v5907 = vsel %vm998, %v5862, 0.0
        %v5908 = vadd.f32 %v5906, %v5907
        %v5909 = vsel %vm998, %v5863, 0.0
        %v5910 = vadd.f32 %v5908, %v5909
        %v5911 = vsel %vm998, %v5864, 0.0
        %v5912 = vadd.f32 %v5910, %v5911
        %v5913 = vsel %vm998, %v5865, 0.0
        %v5914 = vadd.f32 %v5912, %v5913
        %v5915 = vsel %vm998, %v5866, 0.0
        %v5916 = vadd.f32 %v5914, %v5915
        %v5917 = vsel %vm998, %v5867, 0.0
        %v5918 = vadd.f32 %v5916, %v5917
        %v5919 = vsel %vm998, %v5868, 0.0
        %v5920 = vadd.f32 %v5918, %v5919
        %v5921 = vsel %vm998, %v5869, 0.0
        %v5922 = vadd.f32 %v5920, %v5921
        %v5923 = vsel %vm998, %v5870, 0.0
        %v5924 = vadd.f32 %v5922, %v5923
        %v5925 = vsel %vm998, %v5871, 0.0
        %v5926 = vadd.f32 %v5924, %v5925
        %v5927 = vsel %vm998, %v5872, 0.0
        %v5928 = vadd.f32 %v5926, %v5927
        %v5929 = vsel %vm998, %v5873, 0.0
        %v5930 = vadd.f32 %v5928, %v5929
        %v5931 = vsel %vm998, %v5874, 0.0
        %v5932 = vadd.f32 %v5930, %v5931
        %v5933 = vsel %vm998, %v5875, 0.0
        %v5934 = vadd.f32 %v5932, %v5933
        %v5935 = vsel %vm998, %v5876, 0.0
        %v5936 = vadd.f32 %v5934, %v5935
        %v5937 = vsel %vm998, %v5877, 0.0
        %v5938 = vadd.f32 %v5936, %v5937
        %v5939 = vsel %vm998, %v5878, 0.0
        %v5940 = vadd.f32 %v5938, %v5939
        %v5941 = vsel %vm998, %v5879, 0.0
        %v5942 = vadd.f32 %v5940, %v5941
        %v5943 = vrot.slane %v5942, 4
        %v5944 = vadd.f32 %v5942, %v5943
        %v5945 = vrot.slane %v5944, 2
        %v5946 = vadd.f32 %v5944, %v5945
        %v5947 = vrot.slane %v5946, 1
        %v5948 = vadd.f32 %v5946, %v5947
        %5949 = vst.msk [vmem:[%s350] sm:$0x1] %vm5846, %v5948
        %s5950 = sand.u32 %s145, 1
        %s5951 = scalar_lea.sflag [#allocation6], %s5950
        %s5952 = sand.u32 %s145, 1
        %s5953 = smul.addr %s5952, 128
        %s5954 = scalar_lea.vmem [#allocation12], %s5953
        %s5955 = sand.u32 %s29, 1
        %s5956 = scalar_lea.sflag [#allocation14], %s5955
        %s5957 = sand.u32 %s173, 1
        %s5958 = scalar_lea.vmem [#allocation13], %s5957
        %s5959 = sand.u32 %s29, 1
        %s5960 = scalar_lea.sflag [#allocation14], %s5959
        %s5961 = sand.u32 %s201, 1
        %s5962 = scalar_lea.vmem [#allocation15], %s5961
        // Predicated region
        $region57: #{bottleneck_forward.5} parent=35 // pred_check
          %p5963 = pneg %p155
        $region58: #{bottleneck_forward.5} parent=35 // pred_check_branch
          %5965 = sbr.rel (%p5963) target = $region60
        $region59: #{bottleneck_forward.5} parent=35 // pred_region
          %s5967 = ssub.s32 2048, 2048
          %5968 = vsyncadd %s5951, %s5967
          %s5969 = smul.addr %s33, 32
          %s5970 = sadd.s32 %s34, %s5969
          %s5971 = smul.addr %s5970, 64
          %s5972 = scalar_lea.hbm %s4, %s5971
          %s5973 = sshll.u32 %s5954, 4
          %s5974 = int_to_ptr.vmem [resolvable:$true] %s5973
          %5979 = dma.vmem_to_hbm [thread:$0]  %s5974, 2048, %s5972, %s5951, 64, 64, 4
        $region60: #{bottleneck_forward.5} parent=35 // pred_fallthru
          _
        // Predicated region
        $region61: #{bottleneck_forward.5} parent=35 // pred_check
          %p5980 = pneg %p183
        $region62: #{bottleneck_forward.5} parent=35 // pred_check_branch
          %5982 = sbr.rel (%p5980) target = $region64
        $region63: #{bottleneck_forward.5} parent=35 // pred_region
          %s5984 = ssub.s32 16, 16
          %5985 = vsyncadd %s5956, %s5984
          %s5986 = sadd.s32 %s34, %s33
          %s5987 = smul.addr %s5986, 16
          %s5988 = scalar_lea.hbm %s5, %s5987
          %s5990 = sshll.u32 %s5958, 4
          %s5991 = int_to_ptr.vmem [resolvable:$true] %s5990
          %5993 = dma.vmem_to_hbm [thread:$0]  %s5991, 16, %s5988, %s5956
        $region64: #{bottleneck_forward.5} parent=35 // pred_fallthru
          _
        // Predicated region
        $region65: #{bottleneck_forward.5} parent=35 // pred_check
          %p5994 = pneg %p211
        $region66: #{bottleneck_forward.5} parent=35 // pred_check_branch
          %5996 = sbr.rel (%p5994) target = $region68
        $region67: #{bottleneck_forward.5} parent=35 // pred_region
          %s5998 = ssub.s32 16, 16
          %5999 = vsyncadd %s5960, %s5998
          %s6000 = sadd.s32 %s34, %s33
          %s6001 = smul.addr %s6000, 16
          %s6002 = scalar_lea.hbm %s6, %s6001
          %s6004 = sshll.u32 %s5962, 4
          %s6005 = int_to_ptr.vmem [resolvable:$true] %s6004
          %6007 = dma.vmem_to_hbm [thread:$0]  %s6005, 16, %s6002, %s5960
        $region68: #{bottleneck_forward.5} parent=35 // pred_fallthru
          _
      $region36: #{bottleneck_forward.5} parent=5 // pred_fallthru
        _
      %p6008 = scmp.le.s32.totalorder 2, %s24
      // Predicated region
      $region69: #{bottleneck_forward.5} parent=5 // pred_check
        %p6009 = pneg %p6008
      $region70: #{bottleneck_forward.5} parent=5 // pred_check_branch
        %6011 = sbr.rel (%p6009) target = $region72
      $region71: #{bottleneck_forward.5} parent=5 // pred_region
        %s6012 = ssub.s32 %s24, 2
        // Predicated region
        $region73: #{bottleneck_forward.5} parent=71 // pred_check
          %p6013 = pneg %p161
        $region74: #{bottleneck_forward.5} parent=71 // pred_check_branch
          %6015 = sbr.rel (%p6013) target = $region76
        $region75: #{bottleneck_forward.5} parent=71 // pred_region
          %s6016 = sand.u32 %s146, 1
          %s6017 = scalar_lea.sflag [#allocation6], %s6016
          %s6018 = sand.u32 %s146, 1
          %s6019 = smul.addr %s6018, 128
          %s6020 = scalar_lea.vmem [#allocation12], %s6019
          %6021 = dma.done %s6017, 2048
        $region76: #{bottleneck_forward.5} parent=71 // pred_fallthru
          _
        // Predicated region
        $region77: #{bottleneck_forward.5} parent=71 // pred_check
          %p6022 = pneg %p189
        $region78: #{bottleneck_forward.5} parent=71 // pred_check_branch
          %6024 = sbr.rel (%p6022) target = $region80
        $region79: #{bottleneck_forward.5} parent=71 // pred_region
          %s6025 = sand.u32 %s30, 1
          %s6026 = scalar_lea.sflag [#allocation14], %s6025
          %s6027 = sand.u32 %s174, 1
          %s6028 = scalar_lea.vmem [#allocation13], %s6027
          %6029 = dma.done %s6026, 16
        $region80: #{bottleneck_forward.5} parent=71 // pred_fallthru
          _
        // Predicated region
        $region81: #{bottleneck_forward.5} parent=71 // pred_check
          %p6030 = pneg %p217
        $region82: #{bottleneck_forward.5} parent=71 // pred_check_branch
          %6032 = sbr.rel (%p6030) target = $region84
        $region83: #{bottleneck_forward.5} parent=71 // pred_region
          %s6033 = sand.u32 %s30, 1
          %s6034 = scalar_lea.sflag [#allocation14], %s6033
          %s6035 = sand.u32 %s202, 1
          %s6036 = scalar_lea.vmem [#allocation15], %s6035
          %6037 = dma.done %s6034, 16
        $region84: #{bottleneck_forward.5} parent=71 // pred_fallthru
          _
      $region72: #{bottleneck_forward.5} parent=5 // pred_fallthru
        _
    $region6: #{bottleneck_forward.5} parent=1 // loop_footer
      %s28 = sadd.s32 1, %s24
    $region7: #{bottleneck_forward.5} parent=1 // loop_footer_branch
      %23 = sbr.rel target = $region3
    $region8: #{bottleneck_forward.5} parent=1 // loop_exit
      _
    %6038 = vsyncpa [#allocation5], 1
    %s6039 = scalar_lea.sflag [#allocation5], 1
    %6040 = vsyncpa %s6039, 1
    %6041 = vsyncpa [#allocation8], 1
    %6042 = vsyncpa [#allocation11], 1
    %6043 = vsyncpa [#allocation6], 1
    %s6044 = scalar_lea.sflag [#allocation6], 1
    %6045 = vsyncpa %s6044, 1
    %6046 = vsyncpa [#allocation14], 1
    %s6047 = scalar_lea.sflag [#allocation14], 1
    %6048 = vsyncpa %s6047, 1

</llo_original>
